<compile_context>
chip_gen: v7x
topology: tpu7x:2x2x1
jax: 0.10.0
libtpu: 0.0.40
codegen_flags: <defaults>
</compile_context>

<pallas_src>
import numpy as np
import jax
import jax.numpy as jnp
from jax.experimental import pallas as pl
from jax.experimental.pallas import tpu as pltpu

# ----------------------------- tiny T5 config -------------------------------
VOCAB = 64
V_PAD = 128                      # lane-dense padded vocab for LM head / loss
D_MODEL = 32
D_KV = 8
N_HEADS = 4
INNER = N_HEADS * D_KV
D_FF = 64
N_LAYERS = 2
REL_BUCKETS = 32
REL_MAX_DIST = 128
EPS = 1e-6
NEG = -1e9                       # additive mask value (stand-in for finfo.min)

# --------------------------- in-kernel helpers (f32) -------------------------


def _rms(x, g):
    """T5 RMSNorm (no mean subtraction, no bias)."""
    var = jnp.mean(x * x, axis=-1, keepdims=True)
    return x * jax.lax.rsqrt(var + EPS) * g


def _mm(a, b):
    return jnp.dot(a, b, preferred_element_type=jnp.float32)


def _qkt(q, k):
    # q @ k^T without materializing a transpose (contract last dim of both).
    return jax.lax.dot_general(q, k, (((1,), (1,)), ((), ())),
                               preferred_element_type=jnp.float32)


def _softmax(s):
    m = jnp.max(s, axis=-1, keepdims=True)
    p = jnp.exp(s - m)
    return p / jnp.sum(p, axis=-1, keepdims=True)


def _attend(q_all, k_all, v_all, o_w, bias_ref=None, key_mask=None):
    """Multi-head attention + output projection for one batch element.
    q_all: [Sq, INNER], k_all/v_all: [Sk, INNER], o_w: [INNER, D].
    Heads are static column slices; per-head outputs are merged by summing
    (P @ V) @ Wo[head rows] -> no transposes, no concatenates.
    T5 does NOT scale by 1/sqrt(d_kv); bias carries rel-pos / causal mask."""
    out = None
    for hh in range(N_HEADS):
        sl = slice(hh * D_KV, (hh + 1) * D_KV)
        s = _qkt(q_all[:, sl], k_all[:, sl])          # [Sq, Sk] f32
        if bias_ref is not None:
            s = s + bias_ref[hh]                      # [Sq, Sk]
        if key_mask is not None:
            s = s + key_mask                          # [1, Sk] broadcast over rows
        ctx = _mm(_softmax(s), v_all[:, sl])          # [Sq, D_KV]
        contrib = _mm(ctx, o_w[sl, :])                # [Sq, D]
        out = contrib if out is None else out + contrib
    return out

# ----------------------- fully fused T5 forward kernel -----------------------


def _t5_kernel(x_enc_ref, x_dec_ref, enc_b_ref, dec_b_ref, ekm_ref, lab_ref,
               e_ln0, e_qkv, e_ow, e_ln1, e_wi, e_wo, e_fln,
               d_ln0, d_qkv, d_ow, d_ln1, d_xq, d_xkv, d_xow, d_ln2, d_wi,
               d_wo, d_fln, lmh_ref,
               logits_ref, nll_ref, cnt_ref):
    """One batch element per grid step: full encoder stack, decoder stack,
    LM head and loss epilogue.  Activations never leave VMEM."""
    ekm = ekm_ref[0]                                   # [1, Se] additive key mask

    # ------------------------------- encoder ---------------------------------
    x = x_enc_ref[0]                                   # [Se, D]
    for l in range(N_LAYERS):
        qkv = _mm(_rms(x, e_ln0[l]), e_qkv[l])         # [Se, 3*INNER]
        x = x + _attend(qkv[:, :INNER], qkv[:, INNER:2 * INNER],
                        qkv[:, 2 * INNER:], e_ow[l],
                        bias_ref=enc_b_ref, key_mask=ekm)
        ff = jnp.maximum(_mm(_rms(x, e_ln1[l]), e_wi[l]), 0.0)
        x = x + _mm(ff, e_wo[l])
    enc = _rms(x, e_fln[...])                          # [Se, D] stays VMEM-resident

    # ------------------------------- decoder ---------------------------------
    y = x_dec_ref[0]                                   # [Sd, D]
    for l in range(N_LAYERS):
        # self-attention (rel-pos bias + causal mask folded into dec_b)
        qkv = _mm(_rms(y, d_ln0[l]), d_qkv[l])
        y = y + _attend(qkv[:, :INNER], qkv[:, INNER:2 * INNER],
                        qkv[:, 2 * INNER:], d_ow[l], bias_ref=dec_b_ref)
        # cross-attention (no rel bias; encoder key-padding mask)
        q_all = _mm(_rms(y, d_ln1[l]), d_xq[l])        # [Sd, INNER]
        kv = _mm(enc, d_xkv[l])                        # [Se, 2*INNER]
        y = y + _attend(q_all, kv[:, :INNER], kv[:, INNER:], d_xow[l],
                        key_mask=ekm)
        # feed-forward (ReLU)
        ff = jnp.maximum(_mm(_rms(y, d_ln2[l]), d_wi[l]), 0.0)
        y = y + _mm(ff, d_wo[l])

    # --------------- final norm + tied-embedding LM head + loss ---------------
    h = _rms(y, d_fln[...]) * (D_MODEL ** -0.5)        # tied-embedding rescale
    logits = _mm(h, lmh_ref[...])                      # [Sd, V_PAD] lane-dense
    logits_ref[0] = logits

    lane = jax.lax.broadcasted_iota(jnp.int32, logits.shape, 1)
    lg = jnp.where(lane < VOCAB, logits, NEG)          # mask padded vocab lanes
    m = jnp.max(lg, axis=-1, keepdims=True)
    s = lg - m
    logp = s - jnp.log(jnp.sum(jnp.exp(s), axis=-1, keepdims=True))
    lab = lab_ref[0]                                   # [Sd, 1] int32
    valid = lab != -100                                # ignore_index
    onehot = (lane == jnp.where(valid, lab, 0)).astype(jnp.float32)
    nll = -jnp.sum(logp * onehot, axis=-1, keepdims=True)   # [Sd, 1]
    nll = jnp.where(valid, nll, 0.0)
    nll_ref[0] = jnp.sum(nll, axis=0, keepdims=True)        # per-batch scalar
    cnt_ref[0] = jnp.sum(valid.astype(jnp.float32), axis=0, keepdims=True)

# --------------------------------- wrapper -----------------------------------


def _full_spec(shape):
    n = len(shape)
    return pl.BlockSpec(shape, lambda b, _n=n: (0,) * _n)


def t5_fused_forward(params, enc_emb, dec_emb, enc_bias, dec_bias, ekm_add,
                     labels3d):
    B, Se, D = enc_emb.shape
    Sd = dec_emb.shape[1]
    w_names = ["e_ln0", "e_qkv", "e_ow", "e_ln1", "e_wi", "e_wo", "e_fln",
               "d_ln0", "d_qkv", "d_ow", "d_ln1", "d_xq", "d_xkv", "d_xow",
               "d_ln2", "d_wi", "d_wo", "d_fln", "lm_head"]
    w_args = [params[n] for n in w_names]

    in_specs = [
        pl.BlockSpec((1, Se, D), lambda b: (b, 0, 0)),       # encoder embeddings
        pl.BlockSpec((1, Sd, D), lambda b: (b, 0, 0)),       # decoder embeddings
        _full_spec(enc_bias.shape),                          # [H, Se, Se]
        _full_spec(dec_bias.shape),                          # [H, Sd, Sd]
        pl.BlockSpec((1, 1, Se), lambda b: (b, 0, 0)),       # encoder key mask
        pl.BlockSpec((1, Sd, 1), lambda b: (b, 0, 0)),       # labels
    ] + [_full_spec(w.shape) for w in w_args]                # stacked weights

    out_shape = (
        jax.ShapeDtypeStruct((B, Sd, V_PAD), jnp.float32),   # padded logits
        jax.ShapeDtypeStruct((B, 1, 1), jnp.float32),        # per-batch nll sum
        jax.ShapeDtypeStruct((B, 1, 1), jnp.float32),        # per-batch count
    )
    out_specs = (
        pl.BlockSpec((1, Sd, V_PAD), lambda b: (b, 0, 0)),
        pl.BlockSpec((1, 1, 1), lambda b: (b, 0, 0)),
        pl.BlockSpec((1, 1, 1), lambda b: (b, 0, 0)),
    )

    return pl.pallas_call(
        _t5_kernel,
        grid=(B,),
        in_specs=in_specs,
        out_specs=out_specs,
        out_shape=out_shape,
        compiler_params=pltpu.CompilerParams(
            dimension_semantics=("parallel",)),   # v7x: shard batch over 2 TCs
    )(enc_emb, dec_emb, enc_bias, dec_bias, ekm_add, labels3d, *w_args)

# ------------------------ static T5 glue (numpy / JAX) -----------------------


def _rel_bucket_table(q_len, k_len, bidirectional,
                      num_buckets=REL_BUCKETS, max_distance=REL_MAX_DIST):
    """Static numpy relative-position bucket table (shapes are compile-time)."""
    ctx = np.arange(q_len, dtype=np.int64)[:, None]
    mem = np.arange(k_len, dtype=np.int64)[None, :]
    rel = mem - ctx
    buckets = np.zeros_like(rel)
    nb = num_buckets
    if bidirectional:
        nb //= 2
        buckets += (rel > 0).astype(np.int64) * nb
        rel = np.abs(rel)
    else:
        rel = -np.minimum(rel, 0)
    max_exact = nb // 2
    is_small = rel < max_exact
    rel_large = max_exact + (
        np.log(np.maximum(rel, 1).astype(np.float64) / max_exact)
        / np.log(max_distance / max_exact) * (nb - max_exact)
    ).astype(np.int64)
    rel_large = np.minimum(rel_large, nb - 1)
    buckets += np.where(is_small, rel, rel_large)
    return buckets.astype(np.int32)


def shift_right(labels):
    """T5 decoder input: shift right, decoder_start_token_id = pad = 0."""
    B = labels.shape[0]
    dec = jnp.concatenate([jnp.zeros((B, 1), labels.dtype), labels[:, :-1]],
                          axis=1)
    return jnp.where(dec == -100, 0, dec)


def model_forward(params, encoder_input_ids, encoder_attention_mask, labels):
    """Equivalent of Model.forward -> (loss, lm_logits)."""
    B, Se = encoder_input_ids.shape
    Sd = labels.shape[1]

    enc_emb = params["shared"][encoder_input_ids]          # [B, Se, D]
    dec_emb = params["shared"][shift_right(labels)]        # [B, Sd, D]

    # Relative-position biases (bucket tables are static numpy constants;
    # only the tiny rel_emb gather + transpose stays in the traced graph).
    enc_buckets = _rel_bucket_table(Se, Se, bidirectional=True)
    dec_buckets = _rel_bucket_table(Sd, Sd, bidirectional=False)
    enc_bias = jnp.transpose(params["enc_rel"][enc_buckets], (2, 0, 1))   # [H,Se,Se]
    causal = np.where(np.tril(np.ones((Sd, Sd))) > 0, 0.0, NEG).astype(np.float32)
    dec_bias = jnp.transpose(params["dec_rel"][dec_buckets], (2, 0, 1)) + causal[None]

    # Encoder key-padding mask as additive [B, 1, Se] (broadcast in-kernel).
    ekm_add = ((1.0 - encoder_attention_mask.astype(jnp.float32)) * NEG)[:, None, :]
    labels3d = labels.reshape(B, Sd, 1).astype(jnp.int32)

    logits_pad, nll_sum, cnt = t5_fused_forward(
        params, enc_emb, dec_emb, enc_bias, dec_bias, ekm_add, labels3d)

    loss = jnp.sum(nll_sum) / jnp.maximum(jnp.sum(cnt), 1.0)
    logits = logits_pad[:, :, :VOCAB]
    return loss, logits

# ---------------------------- deterministic init -----------------------------


def init_params(key):
    keys = iter(jax.random.split(key, 64))

    def nrm(shape, scale=0.02):
        return jax.random.normal(next(keys), shape, dtype=jnp.float32) * scale

    L = N_LAYERS
    params = {
        # encoder (stacked per-layer weights)
        "e_ln0": jnp.ones((L, 1, D_MODEL), jnp.float32),
        "e_qkv": nrm((L, D_MODEL, 3 * INNER)),
        "e_ow": nrm((L, INNER, D_MODEL)),
        "e_ln1": jnp.ones((L, 1, D_MODEL), jnp.float32),
        "e_wi": nrm((L, D_MODEL, D_FF)),
        "e_wo": nrm((L, D_FF, D_MODEL)),
        "e_fln": jnp.ones((1, D_MODEL), jnp.float32),
        # decoder (stacked per-layer weights)
        "d_ln0": jnp.ones((L, 1, D_MODEL), jnp.float32),
        "d_qkv": nrm((L, D_MODEL, 3 * INNER)),
        "d_ow": nrm((L, INNER, D_MODEL)),
        "d_ln1": jnp.ones((L, 1, D_MODEL), jnp.float32),
        "d_xq": nrm((L, D_MODEL, INNER)),
        "d_xkv": nrm((L, D_MODEL, 2 * INNER)),
        "d_xow": nrm((L, INNER, D_MODEL)),
        "d_ln2": jnp.ones((L, 1, D_MODEL), jnp.float32),
        "d_wi": nrm((L, D_MODEL, D_FF)),
        "d_wo": nrm((L, D_FF, D_MODEL)),
        "d_fln": jnp.ones((1, D_MODEL), jnp.float32),
        # shared rel-pos embeddings (first layer's table, reused by all layers)
        "enc_rel": nrm((REL_BUCKETS, N_HEADS), 1.0),
        "dec_rel": nrm((REL_BUCKETS, N_HEADS), 1.0),
    }
    shared = nrm((VOCAB, D_MODEL), 1.0)
    params["shared"] = shared
    # Tied LM head, padded to 128 lanes (padding columns zero, masked in loss).
    params["lm_head"] = jnp.zeros((D_MODEL, V_PAD),
                                  jnp.float32).at[:, :VOCAB].set(shared.T)
    return params

# ------------------------------------ main -----------------------------------

if __name__ == "__main__":
    # TODO(synk): pretrained checkpoint load / tokenizer resize / dropout have
    # no kernel equivalent; weights are synthetic and vocab is fixed at VOCAB.
    key = jax.random.PRNGKey(0)
    pkey, ikey, lkey = jax.random.split(key, 3)
    params = init_params(pkey)

    B, Se, Sd = 2, 8, 8
    encoder_input_ids = jax.random.randint(ikey, (B, Se), 0, VOCAB, dtype=jnp.int32)
    encoder_attention_mask = jnp.ones((B, Se), jnp.int32).at[1, 6:].set(0)
    labels = jax.random.randint(lkey, (B, Sd), 0, VOCAB, dtype=jnp.int32)

    loss, logits = jax.jit(model_forward)(params, encoder_input_ids,
                                          encoder_attention_mask, labels)
    jax.block_until_ready((loss, logits))
    assert logits.shape == (B, Sd, VOCAB)
    assert bool(jnp.isfinite(loss))
    print("KERNEL_OK")
</pallas_src>

<mosaic_0001>
module attributes {stable_mosaic.version = 11 : i64} {
  func.func @_t5_kernel(%arg0: i32, %arg1: memref<1x8x32xf32, #tpu.memory_space<vmem>>, %arg2: memref<1x8x32xf32, #tpu.memory_space<vmem>>, %arg3: memref<4x8x8xf32, #tpu.memory_space<vmem>>, %arg4: memref<4x8x8xf32, #tpu.memory_space<vmem>>, %arg5: memref<1x1x8xf32, #tpu.memory_space<vmem>>, %arg6: memref<1x8x1xi32, #tpu.memory_space<vmem>>, %arg7: memref<2x1x32xf32, #tpu.memory_space<vmem>>, %arg8: memref<2x32x96xf32, #tpu.memory_space<vmem>>, %arg9: memref<2x32x32xf32, #tpu.memory_space<vmem>>, %arg10: memref<2x1x32xf32, #tpu.memory_space<vmem>>, %arg11: memref<2x32x64xf32, #tpu.memory_space<vmem>>, %arg12: memref<2x64x32xf32, #tpu.memory_space<vmem>>, %arg13: memref<1x32xf32, #tpu.memory_space<vmem>>, %arg14: memref<2x1x32xf32, #tpu.memory_space<vmem>>, %arg15: memref<2x32x96xf32, #tpu.memory_space<vmem>>, %arg16: memref<2x32x32xf32, #tpu.memory_space<vmem>>, %arg17: memref<2x1x32xf32, #tpu.memory_space<vmem>>, %arg18: memref<2x32x32xf32, #tpu.memory_space<vmem>>, %arg19: memref<2x32x64xf32, #tpu.memory_space<vmem>>, %arg20: memref<2x32x32xf32, #tpu.memory_space<vmem>>, %arg21: memref<2x1x32xf32, #tpu.memory_space<vmem>>, %arg22: memref<2x32x64xf32, #tpu.memory_space<vmem>>, %arg23: memref<2x64x32xf32, #tpu.memory_space<vmem>>, %arg24: memref<1x32xf32, #tpu.memory_space<vmem>>, %arg25: memref<32x128xf32, #tpu.memory_space<vmem>>, %arg26: memref<1x8x128xf32, #tpu.memory_space<vmem>>, %arg27: memref<1x1x1xf32, #tpu.memory_space<vmem>>, %arg28: memref<1x1x1xf32, #tpu.memory_space<vmem>>) attributes {dimension_semantics = [#tpu.dimension_semantics<parallel>], iteration_bounds = array<i64: 2>, scalar_prefetch = 0 : i64, scratch_operands = 0 : i64, tpu.core_type = #tpu.core_type<tc>, window_params = [{transform_indices = @transform_0, window_bounds = array<i64: 1, 8, 32>}, {transform_indices = @transform_1, window_bounds = array<i64: 1, 8, 32>}, {pipeline_mode = #tpu.pipeline_mode<synchronous>, transform_indices = @transform_2, window_bounds = array<i64: 4, 8, 8>}, {pipeline_mode = #tpu.pipeline_mode<synchronous>, transform_indices = @transform_3, window_bounds = array<i64: 4, 8, 8>}, {transform_indices = @transform_4, window_bounds = array<i64: 1, 1, 8>}, {transform_indices = @transform_5, window_bounds = array<i64: 1, 8, 1>}, {pipeline_mode = #tpu.pipeline_mode<synchronous>, transform_indices = @transform_6, window_bounds = array<i64: 2, 1, 32>}, {pipeline_mode = #tpu.pipeline_mode<synchronous>, transform_indices = @transform_7, window_bounds = array<i64: 2, 32, 96>}, {pipeline_mode = #tpu.pipeline_mode<synchronous>, transform_indices = @transform_8, window_bounds = array<i64: 2, 32, 32>}, {pipeline_mode = #tpu.pipeline_mode<synchronous>, transform_indices = @transform_9, window_bounds = array<i64: 2, 1, 32>}, {pipeline_mode = #tpu.pipeline_mode<synchronous>, transform_indices = @transform_10, window_bounds = array<i64: 2, 32, 64>}, {pipeline_mode = #tpu.pipeline_mode<synchronous>, transform_indices = @transform_11, window_bounds = array<i64: 2, 64, 32>}, {pipeline_mode = #tpu.pipeline_mode<synchronous>, transform_indices = @transform_12, window_bounds = array<i64: 1, 32>}, {pipeline_mode = #tpu.pipeline_mode<synchronous>, transform_indices = @transform_13, window_bounds = array<i64: 2, 1, 32>}, {pipeline_mode = #tpu.pipeline_mode<synchronous>, transform_indices = @transform_14, window_bounds = array<i64: 2, 32, 96>}, {pipeline_mode = #tpu.pipeline_mode<synchronous>, transform_indices = @transform_15, window_bounds = array<i64: 2, 32, 32>}, {pipeline_mode = #tpu.pipeline_mode<synchronous>, transform_indices = @transform_16, window_bounds = array<i64: 2, 1, 32>}, {pipeline_mode = #tpu.pipeline_mode<synchronous>, transform_indices = @transform_17, window_bounds = array<i64: 2, 32, 32>}, {pipeline_mode = #tpu.pipeline_mode<synchronous>, transform_indices = @transform_18, window_bounds = array<i64: 2, 32, 64>}, {pipeline_mode = #tpu.pipeline_mode<synchronous>, transform_indices = @transform_19, window_bounds = array<i64: 2, 32, 32>}, {pipeline_mode = #tpu.pipeline_mode<synchronous>, transform_indices = @transform_20, window_bounds = array<i64: 2, 1, 32>}, {pipeline_mode = #tpu.pipeline_mode<synchronous>, transform_indices = @transform_21, window_bounds = array<i64: 2, 32, 64>}, {pipeline_mode = #tpu.pipeline_mode<synchronous>, transform_indices = @transform_22, window_bounds = array<i64: 2, 64, 32>}, {pipeline_mode = #tpu.pipeline_mode<synchronous>, transform_indices = @transform_23, window_bounds = array<i64: 1, 32>}, {pipeline_mode = #tpu.pipeline_mode<synchronous>, transform_indices = @transform_24, window_bounds = array<i64: 32, 128>}, {transform_indices = @transform_25, window_bounds = array<i64: 1, 8, 128>}, {transform_indices = @transform_26, window_bounds = array<i64: 1, 1, 1>}, {transform_indices = @transform_27, window_bounds = array<i64: 1, 1, 1>}]} {
    %c0 = arith.constant 0 : index
    %c0_0 = arith.constant 0 : index
    %c0_1 = arith.constant 0 : index
    %0 = vector.load %arg5[%c0, %c0_0, %c0_1] : memref<1x1x8xf32, #tpu.memory_space<vmem>>, vector<1x1x8xf32>
    %1 = vector.shape_cast %0 : vector<1x1x8xf32> to vector<1x8xf32>
    %c0_2 = arith.constant 0 : index
    %c0_3 = arith.constant 0 : index
    %c0_4 = arith.constant 0 : index
    %2 = vector.load %arg1[%c0_2, %c0_3, %c0_4] : memref<1x8x32xf32, #tpu.memory_space<vmem>>, vector<1x8x32xf32>
    %3 = vector.shape_cast %2 : vector<1x8x32xf32> to vector<8x32xf32>
    %c0_5 = arith.constant 0 : index
    %c0_6 = arith.constant 0 : index
    %c0_7 = arith.constant 0 : index
    %4 = vector.load %arg7[%c0_5, %c0_6, %c0_7] : memref<2x1x32xf32, #tpu.memory_space<vmem>>, vector<1x1x32xf32>
    %5 = vector.shape_cast %4 : vector<1x1x32xf32> to vector<1x32xf32>
    %6 = arith.mulf %3, %3 : vector<8x32xf32>
    %cst = arith.constant dense<0.000000e+00> : vector<8xf32>
    %7 = vector.multi_reduction <add>, %6, %cst [1] : vector<8x32xf32> to vector<8xf32>
    %8 = vector.shape_cast %7 : vector<8xf32> to vector<8x1xf32>
    %cst_8 = arith.constant 3.200000e+01 : f32
    %9 = vector.broadcast %cst_8 : f32 to vector<8x1xf32>
    %10 = arith.divf %8, %9 : vector<8x1xf32>
    %cst_9 = arith.constant 9.99999997E-7 : f32
    %11 = vector.broadcast %cst_9 : f32 to vector<8x1xf32>
    %12 = arith.addf %10, %11 : vector<8x1xf32>
    %13 = math.rsqrt %12 : vector<8x1xf32>
    %14 = vector.broadcast %13 : vector<8x1xf32> to vector<8x32xf32>
    %15 = arith.mulf %3, %14 : vector<8x32xf32>
    %16 = vector.broadcast %5 : vector<1x32xf32> to vector<8x32xf32>
    %17 = arith.mulf %15, %16 : vector<8x32xf32>
    %c0_10 = arith.constant 0 : index
    %c0_11 = arith.constant 0 : index
    %c0_12 = arith.constant 0 : index
    %18 = vector.load %arg8[%c0_10, %c0_11, %c0_12] : memref<2x32x96xf32, #tpu.memory_space<vmem>>, vector<1x32x96xf32>
    %19 = vector.shape_cast %18 : vector<1x32x96xf32> to vector<32x96xf32>
    %cst_13 = arith.constant dense<0.000000e+00> : vector<8x96xf32>
    %20 = tpu.matmul %17, %19, %cst_13 {dimension_numbers = #tpu.dot_dimension_numbers<[1], [0], [0], [1], [0, 0, 1, 1], [], []>} : vector<8x32xf32>, vector<32x96xf32>, vector<8x96xf32> -> vector<8x96xf32>
    %21 = vector.extract_strided_slice %20 {offsets = [0, 0], sizes = [8, 32], strides = [1, 1]} : vector<8x96xf32> to vector<8x32xf32>
    %22 = vector.extract_strided_slice %20 {offsets = [0, 32], sizes = [8, 32], strides = [1, 1]} : vector<8x96xf32> to vector<8x32xf32>
    %23 = vector.extract_strided_slice %20 {offsets = [0, 64], sizes = [8, 32], strides = [1, 1]} : vector<8x96xf32> to vector<8x32xf32>
    %c0_14 = arith.constant 0 : index
    %c0_15 = arith.constant 0 : index
    %c0_16 = arith.constant 0 : index
    %24 = vector.load %arg9[%c0_14, %c0_15, %c0_16] : memref<2x32x32xf32, #tpu.memory_space<vmem>>, vector<1x32x32xf32>
    %25 = vector.shape_cast %24 : vector<1x32x32xf32> to vector<32x32xf32>
    %26 = vector.extract_strided_slice %21 {offsets = [0, 0], sizes = [8, 8], strides = [1, 1]} : vector<8x32xf32> to vector<8x8xf32>
    %27 = vector.extract_strided_slice %22 {offsets = [0, 0], sizes = [8, 8], strides = [1, 1]} : vector<8x32xf32> to vector<8x8xf32>
    %cst_17 = arith.constant dense<0.000000e+00> : vector<8x8xf32>
    %28 = tpu.matmul %26, %27, %cst_17 {dimension_numbers = #tpu.dot_dimension_numbers<[1], [1], [0], [0], [0, 0, 1, 0], [], []>} : vector<8x8xf32>, vector<8x8xf32>, vector<8x8xf32> -> vector<8x8xf32>
    %c0_18 = arith.constant 0 : index
    %c0_19 = arith.constant 0 : index
    %c0_20 = arith.constant 0 : index
    %29 = vector.load %arg3[%c0_18, %c0_19, %c0_20] : memref<4x8x8xf32, #tpu.memory_space<vmem>>, vector<1x8x8xf32>
    %30 = vector.shape_cast %29 : vector<1x8x8xf32> to vector<8x8xf32>
    %31 = arith.addf %28, %30 : vector<8x8xf32>
    %32 = vector.broadcast %1 : vector<1x8xf32> to vector<8x8xf32>
    %33 = arith.addf %31, %32 : vector<8x8xf32>
    %cst_21 = arith.constant dense<0xFF800000> : vector<8xf32>
    %34 = vector.multi_reduction <maximumf>, %33, %cst_21 [1] : vector<8x8xf32> to vector<8xf32>
    %35 = vector.shape_cast %34 : vector<8xf32> to vector<8x1xf32>
    %36 = vector.broadcast %35 : vector<8x1xf32> to vector<8x8xf32>
    %37 = arith.subf %33, %36 : vector<8x8xf32>
    %38 = math.exp %37 : vector<8x8xf32>
    %cst_22 = arith.constant dense<0.000000e+00> : vector<8xf32>
    %39 = vector.multi_reduction <add>, %38, %cst_22 [1] : vector<8x8xf32> to vector<8xf32>
    %40 = vector.shape_cast %39 : vector<8xf32> to vector<8x1xf32>
    %41 = vector.broadcast %40 : vector<8x1xf32> to vector<8x8xf32>
    %42 = arith.divf %38, %41 : vector<8x8xf32>
    %43 = vector.extract_strided_slice %23 {offsets = [0, 0], sizes = [8, 8], strides = [1, 1]} : vector<8x32xf32> to vector<8x8xf32>
    %cst_23 = arith.constant dense<0.000000e+00> : vector<8x8xf32>
    %44 = tpu.matmul %42, %43, %cst_23 {dimension_numbers = #tpu.dot_dimension_numbers<[1], [0], [0], [1], [0, 0, 1, 1], [], []>} : vector<8x8xf32>, vector<8x8xf32>, vector<8x8xf32> -> vector<8x8xf32>
    %45 = vector.extract_strided_slice %25 {offsets = [0, 0], sizes = [8, 32], strides = [1, 1]} : vector<32x32xf32> to vector<8x32xf32>
    %cst_24 = arith.constant dense<0.000000e+00> : vector<8x32xf32>
    %46 = tpu.matmul %44, %45, %cst_24 {dimension_numbers = #tpu.dot_dimension_numbers<[1], [0], [0], [1], [0, 0, 1, 1], [], []>} : vector<8x8xf32>, vector<8x32xf32>, vector<8x32xf32> -> vector<8x32xf32>
    %47 = vector.extract_strided_slice %21 {offsets = [0, 8], sizes = [8, 8], strides = [1, 1]} : vector<8x32xf32> to vector<8x8xf32>
    %48 = vector.extract_strided_slice %22 {offsets = [0, 8], sizes = [8, 8], strides = [1, 1]} : vector<8x32xf32> to vector<8x8xf32>
    %cst_25 = arith.constant dense<0.000000e+00> : vector<8x8xf32>
    %49 = tpu.matmul %47, %48, %cst_25 {dimension_numbers = #tpu.dot_dimension_numbers<[1], [1], [0], [0], [0, 0, 1, 0], [], []>} : vector<8x8xf32>, vector<8x8xf32>, vector<8x8xf32> -> vector<8x8xf32>
    %c1 = arith.constant 1 : index
    %c0_26 = arith.constant 0 : index
    %c0_27 = arith.constant 0 : index
    %50 = vector.load %arg3[%c1, %c0_26, %c0_27] : memref<4x8x8xf32, #tpu.memory_space<vmem>>, vector<1x8x8xf32>
    %51 = vector.shape_cast %50 : vector<1x8x8xf32> to vector<8x8xf32>
    %52 = arith.addf %49, %51 : vector<8x8xf32>
    %53 = vector.broadcast %1 : vector<1x8xf32> to vector<8x8xf32>
    %54 = arith.addf %52, %53 : vector<8x8xf32>
    %cst_28 = arith.constant dense<0xFF800000> : vector<8xf32>
    %55 = vector.multi_reduction <maximumf>, %54, %cst_28 [1] : vector<8x8xf32> to vector<8xf32>
    %56 = vector.shape_cast %55 : vector<8xf32> to vector<8x1xf32>
    %57 = vector.broadcast %56 : vector<8x1xf32> to vector<8x8xf32>
    %58 = arith.subf %54, %57 : vector<8x8xf32>
    %59 = math.exp %58 : vector<8x8xf32>
    %cst_29 = arith.constant dense<0.000000e+00> : vector<8xf32>
    %60 = vector.multi_reduction <add>, %59, %cst_29 [1] : vector<8x8xf32> to vector<8xf32>
    %61 = vector.shape_cast %60 : vector<8xf32> to vector<8x1xf32>
    %62 = vector.broadcast %61 : vector<8x1xf32> to vector<8x8xf32>
    %63 = arith.divf %59, %62 : vector<8x8xf32>
    %64 = vector.extract_strided_slice %23 {offsets = [0, 8], sizes = [8, 8], strides = [1, 1]} : vector<8x32xf32> to vector<8x8xf32>
    %cst_30 = arith.constant dense<0.000000e+00> : vector<8x8xf32>
    %65 = tpu.matmul %63, %64, %cst_30 {dimension_numbers = #tpu.dot_dimension_numbers<[1], [0], [0], [1], [0, 0, 1, 1], [], []>} : vector<8x8xf32>, vector<8x8xf32>, vector<8x8xf32> -> vector<8x8xf32>
    %66 = vector.extract_strided_slice %25 {offsets = [8, 0], sizes = [8, 32], strides = [1, 1]} : vector<32x32xf32> to vector<8x32xf32>
    %cst_31 = arith.constant dense<0.000000e+00> : vector<8x32xf32>
    %67 = tpu.matmul %65, %66, %cst_31 {dimension_numbers = #tpu.dot_dimension_numbers<[1], [0], [0], [1], [0, 0, 1, 1], [], []>} : vector<8x8xf32>, vector<8x32xf32>, vector<8x32xf32> -> vector<8x32xf32>
    %68 = arith.addf %46, %67 : vector<8x32xf32>
    %69 = vector.extract_strided_slice %21 {offsets = [0, 16], sizes = [8, 8], strides = [1, 1]} : vector<8x32xf32> to vector<8x8xf32>
    %70 = vector.extract_strided_slice %22 {offsets = [0, 16], sizes = [8, 8], strides = [1, 1]} : vector<8x32xf32> to vector<8x8xf32>
    %cst_32 = arith.constant dense<0.000000e+00> : vector<8x8xf32>
    %71 = tpu.matmul %69, %70, %cst_32 {dimension_numbers = #tpu.dot_dimension_numbers<[1], [1], [0], [0], [0, 0, 1, 0], [], []>} : vector<8x8xf32>, vector<8x8xf32>, vector<8x8xf32> -> vector<8x8xf32>
    %c2 = arith.constant 2 : index
    %c0_33 = arith.constant 0 : index
    %c0_34 = arith.constant 0 : index
    %72 = vector.load %arg3[%c2, %c0_33, %c0_34] : memref<4x8x8xf32, #tpu.memory_space<vmem>>, vector<1x8x8xf32>
    %73 = vector.shape_cast %72 : vector<1x8x8xf32> to vector<8x8xf32>
    %74 = arith.addf %71, %73 : vector<8x8xf32>
    %75 = vector.broadcast %1 : vector<1x8xf32> to vector<8x8xf32>
    %76 = arith.addf %74, %75 : vector<8x8xf32>
    %cst_35 = arith.constant dense<0xFF800000> : vector<8xf32>
    %77 = vector.multi_reduction <maximumf>, %76, %cst_35 [1] : vector<8x8xf32> to vector<8xf32>
    %78 = vector.shape_cast %77 : vector<8xf32> to vector<8x1xf32>
    %79 = vector.broadcast %78 : vector<8x1xf32> to vector<8x8xf32>
    %80 = arith.subf %76, %79 : vector<8x8xf32>
    %81 = math.exp %80 : vector<8x8xf32>
    %cst_36 = arith.constant dense<0.000000e+00> : vector<8xf32>
    %82 = vector.multi_reduction <add>, %81, %cst_36 [1] : vector<8x8xf32> to vector<8xf32>
    %83 = vector.shape_cast %82 : vector<8xf32> to vector<8x1xf32>
    %84 = vector.broadcast %83 : vector<8x1xf32> to vector<8x8xf32>
    %85 = arith.divf %81, %84 : vector<8x8xf32>
    %86 = vector.extract_strided_slice %23 {offsets = [0, 16], sizes = [8, 8], strides = [1, 1]} : vector<8x32xf32> to vector<8x8xf32>
    %cst_37 = arith.constant dense<0.000000e+00> : vector<8x8xf32>
    %87 = tpu.matmul %85, %86, %cst_37 {dimension_numbers = #tpu.dot_dimension_numbers<[1], [0], [0], [1], [0, 0, 1, 1], [], []>} : vector<8x8xf32>, vector<8x8xf32>, vector<8x8xf32> -> vector<8x8xf32>
    %88 = vector.extract_strided_slice %25 {offsets = [16, 0], sizes = [8, 32], strides = [1, 1]} : vector<32x32xf32> to vector<8x32xf32>
    %cst_38 = arith.constant dense<0.000000e+00> : vector<8x32xf32>
    %89 = tpu.matmul %87, %88, %cst_38 {dimension_numbers = #tpu.dot_dimension_numbers<[1], [0], [0], [1], [0, 0, 1, 1], [], []>} : vector<8x8xf32>, vector<8x32xf32>, vector<8x32xf32> -> vector<8x32xf32>
    %90 = arith.addf %68, %89 : vector<8x32xf32>
    %91 = vector.extract_strided_slice %21 {offsets = [0, 24], sizes = [8, 8], strides = [1, 1]} : vector<8x32xf32> to vector<8x8xf32>
    %92 = vector.extract_strided_slice %22 {offsets = [0, 24], sizes = [8, 8], strides = [1, 1]} : vector<8x32xf32> to vector<8x8xf32>
    %cst_39 = arith.constant dense<0.000000e+00> : vector<8x8xf32>
    %93 = tpu.matmul %91, %92, %cst_39 {dimension_numbers = #tpu.dot_dimension_numbers<[1], [1], [0], [0], [0, 0, 1, 0], [], []>} : vector<8x8xf32>, vector<8x8xf32>, vector<8x8xf32> -> vector<8x8xf32>
    %c3 = arith.constant 3 : index
    %c0_40 = arith.constant 0 : index
    %c0_41 = arith.constant 0 : index
    %94 = vector.load %arg3[%c3, %c0_40, %c0_41] : memref<4x8x8xf32, #tpu.memory_space<vmem>>, vector<1x8x8xf32>
    %95 = vector.shape_cast %94 : vector<1x8x8xf32> to vector<8x8xf32>
    %96 = arith.addf %93, %95 : vector<8x8xf32>
    %97 = vector.broadcast %1 : vector<1x8xf32> to vector<8x8xf32>
    %98 = arith.addf %96, %97 : vector<8x8xf32>
    %cst_42 = arith.constant dense<0xFF800000> : vector<8xf32>
    %99 = vector.multi_reduction <maximumf>, %98, %cst_42 [1] : vector<8x8xf32> to vector<8xf32>
    %100 = vector.shape_cast %99 : vector<8xf32> to vector<8x1xf32>
    %101 = vector.broadcast %100 : vector<8x1xf32> to vector<8x8xf32>
    %102 = arith.subf %98, %101 : vector<8x8xf32>
    %103 = math.exp %102 : vector<8x8xf32>
    %cst_43 = arith.constant dense<0.000000e+00> : vector<8xf32>
    %104 = vector.multi_reduction <add>, %103, %cst_43 [1] : vector<8x8xf32> to vector<8xf32>
    %105 = vector.shape_cast %104 : vector<8xf32> to vector<8x1xf32>
    %106 = vector.broadcast %105 : vector<8x1xf32> to vector<8x8xf32>
    %107 = arith.divf %103, %106 : vector<8x8xf32>
    %108 = vector.extract_strided_slice %23 {offsets = [0, 24], sizes = [8, 8], strides = [1, 1]} : vector<8x32xf32> to vector<8x8xf32>
    %cst_44 = arith.constant dense<0.000000e+00> : vector<8x8xf32>
    %109 = tpu.matmul %107, %108, %cst_44 {dimension_numbers = #tpu.dot_dimension_numbers<[1], [0], [0], [1], [0, 0, 1, 1], [], []>} : vector<8x8xf32>, vector<8x8xf32>, vector<8x8xf32> -> vector<8x8xf32>
    %110 = vector.extract_strided_slice %25 {offsets = [24, 0], sizes = [8, 32], strides = [1, 1]} : vector<32x32xf32> to vector<8x32xf32>
    %cst_45 = arith.constant dense<0.000000e+00> : vector<8x32xf32>
    %111 = tpu.matmul %109, %110, %cst_45 {dimension_numbers = #tpu.dot_dimension_numbers<[1], [0], [0], [1], [0, 0, 1, 1], [], []>} : vector<8x8xf32>, vector<8x32xf32>, vector<8x32xf32> -> vector<8x32xf32>
    %112 = arith.addf %90, %111 : vector<8x32xf32>
    %113 = arith.addf %3, %112 : vector<8x32xf32>
    %c0_46 = arith.constant 0 : index
    %c0_47 = arith.constant 0 : index
    %c0_48 = arith.constant 0 : index
    %114 = vector.load %arg10[%c0_46, %c0_47, %c0_48] : memref<2x1x32xf32, #tpu.memory_space<vmem>>, vector<1x1x32xf32>
    %115 = vector.shape_cast %114 : vector<1x1x32xf32> to vector<1x32xf32>
    %116 = arith.mulf %113, %113 : vector<8x32xf32>
    %cst_49 = arith.constant dense<0.000000e+00> : vector<8xf32>
    %117 = vector.multi_reduction <add>, %116, %cst_49 [1] : vector<8x32xf32> to vector<8xf32>
    %118 = vector.shape_cast %117 : vector<8xf32> to vector<8x1xf32>
    %cst_50 = arith.constant 3.200000e+01 : f32
    %119 = vector.broadcast %cst_50 : f32 to vector<8x1xf32>
    %120 = arith.divf %118, %119 : vector<8x1xf32>
    %cst_51 = arith.constant 9.99999997E-7 : f32
    %121 = vector.broadcast %cst_51 : f32 to vector<8x1xf32>
    %122 = arith.addf %120, %121 : vector<8x1xf32>
    %123 = math.rsqrt %122 : vector<8x1xf32>
    %124 = vector.broadcast %123 : vector<8x1xf32> to vector<8x32xf32>
    %125 = arith.mulf %113, %124 : vector<8x32xf32>
    %126 = vector.broadcast %115 : vector<1x32xf32> to vector<8x32xf32>
    %127 = arith.mulf %125, %126 : vector<8x32xf32>
    %c0_52 = arith.constant 0 : index
    %c0_53 = arith.constant 0 : index
    %c0_54 = arith.constant 0 : index
    %128 = vector.load %arg11[%c0_52, %c0_53, %c0_54] : memref<2x32x64xf32, #tpu.memory_space<vmem>>, vector<1x32x64xf32>
    %129 = vector.shape_cast %128 : vector<1x32x64xf32> to vector<32x64xf32>
    %cst_55 = arith.constant dense<0.000000e+00> : vector<8x64xf32>
    %130 = tpu.matmul %127, %129, %cst_55 {dimension_numbers = #tpu.dot_dimension_numbers<[1], [0], [0], [1], [0, 0, 1, 1], [], []>} : vector<8x32xf32>, vector<32x64xf32>, vector<8x64xf32> -> vector<8x64xf32>
    %cst_56 = arith.constant 0.000000e+00 : f32
    %131 = vector.broadcast %cst_56 : f32 to vector<8x64xf32>
    %132 = arith.maximumf %130, %131 : vector<8x64xf32>
    %c0_57 = arith.constant 0 : index
    %c0_58 = arith.constant 0 : index
    %c0_59 = arith.constant 0 : index
    %133 = vector.load %arg12[%c0_57, %c0_58, %c0_59] : memref<2x64x32xf32, #tpu.memory_space<vmem>>, vector<1x64x32xf32>
    %134 = vector.shape_cast %133 : vector<1x64x32xf32> to vector<64x32xf32>
    %cst_60 = arith.constant dense<0.000000e+00> : vector<8x32xf32>
    %135 = tpu.matmul %132, %134, %cst_60 {dimension_numbers = #tpu.dot_dimension_numbers<[1], [0], [0], [1], [0, 0, 1, 1], [], []>} : vector<8x64xf32>, vector<64x32xf32>, vector<8x32xf32> -> vector<8x32xf32>
    %136 = arith.addf %113, %135 : vector<8x32xf32>
    %c1_61 = arith.constant 1 : index
    %c0_62 = arith.constant 0 : index
    %c0_63 = arith.constant 0 : index
    %137 = vector.load %arg7[%c1_61, %c0_62, %c0_63] : memref<2x1x32xf32, #tpu.memory_space<vmem>>, vector<1x1x32xf32>
    %138 = vector.shape_cast %137 : vector<1x1x32xf32> to vector<1x32xf32>
    %139 = arith.mulf %136, %136 : vector<8x32xf32>
    %cst_64 = arith.constant dense<0.000000e+00> : vector<8xf32>
    %140 = vector.multi_reduction <add>, %139, %cst_64 [1] : vector<8x32xf32> to vector<8xf32>
    %141 = vector.shape_cast %140 : vector<8xf32> to vector<8x1xf32>
    %cst_65 = arith.constant 3.200000e+01 : f32
    %142 = vector.broadcast %cst_65 : f32 to vector<8x1xf32>
    %143 = arith.divf %141, %142 : vector<8x1xf32>
    %cst_66 = arith.constant 9.99999997E-7 : f32
    %144 = vector.broadcast %cst_66 : f32 to vector<8x1xf32>
    %145 = arith.addf %143, %144 : vector<8x1xf32>
    %146 = math.rsqrt %145 : vector<8x1xf32>
    %147 = vector.broadcast %146 : vector<8x1xf32> to vector<8x32xf32>
    %148 = arith.mulf %136, %147 : vector<8x32xf32>
    %149 = vector.broadcast %138 : vector<1x32xf32> to vector<8x32xf32>
    %150 = arith.mulf %148, %149 : vector<8x32xf32>
    %c1_67 = arith.constant 1 : index
    %c0_68 = arith.constant 0 : index
    %c0_69 = arith.constant 0 : index
    %151 = vector.load %arg8[%c1_67, %c0_68, %c0_69] : memref<2x32x96xf32, #tpu.memory_space<vmem>>, vector<1x32x96xf32>
    %152 = vector.shape_cast %151 : vector<1x32x96xf32> to vector<32x96xf32>
    %cst_70 = arith.constant dense<0.000000e+00> : vector<8x96xf32>
    %153 = tpu.matmul %150, %152, %cst_70 {dimension_numbers = #tpu.dot_dimension_numbers<[1], [0], [0], [1], [0, 0, 1, 1], [], []>} : vector<8x32xf32>, vector<32x96xf32>, vector<8x96xf32> -> vector<8x96xf32>
    %154 = vector.extract_strided_slice %153 {offsets = [0, 0], sizes = [8, 32], strides = [1, 1]} : vector<8x96xf32> to vector<8x32xf32>
    %155 = vector.extract_strided_slice %153 {offsets = [0, 32], sizes = [8, 32], strides = [1, 1]} : vector<8x96xf32> to vector<8x32xf32>
    %156 = vector.extract_strided_slice %153 {offsets = [0, 64], sizes = [8, 32], strides = [1, 1]} : vector<8x96xf32> to vector<8x32xf32>
    %c1_71 = arith.constant 1 : index
    %c0_72 = arith.constant 0 : index
    %c0_73 = arith.constant 0 : index
    %157 = vector.load %arg9[%c1_71, %c0_72, %c0_73] : memref<2x32x32xf32, #tpu.memory_space<vmem>>, vector<1x32x32xf32>
    %158 = vector.shape_cast %157 : vector<1x32x32xf32> to vector<32x32xf32>
    %159 = vector.extract_strided_slice %154 {offsets = [0, 0], sizes = [8, 8], strides = [1, 1]} : vector<8x32xf32> to vector<8x8xf32>
    %160 = vector.extract_strided_slice %155 {offsets = [0, 0], sizes = [8, 8], strides = [1, 1]} : vector<8x32xf32> to vector<8x8xf32>
    %cst_74 = arith.constant dense<0.000000e+00> : vector<8x8xf32>
    %161 = tpu.matmul %159, %160, %cst_74 {dimension_numbers = #tpu.dot_dimension_numbers<[1], [1], [0], [0], [0, 0, 1, 0], [], []>} : vector<8x8xf32>, vector<8x8xf32>, vector<8x8xf32> -> vector<8x8xf32>
    %c0_75 = arith.constant 0 : index
    %c0_76 = arith.constant 0 : index
    %c0_77 = arith.constant 0 : index
    %162 = vector.load %arg3[%c0_75, %c0_76, %c0_77] : memref<4x8x8xf32, #tpu.memory_space<vmem>>, vector<1x8x8xf32>
    %163 = vector.shape_cast %162 : vector<1x8x8xf32> to vector<8x8xf32>
    %164 = arith.addf %161, %163 : vector<8x8xf32>
    %165 = vector.broadcast %1 : vector<1x8xf32> to vector<8x8xf32>
    %166 = arith.addf %164, %165 : vector<8x8xf32>
    %cst_78 = arith.constant dense<0xFF800000> : vector<8xf32>
    %167 = vector.multi_reduction <maximumf>, %166, %cst_78 [1] : vector<8x8xf32> to vector<8xf32>
    %168 = vector.shape_cast %167 : vector<8xf32> to vector<8x1xf32>
    %169 = vector.broadcast %168 : vector<8x1xf32> to vector<8x8xf32>
    %170 = arith.subf %166, %169 : vector<8x8xf32>
    %171 = math.exp %170 : vector<8x8xf32>
    %cst_79 = arith.constant dense<0.000000e+00> : vector<8xf32>
    %172 = vector.multi_reduction <add>, %171, %cst_79 [1] : vector<8x8xf32> to vector<8xf32>
    %173 = vector.shape_cast %172 : vector<8xf32> to vector<8x1xf32>
    %174 = vector.broadcast %173 : vector<8x1xf32> to vector<8x8xf32>
    %175 = arith.divf %171, %174 : vector<8x8xf32>
    %176 = vector.extract_strided_slice %156 {offsets = [0, 0], sizes = [8, 8], strides = [1, 1]} : vector<8x32xf32> to vector<8x8xf32>
    %cst_80 = arith.constant dense<0.000000e+00> : vector<8x8xf32>
    %177 = tpu.matmul %175, %176, %cst_80 {dimension_numbers = #tpu.dot_dimension_numbers<[1], [0], [0], [1], [0, 0, 1, 1], [], []>} : vector<8x8xf32>, vector<8x8xf32>, vector<8x8xf32> -> vector<8x8xf32>
    %178 = vector.extract_strided_slice %158 {offsets = [0, 0], sizes = [8, 32], strides = [1, 1]} : vector<32x32xf32> to vector<8x32xf32>
    %cst_81 = arith.constant dense<0.000000e+00> : vector<8x32xf32>
    %179 = tpu.matmul %177, %178, %cst_81 {dimension_numbers = #tpu.dot_dimension_numbers<[1], [0], [0], [1], [0, 0, 1, 1], [], []>} : vector<8x8xf32>, vector<8x32xf32>, vector<8x32xf32> -> vector<8x32xf32>
    %180 = vector.extract_strided_slice %154 {offsets = [0, 8], sizes = [8, 8], strides = [1, 1]} : vector<8x32xf32> to vector<8x8xf32>
    %181 = vector.extract_strided_slice %155 {offsets = [0, 8], sizes = [8, 8], strides = [1, 1]} : vector<8x32xf32> to vector<8x8xf32>
    %cst_82 = arith.constant dense<0.000000e+00> : vector<8x8xf32>
    %182 = tpu.matmul %180, %181, %cst_82 {dimension_numbers = #tpu.dot_dimension_numbers<[1], [1], [0], [0], [0, 0, 1, 0], [], []>} : vector<8x8xf32>, vector<8x8xf32>, vector<8x8xf32> -> vector<8x8xf32>
    %c1_83 = arith.constant 1 : index
    %c0_84 = arith.constant 0 : index
    %c0_85 = arith.constant 0 : index
    %183 = vector.load %arg3[%c1_83, %c0_84, %c0_85] : memref<4x8x8xf32, #tpu.memory_space<vmem>>, vector<1x8x8xf32>
    %184 = vector.shape_cast %183 : vector<1x8x8xf32> to vector<8x8xf32>
    %185 = arith.addf %182, %184 : vector<8x8xf32>
    %186 = vector.broadcast %1 : vector<1x8xf32> to vector<8x8xf32>
    %187 = arith.addf %185, %186 : vector<8x8xf32>
    %cst_86 = arith.constant dense<0xFF800000> : vector<8xf32>
    %188 = vector.multi_reduction <maximumf>, %187, %cst_86 [1] : vector<8x8xf32> to vector<8xf32>
    %189 = vector.shape_cast %188 : vector<8xf32> to vector<8x1xf32>
    %190 = vector.broadcast %189 : vector<8x1xf32> to vector<8x8xf32>
    %191 = arith.subf %187, %190 : vector<8x8xf32>
    %192 = math.exp %191 : vector<8x8xf32>
    %cst_87 = arith.constant dense<0.000000e+00> : vector<8xf32>
    %193 = vector.multi_reduction <add>, %192, %cst_87 [1] : vector<8x8xf32> to vector<8xf32>
    %194 = vector.shape_cast %193 : vector<8xf32> to vector<8x1xf32>
    %195 = vector.broadcast %194 : vector<8x1xf32> to vector<8x8xf32>
    %196 = arith.divf %192, %195 : vector<8x8xf32>
    %197 = vector.extract_strided_slice %156 {offsets = [0, 8], sizes = [8, 8], strides = [1, 1]} : vector<8x32xf32> to vector<8x8xf32>
    %cst_88 = arith.constant dense<0.000000e+00> : vector<8x8xf32>
    %198 = tpu.matmul %196, %197, %cst_88 {dimension_numbers = #tpu.dot_dimension_numbers<[1], [0], [0], [1], [0, 0, 1, 1], [], []>} : vector<8x8xf32>, vector<8x8xf32>, vector<8x8xf32> -> vector<8x8xf32>
    %199 = vector.extract_strided_slice %158 {offsets = [8, 0], sizes = [8, 32], strides = [1, 1]} : vector<32x32xf32> to vector<8x32xf32>
    %cst_89 = arith.constant dense<0.000000e+00> : vector<8x32xf32>
    %200 = tpu.matmul %198, %199, %cst_89 {dimension_numbers = #tpu.dot_dimension_numbers<[1], [0], [0], [1], [0, 0, 1, 1], [], []>} : vector<8x8xf32>, vector<8x32xf32>, vector<8x32xf32> -> vector<8x32xf32>
    %201 = arith.addf %179, %200 : vector<8x32xf32>
    %202 = vector.extract_strided_slice %154 {offsets = [0, 16], sizes = [8, 8], strides = [1, 1]} : vector<8x32xf32> to vector<8x8xf32>
    %203 = vector.extract_strided_slice %155 {offsets = [0, 16], sizes = [8, 8], strides = [1, 1]} : vector<8x32xf32> to vector<8x8xf32>
    %cst_90 = arith.constant dense<0.000000e+00> : vector<8x8xf32>
    %204 = tpu.matmul %202, %203, %cst_90 {dimension_numbers = #tpu.dot_dimension_numbers<[1], [1], [0], [0], [0, 0, 1, 0], [], []>} : vector<8x8xf32>, vector<8x8xf32>, vector<8x8xf32> -> vector<8x8xf32>
    %c2_91 = arith.constant 2 : index
    %c0_92 = arith.constant 0 : index
    %c0_93 = arith.constant 0 : index
    %205 = vector.load %arg3[%c2_91, %c0_92, %c0_93] : memref<4x8x8xf32, #tpu.memory_space<vmem>>, vector<1x8x8xf32>
    %206 = vector.shape_cast %205 : vector<1x8x8xf32> to vector<8x8xf32>
    %207 = arith.addf %204, %206 : vector<8x8xf32>
    %208 = vector.broadcast %1 : vector<1x8xf32> to vector<8x8xf32>
    %209 = arith.addf %207, %208 : vector<8x8xf32>
    %cst_94 = arith.constant dense<0xFF800000> : vector<8xf32>
    %210 = vector.multi_reduction <maximumf>, %209, %cst_94 [1] : vector<8x8xf32> to vector<8xf32>
    %211 = vector.shape_cast %210 : vector<8xf32> to vector<8x1xf32>
    %212 = vector.broadcast %211 : vector<8x1xf32> to vector<8x8xf32>
    %213 = arith.subf %209, %212 : vector<8x8xf32>
    %214 = math.exp %213 : vector<8x8xf32>
    %cst_95 = arith.constant dense<0.000000e+00> : vector<8xf32>
    %215 = vector.multi_reduction <add>, %214, %cst_95 [1] : vector<8x8xf32> to vector<8xf32>
    %216 = vector.shape_cast %215 : vector<8xf32> to vector<8x1xf32>
    %217 = vector.broadcast %216 : vector<8x1xf32> to vector<8x8xf32>
    %218 = arith.divf %214, %217 : vector<8x8xf32>
    %219 = vector.extract_strided_slice %156 {offsets = [0, 16], sizes = [8, 8], strides = [1, 1]} : vector<8x32xf32> to vector<8x8xf32>
    %cst_96 = arith.constant dense<0.000000e+00> : vector<8x8xf32>
    %220 = tpu.matmul %218, %219, %cst_96 {dimension_numbers = #tpu.dot_dimension_numbers<[1], [0], [0], [1], [0, 0, 1, 1], [], []>} : vector<8x8xf32>, vector<8x8xf32>, vector<8x8xf32> -> vector<8x8xf32>
    %221 = vector.extract_strided_slice %158 {offsets = [16, 0], sizes = [8, 32], strides = [1, 1]} : vector<32x32xf32> to vector<8x32xf32>
    %cst_97 = arith.constant dense<0.000000e+00> : vector<8x32xf32>
    %222 = tpu.matmul %220, %221, %cst_97 {dimension_numbers = #tpu.dot_dimension_numbers<[1], [0], [0], [1], [0, 0, 1, 1], [], []>} : vector<8x8xf32>, vector<8x32xf32>, vector<8x32xf32> -> vector<8x32xf32>
    %223 = arith.addf %201, %222 : vector<8x32xf32>
    %224 = vector.extract_strided_slice %154 {offsets = [0, 24], sizes = [8, 8], strides = [1, 1]} : vector<8x32xf32> to vector<8x8xf32>
    %225 = vector.extract_strided_slice %155 {offsets = [0, 24], sizes = [8, 8], strides = [1, 1]} : vector<8x32xf32> to vector<8x8xf32>
    %cst_98 = arith.constant dense<0.000000e+00> : vector<8x8xf32>
    %226 = tpu.matmul %224, %225, %cst_98 {dimension_numbers = #tpu.dot_dimension_numbers<[1], [1], [0], [0], [0, 0, 1, 0], [], []>} : vector<8x8xf32>, vector<8x8xf32>, vector<8x8xf32> -> vector<8x8xf32>
    %c3_99 = arith.constant 3 : index
    %c0_100 = arith.constant 0 : index
    %c0_101 = arith.constant 0 : index
    %227 = vector.load %arg3[%c3_99, %c0_100, %c0_101] : memref<4x8x8xf32, #tpu.memory_space<vmem>>, vector<1x8x8xf32>
    %228 = vector.shape_cast %227 : vector<1x8x8xf32> to vector<8x8xf32>
    %229 = arith.addf %226, %228 : vector<8x8xf32>
    %230 = vector.broadcast %1 : vector<1x8xf32> to vector<8x8xf32>
    %231 = arith.addf %229, %230 : vector<8x8xf32>
    %cst_102 = arith.constant dense<0xFF800000> : vector<8xf32>
    %232 = vector.multi_reduction <maximumf>, %231, %cst_102 [1] : vector<8x8xf32> to vector<8xf32>
    %233 = vector.shape_cast %232 : vector<8xf32> to vector<8x1xf32>
    %234 = vector.broadcast %233 : vector<8x1xf32> to vector<8x8xf32>
    %235 = arith.subf %231, %234 : vector<8x8xf32>
    %236 = math.exp %235 : vector<8x8xf32>
    %cst_103 = arith.constant dense<0.000000e+00> : vector<8xf32>
    %237 = vector.multi_reduction <add>, %236, %cst_103 [1] : vector<8x8xf32> to vector<8xf32>
    %238 = vector.shape_cast %237 : vector<8xf32> to vector<8x1xf32>
    %239 = vector.broadcast %238 : vector<8x1xf32> to vector<8x8xf32>
    %240 = arith.divf %236, %239 : vector<8x8xf32>
    %241 = vector.extract_strided_slice %156 {offsets = [0, 24], sizes = [8, 8], strides = [1, 1]} : vector<8x32xf32> to vector<8x8xf32>
    %cst_104 = arith.constant dense<0.000000e+00> : vector<8x8xf32>
    %242 = tpu.matmul %240, %241, %cst_104 {dimension_numbers = #tpu.dot_dimension_numbers<[1], [0], [0], [1], [0, 0, 1, 1], [], []>} : vector<8x8xf32>, vector<8x8xf32>, vector<8x8xf32> -> vector<8x8xf32>
    %243 = vector.extract_strided_slice %158 {offsets = [24, 0], sizes = [8, 32], strides = [1, 1]} : vector<32x32xf32> to vector<8x32xf32>
    %cst_105 = arith.constant dense<0.000000e+00> : vector<8x32xf32>
    %244 = tpu.matmul %242, %243, %cst_105 {dimension_numbers = #tpu.dot_dimension_numbers<[1], [0], [0], [1], [0, 0, 1, 1], [], []>} : vector<8x8xf32>, vector<8x32xf32>, vector<8x32xf32> -> vector<8x32xf32>
    %245 = arith.addf %223, %244 : vector<8x32xf32>
    %246 = arith.addf %136, %245 : vector<8x32xf32>
    %c1_106 = arith.constant 1 : index
    %c0_107 = arith.constant 0 : index
    %c0_108 = arith.constant 0 : index
    %247 = vector.load %arg10[%c1_106, %c0_107, %c0_108] : memref<2x1x32xf32, #tpu.memory_space<vmem>>, vector<1x1x32xf32>
    %248 = vector.shape_cast %247 : vector<1x1x32xf32> to vector<1x32xf32>
    %249 = arith.mulf %246, %246 : vector<8x32xf32>
    %cst_109 = arith.constant dense<0.000000e+00> : vector<8xf32>
    %250 = vector.multi_reduction <add>, %249, %cst_109 [1] : vector<8x32xf32> to vector<8xf32>
    %251 = vector.shape_cast %250 : vector<8xf32> to vector<8x1xf32>
    %cst_110 = arith.constant 3.200000e+01 : f32
    %252 = vector.broadcast %cst_110 : f32 to vector<8x1xf32>
    %253 = arith.divf %251, %252 : vector<8x1xf32>
    %cst_111 = arith.constant 9.99999997E-7 : f32
    %254 = vector.broadcast %cst_111 : f32 to vector<8x1xf32>
    %255 = arith.addf %253, %254 : vector<8x1xf32>
    %256 = math.rsqrt %255 : vector<8x1xf32>
    %257 = vector.broadcast %256 : vector<8x1xf32> to vector<8x32xf32>
    %258 = arith.mulf %246, %257 : vector<8x32xf32>
    %259 = vector.broadcast %248 : vector<1x32xf32> to vector<8x32xf32>
    %260 = arith.mulf %258, %259 : vector<8x32xf32>
    %c1_112 = arith.constant 1 : index
    %c0_113 = arith.constant 0 : index
    %c0_114 = arith.constant 0 : index
    %261 = vector.load %arg11[%c1_112, %c0_113, %c0_114] : memref<2x32x64xf32, #tpu.memory_space<vmem>>, vector<1x32x64xf32>
    %262 = vector.shape_cast %261 : vector<1x32x64xf32> to vector<32x64xf32>
    %cst_115 = arith.constant dense<0.000000e+00> : vector<8x64xf32>
    %263 = tpu.matmul %260, %262, %cst_115 {dimension_numbers = #tpu.dot_dimension_numbers<[1], [0], [0], [1], [0, 0, 1, 1], [], []>} : vector<8x32xf32>, vector<32x64xf32>, vector<8x64xf32> -> vector<8x64xf32>
    %cst_116 = arith.constant 0.000000e+00 : f32
    %264 = vector.broadcast %cst_116 : f32 to vector<8x64xf32>
    %265 = arith.maximumf %263, %264 : vector<8x64xf32>
    %c1_117 = arith.constant 1 : index
    %c0_118 = arith.constant 0 : index
    %c0_119 = arith.constant 0 : index
    %266 = vector.load %arg12[%c1_117, %c0_118, %c0_119] : memref<2x64x32xf32, #tpu.memory_space<vmem>>, vector<1x64x32xf32>
    %267 = vector.shape_cast %266 : vector<1x64x32xf32> to vector<64x32xf32>
    %cst_120 = arith.constant dense<0.000000e+00> : vector<8x32xf32>
    %268 = tpu.matmul %265, %267, %cst_120 {dimension_numbers = #tpu.dot_dimension_numbers<[1], [0], [0], [1], [0, 0, 1, 1], [], []>} : vector<8x64xf32>, vector<64x32xf32>, vector<8x32xf32> -> vector<8x32xf32>
    %269 = arith.addf %246, %268 : vector<8x32xf32>
    %c0_121 = arith.constant 0 : index
    %c0_122 = arith.constant 0 : index
    %270 = vector.load %arg13[%c0_121, %c0_122] : memref<1x32xf32, #tpu.memory_space<vmem>>, vector<1x32xf32>
    %271 = arith.mulf %269, %269 : vector<8x32xf32>
    %cst_123 = arith.constant dense<0.000000e+00> : vector<8xf32>
    %272 = vector.multi_reduction <add>, %271, %cst_123 [1] : vector<8x32xf32> to vector<8xf32>
    %273 = vector.shape_cast %272 : vector<8xf32> to vector<8x1xf32>
    %cst_124 = arith.constant 3.200000e+01 : f32
    %274 = vector.broadcast %cst_124 : f32 to vector<8x1xf32>
    %275 = arith.divf %273, %274 : vector<8x1xf32>
    %cst_125 = arith.constant 9.99999997E-7 : f32
    %276 = vector.broadcast %cst_125 : f32 to vector<8x1xf32>
    %277 = arith.addf %275, %276 : vector<8x1xf32>
    %278 = math.rsqrt %277 : vector<8x1xf32>
    %279 = vector.broadcast %278 : vector<8x1xf32> to vector<8x32xf32>
    %280 = arith.mulf %269, %279 : vector<8x32xf32>
    %281 = vector.broadcast %270 : vector<1x32xf32> to vector<8x32xf32>
    %282 = arith.mulf %280, %281 : vector<8x32xf32>
    %c0_126 = arith.constant 0 : index
    %c0_127 = arith.constant 0 : index
    %c0_128 = arith.constant 0 : index
    %283 = vector.load %arg2[%c0_126, %c0_127, %c0_128] : memref<1x8x32xf32, #tpu.memory_space<vmem>>, vector<1x8x32xf32>
    %284 = vector.shape_cast %283 : vector<1x8x32xf32> to vector<8x32xf32>
    %c0_129 = arith.constant 0 : index
    %c0_130 = arith.constant 0 : index
    %c0_131 = arith.constant 0 : index
    %285 = vector.load %arg14[%c0_129, %c0_130, %c0_131] : memref<2x1x32xf32, #tpu.memory_space<vmem>>, vector<1x1x32xf32>
    %286 = vector.shape_cast %285 : vector<1x1x32xf32> to vector<1x32xf32>
    %287 = arith.mulf %284, %284 : vector<8x32xf32>
    %cst_132 = arith.constant dense<0.000000e+00> : vector<8xf32>
    %288 = vector.multi_reduction <add>, %287, %cst_132 [1] : vector<8x32xf32> to vector<8xf32>
    %289 = vector.shape_cast %288 : vector<8xf32> to vector<8x1xf32>
    %cst_133 = arith.constant 3.200000e+01 : f32
    %290 = vector.broadcast %cst_133 : f32 to vector<8x1xf32>
    %291 = arith.divf %289, %290 : vector<8x1xf32>
    %cst_134 = arith.constant 9.99999997E-7 : f32
    %292 = vector.broadcast %cst_134 : f32 to vector<8x1xf32>
    %293 = arith.addf %291, %292 : vector<8x1xf32>
    %294 = math.rsqrt %293 : vector<8x1xf32>
    %295 = vector.broadcast %294 : vector<8x1xf32> to vector<8x32xf32>
    %296 = arith.mulf %284, %295 : vector<8x32xf32>
    %297 = vector.broadcast %286 : vector<1x32xf32> to vector<8x32xf32>
    %298 = arith.mulf %296, %297 : vector<8x32xf32>
    %c0_135 = arith.constant 0 : index
    %c0_136 = arith.constant 0 : index
    %c0_137 = arith.constant 0 : index
    %299 = vector.load %arg15[%c0_135, %c0_136, %c0_137] : memref<2x32x96xf32, #tpu.memory_space<vmem>>, vector<1x32x96xf32>
    %300 = vector.shape_cast %299 : vector<1x32x96xf32> to vector<32x96xf32>
    %cst_138 = arith.constant dense<0.000000e+00> : vector<8x96xf32>
    %301 = tpu.matmul %298, %300, %cst_138 {dimension_numbers = #tpu.dot_dimension_numbers<[1], [0], [0], [1], [0, 0, 1, 1], [], []>} : vector<8x32xf32>, vector<32x96xf32>, vector<8x96xf32> -> vector<8x96xf32>
    %302 = vector.extract_strided_slice %301 {offsets = [0, 0], sizes = [8, 32], strides = [1, 1]} : vector<8x96xf32> to vector<8x32xf32>
    %303 = vector.extract_strided_slice %301 {offsets = [0, 32], sizes = [8, 32], strides = [1, 1]} : vector<8x96xf32> to vector<8x32xf32>
    %304 = vector.extract_strided_slice %301 {offsets = [0, 64], sizes = [8, 32], strides = [1, 1]} : vector<8x96xf32> to vector<8x32xf32>
    %c0_139 = arith.constant 0 : index
    %c0_140 = arith.constant 0 : index
    %c0_141 = arith.constant 0 : index
    %305 = vector.load %arg16[%c0_139, %c0_140, %c0_141] : memref<2x32x32xf32, #tpu.memory_space<vmem>>, vector<1x32x32xf32>
    %306 = vector.shape_cast %305 : vector<1x32x32xf32> to vector<32x32xf32>
    %307 = vector.extract_strided_slice %302 {offsets = [0, 0], sizes = [8, 8], strides = [1, 1]} : vector<8x32xf32> to vector<8x8xf32>
    %308 = vector.extract_strided_slice %303 {offsets = [0, 0], sizes = [8, 8], strides = [1, 1]} : vector<8x32xf32> to vector<8x8xf32>
    %cst_142 = arith.constant dense<0.000000e+00> : vector<8x8xf32>
    %309 = tpu.matmul %307, %308, %cst_142 {dimension_numbers = #tpu.dot_dimension_numbers<[1], [1], [0], [0], [0, 0, 1, 0], [], []>} : vector<8x8xf32>, vector<8x8xf32>, vector<8x8xf32> -> vector<8x8xf32>
    %c0_143 = arith.constant 0 : index
    %c0_144 = arith.constant 0 : index
    %c0_145 = arith.constant 0 : index
    %310 = vector.load %arg4[%c0_143, %c0_144, %c0_145] : memref<4x8x8xf32, #tpu.memory_space<vmem>>, vector<1x8x8xf32>
    %311 = vector.shape_cast %310 : vector<1x8x8xf32> to vector<8x8xf32>
    %312 = arith.addf %309, %311 : vector<8x8xf32>
    %cst_146 = arith.constant dense<0xFF800000> : vector<8xf32>
    %313 = vector.multi_reduction <maximumf>, %312, %cst_146 [1] : vector<8x8xf32> to vector<8xf32>
    %314 = vector.shape_cast %313 : vector<8xf32> to vector<8x1xf32>
    %315 = vector.broadcast %314 : vector<8x1xf32> to vector<8x8xf32>
    %316 = arith.subf %312, %315 : vector<8x8xf32>
    %317 = math.exp %316 : vector<8x8xf32>
    %cst_147 = arith.constant dense<0.000000e+00> : vector<8xf32>
    %318 = vector.multi_reduction <add>, %317, %cst_147 [1] : vector<8x8xf32> to vector<8xf32>
    %319 = vector.shape_cast %318 : vector<8xf32> to vector<8x1xf32>
    %320 = vector.broadcast %319 : vector<8x1xf32> to vector<8x8xf32>
    %321 = arith.divf %317, %320 : vector<8x8xf32>
    %322 = vector.extract_strided_slice %304 {offsets = [0, 0], sizes = [8, 8], strides = [1, 1]} : vector<8x32xf32> to vector<8x8xf32>
    %cst_148 = arith.constant dense<0.000000e+00> : vector<8x8xf32>
    %323 = tpu.matmul %321, %322, %cst_148 {dimension_numbers = #tpu.dot_dimension_numbers<[1], [0], [0], [1], [0, 0, 1, 1], [], []>} : vector<8x8xf32>, vector<8x8xf32>, vector<8x8xf32> -> vector<8x8xf32>
    %324 = vector.extract_strided_slice %306 {offsets = [0, 0], sizes = [8, 32], strides = [1, 1]} : vector<32x32xf32> to vector<8x32xf32>
    %cst_149 = arith.constant dense<0.000000e+00> : vector<8x32xf32>
    %325 = tpu.matmul %323, %324, %cst_149 {dimension_numbers = #tpu.dot_dimension_numbers<[1], [0], [0], [1], [0, 0, 1, 1], [], []>} : vector<8x8xf32>, vector<8x32xf32>, vector<8x32xf32> -> vector<8x32xf32>
    %326 = vector.extract_strided_slice %302 {offsets = [0, 8], sizes = [8, 8], strides = [1, 1]} : vector<8x32xf32> to vector<8x8xf32>
    %327 = vector.extract_strided_slice %303 {offsets = [0, 8], sizes = [8, 8], strides = [1, 1]} : vector<8x32xf32> to vector<8x8xf32>
    %cst_150 = arith.constant dense<0.000000e+00> : vector<8x8xf32>
    %328 = tpu.matmul %326, %327, %cst_150 {dimension_numbers = #tpu.dot_dimension_numbers<[1], [1], [0], [0], [0, 0, 1, 0], [], []>} : vector<8x8xf32>, vector<8x8xf32>, vector<8x8xf32> -> vector<8x8xf32>
    %c1_151 = arith.constant 1 : index
    %c0_152 = arith.constant 0 : index
    %c0_153 = arith.constant 0 : index
    %329 = vector.load %arg4[%c1_151, %c0_152, %c0_153] : memref<4x8x8xf32, #tpu.memory_space<vmem>>, vector<1x8x8xf32>
    %330 = vector.shape_cast %329 : vector<1x8x8xf32> to vector<8x8xf32>
    %331 = arith.addf %328, %330 : vector<8x8xf32>
    %cst_154 = arith.constant dense<0xFF800000> : vector<8xf32>
    %332 = vector.multi_reduction <maximumf>, %331, %cst_154 [1] : vector<8x8xf32> to vector<8xf32>
    %333 = vector.shape_cast %332 : vector<8xf32> to vector<8x1xf32>
    %334 = vector.broadcast %333 : vector<8x1xf32> to vector<8x8xf32>
    %335 = arith.subf %331, %334 : vector<8x8xf32>
    %336 = math.exp %335 : vector<8x8xf32>
    %cst_155 = arith.constant dense<0.000000e+00> : vector<8xf32>
    %337 = vector.multi_reduction <add>, %336, %cst_155 [1] : vector<8x8xf32> to vector<8xf32>
    %338 = vector.shape_cast %337 : vector<8xf32> to vector<8x1xf32>
    %339 = vector.broadcast %338 : vector<8x1xf32> to vector<8x8xf32>
    %340 = arith.divf %336, %339 : vector<8x8xf32>
    %341 = vector.extract_strided_slice %304 {offsets = [0, 8], sizes = [8, 8], strides = [1, 1]} : vector<8x32xf32> to vector<8x8xf32>
    %cst_156 = arith.constant dense<0.000000e+00> : vector<8x8xf32>
    %342 = tpu.matmul %340, %341, %cst_156 {dimension_numbers = #tpu.dot_dimension_numbers<[1], [0], [0], [1], [0, 0, 1, 1], [], []>} : vector<8x8xf32>, vector<8x8xf32>, vector<8x8xf32> -> vector<8x8xf32>
    %343 = vector.extract_strided_slice %306 {offsets = [8, 0], sizes = [8, 32], strides = [1, 1]} : vector<32x32xf32> to vector<8x32xf32>
    %cst_157 = arith.constant dense<0.000000e+00> : vector<8x32xf32>
    %344 = tpu.matmul %342, %343, %cst_157 {dimension_numbers = #tpu.dot_dimension_numbers<[1], [0], [0], [1], [0, 0, 1, 1], [], []>} : vector<8x8xf32>, vector<8x32xf32>, vector<8x32xf32> -> vector<8x32xf32>
    %345 = arith.addf %325, %344 : vector<8x32xf32>
    %346 = vector.extract_strided_slice %302 {offsets = [0, 16], sizes = [8, 8], strides = [1, 1]} : vector<8x32xf32> to vector<8x8xf32>
    %347 = vector.extract_strided_slice %303 {offsets = [0, 16], sizes = [8, 8], strides = [1, 1]} : vector<8x32xf32> to vector<8x8xf32>
    %cst_158 = arith.constant dense<0.000000e+00> : vector<8x8xf32>
    %348 = tpu.matmul %346, %347, %cst_158 {dimension_numbers = #tpu.dot_dimension_numbers<[1], [1], [0], [0], [0, 0, 1, 0], [], []>} : vector<8x8xf32>, vector<8x8xf32>, vector<8x8xf32> -> vector<8x8xf32>
    %c2_159 = arith.constant 2 : index
    %c0_160 = arith.constant 0 : index
    %c0_161 = arith.constant 0 : index
    %349 = vector.load %arg4[%c2_159, %c0_160, %c0_161] : memref<4x8x8xf32, #tpu.memory_space<vmem>>, vector<1x8x8xf32>
    %350 = vector.shape_cast %349 : vector<1x8x8xf32> to vector<8x8xf32>
    %351 = arith.addf %348, %350 : vector<8x8xf32>
    %cst_162 = arith.constant dense<0xFF800000> : vector<8xf32>
    %352 = vector.multi_reduction <maximumf>, %351, %cst_162 [1] : vector<8x8xf32> to vector<8xf32>
    %353 = vector.shape_cast %352 : vector<8xf32> to vector<8x1xf32>
    %354 = vector.broadcast %353 : vector<8x1xf32> to vector<8x8xf32>
    %355 = arith.subf %351, %354 : vector<8x8xf32>
    %356 = math.exp %355 : vector<8x8xf32>
    %cst_163 = arith.constant dense<0.000000e+00> : vector<8xf32>
    %357 = vector.multi_reduction <add>, %356, %cst_163 [1] : vector<8x8xf32> to vector<8xf32>
    %358 = vector.shape_cast %357 : vector<8xf32> to vector<8x1xf32>
    %359 = vector.broadcast %358 : vector<8x1xf32> to vector<8x8xf32>
    %360 = arith.divf %356, %359 : vector<8x8xf32>
    %361 = vector.extract_strided_slice %304 {offsets = [0, 16], sizes = [8, 8], strides = [1, 1]} : vector<8x32xf32> to vector<8x8xf32>
    %cst_164 = arith.constant dense<0.000000e+00> : vector<8x8xf32>
    %362 = tpu.matmul %360, %361, %cst_164 {dimension_numbers = #tpu.dot_dimension_numbers<[1], [0], [0], [1], [0, 0, 1, 1], [], []>} : vector<8x8xf32>, vector<8x8xf32>, vector<8x8xf32> -> vector<8x8xf32>
    %363 = vector.extract_strided_slice %306 {offsets = [16, 0], sizes = [8, 32], strides = [1, 1]} : vector<32x32xf32> to vector<8x32xf32>
    %cst_165 = arith.constant dense<0.000000e+00> : vector<8x32xf32>
    %364 = tpu.matmul %362, %363, %cst_165 {dimension_numbers = #tpu.dot_dimension_numbers<[1], [0], [0], [1], [0, 0, 1, 1], [], []>} : vector<8x8xf32>, vector<8x32xf32>, vector<8x32xf32> -> vector<8x32xf32>
    %365 = arith.addf %345, %364 : vector<8x32xf32>
    %366 = vector.extract_strided_slice %302 {offsets = [0, 24], sizes = [8, 8], strides = [1, 1]} : vector<8x32xf32> to vector<8x8xf32>
    %367 = vector.extract_strided_slice %303 {offsets = [0, 24], sizes = [8, 8], strides = [1, 1]} : vector<8x32xf32> to vector<8x8xf32>
    %cst_166 = arith.constant dense<0.000000e+00> : vector<8x8xf32>
    %368 = tpu.matmul %366, %367, %cst_166 {dimension_numbers = #tpu.dot_dimension_numbers<[1], [1], [0], [0], [0, 0, 1, 0], [], []>} : vector<8x8xf32>, vector<8x8xf32>, vector<8x8xf32> -> vector<8x8xf32>
    %c3_167 = arith.constant 3 : index
    %c0_168 = arith.constant 0 : index
    %c0_169 = arith.constant 0 : index
    %369 = vector.load %arg4[%c3_167, %c0_168, %c0_169] : memref<4x8x8xf32, #tpu.memory_space<vmem>>, vector<1x8x8xf32>
    %370 = vector.shape_cast %369 : vector<1x8x8xf32> to vector<8x8xf32>
    %371 = arith.addf %368, %370 : vector<8x8xf32>
    %cst_170 = arith.constant dense<0xFF800000> : vector<8xf32>
    %372 = vector.multi_reduction <maximumf>, %371, %cst_170 [1] : vector<8x8xf32> to vector<8xf32>
    %373 = vector.shape_cast %372 : vector<8xf32> to vector<8x1xf32>
    %374 = vector.broadcast %373 : vector<8x1xf32> to vector<8x8xf32>
    %375 = arith.subf %371, %374 : vector<8x8xf32>
    %376 = math.exp %375 : vector<8x8xf32>
    %cst_171 = arith.constant dense<0.000000e+00> : vector<8xf32>
    %377 = vector.multi_reduction <add>, %376, %cst_171 [1] : vector<8x8xf32> to vector<8xf32>
    %378 = vector.shape_cast %377 : vector<8xf32> to vector<8x1xf32>
    %379 = vector.broadcast %378 : vector<8x1xf32> to vector<8x8xf32>
    %380 = arith.divf %376, %379 : vector<8x8xf32>
    %381 = vector.extract_strided_slice %304 {offsets = [0, 24], sizes = [8, 8], strides = [1, 1]} : vector<8x32xf32> to vector<8x8xf32>
    %cst_172 = arith.constant dense<0.000000e+00> : vector<8x8xf32>
    %382 = tpu.matmul %380, %381, %cst_172 {dimension_numbers = #tpu.dot_dimension_numbers<[1], [0], [0], [1], [0, 0, 1, 1], [], []>} : vector<8x8xf32>, vector<8x8xf32>, vector<8x8xf32> -> vector<8x8xf32>
    %383 = vector.extract_strided_slice %306 {offsets = [24, 0], sizes = [8, 32], strides = [1, 1]} : vector<32x32xf32> to vector<8x32xf32>
    %cst_173 = arith.constant dense<0.000000e+00> : vector<8x32xf32>
    %384 = tpu.matmul %382, %383, %cst_173 {dimension_numbers = #tpu.dot_dimension_numbers<[1], [0], [0], [1], [0, 0, 1, 1], [], []>} : vector<8x8xf32>, vector<8x32xf32>, vector<8x32xf32> -> vector<8x32xf32>
    %385 = arith.addf %365, %384 : vector<8x32xf32>
    %386 = arith.addf %284, %385 : vector<8x32xf32>
    %c0_174 = arith.constant 0 : index
    %c0_175 = arith.constant 0 : index
    %c0_176 = arith.constant 0 : index
    %387 = vector.load %arg17[%c0_174, %c0_175, %c0_176] : memref<2x1x32xf32, #tpu.memory_space<vmem>>, vector<1x1x32xf32>
    %388 = vector.shape_cast %387 : vector<1x1x32xf32> to vector<1x32xf32>
    %389 = arith.mulf %386, %386 : vector<8x32xf32>
    %cst_177 = arith.constant dense<0.000000e+00> : vector<8xf32>
    %390 = vector.multi_reduction <add>, %389, %cst_177 [1] : vector<8x32xf32> to vector<8xf32>
    %391 = vector.shape_cast %390 : vector<8xf32> to vector<8x1xf32>
    %cst_178 = arith.constant 3.200000e+01 : f32
    %392 = vector.broadcast %cst_178 : f32 to vector<8x1xf32>
    %393 = arith.divf %391, %392 : vector<8x1xf32>
    %cst_179 = arith.constant 9.99999997E-7 : f32
    %394 = vector.broadcast %cst_179 : f32 to vector<8x1xf32>
    %395 = arith.addf %393, %394 : vector<8x1xf32>
    %396 = math.rsqrt %395 : vector<8x1xf32>
    %397 = vector.broadcast %396 : vector<8x1xf32> to vector<8x32xf32>
    %398 = arith.mulf %386, %397 : vector<8x32xf32>
    %399 = vector.broadcast %388 : vector<1x32xf32> to vector<8x32xf32>
    %400 = arith.mulf %398, %399 : vector<8x32xf32>
    %c0_180 = arith.constant 0 : index
    %c0_181 = arith.constant 0 : index
    %c0_182 = arith.constant 0 : index
    %401 = vector.load %arg18[%c0_180, %c0_181, %c0_182] : memref<2x32x32xf32, #tpu.memory_space<vmem>>, vector<1x32x32xf32>
    %402 = vector.shape_cast %401 : vector<1x32x32xf32> to vector<32x32xf32>
    %cst_183 = arith.constant dense<0.000000e+00> : vector<8x32xf32>
    %403 = tpu.matmul %400, %402, %cst_183 {dimension_numbers = #tpu.dot_dimension_numbers<[1], [0], [0], [1], [0, 0, 1, 1], [], []>} : vector<8x32xf32>, vector<32x32xf32>, vector<8x32xf32> -> vector<8x32xf32>
    %c0_184 = arith.constant 0 : index
    %c0_185 = arith.constant 0 : index
    %c0_186 = arith.constant 0 : index
    %404 = vector.load %arg19[%c0_184, %c0_185, %c0_186] : memref<2x32x64xf32, #tpu.memory_space<vmem>>, vector<1x32x64xf32>
    %405 = vector.shape_cast %404 : vector<1x32x64xf32> to vector<32x64xf32>
    %cst_187 = arith.constant dense<0.000000e+00> : vector<8x64xf32>
    %406 = tpu.matmul %282, %405, %cst_187 {dimension_numbers = #tpu.dot_dimension_numbers<[1], [0], [0], [1], [0, 0, 1, 1], [], []>} : vector<8x32xf32>, vector<32x64xf32>, vector<8x64xf32> -> vector<8x64xf32>
    %407 = vector.extract_strided_slice %406 {offsets = [0, 0], sizes = [8, 32], strides = [1, 1]} : vector<8x64xf32> to vector<8x32xf32>
    %408 = vector.extract_strided_slice %406 {offsets = [0, 32], sizes = [8, 32], strides = [1, 1]} : vector<8x64xf32> to vector<8x32xf32>
    %c0_188 = arith.constant 0 : index
    %c0_189 = arith.constant 0 : index
    %c0_190 = arith.constant 0 : index
    %409 = vector.load %arg20[%c0_188, %c0_189, %c0_190] : memref<2x32x32xf32, #tpu.memory_space<vmem>>, vector<1x32x32xf32>
    %410 = vector.shape_cast %409 : vector<1x32x32xf32> to vector<32x32xf32>
    %411 = vector.extract_strided_slice %403 {offsets = [0, 0], sizes = [8, 8], strides = [1, 1]} : vector<8x32xf32> to vector<8x8xf32>
    %412 = vector.extract_strided_slice %407 {offsets = [0, 0], sizes = [8, 8], strides = [1, 1]} : vector<8x32xf32> to vector<8x8xf32>
    %cst_191 = arith.constant dense<0.000000e+00> : vector<8x8xf32>
    %413 = tpu.matmul %411, %412, %cst_191 {dimension_numbers = #tpu.dot_dimension_numbers<[1], [1], [0], [0], [0, 0, 1, 0], [], []>} : vector<8x8xf32>, vector<8x8xf32>, vector<8x8xf32> -> vector<8x8xf32>
    %414 = vector.broadcast %1 : vector<1x8xf32> to vector<8x8xf32>
    %415 = arith.addf %413, %414 : vector<8x8xf32>
    %cst_192 = arith.constant dense<0xFF800000> : vector<8xf32>
    %416 = vector.multi_reduction <maximumf>, %415, %cst_192 [1] : vector<8x8xf32> to vector<8xf32>
    %417 = vector.shape_cast %416 : vector<8xf32> to vector<8x1xf32>
    %418 = vector.broadcast %417 : vector<8x1xf32> to vector<8x8xf32>
    %419 = arith.subf %415, %418 : vector<8x8xf32>
    %420 = math.exp %419 : vector<8x8xf32>
    %cst_193 = arith.constant dense<0.000000e+00> : vector<8xf32>
    %421 = vector.multi_reduction <add>, %420, %cst_193 [1] : vector<8x8xf32> to vector<8xf32>
    %422 = vector.shape_cast %421 : vector<8xf32> to vector<8x1xf32>
    %423 = vector.broadcast %422 : vector<8x1xf32> to vector<8x8xf32>
    %424 = arith.divf %420, %423 : vector<8x8xf32>
    %425 = vector.extract_strided_slice %408 {offsets = [0, 0], sizes = [8, 8], strides = [1, 1]} : vector<8x32xf32> to vector<8x8xf32>
    %cst_194 = arith.constant dense<0.000000e+00> : vector<8x8xf32>
    %426 = tpu.matmul %424, %425, %cst_194 {dimension_numbers = #tpu.dot_dimension_numbers<[1], [0], [0], [1], [0, 0, 1, 1], [], []>} : vector<8x8xf32>, vector<8x8xf32>, vector<8x8xf32> -> vector<8x8xf32>
    %427 = vector.extract_strided_slice %410 {offsets = [0, 0], sizes = [8, 32], strides = [1, 1]} : vector<32x32xf32> to vector<8x32xf32>
    %cst_195 = arith.constant dense<0.000000e+00> : vector<8x32xf32>
    %428 = tpu.matmul %426, %427, %cst_195 {dimension_numbers = #tpu.dot_dimension_numbers<[1], [0], [0], [1], [0, 0, 1, 1], [], []>} : vector<8x8xf32>, vector<8x32xf32>, vector<8x32xf32> -> vector<8x32xf32>
    %429 = vector.extract_strided_slice %403 {offsets = [0, 8], sizes = [8, 8], strides = [1, 1]} : vector<8x32xf32> to vector<8x8xf32>
    %430 = vector.extract_strided_slice %407 {offsets = [0, 8], sizes = [8, 8], strides = [1, 1]} : vector<8x32xf32> to vector<8x8xf32>
    %cst_196 = arith.constant dense<0.000000e+00> : vector<8x8xf32>
    %431 = tpu.matmul %429, %430, %cst_196 {dimension_numbers = #tpu.dot_dimension_numbers<[1], [1], [0], [0], [0, 0, 1, 0], [], []>} : vector<8x8xf32>, vector<8x8xf32>, vector<8x8xf32> -> vector<8x8xf32>
    %432 = vector.broadcast %1 : vector<1x8xf32> to vector<8x8xf32>
    %433 = arith.addf %431, %432 : vector<8x8xf32>
    %cst_197 = arith.constant dense<0xFF800000> : vector<8xf32>
    %434 = vector.multi_reduction <maximumf>, %433, %cst_197 [1] : vector<8x8xf32> to vector<8xf32>
    %435 = vector.shape_cast %434 : vector<8xf32> to vector<8x1xf32>
    %436 = vector.broadcast %435 : vector<8x1xf32> to vector<8x8xf32>
    %437 = arith.subf %433, %436 : vector<8x8xf32>
    %438 = math.exp %437 : vector<8x8xf32>
    %cst_198 = arith.constant dense<0.000000e+00> : vector<8xf32>
    %439 = vector.multi_reduction <add>, %438, %cst_198 [1] : vector<8x8xf32> to vector<8xf32>
    %440 = vector.shape_cast %439 : vector<8xf32> to vector<8x1xf32>
    %441 = vector.broadcast %440 : vector<8x1xf32> to vector<8x8xf32>
    %442 = arith.divf %438, %441 : vector<8x8xf32>
    %443 = vector.extract_strided_slice %408 {offsets = [0, 8], sizes = [8, 8], strides = [1, 1]} : vector<8x32xf32> to vector<8x8xf32>
    %cst_199 = arith.constant dense<0.000000e+00> : vector<8x8xf32>
    %444 = tpu.matmul %442, %443, %cst_199 {dimension_numbers = #tpu.dot_dimension_numbers<[1], [0], [0], [1], [0, 0, 1, 1], [], []>} : vector<8x8xf32>, vector<8x8xf32>, vector<8x8xf32> -> vector<8x8xf32>
    %445 = vector.extract_strided_slice %410 {offsets = [8, 0], sizes = [8, 32], strides = [1, 1]} : vector<32x32xf32> to vector<8x32xf32>
    %cst_200 = arith.constant dense<0.000000e+00> : vector<8x32xf32>
    %446 = tpu.matmul %444, %445, %cst_200 {dimension_numbers = #tpu.dot_dimension_numbers<[1], [0], [0], [1], [0, 0, 1, 1], [], []>} : vector<8x8xf32>, vector<8x32xf32>, vector<8x32xf32> -> vector<8x32xf32>
    %447 = arith.addf %428, %446 : vector<8x32xf32>
    %448 = vector.extract_strided_slice %403 {offsets = [0, 16], sizes = [8, 8], strides = [1, 1]} : vector<8x32xf32> to vector<8x8xf32>
    %449 = vector.extract_strided_slice %407 {offsets = [0, 16], sizes = [8, 8], strides = [1, 1]} : vector<8x32xf32> to vector<8x8xf32>
    %cst_201 = arith.constant dense<0.000000e+00> : vector<8x8xf32>
    %450 = tpu.matmul %448, %449, %cst_201 {dimension_numbers = #tpu.dot_dimension_numbers<[1], [1], [0], [0], [0, 0, 1, 0], [], []>} : vector<8x8xf32>, vector<8x8xf32>, vector<8x8xf32> -> vector<8x8xf32>
    %451 = vector.broadcast %1 : vector<1x8xf32> to vector<8x8xf32>
    %452 = arith.addf %450, %451 : vector<8x8xf32>
    %cst_202 = arith.constant dense<0xFF800000> : vector<8xf32>
    %453 = vector.multi_reduction <maximumf>, %452, %cst_202 [1] : vector<8x8xf32> to vector<8xf32>
    %454 = vector.shape_cast %453 : vector<8xf32> to vector<8x1xf32>
    %455 = vector.broadcast %454 : vector<8x1xf32> to vector<8x8xf32>
    %456 = arith.subf %452, %455 : vector<8x8xf32>
    %457 = math.exp %456 : vector<8x8xf32>
    %cst_203 = arith.constant dense<0.000000e+00> : vector<8xf32>
    %458 = vector.multi_reduction <add>, %457, %cst_203 [1] : vector<8x8xf32> to vector<8xf32>
    %459 = vector.shape_cast %458 : vector<8xf32> to vector<8x1xf32>
    %460 = vector.broadcast %459 : vector<8x1xf32> to vector<8x8xf32>
    %461 = arith.divf %457, %460 : vector<8x8xf32>
    %462 = vector.extract_strided_slice %408 {offsets = [0, 16], sizes = [8, 8], strides = [1, 1]} : vector<8x32xf32> to vector<8x8xf32>
    %cst_204 = arith.constant dense<0.000000e+00> : vector<8x8xf32>
    %463 = tpu.matmul %461, %462, %cst_204 {dimension_numbers = #tpu.dot_dimension_numbers<[1], [0], [0], [1], [0, 0, 1, 1], [], []>} : vector<8x8xf32>, vector<8x8xf32>, vector<8x8xf32> -> vector<8x8xf32>
    %464 = vector.extract_strided_slice %410 {offsets = [16, 0], sizes = [8, 32], strides = [1, 1]} : vector<32x32xf32> to vector<8x32xf32>
    %cst_205 = arith.constant dense<0.000000e+00> : vector<8x32xf32>
    %465 = tpu.matmul %463, %464, %cst_205 {dimension_numbers = #tpu.dot_dimension_numbers<[1], [0], [0], [1], [0, 0, 1, 1], [], []>} : vector<8x8xf32>, vector<8x32xf32>, vector<8x32xf32> -> vector<8x32xf32>
    %466 = arith.addf %447, %465 : vector<8x32xf32>
    %467 = vector.extract_strided_slice %403 {offsets = [0, 24], sizes = [8, 8], strides = [1, 1]} : vector<8x32xf32> to vector<8x8xf32>
    %468 = vector.extract_strided_slice %407 {offsets = [0, 24], sizes = [8, 8], strides = [1, 1]} : vector<8x32xf32> to vector<8x8xf32>
    %cst_206 = arith.constant dense<0.000000e+00> : vector<8x8xf32>
    %469 = tpu.matmul %467, %468, %cst_206 {dimension_numbers = #tpu.dot_dimension_numbers<[1], [1], [0], [0], [0, 0, 1, 0], [], []>} : vector<8x8xf32>, vector<8x8xf32>, vector<8x8xf32> -> vector<8x8xf32>
    %470 = vector.broadcast %1 : vector<1x8xf32> to vector<8x8xf32>
    %471 = arith.addf %469, %470 : vector<8x8xf32>
    %cst_207 = arith.constant dense<0xFF800000> : vector<8xf32>
    %472 = vector.multi_reduction <maximumf>, %471, %cst_207 [1] : vector<8x8xf32> to vector<8xf32>
    %473 = vector.shape_cast %472 : vector<8xf32> to vector<8x1xf32>
    %474 = vector.broadcast %473 : vector<8x1xf32> to vector<8x8xf32>
    %475 = arith.subf %471, %474 : vector<8x8xf32>
    %476 = math.exp %475 : vector<8x8xf32>
    %cst_208 = arith.constant dense<0.000000e+00> : vector<8xf32>
    %477 = vector.multi_reduction <add>, %476, %cst_208 [1] : vector<8x8xf32> to vector<8xf32>
    %478 = vector.shape_cast %477 : vector<8xf32> to vector<8x1xf32>
    %479 = vector.broadcast %478 : vector<8x1xf32> to vector<8x8xf32>
    %480 = arith.divf %476, %479 : vector<8x8xf32>
    %481 = vector.extract_strided_slice %408 {offsets = [0, 24], sizes = [8, 8], strides = [1, 1]} : vector<8x32xf32> to vector<8x8xf32>
    %cst_209 = arith.constant dense<0.000000e+00> : vector<8x8xf32>
    %482 = tpu.matmul %480, %481, %cst_209 {dimension_numbers = #tpu.dot_dimension_numbers<[1], [0], [0], [1], [0, 0, 1, 1], [], []>} : vector<8x8xf32>, vector<8x8xf32>, vector<8x8xf32> -> vector<8x8xf32>
    %483 = vector.extract_strided_slice %410 {offsets = [24, 0], sizes = [8, 32], strides = [1, 1]} : vector<32x32xf32> to vector<8x32xf32>
    %cst_210 = arith.constant dense<0.000000e+00> : vector<8x32xf32>
    %484 = tpu.matmul %482, %483, %cst_210 {dimension_numbers = #tpu.dot_dimension_numbers<[1], [0], [0], [1], [0, 0, 1, 1], [], []>} : vector<8x8xf32>, vector<8x32xf32>, vector<8x32xf32> -> vector<8x32xf32>
    %485 = arith.addf %466, %484 : vector<8x32xf32>
    %486 = arith.addf %386, %485 : vector<8x32xf32>
    %c0_211 = arith.constant 0 : index
    %c0_212 = arith.constant 0 : index
    %c0_213 = arith.constant 0 : index
    %487 = vector.load %arg21[%c0_211, %c0_212, %c0_213] : memref<2x1x32xf32, #tpu.memory_space<vmem>>, vector<1x1x32xf32>
    %488 = vector.shape_cast %487 : vector<1x1x32xf32> to vector<1x32xf32>
    %489 = arith.mulf %486, %486 : vector<8x32xf32>
    %cst_214 = arith.constant dense<0.000000e+00> : vector<8xf32>
    %490 = vector.multi_reduction <add>, %489, %cst_214 [1] : vector<8x32xf32> to vector<8xf32>
    %491 = vector.shape_cast %490 : vector<8xf32> to vector<8x1xf32>
    %cst_215 = arith.constant 3.200000e+01 : f32
    %492 = vector.broadcast %cst_215 : f32 to vector<8x1xf32>
    %493 = arith.divf %491, %492 : vector<8x1xf32>
    %cst_216 = arith.constant 9.99999997E-7 : f32
    %494 = vector.broadcast %cst_216 : f32 to vector<8x1xf32>
    %495 = arith.addf %493, %494 : vector<8x1xf32>
    %496 = math.rsqrt %495 : vector<8x1xf32>
    %497 = vector.broadcast %496 : vector<8x1xf32> to vector<8x32xf32>
    %498 = arith.mulf %486, %497 : vector<8x32xf32>
    %499 = vector.broadcast %488 : vector<1x32xf32> to vector<8x32xf32>
    %500 = arith.mulf %498, %499 : vector<8x32xf32>
    %c0_217 = arith.constant 0 : index
    %c0_218 = arith.constant 0 : index
    %c0_219 = arith.constant 0 : index
    %501 = vector.load %arg22[%c0_217, %c0_218, %c0_219] : memref<2x32x64xf32, #tpu.memory_space<vmem>>, vector<1x32x64xf32>
    %502 = vector.shape_cast %501 : vector<1x32x64xf32> to vector<32x64xf32>
    %cst_220 = arith.constant dense<0.000000e+00> : vector<8x64xf32>
    %503 = tpu.matmul %500, %502, %cst_220 {dimension_numbers = #tpu.dot_dimension_numbers<[1], [0], [0], [1], [0, 0, 1, 1], [], []>} : vector<8x32xf32>, vector<32x64xf32>, vector<8x64xf32> -> vector<8x64xf32>
    %cst_221 = arith.constant 0.000000e+00 : f32
    %504 = vector.broadcast %cst_221 : f32 to vector<8x64xf32>
    %505 = arith.maximumf %503, %504 : vector<8x64xf32>
    %c0_222 = arith.constant 0 : index
    %c0_223 = arith.constant 0 : index
    %c0_224 = arith.constant 0 : index
    %506 = vector.load %arg23[%c0_222, %c0_223, %c0_224] : memref<2x64x32xf32, #tpu.memory_space<vmem>>, vector<1x64x32xf32>
    %507 = vector.shape_cast %506 : vector<1x64x32xf32> to vector<64x32xf32>
    %cst_225 = arith.constant dense<0.000000e+00> : vector<8x32xf32>
    %508 = tpu.matmul %505, %507, %cst_225 {dimension_numbers = #tpu.dot_dimension_numbers<[1], [0], [0], [1], [0, 0, 1, 1], [], []>} : vector<8x64xf32>, vector<64x32xf32>, vector<8x32xf32> -> vector<8x32xf32>
    %509 = arith.addf %486, %508 : vector<8x32xf32>
    %c1_226 = arith.constant 1 : index
    %c0_227 = arith.constant 0 : index
    %c0_228 = arith.constant 0 : index
    %510 = vector.load %arg14[%c1_226, %c0_227, %c0_228] : memref<2x1x32xf32, #tpu.memory_space<vmem>>, vector<1x1x32xf32>
    %511 = vector.shape_cast %510 : vector<1x1x32xf32> to vector<1x32xf32>
    %512 = arith.mulf %509, %509 : vector<8x32xf32>
    %cst_229 = arith.constant dense<0.000000e+00> : vector<8xf32>
    %513 = vector.multi_reduction <add>, %512, %cst_229 [1] : vector<8x32xf32> to vector<8xf32>
    %514 = vector.shape_cast %513 : vector<8xf32> to vector<8x1xf32>
    %cst_230 = arith.constant 3.200000e+01 : f32
    %515 = vector.broadcast %cst_230 : f32 to vector<8x1xf32>
    %516 = arith.divf %514, %515 : vector<8x1xf32>
    %cst_231 = arith.constant 9.99999997E-7 : f32
    %517 = vector.broadcast %cst_231 : f32 to vector<8x1xf32>
    %518 = arith.addf %516, %517 : vector<8x1xf32>
    %519 = math.rsqrt %518 : vector<8x1xf32>
    %520 = vector.broadcast %519 : vector<8x1xf32> to vector<8x32xf32>
    %521 = arith.mulf %509, %520 : vector<8x32xf32>
    %522 = vector.broadcast %511 : vector<1x32xf32> to vector<8x32xf32>
    %523 = arith.mulf %521, %522 : vector<8x32xf32>
    %c1_232 = arith.constant 1 : index
    %c0_233 = arith.constant 0 : index
    %c0_234 = arith.constant 0 : index
    %524 = vector.load %arg15[%c1_232, %c0_233, %c0_234] : memref<2x32x96xf32, #tpu.memory_space<vmem>>, vector<1x32x96xf32>
    %525 = vector.shape_cast %524 : vector<1x32x96xf32> to vector<32x96xf32>
    %cst_235 = arith.constant dense<0.000000e+00> : vector<8x96xf32>
    %526 = tpu.matmul %523, %525, %cst_235 {dimension_numbers = #tpu.dot_dimension_numbers<[1], [0], [0], [1], [0, 0, 1, 1], [], []>} : vector<8x32xf32>, vector<32x96xf32>, vector<8x96xf32> -> vector<8x96xf32>
    %527 = vector.extract_strided_slice %526 {offsets = [0, 0], sizes = [8, 32], strides = [1, 1]} : vector<8x96xf32> to vector<8x32xf32>
    %528 = vector.extract_strided_slice %526 {offsets = [0, 32], sizes = [8, 32], strides = [1, 1]} : vector<8x96xf32> to vector<8x32xf32>
    %529 = vector.extract_strided_slice %526 {offsets = [0, 64], sizes = [8, 32], strides = [1, 1]} : vector<8x96xf32> to vector<8x32xf32>
    %c1_236 = arith.constant 1 : index
    %c0_237 = arith.constant 0 : index
    %c0_238 = arith.constant 0 : index
    %530 = vector.load %arg16[%c1_236, %c0_237, %c0_238] : memref<2x32x32xf32, #tpu.memory_space<vmem>>, vector<1x32x32xf32>
    %531 = vector.shape_cast %530 : vector<1x32x32xf32> to vector<32x32xf32>
    %532 = vector.extract_strided_slice %527 {offsets = [0, 0], sizes = [8, 8], strides = [1, 1]} : vector<8x32xf32> to vector<8x8xf32>
    %533 = vector.extract_strided_slice %528 {offsets = [0, 0], sizes = [8, 8], strides = [1, 1]} : vector<8x32xf32> to vector<8x8xf32>
    %cst_239 = arith.constant dense<0.000000e+00> : vector<8x8xf32>
    %534 = tpu.matmul %532, %533, %cst_239 {dimension_numbers = #tpu.dot_dimension_numbers<[1], [1], [0], [0], [0, 0, 1, 0], [], []>} : vector<8x8xf32>, vector<8x8xf32>, vector<8x8xf32> -> vector<8x8xf32>
    %c0_240 = arith.constant 0 : index
    %c0_241 = arith.constant 0 : index
    %c0_242 = arith.constant 0 : index
    %535 = vector.load %arg4[%c0_240, %c0_241, %c0_242] : memref<4x8x8xf32, #tpu.memory_space<vmem>>, vector<1x8x8xf32>
    %536 = vector.shape_cast %535 : vector<1x8x8xf32> to vector<8x8xf32>
    %537 = arith.addf %534, %536 : vector<8x8xf32>
    %cst_243 = arith.constant dense<0xFF800000> : vector<8xf32>
    %538 = vector.multi_reduction <maximumf>, %537, %cst_243 [1] : vector<8x8xf32> to vector<8xf32>
    %539 = vector.shape_cast %538 : vector<8xf32> to vector<8x1xf32>
    %540 = vector.broadcast %539 : vector<8x1xf32> to vector<8x8xf32>
    %541 = arith.subf %537, %540 : vector<8x8xf32>
    %542 = math.exp %541 : vector<8x8xf32>
    %cst_244 = arith.constant dense<0.000000e+00> : vector<8xf32>
    %543 = vector.multi_reduction <add>, %542, %cst_244 [1] : vector<8x8xf32> to vector<8xf32>
    %544 = vector.shape_cast %543 : vector<8xf32> to vector<8x1xf32>
    %545 = vector.broadcast %544 : vector<8x1xf32> to vector<8x8xf32>
    %546 = arith.divf %542, %545 : vector<8x8xf32>
    %547 = vector.extract_strided_slice %529 {offsets = [0, 0], sizes = [8, 8], strides = [1, 1]} : vector<8x32xf32> to vector<8x8xf32>
    %cst_245 = arith.constant dense<0.000000e+00> : vector<8x8xf32>
    %548 = tpu.matmul %546, %547, %cst_245 {dimension_numbers = #tpu.dot_dimension_numbers<[1], [0], [0], [1], [0, 0, 1, 1], [], []>} : vector<8x8xf32>, vector<8x8xf32>, vector<8x8xf32> -> vector<8x8xf32>
    %549 = vector.extract_strided_slice %531 {offsets = [0, 0], sizes = [8, 32], strides = [1, 1]} : vector<32x32xf32> to vector<8x32xf32>
    %cst_246 = arith.constant dense<0.000000e+00> : vector<8x32xf32>
    %550 = tpu.matmul %548, %549, %cst_246 {dimension_numbers = #tpu.dot_dimension_numbers<[1], [0], [0], [1], [0, 0, 1, 1], [], []>} : vector<8x8xf32>, vector<8x32xf32>, vector<8x32xf32> -> vector<8x32xf32>
    %551 = vector.extract_strided_slice %527 {offsets = [0, 8], sizes = [8, 8], strides = [1, 1]} : vector<8x32xf32> to vector<8x8xf32>
    %552 = vector.extract_strided_slice %528 {offsets = [0, 8], sizes = [8, 8], strides = [1, 1]} : vector<8x32xf32> to vector<8x8xf32>
    %cst_247 = arith.constant dense<0.000000e+00> : vector<8x8xf32>
    %553 = tpu.matmul %551, %552, %cst_247 {dimension_numbers = #tpu.dot_dimension_numbers<[1], [1], [0], [0], [0, 0, 1, 0], [], []>} : vector<8x8xf32>, vector<8x8xf32>, vector<8x8xf32> -> vector<8x8xf32>
    %c1_248 = arith.constant 1 : index
    %c0_249 = arith.constant 0 : index
    %c0_250 = arith.constant 0 : index
    %554 = vector.load %arg4[%c1_248, %c0_249, %c0_250] : memref<4x8x8xf32, #tpu.memory_space<vmem>>, vector<1x8x8xf32>
    %555 = vector.shape_cast %554 : vector<1x8x8xf32> to vector<8x8xf32>
    %556 = arith.addf %553, %555 : vector<8x8xf32>
    %cst_251 = arith.constant dense<0xFF800000> : vector<8xf32>
    %557 = vector.multi_reduction <maximumf>, %556, %cst_251 [1] : vector<8x8xf32> to vector<8xf32>
    %558 = vector.shape_cast %557 : vector<8xf32> to vector<8x1xf32>
    %559 = vector.broadcast %558 : vector<8x1xf32> to vector<8x8xf32>
    %560 = arith.subf %556, %559 : vector<8x8xf32>
    %561 = math.exp %560 : vector<8x8xf32>
    %cst_252 = arith.constant dense<0.000000e+00> : vector<8xf32>
    %562 = vector.multi_reduction <add>, %561, %cst_252 [1] : vector<8x8xf32> to vector<8xf32>
    %563 = vector.shape_cast %562 : vector<8xf32> to vector<8x1xf32>
    %564 = vector.broadcast %563 : vector<8x1xf32> to vector<8x8xf32>
    %565 = arith.divf %561, %564 : vector<8x8xf32>
    %566 = vector.extract_strided_slice %529 {offsets = [0, 8], sizes = [8, 8], strides = [1, 1]} : vector<8x32xf32> to vector<8x8xf32>
    %cst_253 = arith.constant dense<0.000000e+00> : vector<8x8xf32>
    %567 = tpu.matmul %565, %566, %cst_253 {dimension_numbers = #tpu.dot_dimension_numbers<[1], [0], [0], [1], [0, 0, 1, 1], [], []>} : vector<8x8xf32>, vector<8x8xf32>, vector<8x8xf32> -> vector<8x8xf32>
    %568 = vector.extract_strided_slice %531 {offsets = [8, 0], sizes = [8, 32], strides = [1, 1]} : vector<32x32xf32> to vector<8x32xf32>
    %cst_254 = arith.constant dense<0.000000e+00> : vector<8x32xf32>
    %569 = tpu.matmul %567, %568, %cst_254 {dimension_numbers = #tpu.dot_dimension_numbers<[1], [0], [0], [1], [0, 0, 1, 1], [], []>} : vector<8x8xf32>, vector<8x32xf32>, vector<8x32xf32> -> vector<8x32xf32>
    %570 = arith.addf %550, %569 : vector<8x32xf32>
    %571 = vector.extract_strided_slice %527 {offsets = [0, 16], sizes = [8, 8], strides = [1, 1]} : vector<8x32xf32> to vector<8x8xf32>
    %572 = vector.extract_strided_slice %528 {offsets = [0, 16], sizes = [8, 8], strides = [1, 1]} : vector<8x32xf32> to vector<8x8xf32>
    %cst_255 = arith.constant dense<0.000000e+00> : vector<8x8xf32>
    %573 = tpu.matmul %571, %572, %cst_255 {dimension_numbers = #tpu.dot_dimension_numbers<[1], [1], [0], [0], [0, 0, 1, 0], [], []>} : vector<8x8xf32>, vector<8x8xf32>, vector<8x8xf32> -> vector<8x8xf32>
    %c2_256 = arith.constant 2 : index
    %c0_257 = arith.constant 0 : index
    %c0_258 = arith.constant 0 : index
    %574 = vector.load %arg4[%c2_256, %c0_257, %c0_258] : memref<4x8x8xf32, #tpu.memory_space<vmem>>, vector<1x8x8xf32>
    %575 = vector.shape_cast %574 : vector<1x8x8xf32> to vector<8x8xf32>
    %576 = arith.addf %573, %575 : vector<8x8xf32>
    %cst_259 = arith.constant dense<0xFF800000> : vector<8xf32>
    %577 = vector.multi_reduction <maximumf>, %576, %cst_259 [1] : vector<8x8xf32> to vector<8xf32>
    %578 = vector.shape_cast %577 : vector<8xf32> to vector<8x1xf32>
    %579 = vector.broadcast %578 : vector<8x1xf32> to vector<8x8xf32>
    %580 = arith.subf %576, %579 : vector<8x8xf32>
    %581 = math.exp %580 : vector<8x8xf32>
    %cst_260 = arith.constant dense<0.000000e+00> : vector<8xf32>
    %582 = vector.multi_reduction <add>, %581, %cst_260 [1] : vector<8x8xf32> to vector<8xf32>
    %583 = vector.shape_cast %582 : vector<8xf32> to vector<8x1xf32>
    %584 = vector.broadcast %583 : vector<8x1xf32> to vector<8x8xf32>
    %585 = arith.divf %581, %584 : vector<8x8xf32>
    %586 = vector.extract_strided_slice %529 {offsets = [0, 16], sizes = [8, 8], strides = [1, 1]} : vector<8x32xf32> to vector<8x8xf32>
    %cst_261 = arith.constant dense<0.000000e+00> : vector<8x8xf32>
    %587 = tpu.matmul %585, %586, %cst_261 {dimension_numbers = #tpu.dot_dimension_numbers<[1], [0], [0], [1], [0, 0, 1, 1], [], []>} : vector<8x8xf32>, vector<8x8xf32>, vector<8x8xf32> -> vector<8x8xf32>
    %588 = vector.extract_strided_slice %531 {offsets = [16, 0], sizes = [8, 32], strides = [1, 1]} : vector<32x32xf32> to vector<8x32xf32>
    %cst_262 = arith.constant dense<0.000000e+00> : vector<8x32xf32>
    %589 = tpu.matmul %587, %588, %cst_262 {dimension_numbers = #tpu.dot_dimension_numbers<[1], [0], [0], [1], [0, 0, 1, 1], [], []>} : vector<8x8xf32>, vector<8x32xf32>, vector<8x32xf32> -> vector<8x32xf32>
    %590 = arith.addf %570, %589 : vector<8x32xf32>
    %591 = vector.extract_strided_slice %527 {offsets = [0, 24], sizes = [8, 8], strides = [1, 1]} : vector<8x32xf32> to vector<8x8xf32>
    %592 = vector.extract_strided_slice %528 {offsets = [0, 24], sizes = [8, 8], strides = [1, 1]} : vector<8x32xf32> to vector<8x8xf32>
    %cst_263 = arith.constant dense<0.000000e+00> : vector<8x8xf32>
    %593 = tpu.matmul %591, %592, %cst_263 {dimension_numbers = #tpu.dot_dimension_numbers<[1], [1], [0], [0], [0, 0, 1, 0], [], []>} : vector<8x8xf32>, vector<8x8xf32>, vector<8x8xf32> -> vector<8x8xf32>
    %c3_264 = arith.constant 3 : index
    %c0_265 = arith.constant 0 : index
    %c0_266 = arith.constant 0 : index
    %594 = vector.load %arg4[%c3_264, %c0_265, %c0_266] : memref<4x8x8xf32, #tpu.memory_space<vmem>>, vector<1x8x8xf32>
    %595 = vector.shape_cast %594 : vector<1x8x8xf32> to vector<8x8xf32>
    %596 = arith.addf %593, %595 : vector<8x8xf32>
    %cst_267 = arith.constant dense<0xFF800000> : vector<8xf32>
    %597 = vector.multi_reduction <maximumf>, %596, %cst_267 [1] : vector<8x8xf32> to vector<8xf32>
    %598 = vector.shape_cast %597 : vector<8xf32> to vector<8x1xf32>
    %599 = vector.broadcast %598 : vector<8x1xf32> to vector<8x8xf32>
    %600 = arith.subf %596, %599 : vector<8x8xf32>
    %601 = math.exp %600 : vector<8x8xf32>
    %cst_268 = arith.constant dense<0.000000e+00> : vector<8xf32>
    %602 = vector.multi_reduction <add>, %601, %cst_268 [1] : vector<8x8xf32> to vector<8xf32>
    %603 = vector.shape_cast %602 : vector<8xf32> to vector<8x1xf32>
    %604 = vector.broadcast %603 : vector<8x1xf32> to vector<8x8xf32>
    %605 = arith.divf %601, %604 : vector<8x8xf32>
    %606 = vector.extract_strided_slice %529 {offsets = [0, 24], sizes = [8, 8], strides = [1, 1]} : vector<8x32xf32> to vector<8x8xf32>
    %cst_269 = arith.constant dense<0.000000e+00> : vector<8x8xf32>
    %607 = tpu.matmul %605, %606, %cst_269 {dimension_numbers = #tpu.dot_dimension_numbers<[1], [0], [0], [1], [0, 0, 1, 1], [], []>} : vector<8x8xf32>, vector<8x8xf32>, vector<8x8xf32> -> vector<8x8xf32>
    %608 = vector.extract_strided_slice %531 {offsets = [24, 0], sizes = [8, 32], strides = [1, 1]} : vector<32x32xf32> to vector<8x32xf32>
    %cst_270 = arith.constant dense<0.000000e+00> : vector<8x32xf32>
    %609 = tpu.matmul %607, %608, %cst_270 {dimension_numbers = #tpu.dot_dimension_numbers<[1], [0], [0], [1], [0, 0, 1, 1], [], []>} : vector<8x8xf32>, vector<8x32xf32>, vector<8x32xf32> -> vector<8x32xf32>
    %610 = arith.addf %590, %609 : vector<8x32xf32>
    %611 = arith.addf %509, %610 : vector<8x32xf32>
    %c1_271 = arith.constant 1 : index
    %c0_272 = arith.constant 0 : index
    %c0_273 = arith.constant 0 : index
    %612 = vector.load %arg17[%c1_271, %c0_272, %c0_273] : memref<2x1x32xf32, #tpu.memory_space<vmem>>, vector<1x1x32xf32>
    %613 = vector.shape_cast %612 : vector<1x1x32xf32> to vector<1x32xf32>
    %614 = arith.mulf %611, %611 : vector<8x32xf32>
    %cst_274 = arith.constant dense<0.000000e+00> : vector<8xf32>
    %615 = vector.multi_reduction <add>, %614, %cst_274 [1] : vector<8x32xf32> to vector<8xf32>
    %616 = vector.shape_cast %615 : vector<8xf32> to vector<8x1xf32>
    %cst_275 = arith.constant 3.200000e+01 : f32
    %617 = vector.broadcast %cst_275 : f32 to vector<8x1xf32>
    %618 = arith.divf %616, %617 : vector<8x1xf32>
    %cst_276 = arith.constant 9.99999997E-7 : f32
    %619 = vector.broadcast %cst_276 : f32 to vector<8x1xf32>
    %620 = arith.addf %618, %619 : vector<8x1xf32>
    %621 = math.rsqrt %620 : vector<8x1xf32>
    %622 = vector.broadcast %621 : vector<8x1xf32> to vector<8x32xf32>
    %623 = arith.mulf %611, %622 : vector<8x32xf32>
    %624 = vector.broadcast %613 : vector<1x32xf32> to vector<8x32xf32>
    %625 = arith.mulf %623, %624 : vector<8x32xf32>
    %c1_277 = arith.constant 1 : index
    %c0_278 = arith.constant 0 : index
    %c0_279 = arith.constant 0 : index
    %626 = vector.load %arg18[%c1_277, %c0_278, %c0_279] : memref<2x32x32xf32, #tpu.memory_space<vmem>>, vector<1x32x32xf32>
    %627 = vector.shape_cast %626 : vector<1x32x32xf32> to vector<32x32xf32>
    %cst_280 = arith.constant dense<0.000000e+00> : vector<8x32xf32>
    %628 = tpu.matmul %625, %627, %cst_280 {dimension_numbers = #tpu.dot_dimension_numbers<[1], [0], [0], [1], [0, 0, 1, 1], [], []>} : vector<8x32xf32>, vector<32x32xf32>, vector<8x32xf32> -> vector<8x32xf32>
    %c1_281 = arith.constant 1 : index
    %c0_282 = arith.constant 0 : index
    %c0_283 = arith.constant 0 : index
    %629 = vector.load %arg19[%c1_281, %c0_282, %c0_283] : memref<2x32x64xf32, #tpu.memory_space<vmem>>, vector<1x32x64xf32>
    %630 = vector.shape_cast %629 : vector<1x32x64xf32> to vector<32x64xf32>
    %cst_284 = arith.constant dense<0.000000e+00> : vector<8x64xf32>
    %631 = tpu.matmul %282, %630, %cst_284 {dimension_numbers = #tpu.dot_dimension_numbers<[1], [0], [0], [1], [0, 0, 1, 1], [], []>} : vector<8x32xf32>, vector<32x64xf32>, vector<8x64xf32> -> vector<8x64xf32>
    %632 = vector.extract_strided_slice %631 {offsets = [0, 0], sizes = [8, 32], strides = [1, 1]} : vector<8x64xf32> to vector<8x32xf32>
    %633 = vector.extract_strided_slice %631 {offsets = [0, 32], sizes = [8, 32], strides = [1, 1]} : vector<8x64xf32> to vector<8x32xf32>
    %c1_285 = arith.constant 1 : index
    %c0_286 = arith.constant 0 : index
    %c0_287 = arith.constant 0 : index
    %634 = vector.load %arg20[%c1_285, %c0_286, %c0_287] : memref<2x32x32xf32, #tpu.memory_space<vmem>>, vector<1x32x32xf32>
    %635 = vector.shape_cast %634 : vector<1x32x32xf32> to vector<32x32xf32>
    %636 = vector.extract_strided_slice %628 {offsets = [0, 0], sizes = [8, 8], strides = [1, 1]} : vector<8x32xf32> to vector<8x8xf32>
    %637 = vector.extract_strided_slice %632 {offsets = [0, 0], sizes = [8, 8], strides = [1, 1]} : vector<8x32xf32> to vector<8x8xf32>
    %cst_288 = arith.constant dense<0.000000e+00> : vector<8x8xf32>
    %638 = tpu.matmul %636, %637, %cst_288 {dimension_numbers = #tpu.dot_dimension_numbers<[1], [1], [0], [0], [0, 0, 1, 0], [], []>} : vector<8x8xf32>, vector<8x8xf32>, vector<8x8xf32> -> vector<8x8xf32>
    %639 = vector.broadcast %1 : vector<1x8xf32> to vector<8x8xf32>
    %640 = arith.addf %638, %639 : vector<8x8xf32>
    %cst_289 = arith.constant dense<0xFF800000> : vector<8xf32>
    %641 = vector.multi_reduction <maximumf>, %640, %cst_289 [1] : vector<8x8xf32> to vector<8xf32>
    %642 = vector.shape_cast %641 : vector<8xf32> to vector<8x1xf32>
    %643 = vector.broadcast %642 : vector<8x1xf32> to vector<8x8xf32>
    %644 = arith.subf %640, %643 : vector<8x8xf32>
    %645 = math.exp %644 : vector<8x8xf32>
    %cst_290 = arith.constant dense<0.000000e+00> : vector<8xf32>
    %646 = vector.multi_reduction <add>, %645, %cst_290 [1] : vector<8x8xf32> to vector<8xf32>
    %647 = vector.shape_cast %646 : vector<8xf32> to vector<8x1xf32>
    %648 = vector.broadcast %647 : vector<8x1xf32> to vector<8x8xf32>
    %649 = arith.divf %645, %648 : vector<8x8xf32>
    %650 = vector.extract_strided_slice %633 {offsets = [0, 0], sizes = [8, 8], strides = [1, 1]} : vector<8x32xf32> to vector<8x8xf32>
    %cst_291 = arith.constant dense<0.000000e+00> : vector<8x8xf32>
    %651 = tpu.matmul %649, %650, %cst_291 {dimension_numbers = #tpu.dot_dimension_numbers<[1], [0], [0], [1], [0, 0, 1, 1], [], []>} : vector<8x8xf32>, vector<8x8xf32>, vector<8x8xf32> -> vector<8x8xf32>
    %652 = vector.extract_strided_slice %635 {offsets = [0, 0], sizes = [8, 32], strides = [1, 1]} : vector<32x32xf32> to vector<8x32xf32>
    %cst_292 = arith.constant dense<0.000000e+00> : vector<8x32xf32>
    %653 = tpu.matmul %651, %652, %cst_292 {dimension_numbers = #tpu.dot_dimension_numbers<[1], [0], [0], [1], [0, 0, 1, 1], [], []>} : vector<8x8xf32>, vector<8x32xf32>, vector<8x32xf32> -> vector<8x32xf32>
    %654 = vector.extract_strided_slice %628 {offsets = [0, 8], sizes = [8, 8], strides = [1, 1]} : vector<8x32xf32> to vector<8x8xf32>
    %655 = vector.extract_strided_slice %632 {offsets = [0, 8], sizes = [8, 8], strides = [1, 1]} : vector<8x32xf32> to vector<8x8xf32>
    %cst_293 = arith.constant dense<0.000000e+00> : vector<8x8xf32>
    %656 = tpu.matmul %654, %655, %cst_293 {dimension_numbers = #tpu.dot_dimension_numbers<[1], [1], [0], [0], [0, 0, 1, 0], [], []>} : vector<8x8xf32>, vector<8x8xf32>, vector<8x8xf32> -> vector<8x8xf32>
    %657 = vector.broadcast %1 : vector<1x8xf32> to vector<8x8xf32>
    %658 = arith.addf %656, %657 : vector<8x8xf32>
    %cst_294 = arith.constant dense<0xFF800000> : vector<8xf32>
    %659 = vector.multi_reduction <maximumf>, %658, %cst_294 [1] : vector<8x8xf32> to vector<8xf32>
    %660 = vector.shape_cast %659 : vector<8xf32> to vector<8x1xf32>
    %661 = vector.broadcast %660 : vector<8x1xf32> to vector<8x8xf32>
    %662 = arith.subf %658, %661 : vector<8x8xf32>
    %663 = math.exp %662 : vector<8x8xf32>
    %cst_295 = arith.constant dense<0.000000e+00> : vector<8xf32>
    %664 = vector.multi_reduction <add>, %663, %cst_295 [1] : vector<8x8xf32> to vector<8xf32>
    %665 = vector.shape_cast %664 : vector<8xf32> to vector<8x1xf32>
    %666 = vector.broadcast %665 : vector<8x1xf32> to vector<8x8xf32>
    %667 = arith.divf %663, %666 : vector<8x8xf32>
    %668 = vector.extract_strided_slice %633 {offsets = [0, 8], sizes = [8, 8], strides = [1, 1]} : vector<8x32xf32> to vector<8x8xf32>
    %cst_296 = arith.constant dense<0.000000e+00> : vector<8x8xf32>
    %669 = tpu.matmul %667, %668, %cst_296 {dimension_numbers = #tpu.dot_dimension_numbers<[1], [0], [0], [1], [0, 0, 1, 1], [], []>} : vector<8x8xf32>, vector<8x8xf32>, vector<8x8xf32> -> vector<8x8xf32>
    %670 = vector.extract_strided_slice %635 {offsets = [8, 0], sizes = [8, 32], strides = [1, 1]} : vector<32x32xf32> to vector<8x32xf32>
    %cst_297 = arith.constant dense<0.000000e+00> : vector<8x32xf32>
    %671 = tpu.matmul %669, %670, %cst_297 {dimension_numbers = #tpu.dot_dimension_numbers<[1], [0], [0], [1], [0, 0, 1, 1], [], []>} : vector<8x8xf32>, vector<8x32xf32>, vector<8x32xf32> -> vector<8x32xf32>
    %672 = arith.addf %653, %671 : vector<8x32xf32>
    %673 = vector.extract_strided_slice %628 {offsets = [0, 16], sizes = [8, 8], strides = [1, 1]} : vector<8x32xf32> to vector<8x8xf32>
    %674 = vector.extract_strided_slice %632 {offsets = [0, 16], sizes = [8, 8], strides = [1, 1]} : vector<8x32xf32> to vector<8x8xf32>
    %cst_298 = arith.constant dense<0.000000e+00> : vector<8x8xf32>
    %675 = tpu.matmul %673, %674, %cst_298 {dimension_numbers = #tpu.dot_dimension_numbers<[1], [1], [0], [0], [0, 0, 1, 0], [], []>} : vector<8x8xf32>, vector<8x8xf32>, vector<8x8xf32> -> vector<8x8xf32>
    %676 = vector.broadcast %1 : vector<1x8xf32> to vector<8x8xf32>
    %677 = arith.addf %675, %676 : vector<8x8xf32>
    %cst_299 = arith.constant dense<0xFF800000> : vector<8xf32>
    %678 = vector.multi_reduction <maximumf>, %677, %cst_299 [1] : vector<8x8xf32> to vector<8xf32>
    %679 = vector.shape_cast %678 : vector<8xf32> to vector<8x1xf32>
    %680 = vector.broadcast %679 : vector<8x1xf32> to vector<8x8xf32>
    %681 = arith.subf %677, %680 : vector<8x8xf32>
    %682 = math.exp %681 : vector<8x8xf32>
    %cst_300 = arith.constant dense<0.000000e+00> : vector<8xf32>
    %683 = vector.multi_reduction <add>, %682, %cst_300 [1] : vector<8x8xf32> to vector<8xf32>
    %684 = vector.shape_cast %683 : vector<8xf32> to vector<8x1xf32>
    %685 = vector.broadcast %684 : vector<8x1xf32> to vector<8x8xf32>
    %686 = arith.divf %682, %685 : vector<8x8xf32>
    %687 = vector.extract_strided_slice %633 {offsets = [0, 16], sizes = [8, 8], strides = [1, 1]} : vector<8x32xf32> to vector<8x8xf32>
    %cst_301 = arith.constant dense<0.000000e+00> : vector<8x8xf32>
    %688 = tpu.matmul %686, %687, %cst_301 {dimension_numbers = #tpu.dot_dimension_numbers<[1], [0], [0], [1], [0, 0, 1, 1], [], []>} : vector<8x8xf32>, vector<8x8xf32>, vector<8x8xf32> -> vector<8x8xf32>
    %689 = vector.extract_strided_slice %635 {offsets = [16, 0], sizes = [8, 32], strides = [1, 1]} : vector<32x32xf32> to vector<8x32xf32>
    %cst_302 = arith.constant dense<0.000000e+00> : vector<8x32xf32>
    %690 = tpu.matmul %688, %689, %cst_302 {dimension_numbers = #tpu.dot_dimension_numbers<[1], [0], [0], [1], [0, 0, 1, 1], [], []>} : vector<8x8xf32>, vector<8x32xf32>, vector<8x32xf32> -> vector<8x32xf32>
    %691 = arith.addf %672, %690 : vector<8x32xf32>
    %692 = vector.extract_strided_slice %628 {offsets = [0, 24], sizes = [8, 8], strides = [1, 1]} : vector<8x32xf32> to vector<8x8xf32>
    %693 = vector.extract_strided_slice %632 {offsets = [0, 24], sizes = [8, 8], strides = [1, 1]} : vector<8x32xf32> to vector<8x8xf32>
    %cst_303 = arith.constant dense<0.000000e+00> : vector<8x8xf32>
    %694 = tpu.matmul %692, %693, %cst_303 {dimension_numbers = #tpu.dot_dimension_numbers<[1], [1], [0], [0], [0, 0, 1, 0], [], []>} : vector<8x8xf32>, vector<8x8xf32>, vector<8x8xf32> -> vector<8x8xf32>
    %695 = vector.broadcast %1 : vector<1x8xf32> to vector<8x8xf32>
    %696 = arith.addf %694, %695 : vector<8x8xf32>
    %cst_304 = arith.constant dense<0xFF800000> : vector<8xf32>
    %697 = vector.multi_reduction <maximumf>, %696, %cst_304 [1] : vector<8x8xf32> to vector<8xf32>
    %698 = vector.shape_cast %697 : vector<8xf32> to vector<8x1xf32>
    %699 = vector.broadcast %698 : vector<8x1xf32> to vector<8x8xf32>
    %700 = arith.subf %696, %699 : vector<8x8xf32>
    %701 = math.exp %700 : vector<8x8xf32>
    %cst_305 = arith.constant dense<0.000000e+00> : vector<8xf32>
    %702 = vector.multi_reduction <add>, %701, %cst_305 [1] : vector<8x8xf32> to vector<8xf32>
    %703 = vector.shape_cast %702 : vector<8xf32> to vector<8x1xf32>
    %704 = vector.broadcast %703 : vector<8x1xf32> to vector<8x8xf32>
    %705 = arith.divf %701, %704 : vector<8x8xf32>
    %706 = vector.extract_strided_slice %633 {offsets = [0, 24], sizes = [8, 8], strides = [1, 1]} : vector<8x32xf32> to vector<8x8xf32>
    %cst_306 = arith.constant dense<0.000000e+00> : vector<8x8xf32>
    %707 = tpu.matmul %705, %706, %cst_306 {dimension_numbers = #tpu.dot_dimension_numbers<[1], [0], [0], [1], [0, 0, 1, 1], [], []>} : vector<8x8xf32>, vector<8x8xf32>, vector<8x8xf32> -> vector<8x8xf32>
    %708 = vector.extract_strided_slice %635 {offsets = [24, 0], sizes = [8, 32], strides = [1, 1]} : vector<32x32xf32> to vector<8x32xf32>
    %cst_307 = arith.constant dense<0.000000e+00> : vector<8x32xf32>
    %709 = tpu.matmul %707, %708, %cst_307 {dimension_numbers = #tpu.dot_dimension_numbers<[1], [0], [0], [1], [0, 0, 1, 1], [], []>} : vector<8x8xf32>, vector<8x32xf32>, vector<8x32xf32> -> vector<8x32xf32>
    %710 = arith.addf %691, %709 : vector<8x32xf32>
    %711 = arith.addf %611, %710 : vector<8x32xf32>
    %c1_308 = arith.constant 1 : index
    %c0_309 = arith.constant 0 : index
    %c0_310 = arith.constant 0 : index
    %712 = vector.load %arg21[%c1_308, %c0_309, %c0_310] : memref<2x1x32xf32, #tpu.memory_space<vmem>>, vector<1x1x32xf32>
    %713 = vector.shape_cast %712 : vector<1x1x32xf32> to vector<1x32xf32>
    %714 = arith.mulf %711, %711 : vector<8x32xf32>
    %cst_311 = arith.constant dense<0.000000e+00> : vector<8xf32>
    %715 = vector.multi_reduction <add>, %714, %cst_311 [1] : vector<8x32xf32> to vector<8xf32>
    %716 = vector.shape_cast %715 : vector<8xf32> to vector<8x1xf32>
    %cst_312 = arith.constant 3.200000e+01 : f32
    %717 = vector.broadcast %cst_312 : f32 to vector<8x1xf32>
    %718 = arith.divf %716, %717 : vector<8x1xf32>
    %cst_313 = arith.constant 9.99999997E-7 : f32
    %719 = vector.broadcast %cst_313 : f32 to vector<8x1xf32>
    %720 = arith.addf %718, %719 : vector<8x1xf32>
    %721 = math.rsqrt %720 : vector<8x1xf32>
    %722 = vector.broadcast %721 : vector<8x1xf32> to vector<8x32xf32>
    %723 = arith.mulf %711, %722 : vector<8x32xf32>
    %724 = vector.broadcast %713 : vector<1x32xf32> to vector<8x32xf32>
    %725 = arith.mulf %723, %724 : vector<8x32xf32>
    %c1_314 = arith.constant 1 : index
    %c0_315 = arith.constant 0 : index
    %c0_316 = arith.constant 0 : index
    %726 = vector.load %arg22[%c1_314, %c0_315, %c0_316] : memref<2x32x64xf32, #tpu.memory_space<vmem>>, vector<1x32x64xf32>
    %727 = vector.shape_cast %726 : vector<1x32x64xf32> to vector<32x64xf32>
    %cst_317 = arith.constant dense<0.000000e+00> : vector<8x64xf32>
    %728 = tpu.matmul %725, %727, %cst_317 {dimension_numbers = #tpu.dot_dimension_numbers<[1], [0], [0], [1], [0, 0, 1, 1], [], []>} : vector<8x32xf32>, vector<32x64xf32>, vector<8x64xf32> -> vector<8x64xf32>
    %cst_318 = arith.constant 0.000000e+00 : f32
    %729 = vector.broadcast %cst_318 : f32 to vector<8x64xf32>
    %730 = arith.maximumf %728, %729 : vector<8x64xf32>
    %c1_319 = arith.constant 1 : index
    %c0_320 = arith.constant 0 : index
    %c0_321 = arith.constant 0 : index
    %731 = vector.load %arg23[%c1_319, %c0_320, %c0_321] : memref<2x64x32xf32, #tpu.memory_space<vmem>>, vector<1x64x32xf32>
    %732 = vector.shape_cast %731 : vector<1x64x32xf32> to vector<64x32xf32>
    %cst_322 = arith.constant dense<0.000000e+00> : vector<8x32xf32>
    %733 = tpu.matmul %730, %732, %cst_322 {dimension_numbers = #tpu.dot_dimension_numbers<[1], [0], [0], [1], [0, 0, 1, 1], [], []>} : vector<8x64xf32>, vector<64x32xf32>, vector<8x32xf32> -> vector<8x32xf32>
    %734 = arith.addf %711, %733 : vector<8x32xf32>
    %c0_323 = arith.constant 0 : index
    %c0_324 = arith.constant 0 : index
    %735 = vector.load %arg24[%c0_323, %c0_324] : memref<1x32xf32, #tpu.memory_space<vmem>>, vector<1x32xf32>
    %736 = arith.mulf %734, %734 : vector<8x32xf32>
    %cst_325 = arith.constant dense<0.000000e+00> : vector<8xf32>
    %737 = vector.multi_reduction <add>, %736, %cst_325 [1] : vector<8x32xf32> to vector<8xf32>
    %738 = vector.shape_cast %737 : vector<8xf32> to vector<8x1xf32>
    %cst_326 = arith.constant 3.200000e+01 : f32
    %739 = vector.broadcast %cst_326 : f32 to vector<8x1xf32>
    %740 = arith.divf %738, %739 : vector<8x1xf32>
    %cst_327 = arith.constant 9.99999997E-7 : f32
    %741 = vector.broadcast %cst_327 : f32 to vector<8x1xf32>
    %742 = arith.addf %740, %741 : vector<8x1xf32>
    %743 = math.rsqrt %742 : vector<8x1xf32>
    %744 = vector.broadcast %743 : vector<8x1xf32> to vector<8x32xf32>
    %745 = arith.mulf %734, %744 : vector<8x32xf32>
    %746 = vector.broadcast %735 : vector<1x32xf32> to vector<8x32xf32>
    %747 = arith.mulf %745, %746 : vector<8x32xf32>
    %cst_328 = arith.constant 0.176776692 : f32
    %748 = vector.broadcast %cst_328 : f32 to vector<8x32xf32>
    %749 = arith.mulf %747, %748 : vector<8x32xf32>
    %c0_329 = arith.constant 0 : index
    %c0_330 = arith.constant 0 : index
    %750 = vector.load %arg25[%c0_329, %c0_330] : memref<32x128xf32, #tpu.memory_space<vmem>>, vector<32x128xf32>
    %cst_331 = arith.constant dense<0.000000e+00> : vector<8x128xf32>
    %751 = tpu.matmul %749, %750, %cst_331 {dimension_numbers = #tpu.dot_dimension_numbers<[1], [0], [0], [1], [0, 0, 1, 1], [], []>} : vector<8x32xf32>, vector<32x128xf32>, vector<8x128xf32> -> vector<8x128xf32>
    %c0_332 = arith.constant 0 : index
    %c0_333 = arith.constant 0 : index
    %c0_334 = arith.constant 0 : index
    %752 = vector.load %arg26[%c0_332, %c0_333, %c0_334] : memref<1x8x128xf32, #tpu.memory_space<vmem>>, vector<1x8x128xf32>
    %753 = vector.shape_cast %752 : vector<1x8x128xf32> to vector<8x128xf32>
    %754 = vector.shape_cast %751 : vector<8x128xf32> to vector<1x8x128xf32>
    tpu.vector_store %arg26[%c0_332, %c0_333, %c0_334], %754 {strides = array<i32>} : memref<1x8x128xf32, #tpu.memory_space<vmem>>, vector<1x8x128xf32>,
    %755 = tpu.iota {dimensions = array<i32: 1>} : vector<8x128xi32>
    %c64_i32 = arith.constant 64 : i32
    %756 = vector.broadcast %c64_i32 : i32 to vector<8x128xi32>
    %757 = arith.cmpi slt, %755, %756 : vector<8x128xi32>
    %cst_335 = arith.constant -1.000000e+09 : f32
    %758 = vector.broadcast %cst_335 : f32 to vector<8x128xf32>
    %759 = arith.select %757, %751, %758 : vector<8x128xi1>, vector<8x128xf32>
    %cst_336 = arith.constant dense<0xFF800000> : vector<8xf32>
    %760 = vector.multi_reduction <maximumf>, %759, %cst_336 [1] : vector<8x128xf32> to vector<8xf32>
    %761 = vector.shape_cast %760 : vector<8xf32> to vector<8x1xf32>
    %762 = vector.broadcast %761 : vector<8x1xf32> to vector<8x128xf32>
    %763 = arith.subf %759, %762 : vector<8x128xf32>
    %764 = math.exp %763 : vector<8x128xf32>
    %cst_337 = arith.constant dense<0.000000e+00> : vector<8xf32>
    %765 = vector.multi_reduction <add>, %764, %cst_337 [1] : vector<8x128xf32> to vector<8xf32>
    %766 = vector.shape_cast %765 : vector<8xf32> to vector<8x1xf32>
    %767 = math.log %766 : vector<8x1xf32>
    %768 = vector.broadcast %767 : vector<8x1xf32> to vector<8x128xf32>
    %769 = arith.subf %763, %768 : vector<8x128xf32>
    %c0_338 = arith.constant 0 : index
    %c0_339 = arith.constant 0 : index
    %c0_340 = arith.constant 0 : index
    %770 = vector.load %arg6[%c0_338, %c0_339, %c0_340] : memref<1x8x1xi32, #tpu.memory_space<vmem>>, vector<1x8x1xi32>
    %771 = vector.shape_cast %770 : vector<1x8x1xi32> to vector<8x1xi32>
    %c-100_i32 = arith.constant -100 : i32
    %772 = vector.broadcast %c-100_i32 : i32 to vector<8x1xi32>
    %773 = arith.cmpi ne, %771, %772 : vector<8x1xi32>
    %c0_i32 = arith.constant 0 : i32
    %774 = vector.broadcast %c0_i32 : i32 to vector<8x1xi32>
    %775 = arith.select %773, %771, %774 : vector<8x1xi1>, vector<8x1xi32>
    %776 = vector.broadcast %775 : vector<8x1xi32> to vector<8x128xi32>
    %777 = arith.cmpi eq, %755, %776 : vector<8x128xi32>
    %778 = arith.extui %777 : vector<8x128xi1> to vector<8x128xi32>
    %779 = arith.sitofp %778 : vector<8x128xi32> to vector<8x128xf32>
    %780 = arith.mulf %769, %779 : vector<8x128xf32>
    %cst_341 = arith.constant dense<0.000000e+00> : vector<8xf32>
    %781 = vector.multi_reduction <add>, %780, %cst_341 [1] : vector<8x128xf32> to vector<8xf32>
    %782 = vector.shape_cast %781 : vector<8xf32> to vector<8x1xf32>
    %cst_342 = arith.constant 0.000000e+00 : f32
    %783 = vector.broadcast %cst_342 : f32 to vector<8x1xf32>
    %784 = arith.subf %783, %782 : vector<8x1xf32>
    %cst_343 = arith.constant 0.000000e+00 : f32
    %785 = vector.broadcast %cst_343 : f32 to vector<8x1xf32>
    %786 = arith.select %773, %784, %785 : vector<8x1xi1>, vector<8x1xf32>
    %cst_344 = arith.constant dense<0.000000e+00> : vector<1xf32>
    %787 = vector.multi_reduction <add>, %786, %cst_344 [0] : vector<8x1xf32> to vector<1xf32>
    %788 = vector.shape_cast %787 : vector<1xf32> to vector<1x1xf32>
    %c0_345 = arith.constant 0 : index
    %c0_346 = arith.constant 0 : index
    %c0_347 = arith.constant 0 : index
    %789 = vector.load %arg27[%c0_345, %c0_346, %c0_347] : memref<1x1x1xf32, #tpu.memory_space<vmem>>, vector<1x1x1xf32>
    %790 = vector.shape_cast %789 : vector<1x1x1xf32> to vector<1x1xf32>
    %791 = vector.shape_cast %788 : vector<1x1xf32> to vector<1x1x1xf32>
    tpu.vector_store %arg27[%c0_345, %c0_346, %c0_347], %791 {strides = array<i32>} : memref<1x1x1xf32, #tpu.memory_space<vmem>>, vector<1x1x1xf32>,
    %792 = arith.extui %773 : vector<8x1xi1> to vector<8x1xi32>
    %793 = arith.sitofp %792 : vector<8x1xi32> to vector<8x1xf32>
    %cst_348 = arith.constant dense<0.000000e+00> : vector<1xf32>
    %794 = vector.multi_reduction <add>, %793, %cst_348 [0] : vector<8x1xf32> to vector<1xf32>
    %795 = vector.shape_cast %794 : vector<1xf32> to vector<1x1xf32>
    %c0_349 = arith.constant 0 : index
    %c0_350 = arith.constant 0 : index
    %c0_351 = arith.constant 0 : index
    %796 = vector.load %arg28[%c0_349, %c0_350, %c0_351] : memref<1x1x1xf32, #tpu.memory_space<vmem>>, vector<1x1x1xf32>
    %797 = vector.shape_cast %796 : vector<1x1x1xf32> to vector<1x1xf32>
    %798 = vector.shape_cast %795 : vector<1x1xf32> to vector<1x1x1xf32>
    tpu.vector_store %arg28[%c0_349, %c0_350, %c0_351], %798 {strides = array<i32>} : memref<1x1x1xf32, #tpu.memory_space<vmem>>, vector<1x1x1xf32>,
    return
  }
  func.func @transform_0(%arg0: i32) -> (i32, i32, i32) {
    %c0_i32 = arith.constant 0 : i32
    %c0_i32_0 = arith.constant 0 : i32
    %c0_i32_1 = arith.constant 0 : i32
    return %arg0, %c0_i32, %c0_i32_0 : i32, i32, i32
  }
  func.func @transform_1(%arg0: i32) -> (i32, i32, i32) {
    %c0_i32 = arith.constant 0 : i32
    %c0_i32_0 = arith.constant 0 : i32
    %c0_i32_1 = arith.constant 0 : i32
    return %arg0, %c0_i32, %c0_i32_0 : i32, i32, i32
  }
  func.func @transform_2(%arg0: i32) -> (i32, i32, i32) {
    %c0_i32 = arith.constant 0 : i32
    %c0_i32_0 = arith.constant 0 : i32
    %c0_i32_1 = arith.constant 0 : i32
    %c0_i32_2 = arith.constant 0 : i32
    return %c0_i32, %c0_i32_0, %c0_i32_1 : i32, i32, i32
  }
  func.func @transform_3(%arg0: i32) -> (i32, i32, i32) {
    %c0_i32 = arith.constant 0 : i32
    %c0_i32_0 = arith.constant 0 : i32
    %c0_i32_1 = arith.constant 0 : i32
    %c0_i32_2 = arith.constant 0 : i32
    return %c0_i32, %c0_i32_0, %c0_i32_1 : i32, i32, i32
  }
  func.func @transform_4(%arg0: i32) -> (i32, i32, i32) {
    %c0_i32 = arith.constant 0 : i32
    %c0_i32_0 = arith.constant 0 : i32
    %c0_i32_1 = arith.constant 0 : i32
    return %arg0, %c0_i32, %c0_i32_0 : i32, i32, i32
  }
  func.func @transform_5(%arg0: i32) -> (i32, i32, i32) {
    %c0_i32 = arith.constant 0 : i32
    %c0_i32_0 = arith.constant 0 : i32
    %c0_i32_1 = arith.constant 0 : i32
    return %arg0, %c0_i32, %c0_i32_0 : i32, i32, i32
  }
  func.func @transform_6(%arg0: i32) -> (i32, i32, i32) {
    %c0_i32 = arith.constant 0 : i32
    %c0_i32_0 = arith.constant 0 : i32
    %c0_i32_1 = arith.constant 0 : i32
    %c0_i32_2 = arith.constant 0 : i32
    return %c0_i32, %c0_i32_0, %c0_i32_1 : i32, i32, i32
  }
  func.func @transform_7(%arg0: i32) -> (i32, i32, i32) {
    %c0_i32 = arith.constant 0 : i32
    %c0_i32_0 = arith.constant 0 : i32
    %c0_i32_1 = arith.constant 0 : i32
    %c0_i32_2 = arith.constant 0 : i32
    return %c0_i32, %c0_i32_0, %c0_i32_1 : i32, i32, i32
  }
  func.func @transform_8(%arg0: i32) -> (i32, i32, i32) {
    %c0_i32 = arith.constant 0 : i32
    %c0_i32_0 = arith.constant 0 : i32
    %c0_i32_1 = arith.constant 0 : i32
    %c0_i32_2 = arith.constant 0 : i32
    return %c0_i32, %c0_i32_0, %c0_i32_1 : i32, i32, i32
  }
  func.func @transform_9(%arg0: i32) -> (i32, i32, i32) {
    %c0_i32 = arith.constant 0 : i32
    %c0_i32_0 = arith.constant 0 : i32
    %c0_i32_1 = arith.constant 0 : i32
    %c0_i32_2 = arith.constant 0 : i32
    return %c0_i32, %c0_i32_0, %c0_i32_1 : i32, i32, i32
  }
  func.func @transform_10(%arg0: i32) -> (i32, i32, i32) {
    %c0_i32 = arith.constant 0 : i32
    %c0_i32_0 = arith.constant 0 : i32
    %c0_i32_1 = arith.constant 0 : i32
    %c0_i32_2 = arith.constant 0 : i32
    return %c0_i32, %c0_i32_0, %c0_i32_1 : i32, i32, i32
  }
  func.func @transform_11(%arg0: i32) -> (i32, i32, i32) {
    %c0_i32 = arith.constant 0 : i32
    %c0_i32_0 = arith.constant 0 : i32
    %c0_i32_1 = arith.constant 0 : i32
    %c0_i32_2 = arith.constant 0 : i32
    return %c0_i32, %c0_i32_0, %c0_i32_1 : i32, i32, i32
  }
  func.func @transform_12(%arg0: i32) -> (i32, i32) {
    %c0_i32 = arith.constant 0 : i32
    %c0_i32_0 = arith.constant 0 : i32
    %c0_i32_1 = arith.constant 0 : i32
    return %c0_i32, %c0_i32_0 : i32, i32
  }
  func.func @transform_13(%arg0: i32) -> (i32, i32, i32) {
    %c0_i32 = arith.constant 0 : i32
    %c0_i32_0 = arith.constant 0 : i32
    %c0_i32_1 = arith.constant 0 : i32
    %c0_i32_2 = arith.constant 0 : i32
    return %c0_i32, %c0_i32_0, %c0_i32_1 : i32, i32, i32
  }
  func.func @transform_14(%arg0: i32) -> (i32, i32, i32) {
    %c0_i32 = arith.constant 0 : i32
    %c0_i32_0 = arith.constant 0 : i32
    %c0_i32_1 = arith.constant 0 : i32
    %c0_i32_2 = arith.constant 0 : i32
    return %c0_i32, %c0_i32_0, %c0_i32_1 : i32, i32, i32
  }
  func.func @transform_15(%arg0: i32) -> (i32, i32, i32) {
    %c0_i32 = arith.constant 0 : i32
    %c0_i32_0 = arith.constant 0 : i32
    %c0_i32_1 = arith.constant 0 : i32
    %c0_i32_2 = arith.constant 0 : i32
    return %c0_i32, %c0_i32_0, %c0_i32_1 : i32, i32, i32
  }
  func.func @transform_16(%arg0: i32) -> (i32, i32, i32) {
    %c0_i32 = arith.constant 0 : i32
    %c0_i32_0 = arith.constant 0 : i32
    %c0_i32_1 = arith.constant 0 : i32
    %c0_i32_2 = arith.constant 0 : i32
    return %c0_i32, %c0_i32_0, %c0_i32_1 : i32, i32, i32
  }
  func.func @transform_17(%arg0: i32) -> (i32, i32, i32) {
    %c0_i32 = arith.constant 0 : i32
    %c0_i32_0 = arith.constant 0 : i32
    %c0_i32_1 = arith.constant 0 : i32
    %c0_i32_2 = arith.constant 0 : i32
    return %c0_i32, %c0_i32_0, %c0_i32_1 : i32, i32, i32
  }
  func.func @transform_18(%arg0: i32) -> (i32, i32, i32) {
    %c0_i32 = arith.constant 0 : i32
    %c0_i32_0 = arith.constant 0 : i32
    %c0_i32_1 = arith.constant 0 : i32
    %c0_i32_2 = arith.constant 0 : i32
    return %c0_i32, %c0_i32_0, %c0_i32_1 : i32, i32, i32
  }
  func.func @transform_19(%arg0: i32) -> (i32, i32, i32) {
    %c0_i32 = arith.constant 0 : i32
    %c0_i32_0 = arith.constant 0 : i32
    %c0_i32_1 = arith.constant 0 : i32
    %c0_i32_2 = arith.constant 0 : i32
    return %c0_i32, %c0_i32_0, %c0_i32_1 : i32, i32, i32
  }
  func.func @transform_20(%arg0: i32) -> (i32, i32, i32) {
    %c0_i32 = arith.constant 0 : i32
    %c0_i32_0 = arith.constant 0 : i32
    %c0_i32_1 = arith.constant 0 : i32
    %c0_i32_2 = arith.constant 0 : i32
    return %c0_i32, %c0_i32_0, %c0_i32_1 : i32, i32, i32
  }
  func.func @transform_21(%arg0: i32) -> (i32, i32, i32) {
    %c0_i32 = arith.constant 0 : i32
    %c0_i32_0 = arith.constant 0 : i32
    %c0_i32_1 = arith.constant 0 : i32
    %c0_i32_2 = arith.constant 0 : i32
    return %c0_i32, %c0_i32_0, %c0_i32_1 : i32, i32, i32
  }
  func.func @transform_22(%arg0: i32) -> (i32, i32, i32) {
    %c0_i32 = arith.constant 0 : i32
    %c0_i32_0 = arith.constant 0 : i32
    %c0_i32_1 = arith.constant 0 : i32
    %c0_i32_2 = arith.constant 0 : i32
    return %c0_i32, %c0_i32_0, %c0_i32_1 : i32, i32, i32
  }
  func.func @transform_23(%arg0: i32) -> (i32, i32) {
    %c0_i32 = arith.constant 0 : i32
    %c0_i32_0 = arith.constant 0 : i32
    %c0_i32_1 = arith.constant 0 : i32
    return %c0_i32, %c0_i32_0 : i32, i32
  }
  func.func @transform_24(%arg0: i32) -> (i32, i32) {
    %c0_i32 = arith.constant 0 : i32
    %c0_i32_0 = arith.constant 0 : i32
    %c0_i32_1 = arith.constant 0 : i32
    return %c0_i32, %c0_i32_0 : i32, i32
  }
  func.func @transform_25(%arg0: i32) -> (i32, i32, i32) {
    %c0_i32 = arith.constant 0 : i32
    %c0_i32_0 = arith.constant 0 : i32
    %c0_i32_1 = arith.constant 0 : i32
    return %arg0, %c0_i32, %c0_i32_0 : i32, i32, i32
  }
  func.func @transform_26(%arg0: i32) -> (i32, i32, i32) {
    %c0_i32 = arith.constant 0 : i32
    %c0_i32_0 = arith.constant 0 : i32
    %c0_i32_1 = arith.constant 0 : i32
    return %arg0, %c0_i32, %c0_i32_0 : i32, i32, i32
  }
  func.func @transform_27(%arg0: i32) -> (i32, i32, i32) {
    %c0_i32 = arith.constant 0 : i32
    %c0_i32_0 = arith.constant 0 : i32
    %c0_i32_1 = arith.constant 0 : i32
    return %arg0, %c0_i32, %c0_i32_0 : i32, i32, i32
  }
}

</mosaic_0001>

<llo_original>
// kernel: model_forward.1
$region0: #{model_forward.1}
  #allocation0 [shape = 'u32[]', space=smem, size = 0x4, offset = 0x4, fixed_abs, tag = 'smem constant byte address 0x4 - core index']
  #allocation1 [shape = 'u32[144,128]{1,0:T(1,128)}', space=vmem, size = 0x12000, scoped, tag = 'internal scratch']
  %s0 = inlined_call_operand.vmem [shape: f32[2,8,32], index: 0, kind: input, shape index: {}]
  %s1 = inlined_call_operand.vmem [shape: f32[2,8,32], index: 1, kind: input, shape index: {}]
  %s2 = inlined_call_operand.vmem [shape: f32[4,8,8], index: 2, kind: input, shape index: {}]
  %s3 = inlined_call_operand.vmem [shape: f32[4,8,8], index: 3, kind: input, shape index: {}]
  %s4 = inlined_call_operand.vmem [shape: f32[2,1,8], index: 4, kind: input, shape index: {}]
  %s5 = inlined_call_operand.vmem [shape: s32[2,8,1], index: 5, kind: input, shape index: {}]
  %s6 = inlined_call_operand.vmem [shape: f32[2,1,32], index: 6, kind: input, shape index: {}]
  %s7 = inlined_call_operand.vmem [shape: f32[2,32,96], index: 7, kind: input, shape index: {}]
  %s8 = inlined_call_operand.vmem [shape: f32[2,32,32], index: 8, kind: input, shape index: {}]
  %s9 = inlined_call_operand.vmem [shape: f32[2,1,32], index: 9, kind: input, shape index: {}]
  %s10 = inlined_call_operand.vmem [shape: f32[2,32,64], index: 10, kind: input, shape index: {}]
  %s11 = inlined_call_operand.vmem [shape: f32[2,64,32], index: 11, kind: input, shape index: {}]
  %s12 = inlined_call_operand.vmem [shape: f32[1,32], index: 12, kind: input, shape index: {}]
  %s13 = inlined_call_operand.vmem [shape: f32[2,1,32], index: 13, kind: input, shape index: {}]
  %s14 = inlined_call_operand.vmem [shape: f32[2,32,96], index: 14, kind: input, shape index: {}]
  %s15 = inlined_call_operand.vmem [shape: f32[2,32,32], index: 15, kind: input, shape index: {}]
  %s16 = inlined_call_operand.vmem [shape: f32[2,1,32], index: 16, kind: input, shape index: {}]
  %s17 = inlined_call_operand.vmem [shape: f32[2,32,32], index: 17, kind: input, shape index: {}]
  %s18 = inlined_call_operand.vmem [shape: f32[2,32,64], index: 18, kind: input, shape index: {}]
  %s19 = inlined_call_operand.vmem [shape: f32[2,32,32], index: 19, kind: input, shape index: {}]
  %s20 = inlined_call_operand.vmem [shape: f32[2,1,32], index: 20, kind: input, shape index: {}]
  %s21 = inlined_call_operand.vmem [shape: f32[2,32,64], index: 21, kind: input, shape index: {}]
  %s22 = inlined_call_operand.vmem [shape: f32[2,64,32], index: 22, kind: input, shape index: {}]
  %s23 = inlined_call_operand.vmem [shape: f32[1,32], index: 23, kind: input, shape index: {}]
  %s24 = inlined_call_operand.vmem [shape: f32[32,128], index: 24, kind: input, shape index: {}]
  %s25 = inlined_call_operand.hbm [shape: f32[2,8,128], index: 25, kind: output, shape index: {0}]
  %s26 = inlined_call_operand.vmem [shape: f32[2,1,1], index: 26, kind: output, shape index: {1}]
  %s27 = inlined_call_operand.vmem [shape: f32[2,1,1], index: 27, kind: output, shape index: {2}]
  %28 = xla_tuple %s25, %s26, %s27
  %s29 = sld [smem:[#allocation0]]
  $region149: #{model_forward.1} parent=0
    _
  %s31 = ssub.s32 1, %s29
  %s32 = scalar_select 0, %s31, %s29
  $region1: #{model_forward.1} parent=0
    #allocation2 [shape = 'u8[8192]{0}', space=vmem, size = 0x2000, scoped, tag = 'output window, operand 0']
    #allocation3 [shape = 's32[2]{0}', space=sflag, size = 0x8, scoped, tag = 'scoped memory for model_forward.1']
    %33 = vsyncpa [#allocation3], 0
    %s34 = scalar_lea.sflag [#allocation3], 1
    %35 = vsyncpa %s34, 0
    loop: start=0, step=1, limit=4
    $region2: #{model_forward.1} parent=1 // loop_pre_header
      _
    $region3: #{model_forward.1} parent=1 // loop_header
      %s37 = sphi 0, %s41
      %p38 = scmp.ge.s32.totalorder %s37, 4
      %s47 = sphi 0, %s49
      %s50 = sphi 0, %s47
      %s51 = sphi 0, %s50
      %s67 = sphi 0, %s51
      %s73 = sphi 0, %s75
      %s76 = sphi 0, %s73
      %s77 = sphi 0, %s76
      %s93 = sphi 0, %s77
      %s97 = sphi 0, %s97
      %s99 = sphi 0, %s97
      %s100 = sphi 0, %s99
      %s114 = sphi 0, %s100
      %s118 = sphi 0, %s118
      %s120 = sphi 0, %s118
      %s121 = sphi 0, %s120
      %s135 = sphi 0, %s121
      %s141 = sphi 0, %s143
      %s144 = sphi 0, %s141
      %s145 = sphi 0, %s144
      %s161 = sphi 0, %s145
      %s167 = sphi 0, %s169
      %s170 = sphi 0, %s167
      %s171 = sphi 0, %s170
      %s187 = sphi 0, %s171
      %s191 = sphi 0, %s191
      %s193 = sphi 0, %s191
      %s194 = sphi 0, %s193
      %s208 = sphi 0, %s194
      %s212 = sphi 0, %s212
      %s214 = sphi 0, %s212
      %s215 = sphi 0, %s214
      %s229 = sphi 0, %s215
      %s233 = sphi 0, %s233
      %s235 = sphi 0, %s233
      %s236 = sphi 0, %s235
      %s250 = sphi 0, %s236
      %s254 = sphi 0, %s254
      %s256 = sphi 0, %s254
      %s257 = sphi 0, %s256
      %s271 = sphi 0, %s257
      %s275 = sphi 0, %s275
      %s277 = sphi 0, %s275
      %s278 = sphi 0, %s277
      %s292 = sphi 0, %s278
      %s296 = sphi 0, %s296
      %s298 = sphi 0, %s296
      %s299 = sphi 0, %s298
      %s313 = sphi 0, %s299
      %s317 = sphi 0, %s317
      %s319 = sphi 0, %s317
      %s320 = sphi 0, %s319
      %s334 = sphi 0, %s320
      %s338 = sphi 0, %s338
      %s340 = sphi 0, %s338
      %s341 = sphi 0, %s340
      %s355 = sphi 0, %s341
      %s359 = sphi 0, %s359
      %s361 = sphi 0, %s359
      %s362 = sphi 0, %s361
      %s376 = sphi 0, %s362
      %s380 = sphi 0, %s380
      %s382 = sphi 0, %s380
      %s383 = sphi 0, %s382
      %s397 = sphi 0, %s383
      %s401 = sphi 0, %s401
      %s403 = sphi 0, %s401
      %s404 = sphi 0, %s403
      %s418 = sphi 0, %s404
      %s422 = sphi 0, %s422
      %s424 = sphi 0, %s422
      %s425 = sphi 0, %s424
      %s439 = sphi 0, %s425
      %s443 = sphi 0, %s443
      %s445 = sphi 0, %s443
      %s446 = sphi 0, %s445
      %s460 = sphi 0, %s446
      %s464 = sphi 0, %s464
      %s466 = sphi 0, %s464
      %s467 = sphi 0, %s466
      %s481 = sphi 0, %s467
      %s485 = sphi 0, %s485
      %s487 = sphi 0, %s485
      %s488 = sphi 0, %s487
      %s502 = sphi 0, %s488
      %s506 = sphi 0, %s506
      %s508 = sphi 0, %s506
      %s509 = sphi 0, %s508
      %s523 = sphi 0, %s509
      %s527 = sphi 0, %s527
      %s529 = sphi 0, %s527
      %s530 = sphi 0, %s529
      %s544 = sphi 0, %s530
      %s548 = sphi 0, %s548
      %s550 = sphi 0, %s548
      %s551 = sphi 0, %s550
      %s565 = sphi 0, %s551
      %s569 = sphi 0, %s569
      %s571 = sphi 0, %s569
      %s572 = sphi 0, %s571
      %s586 = sphi 0, %s572
      %s592 = sphi 0, %s594
      %s595 = sphi 0, %s592
      %s596 = sphi 0, %s595
      %s612 = sphi 0, %s596
      %s618 = sphi 0, %s620
      %s621 = sphi 0, %s618
      %s622 = sphi 0, %s621
      %s638 = sphi 0, %s622
      %s644 = sphi 0, %s646
      %s647 = sphi 0, %s644
      %s648 = sphi 0, %s647
      %s664 = sphi 0, %s648
    $region4: #{model_forward.1} parent=1 // loop_header_branch
      %40 = sbr.rel (%p38) target = $region8
    $region5: #{model_forward.1} parent=1 // loop_body
      %s42 = ssub.s32 %s37, 1
      %s43 = ssub.s32 %s37, 2
      %s44 = sadd.s32 %s37, 1
      %s45 = ssub.s32 %s37, %s44
      %p46 = scmp.eq.s32.totalorder %s45, 0
      %s48 = sadd.s32 %s47, 1
      %s49 = scalar_select %p46, %s47, %s48
      %p52 = pneg %p46
      %p53 = scmp.eq.s32.totalorder %s37, 1
      %p54 = por %p52, %p53
      %p55 = scmp.ne.s32.totalorder %s47, %s50
      %p56 = scmp.eq.s32.totalorder %s37, 0
      %p57 = por %p55, %p56
      %p58 = scmp.ne.s32.totalorder %s47, %s50
      %p59 = scmp.eq.s32.totalorder %s42, 1
      %p60 = por %p58, %p59
      %p61 = scmp.ne.s32.totalorder %s50, %s51
      %p62 = scmp.eq.s32.totalorder %s42, 0
      %p63 = por %p61, %p62
      %p64 = scmp.ne.s32.totalorder %s50, %s51
      %p65 = scmp.eq.s32.totalorder %s43, 1
      %p66 = por %p64, %p65
      %p68 = scmp.ne.s32.totalorder %s51, %s67
      %p69 = scmp.eq.s32.totalorder %s43, 0
      %p70 = por %p68, %p69
      %s71 = ssub.s32 %s37, %s44
      %p72 = scmp.eq.s32.totalorder %s71, 0
      %s74 = sadd.s32 %s73, 1
      %s75 = scalar_select %p72, %s73, %s74
      %p78 = pneg %p72
      %p79 = scmp.eq.s32.totalorder %s37, 1
      %p80 = por %p78, %p79
      %p81 = scmp.ne.s32.totalorder %s73, %s76
      %p82 = scmp.eq.s32.totalorder %s37, 0
      %p83 = por %p81, %p82
      %p84 = scmp.ne.s32.totalorder %s73, %s76
      %p85 = scmp.eq.s32.totalorder %s42, 1
      %p86 = por %p84, %p85
      %p87 = scmp.ne.s32.totalorder %s76, %s77
      %p88 = scmp.eq.s32.totalorder %s42, 0
      %p89 = por %p87, %p88
      %p90 = scmp.ne.s32.totalorder %s76, %s77
      %p91 = scmp.eq.s32.totalorder %s43, 1
      %p92 = por %p90, %p91
      %p94 = scmp.ne.s32.totalorder %s77, %s93
      %p95 = scmp.eq.s32.totalorder %s43, 0
      %p96 = por %p94, %p95
      %s98 = sadd.s32 %s97, 1
      %p101 = scmp.eq.s32.totalorder %s37, 1
      %p102 = scmp.ne.s32.totalorder %s97, %s99
      %p103 = scmp.eq.s32.totalorder %s37, 0
      %p104 = por %p102, %p103
      %p105 = scmp.ne.s32.totalorder %s97, %s99
      %p106 = scmp.eq.s32.totalorder %s42, 1
      %p107 = por %p105, %p106
      %p108 = scmp.ne.s32.totalorder %s99, %s100
      %p109 = scmp.eq.s32.totalorder %s42, 0
      %p110 = por %p108, %p109
      %p111 = scmp.ne.s32.totalorder %s99, %s100
      %p112 = scmp.eq.s32.totalorder %s43, 1
      %p113 = por %p111, %p112
      %p115 = scmp.ne.s32.totalorder %s100, %s114
      %p116 = scmp.eq.s32.totalorder %s43, 0
      %p117 = por %p115, %p116
      %s119 = sadd.s32 %s118, 1
      %p122 = scmp.eq.s32.totalorder %s37, 1
      %p123 = scmp.ne.s32.totalorder %s118, %s120
      %p124 = scmp.eq.s32.totalorder %s37, 0
      %p125 = por %p123, %p124
      %p126 = scmp.ne.s32.totalorder %s118, %s120
      %p127 = scmp.eq.s32.totalorder %s42, 1
      %p128 = por %p126, %p127
      %p129 = scmp.ne.s32.totalorder %s120, %s121
      %p130 = scmp.eq.s32.totalorder %s42, 0
      %p131 = por %p129, %p130
      %p132 = scmp.ne.s32.totalorder %s120, %s121
      %p133 = scmp.eq.s32.totalorder %s43, 1
      %p134 = por %p132, %p133
      %p136 = scmp.ne.s32.totalorder %s121, %s135
      %p137 = scmp.eq.s32.totalorder %s43, 0
      %p138 = por %p136, %p137
      %s139 = ssub.s32 %s37, %s44
      %p140 = scmp.eq.s32.totalorder %s139, 0
      %s142 = sadd.s32 %s141, 1
      %s143 = scalar_select %p140, %s141, %s142
      %p146 = pneg %p140
      %p147 = scmp.eq.s32.totalorder %s37, 1
      %p148 = por %p146, %p147
      %p149 = scmp.ne.s32.totalorder %s141, %s144
      %p150 = scmp.eq.s32.totalorder %s37, 0
      %p151 = por %p149, %p150
      %p152 = scmp.ne.s32.totalorder %s141, %s144
      %p153 = scmp.eq.s32.totalorder %s42, 1
      %p154 = por %p152, %p153
      %p155 = scmp.ne.s32.totalorder %s144, %s145
      %p156 = scmp.eq.s32.totalorder %s42, 0
      %p157 = por %p155, %p156
      %p158 = scmp.ne.s32.totalorder %s144, %s145
      %p159 = scmp.eq.s32.totalorder %s43, 1
      %p160 = por %p158, %p159
      %p162 = scmp.ne.s32.totalorder %s145, %s161
      %p163 = scmp.eq.s32.totalorder %s43, 0
      %p164 = por %p162, %p163
      %s165 = ssub.s32 %s37, %s44
      %p166 = scmp.eq.s32.totalorder %s165, 0
      %s168 = sadd.s32 %s167, 1
      %s169 = scalar_select %p166, %s167, %s168
      %p172 = pneg %p166
      %p173 = scmp.eq.s32.totalorder %s37, 1
      %p174 = por %p172, %p173
      %p175 = scmp.ne.s32.totalorder %s167, %s170
      %p176 = scmp.eq.s32.totalorder %s37, 0
      %p177 = por %p175, %p176
      %p178 = scmp.ne.s32.totalorder %s167, %s170
      %p179 = scmp.eq.s32.totalorder %s42, 1
      %p180 = por %p178, %p179
      %p181 = scmp.ne.s32.totalorder %s170, %s171
      %p182 = scmp.eq.s32.totalorder %s42, 0
      %p183 = por %p181, %p182
      %p184 = scmp.ne.s32.totalorder %s170, %s171
      %p185 = scmp.eq.s32.totalorder %s43, 1
      %p186 = por %p184, %p185
      %p188 = scmp.ne.s32.totalorder %s171, %s187
      %p189 = scmp.eq.s32.totalorder %s43, 0
      %p190 = por %p188, %p189
      %s192 = sadd.s32 %s191, 1
      %p195 = scmp.eq.s32.totalorder %s37, 1
      %p196 = scmp.ne.s32.totalorder %s191, %s193
      %p197 = scmp.eq.s32.totalorder %s37, 0
      %p198 = por %p196, %p197
      %p199 = scmp.ne.s32.totalorder %s191, %s193
      %p200 = scmp.eq.s32.totalorder %s42, 1
      %p201 = por %p199, %p200
      %p202 = scmp.ne.s32.totalorder %s193, %s194
      %p203 = scmp.eq.s32.totalorder %s42, 0
      %p204 = por %p202, %p203
      %p205 = scmp.ne.s32.totalorder %s193, %s194
      %p206 = scmp.eq.s32.totalorder %s43, 1
      %p207 = por %p205, %p206
      %p209 = scmp.ne.s32.totalorder %s194, %s208
      %p210 = scmp.eq.s32.totalorder %s43, 0
      %p211 = por %p209, %p210
      %s213 = sadd.s32 %s212, 1
      %p216 = scmp.eq.s32.totalorder %s37, 1
      %p217 = scmp.ne.s32.totalorder %s212, %s214
      %p218 = scmp.eq.s32.totalorder %s37, 0
      %p219 = por %p217, %p218
      %p220 = scmp.ne.s32.totalorder %s212, %s214
      %p221 = scmp.eq.s32.totalorder %s42, 1
      %p222 = por %p220, %p221
      %p223 = scmp.ne.s32.totalorder %s214, %s215
      %p224 = scmp.eq.s32.totalorder %s42, 0
      %p225 = por %p223, %p224
      %p226 = scmp.ne.s32.totalorder %s214, %s215
      %p227 = scmp.eq.s32.totalorder %s43, 1
      %p228 = por %p226, %p227
      %p230 = scmp.ne.s32.totalorder %s215, %s229
      %p231 = scmp.eq.s32.totalorder %s43, 0
      %p232 = por %p230, %p231
      %s234 = sadd.s32 %s233, 1
      %p237 = scmp.eq.s32.totalorder %s37, 1
      %p238 = scmp.ne.s32.totalorder %s233, %s235
      %p239 = scmp.eq.s32.totalorder %s37, 0
      %p240 = por %p238, %p239
      %p241 = scmp.ne.s32.totalorder %s233, %s235
      %p242 = scmp.eq.s32.totalorder %s42, 1
      %p243 = por %p241, %p242
      %p244 = scmp.ne.s32.totalorder %s235, %s236
      %p245 = scmp.eq.s32.totalorder %s42, 0
      %p246 = por %p244, %p245
      %p247 = scmp.ne.s32.totalorder %s235, %s236
      %p248 = scmp.eq.s32.totalorder %s43, 1
      %p249 = por %p247, %p248
      %p251 = scmp.ne.s32.totalorder %s236, %s250
      %p252 = scmp.eq.s32.totalorder %s43, 0
      %p253 = por %p251, %p252
      %s255 = sadd.s32 %s254, 1
      %p258 = scmp.eq.s32.totalorder %s37, 1
      %p259 = scmp.ne.s32.totalorder %s254, %s256
      %p260 = scmp.eq.s32.totalorder %s37, 0
      %p261 = por %p259, %p260
      %p262 = scmp.ne.s32.totalorder %s254, %s256
      %p263 = scmp.eq.s32.totalorder %s42, 1
      %p264 = por %p262, %p263
      %p265 = scmp.ne.s32.totalorder %s256, %s257
      %p266 = scmp.eq.s32.totalorder %s42, 0
      %p267 = por %p265, %p266
      %p268 = scmp.ne.s32.totalorder %s256, %s257
      %p269 = scmp.eq.s32.totalorder %s43, 1
      %p270 = por %p268, %p269
      %p272 = scmp.ne.s32.totalorder %s257, %s271
      %p273 = scmp.eq.s32.totalorder %s43, 0
      %p274 = por %p272, %p273
      %s276 = sadd.s32 %s275, 1
      %p279 = scmp.eq.s32.totalorder %s37, 1
      %p280 = scmp.ne.s32.totalorder %s275, %s277
      %p281 = scmp.eq.s32.totalorder %s37, 0
      %p282 = por %p280, %p281
      %p283 = scmp.ne.s32.totalorder %s275, %s277
      %p284 = scmp.eq.s32.totalorder %s42, 1
      %p285 = por %p283, %p284
      %p286 = scmp.ne.s32.totalorder %s277, %s278
      %p287 = scmp.eq.s32.totalorder %s42, 0
      %p288 = por %p286, %p287
      %p289 = scmp.ne.s32.totalorder %s277, %s278
      %p290 = scmp.eq.s32.totalorder %s43, 1
      %p291 = por %p289, %p290
      %p293 = scmp.ne.s32.totalorder %s278, %s292
      %p294 = scmp.eq.s32.totalorder %s43, 0
      %p295 = por %p293, %p294
      %s297 = sadd.s32 %s296, 1
      %p300 = scmp.eq.s32.totalorder %s37, 1
      %p301 = scmp.ne.s32.totalorder %s296, %s298
      %p302 = scmp.eq.s32.totalorder %s37, 0
      %p303 = por %p301, %p302
      %p304 = scmp.ne.s32.totalorder %s296, %s298
      %p305 = scmp.eq.s32.totalorder %s42, 1
      %p306 = por %p304, %p305
      %p307 = scmp.ne.s32.totalorder %s298, %s299
      %p308 = scmp.eq.s32.totalorder %s42, 0
      %p309 = por %p307, %p308
      %p310 = scmp.ne.s32.totalorder %s298, %s299
      %p311 = scmp.eq.s32.totalorder %s43, 1
      %p312 = por %p310, %p311
      %p314 = scmp.ne.s32.totalorder %s299, %s313
      %p315 = scmp.eq.s32.totalorder %s43, 0
      %p316 = por %p314, %p315
      %s318 = sadd.s32 %s317, 1
      %p321 = scmp.eq.s32.totalorder %s37, 1
      %p322 = scmp.ne.s32.totalorder %s317, %s319
      %p323 = scmp.eq.s32.totalorder %s37, 0
      %p324 = por %p322, %p323
      %p325 = scmp.ne.s32.totalorder %s317, %s319
      %p326 = scmp.eq.s32.totalorder %s42, 1
      %p327 = por %p325, %p326
      %p328 = scmp.ne.s32.totalorder %s319, %s320
      %p329 = scmp.eq.s32.totalorder %s42, 0
      %p330 = por %p328, %p329
      %p331 = scmp.ne.s32.totalorder %s319, %s320
      %p332 = scmp.eq.s32.totalorder %s43, 1
      %p333 = por %p331, %p332
      %p335 = scmp.ne.s32.totalorder %s320, %s334
      %p336 = scmp.eq.s32.totalorder %s43, 0
      %p337 = por %p335, %p336
      %s339 = sadd.s32 %s338, 1
      %p342 = scmp.eq.s32.totalorder %s37, 1
      %p343 = scmp.ne.s32.totalorder %s338, %s340
      %p344 = scmp.eq.s32.totalorder %s37, 0
      %p345 = por %p343, %p344
      %p346 = scmp.ne.s32.totalorder %s338, %s340
      %p347 = scmp.eq.s32.totalorder %s42, 1
      %p348 = por %p346, %p347
      %p349 = scmp.ne.s32.totalorder %s340, %s341
      %p350 = scmp.eq.s32.totalorder %s42, 0
      %p351 = por %p349, %p350
      %p352 = scmp.ne.s32.totalorder %s340, %s341
      %p353 = scmp.eq.s32.totalorder %s43, 1
      %p354 = por %p352, %p353
      %p356 = scmp.ne.s32.totalorder %s341, %s355
      %p357 = scmp.eq.s32.totalorder %s43, 0
      %p358 = por %p356, %p357
      %s360 = sadd.s32 %s359, 1
      %p363 = scmp.eq.s32.totalorder %s37, 1
      %p364 = scmp.ne.s32.totalorder %s359, %s361
      %p365 = scmp.eq.s32.totalorder %s37, 0
      %p366 = por %p364, %p365
      %p367 = scmp.ne.s32.totalorder %s359, %s361
      %p368 = scmp.eq.s32.totalorder %s42, 1
      %p369 = por %p367, %p368
      %p370 = scmp.ne.s32.totalorder %s361, %s362
      %p371 = scmp.eq.s32.totalorder %s42, 0
      %p372 = por %p370, %p371
      %p373 = scmp.ne.s32.totalorder %s361, %s362
      %p374 = scmp.eq.s32.totalorder %s43, 1
      %p375 = por %p373, %p374
      %p377 = scmp.ne.s32.totalorder %s362, %s376
      %p378 = scmp.eq.s32.totalorder %s43, 0
      %p379 = por %p377, %p378
      %s381 = sadd.s32 %s380, 1
      %p384 = scmp.eq.s32.totalorder %s37, 1
      %p385 = scmp.ne.s32.totalorder %s380, %s382
      %p386 = scmp.eq.s32.totalorder %s37, 0
      %p387 = por %p385, %p386
      %p388 = scmp.ne.s32.totalorder %s380, %s382
      %p389 = scmp.eq.s32.totalorder %s42, 1
      %p390 = por %p388, %p389
      %p391 = scmp.ne.s32.totalorder %s382, %s383
      %p392 = scmp.eq.s32.totalorder %s42, 0
      %p393 = por %p391, %p392
      %p394 = scmp.ne.s32.totalorder %s382, %s383
      %p395 = scmp.eq.s32.totalorder %s43, 1
      %p396 = por %p394, %p395
      %p398 = scmp.ne.s32.totalorder %s383, %s397
      %p399 = scmp.eq.s32.totalorder %s43, 0
      %p400 = por %p398, %p399
      %s402 = sadd.s32 %s401, 1
      %p405 = scmp.eq.s32.totalorder %s37, 1
      %p406 = scmp.ne.s32.totalorder %s401, %s403
      %p407 = scmp.eq.s32.totalorder %s37, 0
      %p408 = por %p406, %p407
      %p409 = scmp.ne.s32.totalorder %s401, %s403
      %p410 = scmp.eq.s32.totalorder %s42, 1
      %p411 = por %p409, %p410
      %p412 = scmp.ne.s32.totalorder %s403, %s404
      %p413 = scmp.eq.s32.totalorder %s42, 0
      %p414 = por %p412, %p413
      %p415 = scmp.ne.s32.totalorder %s403, %s404
      %p416 = scmp.eq.s32.totalorder %s43, 1
      %p417 = por %p415, %p416
      %p419 = scmp.ne.s32.totalorder %s404, %s418
      %p420 = scmp.eq.s32.totalorder %s43, 0
      %p421 = por %p419, %p420
      %s423 = sadd.s32 %s422, 1
      %p426 = scmp.eq.s32.totalorder %s37, 1
      %p427 = scmp.ne.s32.totalorder %s422, %s424
      %p428 = scmp.eq.s32.totalorder %s37, 0
      %p429 = por %p427, %p428
      %p430 = scmp.ne.s32.totalorder %s422, %s424
      %p431 = scmp.eq.s32.totalorder %s42, 1
      %p432 = por %p430, %p431
      %p433 = scmp.ne.s32.totalorder %s424, %s425
      %p434 = scmp.eq.s32.totalorder %s42, 0
      %p435 = por %p433, %p434
      %p436 = scmp.ne.s32.totalorder %s424, %s425
      %p437 = scmp.eq.s32.totalorder %s43, 1
      %p438 = por %p436, %p437
      %p440 = scmp.ne.s32.totalorder %s425, %s439
      %p441 = scmp.eq.s32.totalorder %s43, 0
      %p442 = por %p440, %p441
      %s444 = sadd.s32 %s443, 1
      %p447 = scmp.eq.s32.totalorder %s37, 1
      %p448 = scmp.ne.s32.totalorder %s443, %s445
      %p449 = scmp.eq.s32.totalorder %s37, 0
      %p450 = por %p448, %p449
      %p451 = scmp.ne.s32.totalorder %s443, %s445
      %p452 = scmp.eq.s32.totalorder %s42, 1
      %p453 = por %p451, %p452
      %p454 = scmp.ne.s32.totalorder %s445, %s446
      %p455 = scmp.eq.s32.totalorder %s42, 0
      %p456 = por %p454, %p455
      %p457 = scmp.ne.s32.totalorder %s445, %s446
      %p458 = scmp.eq.s32.totalorder %s43, 1
      %p459 = por %p457, %p458
      %p461 = scmp.ne.s32.totalorder %s446, %s460
      %p462 = scmp.eq.s32.totalorder %s43, 0
      %p463 = por %p461, %p462
      %s465 = sadd.s32 %s464, 1
      %p468 = scmp.eq.s32.totalorder %s37, 1
      %p469 = scmp.ne.s32.totalorder %s464, %s466
      %p470 = scmp.eq.s32.totalorder %s37, 0
      %p471 = por %p469, %p470
      %p472 = scmp.ne.s32.totalorder %s464, %s466
      %p473 = scmp.eq.s32.totalorder %s42, 1
      %p474 = por %p472, %p473
      %p475 = scmp.ne.s32.totalorder %s466, %s467
      %p476 = scmp.eq.s32.totalorder %s42, 0
      %p477 = por %p475, %p476
      %p478 = scmp.ne.s32.totalorder %s466, %s467
      %p479 = scmp.eq.s32.totalorder %s43, 1
      %p480 = por %p478, %p479
      %p482 = scmp.ne.s32.totalorder %s467, %s481
      %p483 = scmp.eq.s32.totalorder %s43, 0
      %p484 = por %p482, %p483
      %s486 = sadd.s32 %s485, 1
      %p489 = scmp.eq.s32.totalorder %s37, 1
      %p490 = scmp.ne.s32.totalorder %s485, %s487
      %p491 = scmp.eq.s32.totalorder %s37, 0
      %p492 = por %p490, %p491
      %p493 = scmp.ne.s32.totalorder %s485, %s487
      %p494 = scmp.eq.s32.totalorder %s42, 1
      %p495 = por %p493, %p494
      %p496 = scmp.ne.s32.totalorder %s487, %s488
      %p497 = scmp.eq.s32.totalorder %s42, 0
      %p498 = por %p496, %p497
      %p499 = scmp.ne.s32.totalorder %s487, %s488
      %p500 = scmp.eq.s32.totalorder %s43, 1
      %p501 = por %p499, %p500
      %p503 = scmp.ne.s32.totalorder %s488, %s502
      %p504 = scmp.eq.s32.totalorder %s43, 0
      %p505 = por %p503, %p504
      %s507 = sadd.s32 %s506, 1
      %p510 = scmp.eq.s32.totalorder %s37, 1
      %p511 = scmp.ne.s32.totalorder %s506, %s508
      %p512 = scmp.eq.s32.totalorder %s37, 0
      %p513 = por %p511, %p512
      %p514 = scmp.ne.s32.totalorder %s506, %s508
      %p515 = scmp.eq.s32.totalorder %s42, 1
      %p516 = por %p514, %p515
      %p517 = scmp.ne.s32.totalorder %s508, %s509
      %p518 = scmp.eq.s32.totalorder %s42, 0
      %p519 = por %p517, %p518
      %p520 = scmp.ne.s32.totalorder %s508, %s509
      %p521 = scmp.eq.s32.totalorder %s43, 1
      %p522 = por %p520, %p521
      %p524 = scmp.ne.s32.totalorder %s509, %s523
      %p525 = scmp.eq.s32.totalorder %s43, 0
      %p526 = por %p524, %p525
      %s528 = sadd.s32 %s527, 1
      %p531 = scmp.eq.s32.totalorder %s37, 1
      %p532 = scmp.ne.s32.totalorder %s527, %s529
      %p533 = scmp.eq.s32.totalorder %s37, 0
      %p534 = por %p532, %p533
      %p535 = scmp.ne.s32.totalorder %s527, %s529
      %p536 = scmp.eq.s32.totalorder %s42, 1
      %p537 = por %p535, %p536
      %p538 = scmp.ne.s32.totalorder %s529, %s530
      %p539 = scmp.eq.s32.totalorder %s42, 0
      %p540 = por %p538, %p539
      %p541 = scmp.ne.s32.totalorder %s529, %s530
      %p542 = scmp.eq.s32.totalorder %s43, 1
      %p543 = por %p541, %p542
      %p545 = scmp.ne.s32.totalorder %s530, %s544
      %p546 = scmp.eq.s32.totalorder %s43, 0
      %p547 = por %p545, %p546
      %s549 = sadd.s32 %s548, 1
      %p552 = scmp.eq.s32.totalorder %s37, 1
      %p553 = scmp.ne.s32.totalorder %s548, %s550
      %p554 = scmp.eq.s32.totalorder %s37, 0
      %p555 = por %p553, %p554
      %p556 = scmp.ne.s32.totalorder %s548, %s550
      %p557 = scmp.eq.s32.totalorder %s42, 1
      %p558 = por %p556, %p557
      %p559 = scmp.ne.s32.totalorder %s550, %s551
      %p560 = scmp.eq.s32.totalorder %s42, 0
      %p561 = por %p559, %p560
      %p562 = scmp.ne.s32.totalorder %s550, %s551
      %p563 = scmp.eq.s32.totalorder %s43, 1
      %p564 = por %p562, %p563
      %p566 = scmp.ne.s32.totalorder %s551, %s565
      %p567 = scmp.eq.s32.totalorder %s43, 0
      %p568 = por %p566, %p567
      %s570 = sadd.s32 %s569, 1
      %p573 = scmp.eq.s32.totalorder %s37, 1
      %p574 = scmp.ne.s32.totalorder %s569, %s571
      %p575 = scmp.eq.s32.totalorder %s37, 0
      %p576 = por %p574, %p575
      %p577 = scmp.ne.s32.totalorder %s569, %s571
      %p578 = scmp.eq.s32.totalorder %s42, 1
      %p579 = por %p577, %p578
      %p580 = scmp.ne.s32.totalorder %s571, %s572
      %p581 = scmp.eq.s32.totalorder %s42, 0
      %p582 = por %p580, %p581
      %p583 = scmp.ne.s32.totalorder %s571, %s572
      %p584 = scmp.eq.s32.totalorder %s43, 1
      %p585 = por %p583, %p584
      %p587 = scmp.ne.s32.totalorder %s572, %s586
      %p588 = scmp.eq.s32.totalorder %s43, 0
      %p589 = por %p587, %p588
      %s590 = ssub.s32 %s37, %s44
      %p591 = scmp.eq.s32.totalorder %s590, 0
      %s593 = sadd.s32 %s592, 1
      %s594 = scalar_select %p591, %s592, %s593
      %p597 = pneg %p591
      %p598 = scmp.eq.s32.totalorder %s37, 1
      %p599 = por %p597, %p598
      %p600 = scmp.ne.s32.totalorder %s592, %s595
      %p601 = scmp.eq.s32.totalorder %s37, 0
      %p602 = por %p600, %p601
      %p603 = scmp.ne.s32.totalorder %s592, %s595
      %p604 = scmp.eq.s32.totalorder %s42, 1
      %p605 = por %p603, %p604
      %p606 = scmp.ne.s32.totalorder %s595, %s596
      %p607 = scmp.eq.s32.totalorder %s42, 0
      %p608 = por %p606, %p607
      %p609 = scmp.ne.s32.totalorder %s595, %s596
      %p610 = scmp.eq.s32.totalorder %s43, 1
      %p611 = por %p609, %p610
      %p613 = scmp.ne.s32.totalorder %s596, %s612
      %p614 = scmp.eq.s32.totalorder %s43, 0
      %p615 = por %p613, %p614
      %s616 = ssub.s32 %s37, %s44
      %p617 = scmp.eq.s32.totalorder %s616, 0
      %s619 = sadd.s32 %s618, 1
      %s620 = scalar_select %p617, %s618, %s619
      %p623 = pneg %p617
      %p624 = scmp.eq.s32.totalorder %s37, 1
      %p625 = por %p623, %p624
      %p626 = scmp.ne.s32.totalorder %s618, %s621
      %p627 = scmp.eq.s32.totalorder %s37, 0
      %p628 = por %p626, %p627
      %p629 = scmp.ne.s32.totalorder %s618, %s621
      %p630 = scmp.eq.s32.totalorder %s42, 1
      %p631 = por %p629, %p630
      %p632 = scmp.ne.s32.totalorder %s621, %s622
      %p633 = scmp.eq.s32.totalorder %s42, 0
      %p634 = por %p632, %p633
      %p635 = scmp.ne.s32.totalorder %s621, %s622
      %p636 = scmp.eq.s32.totalorder %s43, 1
      %p637 = por %p635, %p636
      %p639 = scmp.ne.s32.totalorder %s622, %s638
      %p640 = scmp.eq.s32.totalorder %s43, 0
      %p641 = por %p639, %p640
      %s642 = ssub.s32 %s37, %s44
      %p643 = scmp.eq.s32.totalorder %s642, 0
      %s645 = sadd.s32 %s644, 1
      %s646 = scalar_select %p643, %s644, %s645
      %p649 = pneg %p643
      %p650 = scmp.eq.s32.totalorder %s37, 1
      %p651 = por %p649, %p650
      %p652 = scmp.ne.s32.totalorder %s644, %s647
      %p653 = scmp.eq.s32.totalorder %s37, 0
      %p654 = por %p652, %p653
      %p655 = scmp.ne.s32.totalorder %s644, %s647
      %p656 = scmp.eq.s32.totalorder %s42, 1
      %p657 = por %p655, %p656
      %p658 = scmp.ne.s32.totalorder %s647, %s648
      %p659 = scmp.eq.s32.totalorder %s42, 0
      %p660 = por %p658, %p659
      %p661 = scmp.ne.s32.totalorder %s647, %s648
      %p662 = scmp.eq.s32.totalorder %s43, 1
      %p663 = por %p661, %p662
      %p665 = scmp.ne.s32.totalorder %s648, %s664
      %p666 = scmp.eq.s32.totalorder %s43, 0
      %p667 = por %p665, %p666
      %p668 = scmp.le.s32.totalorder 1, %s37
      %p669 = scmp.lt.s32.totalorder %s37, 3
      %p670 = pnand %p668, %p669
      %p671 = pneg %p670
      // Predicated region
      $region9: #{model_forward.1} parent=5 // pred_check
        _
      $region10: #{model_forward.1} parent=5 // pred_check_branch
        %673 = sbr.rel (%p670) target = $region12
      $region11: #{model_forward.1} parent=5 // pred_region
        %s674 = ssub.s32 %s37, 1
        // Predicated region
        $region13: #{model_forward.1} parent=11 // pred_check
          %p675 = pneg %p110
        $region14: #{model_forward.1} parent=11 // pred_check_branch
          %677 = sbr.rel (%p675) target = $region16
        $region15: #{model_forward.1} parent=11 // pred_region
          _
        $region16: #{model_forward.1} parent=11 // pred_fallthru
          _
        // Predicated region
        $region17: #{model_forward.1} parent=11 // pred_check
          %p678 = pneg %p131
        $region18: #{model_forward.1} parent=11 // pred_check_branch
          %680 = sbr.rel (%p678) target = $region20
        $region19: #{model_forward.1} parent=11 // pred_region
          _
        $region20: #{model_forward.1} parent=11 // pred_fallthru
          _
        // Predicated region
        $region21: #{model_forward.1} parent=11 // pred_check
          %p681 = pneg %p204
        $region22: #{model_forward.1} parent=11 // pred_check_branch
          %683 = sbr.rel (%p681) target = $region24
        $region23: #{model_forward.1} parent=11 // pred_region
          _
        $region24: #{model_forward.1} parent=11 // pred_fallthru
          _
        // Predicated region
        $region25: #{model_forward.1} parent=11 // pred_check
          %p684 = pneg %p225
        $region26: #{model_forward.1} parent=11 // pred_check_branch
          %686 = sbr.rel (%p684) target = $region28
        $region27: #{model_forward.1} parent=11 // pred_region
          _
        $region28: #{model_forward.1} parent=11 // pred_fallthru
          _
        // Predicated region
        $region29: #{model_forward.1} parent=11 // pred_check
          %p687 = pneg %p246
        $region30: #{model_forward.1} parent=11 // pred_check_branch
          %689 = sbr.rel (%p687) target = $region32
        $region31: #{model_forward.1} parent=11 // pred_region
          _
        $region32: #{model_forward.1} parent=11 // pred_fallthru
          _
        // Predicated region
        $region33: #{model_forward.1} parent=11 // pred_check
          %p690 = pneg %p267
        $region34: #{model_forward.1} parent=11 // pred_check_branch
          %692 = sbr.rel (%p690) target = $region36
        $region35: #{model_forward.1} parent=11 // pred_region
          _
        $region36: #{model_forward.1} parent=11 // pred_fallthru
          _
        // Predicated region
        $region37: #{model_forward.1} parent=11 // pred_check
          %p693 = pneg %p288
        $region38: #{model_forward.1} parent=11 // pred_check_branch
          %695 = sbr.rel (%p693) target = $region40
        $region39: #{model_forward.1} parent=11 // pred_region
          _
        $region40: #{model_forward.1} parent=11 // pred_fallthru
          _
        // Predicated region
        $region41: #{model_forward.1} parent=11 // pred_check
          %p696 = pneg %p309
        $region42: #{model_forward.1} parent=11 // pred_check_branch
          %698 = sbr.rel (%p696) target = $region44
        $region43: #{model_forward.1} parent=11 // pred_region
          _
        $region44: #{model_forward.1} parent=11 // pred_fallthru
          _
        // Predicated region
        $region45: #{model_forward.1} parent=11 // pred_check
          %p699 = pneg %p330
        $region46: #{model_forward.1} parent=11 // pred_check_branch
          %701 = sbr.rel (%p699) target = $region48
        $region47: #{model_forward.1} parent=11 // pred_region
          _
        $region48: #{model_forward.1} parent=11 // pred_fallthru
          _
        // Predicated region
        $region49: #{model_forward.1} parent=11 // pred_check
          %p702 = pneg %p351
        $region50: #{model_forward.1} parent=11 // pred_check_branch
          %704 = sbr.rel (%p702) target = $region52
        $region51: #{model_forward.1} parent=11 // pred_region
          _
        $region52: #{model_forward.1} parent=11 // pred_fallthru
          _
        // Predicated region
        $region53: #{model_forward.1} parent=11 // pred_check
          %p705 = pneg %p372
        $region54: #{model_forward.1} parent=11 // pred_check_branch
          %707 = sbr.rel (%p705) target = $region56
        $region55: #{model_forward.1} parent=11 // pred_region
          _
        $region56: #{model_forward.1} parent=11 // pred_fallthru
          _
        // Predicated region
        $region57: #{model_forward.1} parent=11 // pred_check
          %p708 = pneg %p393
        $region58: #{model_forward.1} parent=11 // pred_check_branch
          %710 = sbr.rel (%p708) target = $region60
        $region59: #{model_forward.1} parent=11 // pred_region
          _
        $region60: #{model_forward.1} parent=11 // pred_fallthru
          _
        // Predicated region
        $region61: #{model_forward.1} parent=11 // pred_check
          %p711 = pneg %p414
        $region62: #{model_forward.1} parent=11 // pred_check_branch
          %713 = sbr.rel (%p711) target = $region64
        $region63: #{model_forward.1} parent=11 // pred_region
          _
        $region64: #{model_forward.1} parent=11 // pred_fallthru
          _
        // Predicated region
        $region65: #{model_forward.1} parent=11 // pred_check
          %p714 = pneg %p435
        $region66: #{model_forward.1} parent=11 // pred_check_branch
          %716 = sbr.rel (%p714) target = $region68
        $region67: #{model_forward.1} parent=11 // pred_region
          _
        $region68: #{model_forward.1} parent=11 // pred_fallthru
          _
        // Predicated region
        $region69: #{model_forward.1} parent=11 // pred_check
          %p717 = pneg %p456
        $region70: #{model_forward.1} parent=11 // pred_check_branch
          %719 = sbr.rel (%p717) target = $region72
        $region71: #{model_forward.1} parent=11 // pred_region
          _
        $region72: #{model_forward.1} parent=11 // pred_fallthru
          _
        // Predicated region
        $region73: #{model_forward.1} parent=11 // pred_check
          %p720 = pneg %p477
        $region74: #{model_forward.1} parent=11 // pred_check_branch
          %722 = sbr.rel (%p720) target = $region76
        $region75: #{model_forward.1} parent=11 // pred_region
          _
        $region76: #{model_forward.1} parent=11 // pred_fallthru
          _
        // Predicated region
        $region77: #{model_forward.1} parent=11 // pred_check
          %p723 = pneg %p498
        $region78: #{model_forward.1} parent=11 // pred_check_branch
          %725 = sbr.rel (%p723) target = $region80
        $region79: #{model_forward.1} parent=11 // pred_region
          _
        $region80: #{model_forward.1} parent=11 // pred_fallthru
          _
        // Predicated region
        $region81: #{model_forward.1} parent=11 // pred_check
          %p726 = pneg %p519
        $region82: #{model_forward.1} parent=11 // pred_check_branch
          %728 = sbr.rel (%p726) target = $region84
        $region83: #{model_forward.1} parent=11 // pred_region
          _
        $region84: #{model_forward.1} parent=11 // pred_fallthru
          _
        // Predicated region
        $region85: #{model_forward.1} parent=11 // pred_check
          %p729 = pneg %p540
        $region86: #{model_forward.1} parent=11 // pred_check_branch
          %731 = sbr.rel (%p729) target = $region88
        $region87: #{model_forward.1} parent=11 // pred_region
          _
        $region88: #{model_forward.1} parent=11 // pred_fallthru
          _
        // Predicated region
        $region89: #{model_forward.1} parent=11 // pred_check
          %p732 = pneg %p561
        $region90: #{model_forward.1} parent=11 // pred_check_branch
          %734 = sbr.rel (%p732) target = $region92
        $region91: #{model_forward.1} parent=11 // pred_region
          _
        $region92: #{model_forward.1} parent=11 // pred_fallthru
          _
        // Predicated region
        $region93: #{model_forward.1} parent=11 // pred_check
          %p735 = pneg %p582
        $region94: #{model_forward.1} parent=11 // pred_check_branch
          %737 = sbr.rel (%p735) target = $region96
        $region95: #{model_forward.1} parent=11 // pred_region
          _
        $region96: #{model_forward.1} parent=11 // pred_fallthru
          _
      $region12: #{model_forward.1} parent=5 // pred_fallthru
        _
      %p738 = scmp.lt.s32.totalorder %s37, 2
      // Predicated region
      $region97: #{model_forward.1} parent=5 // pred_check
        %p739 = pneg %p738
      $region98: #{model_forward.1} parent=5 // pred_check_branch
        %741 = sbr.rel (%p739) target = $region100
      $region99: #{model_forward.1} parent=5 // pred_region
        // Predicated region
        $region101: #{model_forward.1} parent=99 // pred_check
          %p742 = pneg %p57
        $region102: #{model_forward.1} parent=99 // pred_check_branch
          %744 = sbr.rel (%p742) target = $region104
        $region103: #{model_forward.1} parent=99 // pred_region
          %p745 = scmp.lt.s32.totalorder %s37, 1
          %s746 = scalar_select %p745, %s37, 1
          %s747 = smul.addr %s746, 8
          %s748 = scalar_lea.vmem %s0, %s747
        $region104: #{model_forward.1} parent=99 // pred_fallthru
          _
        // Predicated region
        $region105: #{model_forward.1} parent=99 // pred_check
          %p749 = pneg %p83
        $region106: #{model_forward.1} parent=99 // pred_check_branch
          %751 = sbr.rel (%p749) target = $region108
        $region107: #{model_forward.1} parent=99 // pred_region
          %p752 = scmp.lt.s32.totalorder %s37, 1
          %s753 = scalar_select %p752, %s37, 1
          %s754 = smul.addr %s753, 8
          %s755 = scalar_lea.vmem %s1, %s754
        $region108: #{model_forward.1} parent=99 // pred_fallthru
          _
        // Predicated region
        $region109: #{model_forward.1} parent=99 // pred_check
          %p756 = pneg %p151
        $region110: #{model_forward.1} parent=99 // pred_check_branch
          %758 = sbr.rel (%p756) target = $region112
        $region111: #{model_forward.1} parent=99 // pred_region
          %p759 = scmp.lt.s32.totalorder %s37, 1
          %s760 = scalar_select %p759, %s37, 1
          %s761 = scalar_lea.vmem %s4, %s760
        $region112: #{model_forward.1} parent=99 // pred_fallthru
          _
        // Predicated region
        $region113: #{model_forward.1} parent=99 // pred_check
          %p762 = pneg %p177
        $region114: #{model_forward.1} parent=99 // pred_check_branch
          %764 = sbr.rel (%p762) target = $region116
        $region115: #{model_forward.1} parent=99 // pred_region
          %p765 = scmp.lt.s32.totalorder %s37, 1
          %s766 = scalar_select %p765, %s37, 1
          %s767 = smul.addr %s766, 8
          %s768 = scalar_lea.vmem %s5, %s767
        $region116: #{model_forward.1} parent=99 // pred_fallthru
          _
      $region100: #{model_forward.1} parent=5 // pred_fallthru
        _
      %p769 = scmp.le.s32.totalorder 1, %s37
      %p770 = scmp.lt.s32.totalorder %s37, 3
      %p771 = pnand %p769, %p770
      %p772 = pneg %p771
      // Predicated region
      $region117: #{model_forward.1} parent=5 // pred_check
        _
      $region118: #{model_forward.1} parent=5 // pred_check_branch
        %774 = sbr.rel (%p771) target = $region120
      $region119: #{model_forward.1} parent=5 // pred_region
        %s775 = ssub.s32 %s37, 1
        %p776 = scmp.lt.s32.totalorder %s42, 1
        %s777 = scalar_select %p776, %s42, 1
        %s778 = smul.addr %s777, 8
        %s779 = scalar_lea.vmem %s0, %s778
        %p780 = pneg %p63
        %p781 = pneg %p60
        %p782 = scmp.lt.s32.totalorder %s42, 1
        %s783 = scalar_select %p782, %s42, 1
        %s784 = smul.addr %s783, 8
        %s785 = scalar_lea.vmem %s1, %s784
        %p786 = pneg %p89
        %p787 = pneg %p86
        %p788 = pneg %p110
        %p789 = pneg %p107
        %p790 = pneg %p131
        %p791 = pneg %p128
        %p792 = scmp.lt.s32.totalorder %s42, 1
        %s793 = scalar_select %p792, %s42, 1
        %s794 = scalar_lea.vmem %s4, %s793
        %p795 = pneg %p157
        %p796 = pneg %p154
        %p797 = scmp.lt.s32.totalorder %s42, 1
        %s798 = scalar_select %p797, %s42, 1
        %s799 = smul.addr %s798, 8
        %s800 = scalar_lea.vmem %s5, %s799
        %p801 = pneg %p183
        %p802 = pneg %p180
        %p803 = pneg %p204
        %p804 = pneg %p201
        %p805 = pneg %p225
        %p806 = pneg %p222
        %p807 = pneg %p246
        %p808 = pneg %p243
        %p809 = pneg %p267
        %p810 = pneg %p264
        %p811 = pneg %p288
        %p812 = pneg %p285
        %p813 = pneg %p309
        %p814 = pneg %p306
        %p815 = pneg %p330
        %p816 = pneg %p327
        %p817 = pneg %p351
        %p818 = pneg %p348
        %p819 = pneg %p372
        %p820 = pneg %p369
        %p821 = pneg %p393
        %p822 = pneg %p390
        %p823 = pneg %p414
        %p824 = pneg %p411
        %p825 = pneg %p435
        %p826 = pneg %p432
        %p827 = pneg %p456
        %p828 = pneg %p453
        %p829 = pneg %p477
        %p830 = pneg %p474
        %p831 = pneg %p498
        %p832 = pneg %p495
        %p833 = pneg %p519
        %p834 = pneg %p516
        %p835 = pneg %p540
        %p836 = pneg %p537
        %p837 = pneg %p561
        %p838 = pneg %p558
        %p839 = pneg %p582
        %p840 = pneg %p579
        %p841 = pneg %p608
        %p842 = pneg %p605
        %s843 = sand.u32 %s595, 1
        %s844 = scalar_lea.sflag [#allocation3], %s843
        %s845 = sand.u32 %s595, 1
        %s846 = smul.addr %s845, 8
        %s847 = scalar_lea.vmem [#allocation2], %s846
        %p848 = pneg %p634
        %p849 = pneg %p631
        %p850 = scmp.lt.s32.totalorder %s42, 1
        %s851 = scalar_select %p850, %s42, 1
        %s852 = scalar_lea.vmem %s26, %s851
        %p853 = pneg %p660
        %p854 = pneg %p657
        %p855 = scmp.lt.s32.totalorder %s42, 1
        %s856 = scalar_select %p855, %s42, 1
        %s857 = scalar_lea.vmem %s27, %s856
        %p858 = scmp.lt.s32.totalorder %s42, 1
        %s859 = scalar_select %p858, %s42, 1
        %s860 = smul.addr %s859, 8
        %s861 = scalar_lea.vmem %s0, %s860
        %p862 = scmp.lt.s32.totalorder %s42, 1
        %s863 = scalar_select %p862, %s42, 1
        %s864 = smul.addr %s863, 8
        %s865 = scalar_lea.vmem %s1, %s864
        %p866 = scmp.lt.s32.totalorder %s42, 1
        %s867 = scalar_select %p866, %s42, 1
        %s868 = scalar_lea.vmem %s4, %s867
        %p869 = scmp.lt.s32.totalorder %s42, 1
        %s870 = scalar_select %p869, %s42, 1
        %s871 = smul.addr %s870, 8
        %s872 = scalar_lea.vmem %s5, %s871
        %p873 = scmp.lt.s32.totalorder %s42, 1
        %s874 = scalar_select %p873, %s42, 1
        %s875 = scalar_lea.vmem %s26, %s874
        %p876 = scmp.lt.s32.totalorder %s42, 1
        %s877 = scalar_select %p876, %s42, 1
        %s878 = scalar_lea.vmem %s27, %s877
        %v879 = vld [vmem:[%s868] sm:$0x1]
        %v880 = vld [vmem:[%s861] sm:$0xff]
        %v881 = vld [vmem:[%s6] sm:$0x1]
        %v882 = vmul.f32 %v880, %v880
        %vm883 = vcmask 261120
        %v884 = vsel %vm883, %v882, 0.0
        %885 = vadd.xlane.f32.xlu0 %v884
        %v886 = vpop.xlane.xlu0 %885
        %v887 = vrcp.pop 32.0
        %v888 = vmul.f32 %v886, %v887
        %v889 = vadd.f32 %v888, 1e-06
        %v890 = vrsqrt.pop %v889
        %v891 = vmul.f32 %v880, %v890
        %v893 = vlaneseq
        %v894 = vshrl.u32 %v893, 7
        %v895 = vsub.s32 0, %v894
        %v896 = vrot.slane %v881, %v895
        %v898 = vmul.f32 %v891, %v896
        %v899 = vld [vmem:[%s7] sm:$0xff]
        %v900 = vld [vmem:[%s7 + $0x8] sm:$0xff]
        %v901 = vld [vmem:[%s7 + $0x10] sm:$0xff]
        %v902 = vld [vmem:[%s7 + $0x18] sm:$0xff]
        %v904 = vsel %vm883, %v898, 0
        %906 = vmatprep.subr.mxu0 0.0
        %907 = vmatpush1.msra.mxu0 %v899
        %908 = vmatprep.subr.mxu0 0.0
        %909 = vmatpush1.msra.mxu0 %v900
        %910 = vmatprep.subr.mxu0 0.0
        %911 = vmatpush1.msra.mxu0 %v901
        %912 = vmatprep.subr.mxu0 0.0
        %913 = vmatpush1.msra.mxu0 %v902
        %914 = vmatprep.subr.mxu0 0.0
        %915 = vmatpush1.msra.mxu0 0.0
        %916 = vmatprep.subr.mxu0 0.0
        %917 = vmatpush1.msra.mxu0 0.0
        %918 = vmatprep.subr.mxu0 0.0
        %919 = vmatpush1.msra.mxu0 0.0
        %920 = vmatprep.subr.mxu0 0.0
        %921 = vmatpush1.msra.mxu0 0.0
        %922 = vmatprep.subr.mxu0 0.0
        %923 = vmatpush1.msra.mxu0 0.0
        %924 = vmatprep.subr.mxu0 0.0
        %925 = vmatpush1.msra.mxu0 0.0
        %926 = vmatprep.subr.mxu0 0.0
        %927 = vmatpush1.msra.mxu0 0.0
        %928 = vmatprep.subr.mxu0 0.0
        %929 = vmatpush1.msra.mxu0 0.0
        %930 = vmatprep.subr.mxu0 0.0
        %931 = vmatpush1.msra.mxu0 0.0
        %932 = vmatprep.subr.mxu0 0.0
        %933 = vmatpush1.msra.mxu0 0.0
        %934 = vmatprep.subr.mxu0 0.0
        %935 = vmatpush1.msra.mxu0 0.0
        %936 = vmatprep.subr.mxu0 0.0
        %937 = vmatpush1.msra.mxu0 0.0
        %938 = vmatprep.subr.mxu0 0.0
        %939 = vmatpush1.msra.mxu0 0.0
        %940 = vmatprep.subr.mxu0 0.0
        %941 = vmatpush1.msra.mxu0 0.0
        %942 = vmatprep.subr.mxu0 0.0
        %943 = vmatpush1.msra.mxu0 0.0
        %944 = vmatprep.subr.mxu0 0.0
        %945 = vmatpush1.msra.mxu0 0.0
        %946 = vmatprep.subr.mxu0 0.0
        %947 = vmatpush1.msra.mxu0 0.0
        %948 = vmatprep.subr.mxu0 0.0
        %949 = vmatpush1.msra.mxu0 0.0
        %950 = vmatprep.subr.mxu0 0.0
        %951 = vmatpush1.msra.mxu0 0.0
        %952 = vmatprep.subr.mxu0 0.0
        %953 = vmatpush1.msra.mxu0 0.0
        %954 = vmatprep.subr.mxu0 0.0
        %955 = vmatpush1.msra.mxu0 0.0
        %956 = vmatprep.subr.mxu0 0.0
        %957 = vmatpush1.msra.mxu0 0.0
        %958 = vmatprep.subr.mxu0 0.0
        %959 = vmatpush1.msra.mxu0 0.0
        %960 = vmatprep.subr.mxu0 0.0
        %961 = vmatpush1.msra.mxu0 0.0
        %962 = vmatprep.subr.mxu0 0.0
        %963 = vmatpush1.msra.mxu0 0.0
        %964 = vmatprep.subr.mxu0 0.0
        %965 = vmatpush1.msra.mxu0 0.0
        %966 = vmatprep.subr.mxu0 0.0
        %967 = vmatpush1.msra.mxu0 0.0
        %968 = vmatprep.subr.mxu0 0.0
        %969 = vmatpush1.msra.mxu0 0.0
        %970 = vmatprep.mubr.f32.mxu0 0.0
        %971 = vmatmul.mubr.f32.gmra.mrb[0].mxu0 %v904
        %v972 = vpop.f32.mrb[0].mxu0
        %v973 = vadd.f32 0.0, %v972
        %v974 = vpop.f32.mrb[0].mxu0
        %975 = vdwg.mxu0
        %v976 = vld [vmem:[%s8] sm:$0xff]
        %v977 = vld [vmem:[%s8 + $0x8] sm:$0xff]
        %v978 = vld [vmem:[%s8 + $0x10] sm:$0xff]
        %v979 = vld [vmem:[%s8 + $0x18] sm:$0xff]
        %v980 = vld [vmem:[%s2] sm:$0xff]
        %982 = vrot.lane.b32.xlu0 %v973, 96
        %v983 = vpop.permute.xlu0 %982
        %vm984 = vcmask 64512
        %v985 = vsel %vm984, %v973, 0
        %v987 = vsel %vm984, %v983, 0
        %989 = vmatprep.subr.mxu0 0.0
        %990 = vmatpush1.xpose.msra.mxu0 %v987
        %991 = vmatprep.subr.mxu0 0.0
        %992 = vmatpush1.xpose.msra.mxu0 0.0
        %993 = vmatprep.subr.mxu0 0.0
        %994 = vmatpush1.xpose.msra.mxu0 0.0
        %995 = vmatprep.subr.mxu0 0.0
        %996 = vmatpush1.xpose.msra.mxu0 0.0
        %997 = vmatprep.subr.mxu0 0.0
        %998 = vmatpush1.xpose.msra.mxu0 0.0
        %999 = vmatprep.subr.mxu0 0.0
        %1000 = vmatpush1.xpose.msra.mxu0 0.0
        %1001 = vmatprep.subr.mxu0 0.0
        %1002 = vmatpush1.xpose.msra.mxu0 0.0
        %1003 = vmatprep.subr.mxu0 0.0
        %1004 = vmatpush1.xpose.msra.mxu0 0.0
        %1005 = vmatprep.subr.mxu0 0.0
        %1006 = vmatpush1.xpose.msra.mxu0 0.0
        %1007 = vmatprep.subr.mxu0 0.0
        %1008 = vmatpush1.xpose.msra.mxu0 0.0
        %1009 = vmatprep.subr.mxu0 0.0
        %1010 = vmatpush1.xpose.msra.mxu0 0.0
        %1011 = vmatprep.subr.mxu0 0.0
        %1012 = vmatpush1.xpose.msra.mxu0 0.0
        %1013 = vmatprep.subr.mxu0 0.0
        %1014 = vmatpush1.xpose.msra.mxu0 0.0
        %1015 = vmatprep.subr.mxu0 0.0
        %1016 = vmatpush1.xpose.msra.mxu0 0.0
        %1017 = vmatprep.subr.mxu0 0.0
        %1018 = vmatpush1.xpose.msra.mxu0 0.0
        %1019 = vmatprep.subr.mxu0 0.0
        %1020 = vmatpush1.xpose.msra.mxu0 0.0
        %1021 = vmatprep.subr.mxu0 0.0
        %1022 = vmatpush1.xpose.msra.mxu0 0.0
        %1023 = vmatprep.subr.mxu0 0.0
        %1024 = vmatpush1.xpose.msra.mxu0 0.0
        %1025 = vmatprep.subr.mxu0 0.0
        %1026 = vmatpush1.xpose.msra.mxu0 0.0
        %1027 = vmatprep.subr.mxu0 0.0
        %1028 = vmatpush1.xpose.msra.mxu0 0.0
        %1029 = vmatprep.subr.mxu0 0.0
        %1030 = vmatpush1.xpose.msra.mxu0 0.0
        %1031 = vmatprep.subr.mxu0 0.0
        %1032 = vmatpush1.xpose.msra.mxu0 0.0
        %1033 = vmatprep.subr.mxu0 0.0
        %1034 = vmatpush1.xpose.msra.mxu0 0.0
        %1035 = vmatprep.subr.mxu0 0.0
        %1036 = vmatpush1.xpose.msra.mxu0 0.0
        %1037 = vmatprep.subr.mxu0 0.0
        %1038 = vmatpush1.xpose.msra.mxu0 0.0
        %1039 = vmatprep.subr.mxu0 0.0
        %1040 = vmatpush1.xpose.msra.mxu0 0.0
        %1041 = vmatprep.subr.mxu0 0.0
        %1042 = vmatpush1.xpose.msra.mxu0 0.0
        %1043 = vmatprep.subr.mxu0 0.0
        %1044 = vmatpush1.xpose.msra.mxu0 0.0
        %1045 = vmatprep.subr.mxu0 0.0
        %1046 = vmatpush1.xpose.msra.mxu0 0.0
        %1047 = vmatprep.subr.mxu0 0.0
        %1048 = vmatpush1.xpose.msra.mxu0 0.0
        %1049 = vmatprep.subr.mxu0 0.0
        %1050 = vmatpush1.xpose.msra.mxu0 0.0
        %1051 = vmatprep.subr.mxu0 0.0
        %1052 = vmatpush1.xpose.msra.mxu0 0.0
        %1053 = vmatprep.mubr.f32.mxu0 0.0
        %1054 = vmatmul.mubr.f32.gmra.mrb[0].mxu0 %v985
        %v1055 = vpop.f32.mrb[0].mxu0
        %v1056 = vadd.f32 %v980, %v1055
        %v1057 = vpop.f32.mrb[0].mxu0
        %1058 = vdwg.mxu0
        %v1060 = vlaneseq
        %v1061 = vshrl.u32 %v1060, 7
        %v1062 = vsub.s32 0, %v1061
        %v1063 = vrot.slane %v879, %v1062
        %v1065 = vadd.f32 %v1056, %v1063
        %v1066 = vsel %vm984, %v1065, -inf
        %1067 = vmax.xlane.f32.xlu0 %v1066
        %v1068 = vpop.xlane.xlu0 %1067
        %v1069 = vsub.f32 %v1065, %v1068
        %v1070 = vmul.f32 %v1069, 1.442695
        %v1071 = vpow.pop %v1070
        %v1072 = vsel %vm984, %v1071, 0.0
        %1073 = vadd.xlane.f32.xlu0 %v1072
        %v1074 = vpop.xlane.xlu0 %1073
        %v1075 = vrcp.pop %v1074
        %v1076 = vmul.f32 %v1071, %v1075
        %1077 = vrot.lane.b32.xlu0 %v973, 64
        %v1078 = vpop.permute.xlu0 %1077
        %v1081 = vsel %vm984, %v1076, 0
        %1083 = vmatprep.subr.mxu0 0.0
        %1084 = vmatpush1.msra.mxu0 %v1078
        %1085 = vmatprep.subr.mxu0 0.0
        %1086 = vmatpush1.msra.mxu0 0.0
        %1087 = vmatprep.subr.mxu0 0.0
        %1088 = vmatpush1.msra.mxu0 0.0
        %1089 = vmatprep.subr.mxu0 0.0
        %1090 = vmatpush1.msra.mxu0 0.0
        %1091 = vmatprep.subr.mxu0 0.0
        %1092 = vmatpush1.msra.mxu0 0.0
        %1093 = vmatprep.subr.mxu0 0.0
        %1094 = vmatpush1.msra.mxu0 0.0
        %1095 = vmatprep.subr.mxu0 0.0
        %1096 = vmatpush1.msra.mxu0 0.0
        %1097 = vmatprep.subr.mxu0 0.0
        %1098 = vmatpush1.msra.mxu0 0.0
        %1099 = vmatprep.subr.mxu0 0.0
        %1100 = vmatpush1.msra.mxu0 0.0
        %1101 = vmatprep.subr.mxu0 0.0
        %1102 = vmatpush1.msra.mxu0 0.0
        %1103 = vmatprep.subr.mxu0 0.0
        %1104 = vmatpush1.msra.mxu0 0.0
        %1105 = vmatprep.subr.mxu0 0.0
        %1106 = vmatpush1.msra.mxu0 0.0
        %1107 = vmatprep.subr.mxu0 0.0
        %1108 = vmatpush1.msra.mxu0 0.0
        %1109 = vmatprep.subr.mxu0 0.0
        %1110 = vmatpush1.msra.mxu0 0.0
        %1111 = vmatprep.subr.mxu0 0.0
        %1112 = vmatpush1.msra.mxu0 0.0
        %1113 = vmatprep.subr.mxu0 0.0
        %1114 = vmatpush1.msra.mxu0 0.0
        %1115 = vmatprep.subr.mxu0 0.0
        %1116 = vmatpush1.msra.mxu0 0.0
        %1117 = vmatprep.subr.mxu0 0.0
        %1118 = vmatpush1.msra.mxu0 0.0
        %1119 = vmatprep.subr.mxu0 0.0
        %1120 = vmatpush1.msra.mxu0 0.0
        %1121 = vmatprep.subr.mxu0 0.0
        %1122 = vmatpush1.msra.mxu0 0.0
        %1123 = vmatprep.subr.mxu0 0.0
        %1124 = vmatpush1.msra.mxu0 0.0
        %1125 = vmatprep.subr.mxu0 0.0
        %1126 = vmatpush1.msra.mxu0 0.0
        %1127 = vmatprep.subr.mxu0 0.0
        %1128 = vmatpush1.msra.mxu0 0.0
        %1129 = vmatprep.subr.mxu0 0.0
        %1130 = vmatpush1.msra.mxu0 0.0
        %1131 = vmatprep.subr.mxu0 0.0
        %1132 = vmatpush1.msra.mxu0 0.0
        %1133 = vmatprep.subr.mxu0 0.0
        %1134 = vmatpush1.msra.mxu0 0.0
        %1135 = vmatprep.subr.mxu0 0.0
        %1136 = vmatpush1.msra.mxu0 0.0
        %1137 = vmatprep.subr.mxu0 0.0
        %1138 = vmatpush1.msra.mxu0 0.0
        %1139 = vmatprep.subr.mxu0 0.0
        %1140 = vmatpush1.msra.mxu0 0.0
        %1141 = vmatprep.subr.mxu0 0.0
        %1142 = vmatpush1.msra.mxu0 0.0
        %1143 = vmatprep.subr.mxu0 0.0
        %1144 = vmatpush1.msra.mxu0 0.0
        %1145 = vmatprep.subr.mxu0 0.0
        %1146 = vmatpush1.msra.mxu0 0.0
        %1147 = vmatprep.mubr.f32.mxu0 0.0
        %1148 = vmatmul.mubr.f32.gmra.mrb[0].mxu0 %v1081
        %v1149 = vpop.f32.mrb[0].mxu0
        %v1150 = vadd.f32 0.0, %v1149
        %v1151 = vpop.f32.mrb[0].mxu0
        %1152 = vdwg.mxu0
        %s1153 = scalar_lea.vmem %s2, 8
        %v1154 = vld [vmem:[%s1153] sm:$0xff]
        %1155 = vrot.lane.b32.xlu0 %v973, 120
        %v1156 = vpop.permute.xlu0 %1155
        %1157 = vrot.lane.b32.xlu0 %v973, 88
        %v1158 = vpop.permute.xlu0 %1157
        %v1159 = vsel %vm984, %v1156, 0
        %v1161 = vsel %vm984, %v1158, 0
        %1163 = vmatprep.subr.mxu0 0.0
        %1164 = vmatpush1.xpose.msra.mxu0 %v1161
        %1165 = vmatprep.subr.mxu0 0.0
        %1166 = vmatpush1.xpose.msra.mxu0 0.0
        %1167 = vmatprep.subr.mxu0 0.0
        %1168 = vmatpush1.xpose.msra.mxu0 0.0
        %1169 = vmatprep.subr.mxu0 0.0
        %1170 = vmatpush1.xpose.msra.mxu0 0.0
        %1171 = vmatprep.subr.mxu0 0.0
        %1172 = vmatpush1.xpose.msra.mxu0 0.0
        %1173 = vmatprep.subr.mxu0 0.0
        %1174 = vmatpush1.xpose.msra.mxu0 0.0
        %1175 = vmatprep.subr.mxu0 0.0
        %1176 = vmatpush1.xpose.msra.mxu0 0.0
        %1177 = vmatprep.subr.mxu0 0.0
        %1178 = vmatpush1.xpose.msra.mxu0 0.0
        %1179 = vmatprep.subr.mxu0 0.0
        %1180 = vmatpush1.xpose.msra.mxu0 0.0
        %1181 = vmatprep.subr.mxu0 0.0
        %1182 = vmatpush1.xpose.msra.mxu0 0.0
        %1183 = vmatprep.subr.mxu0 0.0
        %1184 = vmatpush1.xpose.msra.mxu0 0.0
        %1185 = vmatprep.subr.mxu0 0.0
        %1186 = vmatpush1.xpose.msra.mxu0 0.0
        %1187 = vmatprep.subr.mxu0 0.0
        %1188 = vmatpush1.xpose.msra.mxu0 0.0
        %1189 = vmatprep.subr.mxu0 0.0
        %1190 = vmatpush1.xpose.msra.mxu0 0.0
        %1191 = vmatprep.subr.mxu0 0.0
        %1192 = vmatpush1.xpose.msra.mxu0 0.0
        %1193 = vmatprep.subr.mxu0 0.0
        %1194 = vmatpush1.xpose.msra.mxu0 0.0
        %1195 = vmatprep.subr.mxu0 0.0
        %1196 = vmatpush1.xpose.msra.mxu0 0.0
        %1197 = vmatprep.subr.mxu0 0.0
        %1198 = vmatpush1.xpose.msra.mxu0 0.0
        %1199 = vmatprep.subr.mxu0 0.0
        %1200 = vmatpush1.xpose.msra.mxu0 0.0
        %1201 = vmatprep.subr.mxu0 0.0
        %1202 = vmatpush1.xpose.msra.mxu0 0.0
        %1203 = vmatprep.subr.mxu0 0.0
        %1204 = vmatpush1.xpose.msra.mxu0 0.0
        %1205 = vmatprep.subr.mxu0 0.0
        %1206 = vmatpush1.xpose.msra.mxu0 0.0
        %1207 = vmatprep.subr.mxu0 0.0
        %1208 = vmatpush1.xpose.msra.mxu0 0.0
        %1209 = vmatprep.subr.mxu0 0.0
        %1210 = vmatpush1.xpose.msra.mxu0 0.0
        %1211 = vmatprep.subr.mxu0 0.0
        %1212 = vmatpush1.xpose.msra.mxu0 0.0
        %1213 = vmatprep.subr.mxu0 0.0
        %1214 = vmatpush1.xpose.msra.mxu0 0.0
        %1215 = vmatprep.subr.mxu0 0.0
        %1216 = vmatpush1.xpose.msra.mxu0 0.0
        %1217 = vmatprep.subr.mxu0 0.0
        %1218 = vmatpush1.xpose.msra.mxu0 0.0
        %1219 = vmatprep.subr.mxu0 0.0
        %1220 = vmatpush1.xpose.msra.mxu0 0.0
        %1221 = vmatprep.subr.mxu0 0.0
        %1222 = vmatpush1.xpose.msra.mxu0 0.0
        %1223 = vmatprep.subr.mxu0 0.0
        %1224 = vmatpush1.xpose.msra.mxu0 0.0
        %1225 = vmatprep.subr.mxu0 0.0
        %1226 = vmatpush1.xpose.msra.mxu0 0.0
        %1227 = vmatprep.mubr.f32.mxu0 0.0
        %1228 = vmatmul.mubr.f32.gmra.mrb[0].mxu0 %v1159
        %v1229 = vpop.f32.mrb[0].mxu0
        %v1230 = vadd.f32 %v1154, %v1229
        %v1231 = vpop.f32.mrb[0].mxu0
        %1232 = vdwg.mxu0
        %v1233 = vadd.f32 %v1230, %v1063
        %v1234 = vsel %vm984, %v1233, -inf
        %1235 = vmax.xlane.f32.xlu0 %v1234
        %v1236 = vpop.xlane.xlu0 %1235
        %v1237 = vsub.f32 %v1233, %v1236
        %v1238 = vmul.f32 %v1237, 1.442695
        %v1239 = vpow.pop %v1238
        %v1240 = vsel %vm984, %v1239, 0.0
        %1241 = vadd.xlane.f32.xlu0 %v1240
        %v1242 = vpop.xlane.xlu0 %1241
        %v1243 = vrcp.pop %v1242
        %v1244 = vmul.f32 %v1239, %v1243
        %1245 = vrot.lane.b32.xlu0 %v973, 56
        %v1246 = vpop.permute.xlu0 %1245
        %v1249 = vsel %vm984, %v1244, 0
        %1251 = vmatprep.subr.mxu0 0.0
        %1252 = vmatpush1.msra.mxu0 %v1246
        %1253 = vmatprep.subr.mxu0 0.0
        %1254 = vmatpush1.msra.mxu0 0.0
        %1255 = vmatprep.subr.mxu0 0.0
        %1256 = vmatpush1.msra.mxu0 0.0
        %1257 = vmatprep.subr.mxu0 0.0
        %1258 = vmatpush1.msra.mxu0 0.0
        %1259 = vmatprep.subr.mxu0 0.0
        %1260 = vmatpush1.msra.mxu0 0.0
        %1261 = vmatprep.subr.mxu0 0.0
        %1262 = vmatpush1.msra.mxu0 0.0
        %1263 = vmatprep.subr.mxu0 0.0
        %1264 = vmatpush1.msra.mxu0 0.0
        %1265 = vmatprep.subr.mxu0 0.0
        %1266 = vmatpush1.msra.mxu0 0.0
        %1267 = vmatprep.subr.mxu0 0.0
        %1268 = vmatpush1.msra.mxu0 0.0
        %1269 = vmatprep.subr.mxu0 0.0
        %1270 = vmatpush1.msra.mxu0 0.0
        %1271 = vmatprep.subr.mxu0 0.0
        %1272 = vmatpush1.msra.mxu0 0.0
        %1273 = vmatprep.subr.mxu0 0.0
        %1274 = vmatpush1.msra.mxu0 0.0
        %1275 = vmatprep.subr.mxu0 0.0
        %1276 = vmatpush1.msra.mxu0 0.0
        %1277 = vmatprep.subr.mxu0 0.0
        %1278 = vmatpush1.msra.mxu0 0.0
        %1279 = vmatprep.subr.mxu0 0.0
        %1280 = vmatpush1.msra.mxu0 0.0
        %1281 = vmatprep.subr.mxu0 0.0
        %1282 = vmatpush1.msra.mxu0 0.0
        %1283 = vmatprep.subr.mxu0 0.0
        %1284 = vmatpush1.msra.mxu0 0.0
        %1285 = vmatprep.subr.mxu0 0.0
        %1286 = vmatpush1.msra.mxu0 0.0
        %1287 = vmatprep.subr.mxu0 0.0
        %1288 = vmatpush1.msra.mxu0 0.0
        %1289 = vmatprep.subr.mxu0 0.0
        %1290 = vmatpush1.msra.mxu0 0.0
        %1291 = vmatprep.subr.mxu0 0.0
        %1292 = vmatpush1.msra.mxu0 0.0
        %1293 = vmatprep.subr.mxu0 0.0
        %1294 = vmatpush1.msra.mxu0 0.0
        %1295 = vmatprep.subr.mxu0 0.0
        %1296 = vmatpush1.msra.mxu0 0.0
        %1297 = vmatprep.subr.mxu0 0.0
        %1298 = vmatpush1.msra.mxu0 0.0
        %1299 = vmatprep.subr.mxu0 0.0
        %1300 = vmatpush1.msra.mxu0 0.0
        %1301 = vmatprep.subr.mxu0 0.0
        %1302 = vmatpush1.msra.mxu0 0.0
        %1303 = vmatprep.subr.mxu0 0.0
        %1304 = vmatpush1.msra.mxu0 0.0
        %1305 = vmatprep.subr.mxu0 0.0
        %1306 = vmatpush1.msra.mxu0 0.0
        %1307 = vmatprep.subr.mxu0 0.0
        %1308 = vmatpush1.msra.mxu0 0.0
        %1309 = vmatprep.subr.mxu0 0.0
        %1310 = vmatpush1.msra.mxu0 0.0
        %1311 = vmatprep.subr.mxu0 0.0
        %1312 = vmatpush1.msra.mxu0 0.0
        %1313 = vmatprep.subr.mxu0 0.0
        %1314 = vmatpush1.msra.mxu0 0.0
        %1315 = vmatprep.mubr.f32.mxu0 0.0
        %1316 = vmatmul.mubr.f32.gmra.mrb[0].mxu0 %v1249
        %v1317 = vpop.f32.mrb[0].mxu0
        %v1318 = vadd.f32 0.0, %v1317
        %v1319 = vpop.f32.mrb[0].mxu0
        %1320 = vdwg.mxu0
        %v1322 = vsel %vm984, %v1318, 0
        %1324 = vmatprep.subr.mxu0 0.0
        %1325 = vmatpush1.msra.mxu0 %v977
        %1326 = vmatprep.subr.mxu0 0.0
        %1327 = vmatpush1.msra.mxu0 0.0
        %1328 = vmatprep.subr.mxu0 0.0
        %1329 = vmatpush1.msra.mxu0 0.0
        %1330 = vmatprep.subr.mxu0 0.0
        %1331 = vmatpush1.msra.mxu0 0.0
        %1332 = vmatprep.subr.mxu0 0.0
        %1333 = vmatpush1.msra.mxu0 0.0
        %1334 = vmatprep.subr.mxu0 0.0
        %1335 = vmatpush1.msra.mxu0 0.0
        %1336 = vmatprep.subr.mxu0 0.0
        %1337 = vmatpush1.msra.mxu0 0.0
        %1338 = vmatprep.subr.mxu0 0.0
        %1339 = vmatpush1.msra.mxu0 0.0
        %1340 = vmatprep.subr.mxu0 0.0
        %1341 = vmatpush1.msra.mxu0 0.0
        %1342 = vmatprep.subr.mxu0 0.0
        %1343 = vmatpush1.msra.mxu0 0.0
        %1344 = vmatprep.subr.mxu0 0.0
        %1345 = vmatpush1.msra.mxu0 0.0
        %1346 = vmatprep.subr.mxu0 0.0
        %1347 = vmatpush1.msra.mxu0 0.0
        %1348 = vmatprep.subr.mxu0 0.0
        %1349 = vmatpush1.msra.mxu0 0.0
        %1350 = vmatprep.subr.mxu0 0.0
        %1351 = vmatpush1.msra.mxu0 0.0
        %1352 = vmatprep.subr.mxu0 0.0
        %1353 = vmatpush1.msra.mxu0 0.0
        %1354 = vmatprep.subr.mxu0 0.0
        %1355 = vmatpush1.msra.mxu0 0.0
        %1356 = vmatprep.subr.mxu0 0.0
        %1357 = vmatpush1.msra.mxu0 0.0
        %1358 = vmatprep.subr.mxu0 0.0
        %1359 = vmatpush1.msra.mxu0 0.0
        %1360 = vmatprep.subr.mxu0 0.0
        %1361 = vmatpush1.msra.mxu0 0.0
        %1362 = vmatprep.subr.mxu0 0.0
        %1363 = vmatpush1.msra.mxu0 0.0
        %1364 = vmatprep.subr.mxu0 0.0
        %1365 = vmatpush1.msra.mxu0 0.0
        %1366 = vmatprep.subr.mxu0 0.0
        %1367 = vmatpush1.msra.mxu0 0.0
        %1368 = vmatprep.subr.mxu0 0.0
        %1369 = vmatpush1.msra.mxu0 0.0
        %1370 = vmatprep.subr.mxu0 0.0
        %1371 = vmatpush1.msra.mxu0 0.0
        %1372 = vmatprep.subr.mxu0 0.0
        %1373 = vmatpush1.msra.mxu0 0.0
        %1374 = vmatprep.subr.mxu0 0.0
        %1375 = vmatpush1.msra.mxu0 0.0
        %1376 = vmatprep.subr.mxu0 0.0
        %1377 = vmatpush1.msra.mxu0 0.0
        %1378 = vmatprep.subr.mxu0 0.0
        %1379 = vmatpush1.msra.mxu0 0.0
        %1380 = vmatprep.subr.mxu0 0.0
        %1381 = vmatpush1.msra.mxu0 0.0
        %1382 = vmatprep.subr.mxu0 0.0
        %1383 = vmatpush1.msra.mxu0 0.0
        %1384 = vmatprep.subr.mxu0 0.0
        %1385 = vmatpush1.msra.mxu0 0.0
        %1386 = vmatprep.subr.mxu0 0.0
        %1387 = vmatpush1.msra.mxu0 0.0
        %1388 = vmatprep.mubr.f32.mxu0 0.0
        %1389 = vmatmul.mubr.f32.gmra.mrb[0].mxu0 %v1322
        %v1390 = vpop.f32.mrb[0].mxu0
        %v1391 = vadd.f32 0.0, %v1390
        %v1392 = vpop.f32.mrb[0].mxu0
        %1393 = vdwg.mxu0
        %v1395 = vsel %vm984, %v1150, 0
        %1397 = vmatprep.subr.mxu0 0.0
        %1398 = vmatpush1.msra.mxu0 %v976
        %1399 = vmatprep.subr.mxu0 0.0
        %1400 = vmatpush1.msra.mxu0 0.0
        %1401 = vmatprep.subr.mxu0 0.0
        %1402 = vmatpush1.msra.mxu0 0.0
        %1403 = vmatprep.subr.mxu0 0.0
        %1404 = vmatpush1.msra.mxu0 0.0
        %1405 = vmatprep.subr.mxu0 0.0
        %1406 = vmatpush1.msra.mxu0 0.0
        %1407 = vmatprep.subr.mxu0 0.0
        %1408 = vmatpush1.msra.mxu0 0.0
        %1409 = vmatprep.subr.mxu0 0.0
        %1410 = vmatpush1.msra.mxu0 0.0
        %1411 = vmatprep.subr.mxu0 0.0
        %1412 = vmatpush1.msra.mxu0 0.0
        %1413 = vmatprep.subr.mxu0 0.0
        %1414 = vmatpush1.msra.mxu0 0.0
        %1415 = vmatprep.subr.mxu0 0.0
        %1416 = vmatpush1.msra.mxu0 0.0
        %1417 = vmatprep.subr.mxu0 0.0
        %1418 = vmatpush1.msra.mxu0 0.0
        %1419 = vmatprep.subr.mxu0 0.0
        %1420 = vmatpush1.msra.mxu0 0.0
        %1421 = vmatprep.subr.mxu0 0.0
        %1422 = vmatpush1.msra.mxu0 0.0
        %1423 = vmatprep.subr.mxu0 0.0
        %1424 = vmatpush1.msra.mxu0 0.0
        %1425 = vmatprep.subr.mxu0 0.0
        %1426 = vmatpush1.msra.mxu0 0.0
        %1427 = vmatprep.subr.mxu0 0.0
        %1428 = vmatpush1.msra.mxu0 0.0
        %1429 = vmatprep.subr.mxu0 0.0
        %1430 = vmatpush1.msra.mxu0 0.0
        %1431 = vmatprep.subr.mxu0 0.0
        %1432 = vmatpush1.msra.mxu0 0.0
        %1433 = vmatprep.subr.mxu0 0.0
        %1434 = vmatpush1.msra.mxu0 0.0
        %1435 = vmatprep.subr.mxu0 0.0
        %1436 = vmatpush1.msra.mxu0 0.0
        %1437 = vmatprep.subr.mxu0 0.0
        %1438 = vmatpush1.msra.mxu0 0.0
        %1439 = vmatprep.subr.mxu0 0.0
        %1440 = vmatpush1.msra.mxu0 0.0
        %1441 = vmatprep.subr.mxu0 0.0
        %1442 = vmatpush1.msra.mxu0 0.0
        %1443 = vmatprep.subr.mxu0 0.0
        %1444 = vmatpush1.msra.mxu0 0.0
        %1445 = vmatprep.subr.mxu0 0.0
        %1446 = vmatpush1.msra.mxu0 0.0
        %1447 = vmatprep.subr.mxu0 0.0
        %1448 = vmatpush1.msra.mxu0 0.0
        %1449 = vmatprep.subr.mxu0 0.0
        %1450 = vmatpush1.msra.mxu0 0.0
        %1451 = vmatprep.subr.mxu0 0.0
        %1452 = vmatpush1.msra.mxu0 0.0
        %1453 = vmatprep.subr.mxu0 0.0
        %1454 = vmatpush1.msra.mxu0 0.0
        %1455 = vmatprep.subr.mxu0 0.0
        %1456 = vmatpush1.msra.mxu0 0.0
        %1457 = vmatprep.subr.mxu0 0.0
        %1458 = vmatpush1.msra.mxu0 0.0
        %1459 = vmatprep.subr.mxu0 0.0
        %1460 = vmatpush1.msra.mxu0 0.0
        %1461 = vmatprep.mubr.f32.mxu0 0.0
        %1462 = vmatmul.mubr.f32.gmra.mrb[0].mxu0 %v1395
        %v1463 = vpop.f32.mrb[0].mxu0
        %v1464 = vadd.f32 %v1391, %v1463
        %v1465 = vpop.f32.mrb[0].mxu0
        %1466 = vdwg.mxu0
        %s1467 = scalar_lea.vmem %s2, 16
        %v1468 = vld [vmem:[%s1467] sm:$0xff]
        %1469 = vrot.lane.b32.xlu0 %v973, 112
        %v1470 = vpop.permute.xlu0 %1469
        %1471 = vrot.lane.b32.xlu0 %v973, 80
        %v1472 = vpop.permute.xlu0 %1471
        %v1473 = vsel %vm984, %v1470, 0
        %v1475 = vsel %vm984, %v1472, 0
        %1477 = vmatprep.subr.mxu0 0.0
        %1478 = vmatpush1.xpose.msra.mxu0 %v1475
        %1479 = vmatprep.subr.mxu0 0.0
        %1480 = vmatpush1.xpose.msra.mxu0 0.0
        %1481 = vmatprep.subr.mxu0 0.0
        %1482 = vmatpush1.xpose.msra.mxu0 0.0
        %1483 = vmatprep.subr.mxu0 0.0
        %1484 = vmatpush1.xpose.msra.mxu0 0.0
        %1485 = vmatprep.subr.mxu0 0.0
        %1486 = vmatpush1.xpose.msra.mxu0 0.0
        %1487 = vmatprep.subr.mxu0 0.0
        %1488 = vmatpush1.xpose.msra.mxu0 0.0
        %1489 = vmatprep.subr.mxu0 0.0
        %1490 = vmatpush1.xpose.msra.mxu0 0.0
        %1491 = vmatprep.subr.mxu0 0.0
        %1492 = vmatpush1.xpose.msra.mxu0 0.0
        %1493 = vmatprep.subr.mxu0 0.0
        %1494 = vmatpush1.xpose.msra.mxu0 0.0
        %1495 = vmatprep.subr.mxu0 0.0
        %1496 = vmatpush1.xpose.msra.mxu0 0.0
        %1497 = vmatprep.subr.mxu0 0.0
        %1498 = vmatpush1.xpose.msra.mxu0 0.0
        %1499 = vmatprep.subr.mxu0 0.0
        %1500 = vmatpush1.xpose.msra.mxu0 0.0
        %1501 = vmatprep.subr.mxu0 0.0
        %1502 = vmatpush1.xpose.msra.mxu0 0.0
        %1503 = vmatprep.subr.mxu0 0.0
        %1504 = vmatpush1.xpose.msra.mxu0 0.0
        %1505 = vmatprep.subr.mxu0 0.0
        %1506 = vmatpush1.xpose.msra.mxu0 0.0
        %1507 = vmatprep.subr.mxu0 0.0
        %1508 = vmatpush1.xpose.msra.mxu0 0.0
        %1509 = vmatprep.subr.mxu0 0.0
        %1510 = vmatpush1.xpose.msra.mxu0 0.0
        %1511 = vmatprep.subr.mxu0 0.0
        %1512 = vmatpush1.xpose.msra.mxu0 0.0
        %1513 = vmatprep.subr.mxu0 0.0
        %1514 = vmatpush1.xpose.msra.mxu0 0.0
        %1515 = vmatprep.subr.mxu0 0.0
        %1516 = vmatpush1.xpose.msra.mxu0 0.0
        %1517 = vmatprep.subr.mxu0 0.0
        %1518 = vmatpush1.xpose.msra.mxu0 0.0
        %1519 = vmatprep.subr.mxu0 0.0
        %1520 = vmatpush1.xpose.msra.mxu0 0.0
        %1521 = vmatprep.subr.mxu0 0.0
        %1522 = vmatpush1.xpose.msra.mxu0 0.0
        %1523 = vmatprep.subr.mxu0 0.0
        %1524 = vmatpush1.xpose.msra.mxu0 0.0
        %1525 = vmatprep.subr.mxu0 0.0
        %1526 = vmatpush1.xpose.msra.mxu0 0.0
        %1527 = vmatprep.subr.mxu0 0.0
        %1528 = vmatpush1.xpose.msra.mxu0 0.0
        %1529 = vmatprep.subr.mxu0 0.0
        %1530 = vmatpush1.xpose.msra.mxu0 0.0
        %1531 = vmatprep.subr.mxu0 0.0
        %1532 = vmatpush1.xpose.msra.mxu0 0.0
        %1533 = vmatprep.subr.mxu0 0.0
        %1534 = vmatpush1.xpose.msra.mxu0 0.0
        %1535 = vmatprep.subr.mxu0 0.0
        %1536 = vmatpush1.xpose.msra.mxu0 0.0
        %1537 = vmatprep.subr.mxu0 0.0
        %1538 = vmatpush1.xpose.msra.mxu0 0.0
        %1539 = vmatprep.subr.mxu0 0.0
        %1540 = vmatpush1.xpose.msra.mxu0 0.0
        %1541 = vmatprep.mubr.f32.mxu0 0.0
        %1542 = vmatmul.mubr.f32.gmra.mrb[0].mxu0 %v1473
        %v1543 = vpop.f32.mrb[0].mxu0
        %v1544 = vadd.f32 %v1468, %v1543
        %v1545 = vpop.f32.mrb[0].mxu0
        %1546 = vdwg.mxu0
        %v1547 = vadd.f32 %v1544, %v1063
        %v1548 = vsel %vm984, %v1547, -inf
        %1549 = vmax.xlane.f32.xlu0 %v1548
        %v1550 = vpop.xlane.xlu0 %1549
        %v1551 = vsub.f32 %v1547, %v1550
        %v1552 = vmul.f32 %v1551, 1.442695
        %v1553 = vpow.pop %v1552
        %v1554 = vsel %vm984, %v1553, 0.0
        %1555 = vadd.xlane.f32.xlu0 %v1554
        %v1556 = vpop.xlane.xlu0 %1555
        %v1557 = vrcp.pop %v1556
        %v1558 = vmul.f32 %v1553, %v1557
        %1559 = vrot.lane.b32.xlu0 %v973, 48
        %v1560 = vpop.permute.xlu0 %1559
        %v1563 = vsel %vm984, %v1558, 0
        %1565 = vmatprep.subr.mxu0 0.0
        %1566 = vmatpush1.msra.mxu0 %v1560
        %1567 = vmatprep.subr.mxu0 0.0
        %1568 = vmatpush1.msra.mxu0 0.0
        %1569 = vmatprep.subr.mxu0 0.0
        %1570 = vmatpush1.msra.mxu0 0.0
        %1571 = vmatprep.subr.mxu0 0.0
        %1572 = vmatpush1.msra.mxu0 0.0
        %1573 = vmatprep.subr.mxu0 0.0
        %1574 = vmatpush1.msra.mxu0 0.0
        %1575 = vmatprep.subr.mxu0 0.0
        %1576 = vmatpush1.msra.mxu0 0.0
        %1577 = vmatprep.subr.mxu0 0.0
        %1578 = vmatpush1.msra.mxu0 0.0
        %1579 = vmatprep.subr.mxu0 0.0
        %1580 = vmatpush1.msra.mxu0 0.0
        %1581 = vmatprep.subr.mxu0 0.0
        %1582 = vmatpush1.msra.mxu0 0.0
        %1583 = vmatprep.subr.mxu0 0.0
        %1584 = vmatpush1.msra.mxu0 0.0
        %1585 = vmatprep.subr.mxu0 0.0
        %1586 = vmatpush1.msra.mxu0 0.0
        %1587 = vmatprep.subr.mxu0 0.0
        %1588 = vmatpush1.msra.mxu0 0.0
        %1589 = vmatprep.subr.mxu0 0.0
        %1590 = vmatpush1.msra.mxu0 0.0
        %1591 = vmatprep.subr.mxu0 0.0
        %1592 = vmatpush1.msra.mxu0 0.0
        %1593 = vmatprep.subr.mxu0 0.0
        %1594 = vmatpush1.msra.mxu0 0.0
        %1595 = vmatprep.subr.mxu0 0.0
        %1596 = vmatpush1.msra.mxu0 0.0
        %1597 = vmatprep.subr.mxu0 0.0
        %1598 = vmatpush1.msra.mxu0 0.0
        %1599 = vmatprep.subr.mxu0 0.0
        %1600 = vmatpush1.msra.mxu0 0.0
        %1601 = vmatprep.subr.mxu0 0.0
        %1602 = vmatpush1.msra.mxu0 0.0
        %1603 = vmatprep.subr.mxu0 0.0
        %1604 = vmatpush1.msra.mxu0 0.0
        %1605 = vmatprep.subr.mxu0 0.0
        %1606 = vmatpush1.msra.mxu0 0.0
        %1607 = vmatprep.subr.mxu0 0.0
        %1608 = vmatpush1.msra.mxu0 0.0
        %1609 = vmatprep.subr.mxu0 0.0
        %1610 = vmatpush1.msra.mxu0 0.0
        %1611 = vmatprep.subr.mxu0 0.0
        %1612 = vmatpush1.msra.mxu0 0.0
        %1613 = vmatprep.subr.mxu0 0.0
        %1614 = vmatpush1.msra.mxu0 0.0
        %1615 = vmatprep.subr.mxu0 0.0
        %1616 = vmatpush1.msra.mxu0 0.0
        %1617 = vmatprep.subr.mxu0 0.0
        %1618 = vmatpush1.msra.mxu0 0.0
        %1619 = vmatprep.subr.mxu0 0.0
        %1620 = vmatpush1.msra.mxu0 0.0
        %1621 = vmatprep.subr.mxu0 0.0
        %1622 = vmatpush1.msra.mxu0 0.0
        %1623 = vmatprep.subr.mxu0 0.0
        %1624 = vmatpush1.msra.mxu0 0.0
        %1625 = vmatprep.subr.mxu0 0.0
        %1626 = vmatpush1.msra.mxu0 0.0
        %1627 = vmatprep.subr.mxu0 0.0
        %1628 = vmatpush1.msra.mxu0 0.0
        %1629 = vmatprep.mubr.f32.mxu0 0.0
        %1630 = vmatmul.mubr.f32.gmra.mrb[0].mxu0 %v1563
        %v1631 = vpop.f32.mrb[0].mxu0
        %v1632 = vadd.f32 0.0, %v1631
        %v1633 = vpop.f32.mrb[0].mxu0
        %1634 = vdwg.mxu0
        %v1636 = vsel %vm984, %v1632, 0
        %1638 = vmatprep.subr.mxu0 0.0
        %1639 = vmatpush1.msra.mxu0 %v978
        %1640 = vmatprep.subr.mxu0 0.0
        %1641 = vmatpush1.msra.mxu0 0.0
        %1642 = vmatprep.subr.mxu0 0.0
        %1643 = vmatpush1.msra.mxu0 0.0
        %1644 = vmatprep.subr.mxu0 0.0
        %1645 = vmatpush1.msra.mxu0 0.0
        %1646 = vmatprep.subr.mxu0 0.0
        %1647 = vmatpush1.msra.mxu0 0.0
        %1648 = vmatprep.subr.mxu0 0.0
        %1649 = vmatpush1.msra.mxu0 0.0
        %1650 = vmatprep.subr.mxu0 0.0
        %1651 = vmatpush1.msra.mxu0 0.0
        %1652 = vmatprep.subr.mxu0 0.0
        %1653 = vmatpush1.msra.mxu0 0.0
        %1654 = vmatprep.subr.mxu0 0.0
        %1655 = vmatpush1.msra.mxu0 0.0
        %1656 = vmatprep.subr.mxu0 0.0
        %1657 = vmatpush1.msra.mxu0 0.0
        %1658 = vmatprep.subr.mxu0 0.0
        %1659 = vmatpush1.msra.mxu0 0.0
        %1660 = vmatprep.subr.mxu0 0.0
        %1661 = vmatpush1.msra.mxu0 0.0
        %1662 = vmatprep.subr.mxu0 0.0
        %1663 = vmatpush1.msra.mxu0 0.0
        %1664 = vmatprep.subr.mxu0 0.0
        %1665 = vmatpush1.msra.mxu0 0.0
        %1666 = vmatprep.subr.mxu0 0.0
        %1667 = vmatpush1.msra.mxu0 0.0
        %1668 = vmatprep.subr.mxu0 0.0
        %1669 = vmatpush1.msra.mxu0 0.0
        %1670 = vmatprep.subr.mxu0 0.0
        %1671 = vmatpush1.msra.mxu0 0.0
        %1672 = vmatprep.subr.mxu0 0.0
        %1673 = vmatpush1.msra.mxu0 0.0
        %1674 = vmatprep.subr.mxu0 0.0
        %1675 = vmatpush1.msra.mxu0 0.0
        %1676 = vmatprep.subr.mxu0 0.0
        %1677 = vmatpush1.msra.mxu0 0.0
        %1678 = vmatprep.subr.mxu0 0.0
        %1679 = vmatpush1.msra.mxu0 0.0
        %1680 = vmatprep.subr.mxu0 0.0
        %1681 = vmatpush1.msra.mxu0 0.0
        %1682 = vmatprep.subr.mxu0 0.0
        %1683 = vmatpush1.msra.mxu0 0.0
        %1684 = vmatprep.subr.mxu0 0.0
        %1685 = vmatpush1.msra.mxu0 0.0
        %1686 = vmatprep.subr.mxu0 0.0
        %1687 = vmatpush1.msra.mxu0 0.0
        %1688 = vmatprep.subr.mxu0 0.0
        %1689 = vmatpush1.msra.mxu0 0.0
        %1690 = vmatprep.subr.mxu0 0.0
        %1691 = vmatpush1.msra.mxu0 0.0
        %1692 = vmatprep.subr.mxu0 0.0
        %1693 = vmatpush1.msra.mxu0 0.0
        %1694 = vmatprep.subr.mxu0 0.0
        %1695 = vmatpush1.msra.mxu0 0.0
        %1696 = vmatprep.subr.mxu0 0.0
        %1697 = vmatpush1.msra.mxu0 0.0
        %1698 = vmatprep.subr.mxu0 0.0
        %1699 = vmatpush1.msra.mxu0 0.0
        %1700 = vmatprep.subr.mxu0 0.0
        %1701 = vmatpush1.msra.mxu0 0.0
        %1702 = vmatprep.mubr.f32.mxu0 0.0
        %1703 = vmatmul.mubr.f32.gmra.mrb[0].mxu0 %v1636
        %v1704 = vpop.f32.mrb[0].mxu0
        %v1705 = vadd.f32 0.0, %v1704
        %v1706 = vpop.f32.mrb[0].mxu0
        %1707 = vdwg.mxu0
        %v1708 = vadd.f32 %v1464, %v1705
        %s1709 = scalar_lea.vmem %s2, 24
        %v1710 = vld [vmem:[%s1709] sm:$0xff]
        %1711 = vrot.lane.b32.xlu0 %v973, 104
        %v1712 = vpop.permute.xlu0 %1711
        %1713 = vrot.lane.b32.xlu0 %v973, 72
        %v1714 = vpop.permute.xlu0 %1713
        %v1715 = vsel %vm984, %v1712, 0
        %v1717 = vsel %vm984, %v1714, 0
        %1719 = vmatprep.subr.mxu0 0.0
        %1720 = vmatpush1.xpose.msra.mxu0 %v1717
        %1721 = vmatprep.subr.mxu0 0.0
        %1722 = vmatpush1.xpose.msra.mxu0 0.0
        %1723 = vmatprep.subr.mxu0 0.0
        %1724 = vmatpush1.xpose.msra.mxu0 0.0
        %1725 = vmatprep.subr.mxu0 0.0
        %1726 = vmatpush1.xpose.msra.mxu0 0.0
        %1727 = vmatprep.subr.mxu0 0.0
        %1728 = vmatpush1.xpose.msra.mxu0 0.0
        %1729 = vmatprep.subr.mxu0 0.0
        %1730 = vmatpush1.xpose.msra.mxu0 0.0
        %1731 = vmatprep.subr.mxu0 0.0
        %1732 = vmatpush1.xpose.msra.mxu0 0.0
        %1733 = vmatprep.subr.mxu0 0.0
        %1734 = vmatpush1.xpose.msra.mxu0 0.0
        %1735 = vmatprep.subr.mxu0 0.0
        %1736 = vmatpush1.xpose.msra.mxu0 0.0
        %1737 = vmatprep.subr.mxu0 0.0
        %1738 = vmatpush1.xpose.msra.mxu0 0.0
        %1739 = vmatprep.subr.mxu0 0.0
        %1740 = vmatpush1.xpose.msra.mxu0 0.0
        %1741 = vmatprep.subr.mxu0 0.0
        %1742 = vmatpush1.xpose.msra.mxu0 0.0
        %1743 = vmatprep.subr.mxu0 0.0
        %1744 = vmatpush1.xpose.msra.mxu0 0.0
        %1745 = vmatprep.subr.mxu0 0.0
        %1746 = vmatpush1.xpose.msra.mxu0 0.0
        %1747 = vmatprep.subr.mxu0 0.0
        %1748 = vmatpush1.xpose.msra.mxu0 0.0
        %1749 = vmatprep.subr.mxu0 0.0
        %1750 = vmatpush1.xpose.msra.mxu0 0.0
        %1751 = vmatprep.subr.mxu0 0.0
        %1752 = vmatpush1.xpose.msra.mxu0 0.0
        %1753 = vmatprep.subr.mxu0 0.0
        %1754 = vmatpush1.xpose.msra.mxu0 0.0
        %1755 = vmatprep.subr.mxu0 0.0
        %1756 = vmatpush1.xpose.msra.mxu0 0.0
        %1757 = vmatprep.subr.mxu0 0.0
        %1758 = vmatpush1.xpose.msra.mxu0 0.0
        %1759 = vmatprep.subr.mxu0 0.0
        %1760 = vmatpush1.xpose.msra.mxu0 0.0
        %1761 = vmatprep.subr.mxu0 0.0
        %1762 = vmatpush1.xpose.msra.mxu0 0.0
        %1763 = vmatprep.subr.mxu0 0.0
        %1764 = vmatpush1.xpose.msra.mxu0 0.0
        %1765 = vmatprep.subr.mxu0 0.0
        %1766 = vmatpush1.xpose.msra.mxu0 0.0
        %1767 = vmatprep.subr.mxu0 0.0
        %1768 = vmatpush1.xpose.msra.mxu0 0.0
        %1769 = vmatprep.subr.mxu0 0.0
        %1770 = vmatpush1.xpose.msra.mxu0 0.0
        %1771 = vmatprep.subr.mxu0 0.0
        %1772 = vmatpush1.xpose.msra.mxu0 0.0
        %1773 = vmatprep.subr.mxu0 0.0
        %1774 = vmatpush1.xpose.msra.mxu0 0.0
        %1775 = vmatprep.subr.mxu0 0.0
        %1776 = vmatpush1.xpose.msra.mxu0 0.0
        %1777 = vmatprep.subr.mxu0 0.0
        %1778 = vmatpush1.xpose.msra.mxu0 0.0
        %1779 = vmatprep.subr.mxu0 0.0
        %1780 = vmatpush1.xpose.msra.mxu0 0.0
        %1781 = vmatprep.subr.mxu0 0.0
        %1782 = vmatpush1.xpose.msra.mxu0 0.0
        %1783 = vmatprep.mubr.f32.mxu0 0.0
        %1784 = vmatmul.mubr.f32.gmra.mrb[0].mxu0 %v1715
        %v1785 = vpop.f32.mrb[0].mxu0
        %v1786 = vadd.f32 %v1710, %v1785
        %v1787 = vpop.f32.mrb[0].mxu0
        %1788 = vdwg.mxu0
        %v1789 = vadd.f32 %v1786, %v1063
        %v1790 = vsel %vm984, %v1789, -inf
        %1791 = vmax.xlane.f32.xlu0 %v1790
        %v1792 = vpop.xlane.xlu0 %1791
        %v1793 = vsub.f32 %v1789, %v1792
        %v1794 = vmul.f32 %v1793, 1.442695
        %v1795 = vpow.pop %v1794
        %v1796 = vsel %vm984, %v1795, 0.0
        %1797 = vadd.xlane.f32.xlu0 %v1796
        %v1798 = vpop.xlane.xlu0 %1797
        %v1799 = vrcp.pop %v1798
        %v1800 = vmul.f32 %v1795, %v1799
        %1801 = vrot.lane.b32.xlu0 %v973, 40
        %v1802 = vpop.permute.xlu0 %1801
        %v1805 = vsel %vm984, %v1800, 0
        %1807 = vmatprep.subr.mxu0 0.0
        %1808 = vmatpush1.msra.mxu0 %v1802
        %1809 = vmatprep.subr.mxu0 0.0
        %1810 = vmatpush1.msra.mxu0 0.0
        %1811 = vmatprep.subr.mxu0 0.0
        %1812 = vmatpush1.msra.mxu0 0.0
        %1813 = vmatprep.subr.mxu0 0.0
        %1814 = vmatpush1.msra.mxu0 0.0
        %1815 = vmatprep.subr.mxu0 0.0
        %1816 = vmatpush1.msra.mxu0 0.0
        %1817 = vmatprep.subr.mxu0 0.0
        %1818 = vmatpush1.msra.mxu0 0.0
        %1819 = vmatprep.subr.mxu0 0.0
        %1820 = vmatpush1.msra.mxu0 0.0
        %1821 = vmatprep.subr.mxu0 0.0
        %1822 = vmatpush1.msra.mxu0 0.0
        %1823 = vmatprep.subr.mxu0 0.0
        %1824 = vmatpush1.msra.mxu0 0.0
        %1825 = vmatprep.subr.mxu0 0.0
        %1826 = vmatpush1.msra.mxu0 0.0
        %1827 = vmatprep.subr.mxu0 0.0
        %1828 = vmatpush1.msra.mxu0 0.0
        %1829 = vmatprep.subr.mxu0 0.0
        %1830 = vmatpush1.msra.mxu0 0.0
        %1831 = vmatprep.subr.mxu0 0.0
        %1832 = vmatpush1.msra.mxu0 0.0
        %1833 = vmatprep.subr.mxu0 0.0
        %1834 = vmatpush1.msra.mxu0 0.0
        %1835 = vmatprep.subr.mxu0 0.0
        %1836 = vmatpush1.msra.mxu0 0.0
        %1837 = vmatprep.subr.mxu0 0.0
        %1838 = vmatpush1.msra.mxu0 0.0
        %1839 = vmatprep.subr.mxu0 0.0
        %1840 = vmatpush1.msra.mxu0 0.0
        %1841 = vmatprep.subr.mxu0 0.0
        %1842 = vmatpush1.msra.mxu0 0.0
        %1843 = vmatprep.subr.mxu0 0.0
        %1844 = vmatpush1.msra.mxu0 0.0
        %1845 = vmatprep.subr.mxu0 0.0
        %1846 = vmatpush1.msra.mxu0 0.0
        %1847 = vmatprep.subr.mxu0 0.0
        %1848 = vmatpush1.msra.mxu0 0.0
        %1849 = vmatprep.subr.mxu0 0.0
        %1850 = vmatpush1.msra.mxu0 0.0
        %1851 = vmatprep.subr.mxu0 0.0
        %1852 = vmatpush1.msra.mxu0 0.0
        %1853 = vmatprep.subr.mxu0 0.0
        %1854 = vmatpush1.msra.mxu0 0.0
        %1855 = vmatprep.subr.mxu0 0.0
        %1856 = vmatpush1.msra.mxu0 0.0
        %1857 = vmatprep.subr.mxu0 0.0
        %1858 = vmatpush1.msra.mxu0 0.0
        %1859 = vmatprep.subr.mxu0 0.0
        %1860 = vmatpush1.msra.mxu0 0.0
        %1861 = vmatprep.subr.mxu0 0.0
        %1862 = vmatpush1.msra.mxu0 0.0
        %1863 = vmatprep.subr.mxu0 0.0
        %1864 = vmatpush1.msra.mxu0 0.0
        %1865 = vmatprep.subr.mxu0 0.0
        %1866 = vmatpush1.msra.mxu0 0.0
        %1867 = vmatprep.subr.mxu0 0.0
        %1868 = vmatpush1.msra.mxu0 0.0
        %1869 = vmatprep.subr.mxu0 0.0
        %1870 = vmatpush1.msra.mxu0 0.0
        %1871 = vmatprep.mubr.f32.mxu0 0.0
        %1872 = vmatmul.mubr.f32.gmra.mrb[0].mxu0 %v1805
        %v1873 = vpop.f32.mrb[0].mxu0
        %v1874 = vadd.f32 0.0, %v1873
        %v1875 = vpop.f32.mrb[0].mxu0
        %1876 = vdwg.mxu0
        %v1878 = vsel %vm984, %v1874, 0
        %1880 = vmatprep.subr.mxu0 0.0
        %1881 = vmatpush1.msra.mxu0 %v979
        %1882 = vmatprep.subr.mxu0 0.0
        %1883 = vmatpush1.msra.mxu0 0.0
        %1884 = vmatprep.subr.mxu0 0.0
        %1885 = vmatpush1.msra.mxu0 0.0
        %1886 = vmatprep.subr.mxu0 0.0
        %1887 = vmatpush1.msra.mxu0 0.0
        %1888 = vmatprep.subr.mxu0 0.0
        %1889 = vmatpush1.msra.mxu0 0.0
        %1890 = vmatprep.subr.mxu0 0.0
        %1891 = vmatpush1.msra.mxu0 0.0
        %1892 = vmatprep.subr.mxu0 0.0
        %1893 = vmatpush1.msra.mxu0 0.0
        %1894 = vmatprep.subr.mxu0 0.0
        %1895 = vmatpush1.msra.mxu0 0.0
        %1896 = vmatprep.subr.mxu0 0.0
        %1897 = vmatpush1.msra.mxu0 0.0
        %1898 = vmatprep.subr.mxu0 0.0
        %1899 = vmatpush1.msra.mxu0 0.0
        %1900 = vmatprep.subr.mxu0 0.0
        %1901 = vmatpush1.msra.mxu0 0.0
        %1902 = vmatprep.subr.mxu0 0.0
        %1903 = vmatpush1.msra.mxu0 0.0
        %1904 = vmatprep.subr.mxu0 0.0
        %1905 = vmatpush1.msra.mxu0 0.0
        %1906 = vmatprep.subr.mxu0 0.0
        %1907 = vmatpush1.msra.mxu0 0.0
        %1908 = vmatprep.subr.mxu0 0.0
        %1909 = vmatpush1.msra.mxu0 0.0
        %1910 = vmatprep.subr.mxu0 0.0
        %1911 = vmatpush1.msra.mxu0 0.0
        %1912 = vmatprep.subr.mxu0 0.0
        %1913 = vmatpush1.msra.mxu0 0.0
        %1914 = vmatprep.subr.mxu0 0.0
        %1915 = vmatpush1.msra.mxu0 0.0
        %1916 = vmatprep.subr.mxu0 0.0
        %1917 = vmatpush1.msra.mxu0 0.0
        %1918 = vmatprep.subr.mxu0 0.0
        %1919 = vmatpush1.msra.mxu0 0.0
        %1920 = vmatprep.subr.mxu0 0.0
        %1921 = vmatpush1.msra.mxu0 0.0
        %1922 = vmatprep.subr.mxu0 0.0
        %1923 = vmatpush1.msra.mxu0 0.0
        %1924 = vmatprep.subr.mxu0 0.0
        %1925 = vmatpush1.msra.mxu0 0.0
        %1926 = vmatprep.subr.mxu0 0.0
        %1927 = vmatpush1.msra.mxu0 0.0
        %1928 = vmatprep.subr.mxu0 0.0
        %1929 = vmatpush1.msra.mxu0 0.0
        %1930 = vmatprep.subr.mxu0 0.0
        %1931 = vmatpush1.msra.mxu0 0.0
        %1932 = vmatprep.subr.mxu0 0.0
        %1933 = vmatpush1.msra.mxu0 0.0
        %1934 = vmatprep.subr.mxu0 0.0
        %1935 = vmatpush1.msra.mxu0 0.0
        %1936 = vmatprep.subr.mxu0 0.0
        %1937 = vmatpush1.msra.mxu0 0.0
        %1938 = vmatprep.subr.mxu0 0.0
        %1939 = vmatpush1.msra.mxu0 0.0
        %1940 = vmatprep.subr.mxu0 0.0
        %1941 = vmatpush1.msra.mxu0 0.0
        %1942 = vmatprep.subr.mxu0 0.0
        %1943 = vmatpush1.msra.mxu0 0.0
        %1944 = vmatprep.mubr.f32.mxu0 0.0
        %1945 = vmatmul.mubr.f32.gmra.mrb[0].mxu0 %v1878
        %v1946 = vpop.f32.mrb[0].mxu0
        %v1947 = vadd.f32 0.0, %v1946
        %v1948 = vpop.f32.mrb[0].mxu0
        %1949 = vdwg.mxu0
        %v1950 = vadd.f32 %v1708, %v1947
        %v1951 = vadd.f32 %v880, %v1950
        %v1952 = vld [vmem:[%s9] sm:$0x1]
        %v1953 = vmul.f32 %v1951, %v1951
        %v1954 = vsel %vm883, %v1953, 0.0
        %1955 = vadd.xlane.f32.xlu0 %v1954
        %v1956 = vpop.xlane.xlu0 %1955
        %v1957 = vmul.f32 %v1956, %v887
        %v1958 = vadd.f32 %v1957, 1e-06
        %v1959 = vrsqrt.pop %v1958
        %v1960 = vmul.f32 %v1951, %v1959
        %v1962 = vlaneseq
        %v1963 = vshrl.u32 %v1962, 7
        %v1964 = vsub.s32 0, %v1963
        %v1965 = vrot.slane %v1952, %v1964
        %v1967 = vmul.f32 %v1960, %v1965
        %v1968 = vld [vmem:[%s10] sm:$0xff]
        %v1969 = vld [vmem:[%s10 + $0x8] sm:$0xff]
        %v1970 = vld [vmem:[%s10 + $0x10] sm:$0xff]
        %v1971 = vld [vmem:[%s10 + $0x18] sm:$0xff]
        %v1973 = vsel %vm883, %v1967, 0
        %1975 = vmatprep.subr.mxu0 0.0
        %1976 = vmatpush1.msra.mxu0 %v1968
        %1977 = vmatprep.subr.mxu0 0.0
        %1978 = vmatpush1.msra.mxu0 %v1969
        %1979 = vmatprep.subr.mxu0 0.0
        %1980 = vmatpush1.msra.mxu0 %v1970
        %1981 = vmatprep.subr.mxu0 0.0
        %1982 = vmatpush1.msra.mxu0 %v1971
        %1983 = vmatprep.subr.mxu0 0.0
        %1984 = vmatpush1.msra.mxu0 0.0
        %1985 = vmatprep.subr.mxu0 0.0
        %1986 = vmatpush1.msra.mxu0 0.0
        %1987 = vmatprep.subr.mxu0 0.0
        %1988 = vmatpush1.msra.mxu0 0.0
        %1989 = vmatprep.subr.mxu0 0.0
        %1990 = vmatpush1.msra.mxu0 0.0
        %1991 = vmatprep.subr.mxu0 0.0
        %1992 = vmatpush1.msra.mxu0 0.0
        %1993 = vmatprep.subr.mxu0 0.0
        %1994 = vmatpush1.msra.mxu0 0.0
        %1995 = vmatprep.subr.mxu0 0.0
        %1996 = vmatpush1.msra.mxu0 0.0
        %1997 = vmatprep.subr.mxu0 0.0
        %1998 = vmatpush1.msra.mxu0 0.0
        %1999 = vmatprep.subr.mxu0 0.0
        %2000 = vmatpush1.msra.mxu0 0.0
        %2001 = vmatprep.subr.mxu0 0.0
        %2002 = vmatpush1.msra.mxu0 0.0
        %2003 = vmatprep.subr.mxu0 0.0
        %2004 = vmatpush1.msra.mxu0 0.0
        %2005 = vmatprep.subr.mxu0 0.0
        %2006 = vmatpush1.msra.mxu0 0.0
        %2007 = vmatprep.subr.mxu0 0.0
        %2008 = vmatpush1.msra.mxu0 0.0
        %2009 = vmatprep.subr.mxu0 0.0
        %2010 = vmatpush1.msra.mxu0 0.0
        %2011 = vmatprep.subr.mxu0 0.0
        %2012 = vmatpush1.msra.mxu0 0.0
        %2013 = vmatprep.subr.mxu0 0.0
        %2014 = vmatpush1.msra.mxu0 0.0
        %2015 = vmatprep.subr.mxu0 0.0
        %2016 = vmatpush1.msra.mxu0 0.0
        %2017 = vmatprep.subr.mxu0 0.0
        %2018 = vmatpush1.msra.mxu0 0.0
        %2019 = vmatprep.subr.mxu0 0.0
        %2020 = vmatpush1.msra.mxu0 0.0
        %2021 = vmatprep.subr.mxu0 0.0
        %2022 = vmatpush1.msra.mxu0 0.0
        %2023 = vmatprep.subr.mxu0 0.0
        %2024 = vmatpush1.msra.mxu0 0.0
        %2025 = vmatprep.subr.mxu0 0.0
        %2026 = vmatpush1.msra.mxu0 0.0
        %2027 = vmatprep.subr.mxu0 0.0
        %2028 = vmatpush1.msra.mxu0 0.0
        %2029 = vmatprep.subr.mxu0 0.0
        %2030 = vmatpush1.msra.mxu0 0.0
        %2031 = vmatprep.subr.mxu0 0.0
        %2032 = vmatpush1.msra.mxu0 0.0
        %2033 = vmatprep.subr.mxu0 0.0
        %2034 = vmatpush1.msra.mxu0 0.0
        %2035 = vmatprep.subr.mxu0 0.0
        %2036 = vmatpush1.msra.mxu0 0.0
        %2037 = vmatprep.subr.mxu0 0.0
        %2038 = vmatpush1.msra.mxu0 0.0
        %2039 = vmatprep.mubr.f32.mxu0 0.0
        %2040 = vmatmul.mubr.f32.gmra.mrb[0].mxu0 %v1973
        %v2041 = vpop.f32.mrb[0].mxu0
        %v2042 = vadd.f32 0.0, %v2041
        %v2043 = vpop.f32.mrb[0].mxu0
        %2044 = vdwg.mxu0
        %v2045 = vmax.f32 %v2042, 0.0
        %v2046 = vld [vmem:[%s11] sm:$0xff]
        %v2047 = vld [vmem:[%s11 + $0x8] sm:$0xff]
        %v2048 = vld [vmem:[%s11 + $0x10] sm:$0xff]
        %v2049 = vld [vmem:[%s11 + $0x18] sm:$0xff]
        %v2050 = vld [vmem:[%s11 + $0x20] sm:$0xff]
        %v2051 = vld [vmem:[%s11 + $0x28] sm:$0xff]
        %v2052 = vld [vmem:[%s11 + $0x30] sm:$0xff]
        %v2053 = vld [vmem:[%s11 + $0x38] sm:$0xff]
        %vm2054 = vcmask 523264
        %v2056 = vsel %vm2054, %v2045, 0
        %2058 = vmatprep.subr.mxu0 0.0
        %2059 = vmatpush1.msra.mxu0 %v2046
        %2060 = vmatprep.subr.mxu0 0.0
        %2061 = vmatpush1.msra.mxu0 %v2047
        %2062 = vmatprep.subr.mxu0 0.0
        %2063 = vmatpush1.msra.mxu0 %v2048
        %2064 = vmatprep.subr.mxu0 0.0
        %2065 = vmatpush1.msra.mxu0 %v2049
        %2066 = vmatprep.subr.mxu0 0.0
        %2067 = vmatpush1.msra.mxu0 %v2050
        %2068 = vmatprep.subr.mxu0 0.0
        %2069 = vmatpush1.msra.mxu0 %v2051
        %2070 = vmatprep.subr.mxu0 0.0
        %2071 = vmatpush1.msra.mxu0 %v2052
        %2072 = vmatprep.subr.mxu0 0.0
        %2073 = vmatpush1.msra.mxu0 %v2053
        %2074 = vmatprep.subr.mxu0 0.0
        %2075 = vmatpush1.msra.mxu0 0.0
        %2076 = vmatprep.subr.mxu0 0.0
        %2077 = vmatpush1.msra.mxu0 0.0
        %2078 = vmatprep.subr.mxu0 0.0
        %2079 = vmatpush1.msra.mxu0 0.0
        %2080 = vmatprep.subr.mxu0 0.0
        %2081 = vmatpush1.msra.mxu0 0.0
        %2082 = vmatprep.subr.mxu0 0.0
        %2083 = vmatpush1.msra.mxu0 0.0
        %2084 = vmatprep.subr.mxu0 0.0
        %2085 = vmatpush1.msra.mxu0 0.0
        %2086 = vmatprep.subr.mxu0 0.0
        %2087 = vmatpush1.msra.mxu0 0.0
        %2088 = vmatprep.subr.mxu0 0.0
        %2089 = vmatpush1.msra.mxu0 0.0
        %2090 = vmatprep.subr.mxu0 0.0
        %2091 = vmatpush1.msra.mxu0 0.0
        %2092 = vmatprep.subr.mxu0 0.0
        %2093 = vmatpush1.msra.mxu0 0.0
        %2094 = vmatprep.subr.mxu0 0.0
        %2095 = vmatpush1.msra.mxu0 0.0
        %2096 = vmatprep.subr.mxu0 0.0
        %2097 = vmatpush1.msra.mxu0 0.0
        %2098 = vmatprep.subr.mxu0 0.0
        %2099 = vmatpush1.msra.mxu0 0.0
        %2100 = vmatprep.subr.mxu0 0.0
        %2101 = vmatpush1.msra.mxu0 0.0
        %2102 = vmatprep.subr.mxu0 0.0
        %2103 = vmatpush1.msra.mxu0 0.0
        %2104 = vmatprep.subr.mxu0 0.0
        %2105 = vmatpush1.msra.mxu0 0.0
        %2106 = vmatprep.subr.mxu0 0.0
        %2107 = vmatpush1.msra.mxu0 0.0
        %2108 = vmatprep.subr.mxu0 0.0
        %2109 = vmatpush1.msra.mxu0 0.0
        %2110 = vmatprep.subr.mxu0 0.0
        %2111 = vmatpush1.msra.mxu0 0.0
        %2112 = vmatprep.subr.mxu0 0.0
        %2113 = vmatpush1.msra.mxu0 0.0
        %2114 = vmatprep.subr.mxu0 0.0
        %2115 = vmatpush1.msra.mxu0 0.0
        %2116 = vmatprep.subr.mxu0 0.0
        %2117 = vmatpush1.msra.mxu0 0.0
        %2118 = vmatprep.subr.mxu0 0.0
        %2119 = vmatpush1.msra.mxu0 0.0
        %2120 = vmatprep.subr.mxu0 0.0
        %2121 = vmatpush1.msra.mxu0 0.0
        %2122 = vmatprep.mubr.f32.mxu0 0.0
        %2123 = vmatmul.mubr.f32.gmra.mrb[0].mxu0 %v2056
        %v2124 = vpop.f32.mrb[0].mxu0
        %v2125 = vadd.f32 0.0, %v2124
        %v2126 = vpop.f32.mrb[0].mxu0
        %2127 = vdwg.mxu0
        %v2128 = vadd.f32 %v1951, %v2125
        %s2129 = scalar_lea.vmem %s6, 1
        %v2130 = vld [vmem:[%s2129] sm:$0x1]
        %v2131 = vmul.f32 %v2128, %v2128
        %v2132 = vsel %vm883, %v2131, 0.0
        %2133 = vadd.xlane.f32.xlu0 %v2132
        %v2134 = vpop.xlane.xlu0 %2133
        %v2135 = vmul.f32 %v2134, %v887
        %v2136 = vadd.f32 %v2135, 1e-06
        %v2137 = vrsqrt.pop %v2136
        %v2138 = vmul.f32 %v2128, %v2137
        %v2140 = vlaneseq
        %v2141 = vshrl.u32 %v2140, 7
        %v2142 = vsub.s32 0, %v2141
        %v2143 = vrot.slane %v2130, %v2142
        %v2145 = vmul.f32 %v2138, %v2143
        %s2146 = scalar_lea.vmem %s7, 32
        %v2147 = vld [vmem:[%s2146] sm:$0xff]
        %v2148 = vld [vmem:[%s2146 + $0x8] sm:$0xff]
        %v2149 = vld [vmem:[%s2146 + $0x10] sm:$0xff]
        %v2150 = vld [vmem:[%s2146 + $0x18] sm:$0xff]
        %v2152 = vsel %vm883, %v2145, 0
        %2154 = vmatprep.subr.mxu0 0.0
        %2155 = vmatpush1.msra.mxu0 %v2147
        %2156 = vmatprep.subr.mxu0 0.0
        %2157 = vmatpush1.msra.mxu0 %v2148
        %2158 = vmatprep.subr.mxu0 0.0
        %2159 = vmatpush1.msra.mxu0 %v2149
        %2160 = vmatprep.subr.mxu0 0.0
        %2161 = vmatpush1.msra.mxu0 %v2150
        %2162 = vmatprep.subr.mxu0 0.0
        %2163 = vmatpush1.msra.mxu0 0.0
        %2164 = vmatprep.subr.mxu0 0.0
        %2165 = vmatpush1.msra.mxu0 0.0
        %2166 = vmatprep.subr.mxu0 0.0
        %2167 = vmatpush1.msra.mxu0 0.0
        %2168 = vmatprep.subr.mxu0 0.0
        %2169 = vmatpush1.msra.mxu0 0.0
        %2170 = vmatprep.subr.mxu0 0.0
        %2171 = vmatpush1.msra.mxu0 0.0
        %2172 = vmatprep.subr.mxu0 0.0
        %2173 = vmatpush1.msra.mxu0 0.0
        %2174 = vmatprep.subr.mxu0 0.0
        %2175 = vmatpush1.msra.mxu0 0.0
        %2176 = vmatprep.subr.mxu0 0.0
        %2177 = vmatpush1.msra.mxu0 0.0
        %2178 = vmatprep.subr.mxu0 0.0
        %2179 = vmatpush1.msra.mxu0 0.0
        %2180 = vmatprep.subr.mxu0 0.0
        %2181 = vmatpush1.msra.mxu0 0.0
        %2182 = vmatprep.subr.mxu0 0.0
        %2183 = vmatpush1.msra.mxu0 0.0
        %2184 = vmatprep.subr.mxu0 0.0
        %2185 = vmatpush1.msra.mxu0 0.0
        %2186 = vmatprep.subr.mxu0 0.0
        %2187 = vmatpush1.msra.mxu0 0.0
        %2188 = vmatprep.subr.mxu0 0.0
        %2189 = vmatpush1.msra.mxu0 0.0
        %2190 = vmatprep.subr.mxu0 0.0
        %2191 = vmatpush1.msra.mxu0 0.0
        %2192 = vmatprep.subr.mxu0 0.0
        %2193 = vmatpush1.msra.mxu0 0.0
        %2194 = vmatprep.subr.mxu0 0.0
        %2195 = vmatpush1.msra.mxu0 0.0
        %2196 = vmatprep.subr.mxu0 0.0
        %2197 = vmatpush1.msra.mxu0 0.0
        %2198 = vmatprep.subr.mxu0 0.0
        %2199 = vmatpush1.msra.mxu0 0.0
        %2200 = vmatprep.subr.mxu0 0.0
        %2201 = vmatpush1.msra.mxu0 0.0
        %2202 = vmatprep.subr.mxu0 0.0
        %2203 = vmatpush1.msra.mxu0 0.0
        %2204 = vmatprep.subr.mxu0 0.0
        %2205 = vmatpush1.msra.mxu0 0.0
        %2206 = vmatprep.subr.mxu0 0.0
        %2207 = vmatpush1.msra.mxu0 0.0
        %2208 = vmatprep.subr.mxu0 0.0
        %2209 = vmatpush1.msra.mxu0 0.0
        %2210 = vmatprep.subr.mxu0 0.0
        %2211 = vmatpush1.msra.mxu0 0.0
        %2212 = vmatprep.subr.mxu0 0.0
        %2213 = vmatpush1.msra.mxu0 0.0
        %2214 = vmatprep.subr.mxu0 0.0
        %2215 = vmatpush1.msra.mxu0 0.0
        %2216 = vmatprep.subr.mxu0 0.0
        %2217 = vmatpush1.msra.mxu0 0.0
        %2218 = vmatprep.mubr.f32.mxu0 0.0
        %2219 = vmatmul.mubr.f32.gmra.mrb[0].mxu0 %v2152
        %v2220 = vpop.f32.mrb[0].mxu0
        %v2221 = vadd.f32 0.0, %v2220
        %v2222 = vpop.f32.mrb[0].mxu0
        %2223 = vdwg.mxu0
        %s2224 = scalar_lea.vmem %s8, 32
        %v2225 = vld [vmem:[%s2224] sm:$0xff]
        %v2226 = vld [vmem:[%s2224 + $0x8] sm:$0xff]
        %v2227 = vld [vmem:[%s2224 + $0x10] sm:$0xff]
        %v2228 = vld [vmem:[%s2224 + $0x18] sm:$0xff]
        %2230 = vrot.lane.b32.xlu0 %v2221, 96
        %v2231 = vpop.permute.xlu0 %2230
        %v2232 = vsel %vm984, %v2221, 0
        %v2234 = vsel %vm984, %v2231, 0
        %2236 = vmatprep.subr.mxu0 0.0
        %2237 = vmatpush1.xpose.msra.mxu0 %v2234
        %2238 = vmatprep.subr.mxu0 0.0
        %2239 = vmatpush1.xpose.msra.mxu0 0.0
        %2240 = vmatprep.subr.mxu0 0.0
        %2241 = vmatpush1.xpose.msra.mxu0 0.0
        %2242 = vmatprep.subr.mxu0 0.0
        %2243 = vmatpush1.xpose.msra.mxu0 0.0
        %2244 = vmatprep.subr.mxu0 0.0
        %2245 = vmatpush1.xpose.msra.mxu0 0.0
        %2246 = vmatprep.subr.mxu0 0.0
        %2247 = vmatpush1.xpose.msra.mxu0 0.0
        %2248 = vmatprep.subr.mxu0 0.0
        %2249 = vmatpush1.xpose.msra.mxu0 0.0
        %2250 = vmatprep.subr.mxu0 0.0
        %2251 = vmatpush1.xpose.msra.mxu0 0.0
        %2252 = vmatprep.subr.mxu0 0.0
        %2253 = vmatpush1.xpose.msra.mxu0 0.0
        %2254 = vmatprep.subr.mxu0 0.0
        %2255 = vmatpush1.xpose.msra.mxu0 0.0
        %2256 = vmatprep.subr.mxu0 0.0
        %2257 = vmatpush1.xpose.msra.mxu0 0.0
        %2258 = vmatprep.subr.mxu0 0.0
        %2259 = vmatpush1.xpose.msra.mxu0 0.0
        %2260 = vmatprep.subr.mxu0 0.0
        %2261 = vmatpush1.xpose.msra.mxu0 0.0
        %2262 = vmatprep.subr.mxu0 0.0
        %2263 = vmatpush1.xpose.msra.mxu0 0.0
        %2264 = vmatprep.subr.mxu0 0.0
        %2265 = vmatpush1.xpose.msra.mxu0 0.0
        %2266 = vmatprep.subr.mxu0 0.0
        %2267 = vmatpush1.xpose.msra.mxu0 0.0
        %2268 = vmatprep.subr.mxu0 0.0
        %2269 = vmatpush1.xpose.msra.mxu0 0.0
        %2270 = vmatprep.subr.mxu0 0.0
        %2271 = vmatpush1.xpose.msra.mxu0 0.0
        %2272 = vmatprep.subr.mxu0 0.0
        %2273 = vmatpush1.xpose.msra.mxu0 0.0
        %2274 = vmatprep.subr.mxu0 0.0
        %2275 = vmatpush1.xpose.msra.mxu0 0.0
        %2276 = vmatprep.subr.mxu0 0.0
        %2277 = vmatpush1.xpose.msra.mxu0 0.0
        %2278 = vmatprep.subr.mxu0 0.0
        %2279 = vmatpush1.xpose.msra.mxu0 0.0
        %2280 = vmatprep.subr.mxu0 0.0
        %2281 = vmatpush1.xpose.msra.mxu0 0.0
        %2282 = vmatprep.subr.mxu0 0.0
        %2283 = vmatpush1.xpose.msra.mxu0 0.0
        %2284 = vmatprep.subr.mxu0 0.0
        %2285 = vmatpush1.xpose.msra.mxu0 0.0
        %2286 = vmatprep.subr.mxu0 0.0
        %2287 = vmatpush1.xpose.msra.mxu0 0.0
        %2288 = vmatprep.subr.mxu0 0.0
        %2289 = vmatpush1.xpose.msra.mxu0 0.0
        %2290 = vmatprep.subr.mxu0 0.0
        %2291 = vmatpush1.xpose.msra.mxu0 0.0
        %2292 = vmatprep.subr.mxu0 0.0
        %2293 = vmatpush1.xpose.msra.mxu0 0.0
        %2294 = vmatprep.subr.mxu0 0.0
        %2295 = vmatpush1.xpose.msra.mxu0 0.0
        %2296 = vmatprep.subr.mxu0 0.0
        %2297 = vmatpush1.xpose.msra.mxu0 0.0
        %2298 = vmatprep.subr.mxu0 0.0
        %2299 = vmatpush1.xpose.msra.mxu0 0.0
        %2300 = vmatprep.mubr.f32.mxu0 0.0
        %2301 = vmatmul.mubr.f32.gmra.mrb[0].mxu0 %v2232
        %v2302 = vpop.f32.mrb[0].mxu0
        %v2303 = vadd.f32 %v980, %v2302
        %v2304 = vpop.f32.mrb[0].mxu0
        %2305 = vdwg.mxu0
        %v2306 = vadd.f32 %v2303, %v1063
        %v2307 = vsel %vm984, %v2306, -inf
        %2308 = vmax.xlane.f32.xlu0 %v2307
        %v2309 = vpop.xlane.xlu0 %2308
        %v2310 = vsub.f32 %v2306, %v2309
        %v2311 = vmul.f32 %v2310, 1.442695
        %v2312 = vpow.pop %v2311
        %v2313 = vsel %vm984, %v2312, 0.0
        %2314 = vadd.xlane.f32.xlu0 %v2313
        %v2315 = vpop.xlane.xlu0 %2314
        %v2316 = vrcp.pop %v2315
        %v2317 = vmul.f32 %v2312, %v2316
        %2318 = vrot.lane.b32.xlu0 %v2221, 64
        %v2319 = vpop.permute.xlu0 %2318
        %v2322 = vsel %vm984, %v2317, 0
        %2324 = vmatprep.subr.mxu0 0.0
        %2325 = vmatpush1.msra.mxu0 %v2319
        %2326 = vmatprep.subr.mxu0 0.0
        %2327 = vmatpush1.msra.mxu0 0.0
        %2328 = vmatprep.subr.mxu0 0.0
        %2329 = vmatpush1.msra.mxu0 0.0
        %2330 = vmatprep.subr.mxu0 0.0
        %2331 = vmatpush1.msra.mxu0 0.0
        %2332 = vmatprep.subr.mxu0 0.0
        %2333 = vmatpush1.msra.mxu0 0.0
        %2334 = vmatprep.subr.mxu0 0.0
        %2335 = vmatpush1.msra.mxu0 0.0
        %2336 = vmatprep.subr.mxu0 0.0
        %2337 = vmatpush1.msra.mxu0 0.0
        %2338 = vmatprep.subr.mxu0 0.0
        %2339 = vmatpush1.msra.mxu0 0.0
        %2340 = vmatprep.subr.mxu0 0.0
        %2341 = vmatpush1.msra.mxu0 0.0
        %2342 = vmatprep.subr.mxu0 0.0
        %2343 = vmatpush1.msra.mxu0 0.0
        %2344 = vmatprep.subr.mxu0 0.0
        %2345 = vmatpush1.msra.mxu0 0.0
        %2346 = vmatprep.subr.mxu0 0.0
        %2347 = vmatpush1.msra.mxu0 0.0
        %2348 = vmatprep.subr.mxu0 0.0
        %2349 = vmatpush1.msra.mxu0 0.0
        %2350 = vmatprep.subr.mxu0 0.0
        %2351 = vmatpush1.msra.mxu0 0.0
        %2352 = vmatprep.subr.mxu0 0.0
        %2353 = vmatpush1.msra.mxu0 0.0
        %2354 = vmatprep.subr.mxu0 0.0
        %2355 = vmatpush1.msra.mxu0 0.0
        %2356 = vmatprep.subr.mxu0 0.0
        %2357 = vmatpush1.msra.mxu0 0.0
        %2358 = vmatprep.subr.mxu0 0.0
        %2359 = vmatpush1.msra.mxu0 0.0
        %2360 = vmatprep.subr.mxu0 0.0
        %2361 = vmatpush1.msra.mxu0 0.0
        %2362 = vmatprep.subr.mxu0 0.0
        %2363 = vmatpush1.msra.mxu0 0.0
        %2364 = vmatprep.subr.mxu0 0.0
        %2365 = vmatpush1.msra.mxu0 0.0
        %2366 = vmatprep.subr.mxu0 0.0
        %2367 = vmatpush1.msra.mxu0 0.0
        %2368 = vmatprep.subr.mxu0 0.0
        %2369 = vmatpush1.msra.mxu0 0.0
        %2370 = vmatprep.subr.mxu0 0.0
        %2371 = vmatpush1.msra.mxu0 0.0
        %2372 = vmatprep.subr.mxu0 0.0
        %2373 = vmatpush1.msra.mxu0 0.0
        %2374 = vmatprep.subr.mxu0 0.0
        %2375 = vmatpush1.msra.mxu0 0.0
        %2376 = vmatprep.subr.mxu0 0.0
        %2377 = vmatpush1.msra.mxu0 0.0
        %2378 = vmatprep.subr.mxu0 0.0
        %2379 = vmatpush1.msra.mxu0 0.0
        %2380 = vmatprep.subr.mxu0 0.0
        %2381 = vmatpush1.msra.mxu0 0.0
        %2382 = vmatprep.subr.mxu0 0.0
        %2383 = vmatpush1.msra.mxu0 0.0
        %2384 = vmatprep.subr.mxu0 0.0
        %2385 = vmatpush1.msra.mxu0 0.0
        %2386 = vmatprep.subr.mxu0 0.0
        %2387 = vmatpush1.msra.mxu0 0.0
        %2388 = vmatprep.mubr.f32.mxu0 0.0
        %2389 = vmatmul.mubr.f32.gmra.mrb[0].mxu0 %v2322
        %v2390 = vpop.f32.mrb[0].mxu0
        %v2391 = vadd.f32 0.0, %v2390
        %v2392 = vpop.f32.mrb[0].mxu0
        %2393 = vdwg.mxu0
        %2394 = vrot.lane.b32.xlu0 %v2221, 120
        %v2395 = vpop.permute.xlu0 %2394
        %2396 = vrot.lane.b32.xlu0 %v2221, 88
        %v2397 = vpop.permute.xlu0 %2396
        %v2398 = vsel %vm984, %v2395, 0
        %v2400 = vsel %vm984, %v2397, 0
        %2402 = vmatprep.subr.mxu0 0.0
        %2403 = vmatpush1.xpose.msra.mxu0 %v2400
        %2404 = vmatprep.subr.mxu0 0.0
        %2405 = vmatpush1.xpose.msra.mxu0 0.0
        %2406 = vmatprep.subr.mxu0 0.0
        %2407 = vmatpush1.xpose.msra.mxu0 0.0
        %2408 = vmatprep.subr.mxu0 0.0
        %2409 = vmatpush1.xpose.msra.mxu0 0.0
        %2410 = vmatprep.subr.mxu0 0.0
        %2411 = vmatpush1.xpose.msra.mxu0 0.0
        %2412 = vmatprep.subr.mxu0 0.0
        %2413 = vmatpush1.xpose.msra.mxu0 0.0
        %2414 = vmatprep.subr.mxu0 0.0
        %2415 = vmatpush1.xpose.msra.mxu0 0.0
        %2416 = vmatprep.subr.mxu0 0.0
        %2417 = vmatpush1.xpose.msra.mxu0 0.0
        %2418 = vmatprep.subr.mxu0 0.0
        %2419 = vmatpush1.xpose.msra.mxu0 0.0
        %2420 = vmatprep.subr.mxu0 0.0
        %2421 = vmatpush1.xpose.msra.mxu0 0.0
        %2422 = vmatprep.subr.mxu0 0.0
        %2423 = vmatpush1.xpose.msra.mxu0 0.0
        %2424 = vmatprep.subr.mxu0 0.0
        %2425 = vmatpush1.xpose.msra.mxu0 0.0
        %2426 = vmatprep.subr.mxu0 0.0
        %2427 = vmatpush1.xpose.msra.mxu0 0.0
        %2428 = vmatprep.subr.mxu0 0.0
        %2429 = vmatpush1.xpose.msra.mxu0 0.0
        %2430 = vmatprep.subr.mxu0 0.0
        %2431 = vmatpush1.xpose.msra.mxu0 0.0
        %2432 = vmatprep.subr.mxu0 0.0
        %2433 = vmatpush1.xpose.msra.mxu0 0.0
        %2434 = vmatprep.subr.mxu0 0.0
        %2435 = vmatpush1.xpose.msra.mxu0 0.0
        %2436 = vmatprep.subr.mxu0 0.0
        %2437 = vmatpush1.xpose.msra.mxu0 0.0
        %2438 = vmatprep.subr.mxu0 0.0
        %2439 = vmatpush1.xpose.msra.mxu0 0.0
        %2440 = vmatprep.subr.mxu0 0.0
        %2441 = vmatpush1.xpose.msra.mxu0 0.0
        %2442 = vmatprep.subr.mxu0 0.0
        %2443 = vmatpush1.xpose.msra.mxu0 0.0
        %2444 = vmatprep.subr.mxu0 0.0
        %2445 = vmatpush1.xpose.msra.mxu0 0.0
        %2446 = vmatprep.subr.mxu0 0.0
        %2447 = vmatpush1.xpose.msra.mxu0 0.0
        %2448 = vmatprep.subr.mxu0 0.0
        %2449 = vmatpush1.xpose.msra.mxu0 0.0
        %2450 = vmatprep.subr.mxu0 0.0
        %2451 = vmatpush1.xpose.msra.mxu0 0.0
        %2452 = vmatprep.subr.mxu0 0.0
        %2453 = vmatpush1.xpose.msra.mxu0 0.0
        %2454 = vmatprep.subr.mxu0 0.0
        %2455 = vmatpush1.xpose.msra.mxu0 0.0
        %2456 = vmatprep.subr.mxu0 0.0
        %2457 = vmatpush1.xpose.msra.mxu0 0.0
        %2458 = vmatprep.subr.mxu0 0.0
        %2459 = vmatpush1.xpose.msra.mxu0 0.0
        %2460 = vmatprep.subr.mxu0 0.0
        %2461 = vmatpush1.xpose.msra.mxu0 0.0
        %2462 = vmatprep.subr.mxu0 0.0
        %2463 = vmatpush1.xpose.msra.mxu0 0.0
        %2464 = vmatprep.subr.mxu0 0.0
        %2465 = vmatpush1.xpose.msra.mxu0 0.0
        %2466 = vmatprep.mubr.f32.mxu0 0.0
        %2467 = vmatmul.mubr.f32.gmra.mrb[0].mxu0 %v2398
        %v2468 = vpop.f32.mrb[0].mxu0
        %v2469 = vadd.f32 %v1154, %v2468
        %v2470 = vpop.f32.mrb[0].mxu0
        %2471 = vdwg.mxu0
        %v2472 = vadd.f32 %v2469, %v1063
        %v2473 = vsel %vm984, %v2472, -inf
        %2474 = vmax.xlane.f32.xlu0 %v2473
        %v2475 = vpop.xlane.xlu0 %2474
        %v2476 = vsub.f32 %v2472, %v2475
        %v2477 = vmul.f32 %v2476, 1.442695
        %v2478 = vpow.pop %v2477
        %v2479 = vsel %vm984, %v2478, 0.0
        %2480 = vadd.xlane.f32.xlu0 %v2479
        %v2481 = vpop.xlane.xlu0 %2480
        %v2482 = vrcp.pop %v2481
        %v2483 = vmul.f32 %v2478, %v2482
        %2484 = vrot.lane.b32.xlu0 %v2221, 56
        %v2485 = vpop.permute.xlu0 %2484
        %v2488 = vsel %vm984, %v2483, 0
        %2490 = vmatprep.subr.mxu0 0.0
        %2491 = vmatpush1.msra.mxu0 %v2485
        %2492 = vmatprep.subr.mxu0 0.0
        %2493 = vmatpush1.msra.mxu0 0.0
        %2494 = vmatprep.subr.mxu0 0.0
        %2495 = vmatpush1.msra.mxu0 0.0
        %2496 = vmatprep.subr.mxu0 0.0
        %2497 = vmatpush1.msra.mxu0 0.0
        %2498 = vmatprep.subr.mxu0 0.0
        %2499 = vmatpush1.msra.mxu0 0.0
        %2500 = vmatprep.subr.mxu0 0.0
        %2501 = vmatpush1.msra.mxu0 0.0
        %2502 = vmatprep.subr.mxu0 0.0
        %2503 = vmatpush1.msra.mxu0 0.0
        %2504 = vmatprep.subr.mxu0 0.0
        %2505 = vmatpush1.msra.mxu0 0.0
        %2506 = vmatprep.subr.mxu0 0.0
        %2507 = vmatpush1.msra.mxu0 0.0
        %2508 = vmatprep.subr.mxu0 0.0
        %2509 = vmatpush1.msra.mxu0 0.0
        %2510 = vmatprep.subr.mxu0 0.0
        %2511 = vmatpush1.msra.mxu0 0.0
        %2512 = vmatprep.subr.mxu0 0.0
        %2513 = vmatpush1.msra.mxu0 0.0
        %2514 = vmatprep.subr.mxu0 0.0
        %2515 = vmatpush1.msra.mxu0 0.0
        %2516 = vmatprep.subr.mxu0 0.0
        %2517 = vmatpush1.msra.mxu0 0.0
        %2518 = vmatprep.subr.mxu0 0.0
        %2519 = vmatpush1.msra.mxu0 0.0
        %2520 = vmatprep.subr.mxu0 0.0
        %2521 = vmatpush1.msra.mxu0 0.0
        %2522 = vmatprep.subr.mxu0 0.0
        %2523 = vmatpush1.msra.mxu0 0.0
        %2524 = vmatprep.subr.mxu0 0.0
        %2525 = vmatpush1.msra.mxu0 0.0
        %2526 = vmatprep.subr.mxu0 0.0
        %2527 = vmatpush1.msra.mxu0 0.0
        %2528 = vmatprep.subr.mxu0 0.0
        %2529 = vmatpush1.msra.mxu0 0.0
        %2530 = vmatprep.subr.mxu0 0.0
        %2531 = vmatpush1.msra.mxu0 0.0
        %2532 = vmatprep.subr.mxu0 0.0
        %2533 = vmatpush1.msra.mxu0 0.0
        %2534 = vmatprep.subr.mxu0 0.0
        %2535 = vmatpush1.msra.mxu0 0.0
        %2536 = vmatprep.subr.mxu0 0.0
        %2537 = vmatpush1.msra.mxu0 0.0
        %2538 = vmatprep.subr.mxu0 0.0
        %2539 = vmatpush1.msra.mxu0 0.0
        %2540 = vmatprep.subr.mxu0 0.0
        %2541 = vmatpush1.msra.mxu0 0.0
        %2542 = vmatprep.subr.mxu0 0.0
        %2543 = vmatpush1.msra.mxu0 0.0
        %2544 = vmatprep.subr.mxu0 0.0
        %2545 = vmatpush1.msra.mxu0 0.0
        %2546 = vmatprep.subr.mxu0 0.0
        %2547 = vmatpush1.msra.mxu0 0.0
        %2548 = vmatprep.subr.mxu0 0.0
        %2549 = vmatpush1.msra.mxu0 0.0
        %2550 = vmatprep.subr.mxu0 0.0
        %2551 = vmatpush1.msra.mxu0 0.0
        %2552 = vmatprep.subr.mxu0 0.0
        %2553 = vmatpush1.msra.mxu0 0.0
        %2554 = vmatprep.mubr.f32.mxu0 0.0
        %2555 = vmatmul.mubr.f32.gmra.mrb[0].mxu0 %v2488
        %v2556 = vpop.f32.mrb[0].mxu0
        %v2557 = vadd.f32 0.0, %v2556
        %v2558 = vpop.f32.mrb[0].mxu0
        %2559 = vdwg.mxu0
        %v2561 = vsel %vm984, %v2557, 0
        %2563 = vmatprep.subr.mxu0 0.0
        %2564 = vmatpush1.msra.mxu0 %v2226
        %2565 = vmatprep.subr.mxu0 0.0
        %2566 = vmatpush1.msra.mxu0 0.0
        %2567 = vmatprep.subr.mxu0 0.0
        %2568 = vmatpush1.msra.mxu0 0.0
        %2569 = vmatprep.subr.mxu0 0.0
        %2570 = vmatpush1.msra.mxu0 0.0
        %2571 = vmatprep.subr.mxu0 0.0
        %2572 = vmatpush1.msra.mxu0 0.0
        %2573 = vmatprep.subr.mxu0 0.0
        %2574 = vmatpush1.msra.mxu0 0.0
        %2575 = vmatprep.subr.mxu0 0.0
        %2576 = vmatpush1.msra.mxu0 0.0
        %2577 = vmatprep.subr.mxu0 0.0
        %2578 = vmatpush1.msra.mxu0 0.0
        %2579 = vmatprep.subr.mxu0 0.0
        %2580 = vmatpush1.msra.mxu0 0.0
        %2581 = vmatprep.subr.mxu0 0.0
        %2582 = vmatpush1.msra.mxu0 0.0
        %2583 = vmatprep.subr.mxu0 0.0
        %2584 = vmatpush1.msra.mxu0 0.0
        %2585 = vmatprep.subr.mxu0 0.0
        %2586 = vmatpush1.msra.mxu0 0.0
        %2587 = vmatprep.subr.mxu0 0.0
        %2588 = vmatpush1.msra.mxu0 0.0
        %2589 = vmatprep.subr.mxu0 0.0
        %2590 = vmatpush1.msra.mxu0 0.0
        %2591 = vmatprep.subr.mxu0 0.0
        %2592 = vmatpush1.msra.mxu0 0.0
        %2593 = vmatprep.subr.mxu0 0.0
        %2594 = vmatpush1.msra.mxu0 0.0
        %2595 = vmatprep.subr.mxu0 0.0
        %2596 = vmatpush1.msra.mxu0 0.0
        %2597 = vmatprep.subr.mxu0 0.0
        %2598 = vmatpush1.msra.mxu0 0.0
        %2599 = vmatprep.subr.mxu0 0.0
        %2600 = vmatpush1.msra.mxu0 0.0
        %2601 = vmatprep.subr.mxu0 0.0
        %2602 = vmatpush1.msra.mxu0 0.0
        %2603 = vmatprep.subr.mxu0 0.0
        %2604 = vmatpush1.msra.mxu0 0.0
        %2605 = vmatprep.subr.mxu0 0.0
        %2606 = vmatpush1.msra.mxu0 0.0
        %2607 = vmatprep.subr.mxu0 0.0
        %2608 = vmatpush1.msra.mxu0 0.0
        %2609 = vmatprep.subr.mxu0 0.0
        %2610 = vmatpush1.msra.mxu0 0.0
        %2611 = vmatprep.subr.mxu0 0.0
        %2612 = vmatpush1.msra.mxu0 0.0
        %2613 = vmatprep.subr.mxu0 0.0
        %2614 = vmatpush1.msra.mxu0 0.0
        %2615 = vmatprep.subr.mxu0 0.0
        %2616 = vmatpush1.msra.mxu0 0.0
        %2617 = vmatprep.subr.mxu0 0.0
        %2618 = vmatpush1.msra.mxu0 0.0
        %2619 = vmatprep.subr.mxu0 0.0
        %2620 = vmatpush1.msra.mxu0 0.0
        %2621 = vmatprep.subr.mxu0 0.0
        %2622 = vmatpush1.msra.mxu0 0.0
        %2623 = vmatprep.subr.mxu0 0.0
        %2624 = vmatpush1.msra.mxu0 0.0
        %2625 = vmatprep.subr.mxu0 0.0
        %2626 = vmatpush1.msra.mxu0 0.0
        %2627 = vmatprep.mubr.f32.mxu0 0.0
        %2628 = vmatmul.mubr.f32.gmra.mrb[0].mxu0 %v2561
        %v2629 = vpop.f32.mrb[0].mxu0
        %v2630 = vadd.f32 0.0, %v2629
        %v2631 = vpop.f32.mrb[0].mxu0
        %2632 = vdwg.mxu0
        %v2634 = vsel %vm984, %v2391, 0
        %2636 = vmatprep.subr.mxu0 0.0
        %2637 = vmatpush1.msra.mxu0 %v2225
        %2638 = vmatprep.subr.mxu0 0.0
        %2639 = vmatpush1.msra.mxu0 0.0
        %2640 = vmatprep.subr.mxu0 0.0
        %2641 = vmatpush1.msra.mxu0 0.0
        %2642 = vmatprep.subr.mxu0 0.0
        %2643 = vmatpush1.msra.mxu0 0.0
        %2644 = vmatprep.subr.mxu0 0.0
        %2645 = vmatpush1.msra.mxu0 0.0
        %2646 = vmatprep.subr.mxu0 0.0
        %2647 = vmatpush1.msra.mxu0 0.0
        %2648 = vmatprep.subr.mxu0 0.0
        %2649 = vmatpush1.msra.mxu0 0.0
        %2650 = vmatprep.subr.mxu0 0.0
        %2651 = vmatpush1.msra.mxu0 0.0
        %2652 = vmatprep.subr.mxu0 0.0
        %2653 = vmatpush1.msra.mxu0 0.0
        %2654 = vmatprep.subr.mxu0 0.0
        %2655 = vmatpush1.msra.mxu0 0.0
        %2656 = vmatprep.subr.mxu0 0.0
        %2657 = vmatpush1.msra.mxu0 0.0
        %2658 = vmatprep.subr.mxu0 0.0
        %2659 = vmatpush1.msra.mxu0 0.0
        %2660 = vmatprep.subr.mxu0 0.0
        %2661 = vmatpush1.msra.mxu0 0.0
        %2662 = vmatprep.subr.mxu0 0.0
        %2663 = vmatpush1.msra.mxu0 0.0
        %2664 = vmatprep.subr.mxu0 0.0
        %2665 = vmatpush1.msra.mxu0 0.0
        %2666 = vmatprep.subr.mxu0 0.0
        %2667 = vmatpush1.msra.mxu0 0.0
        %2668 = vmatprep.subr.mxu0 0.0
        %2669 = vmatpush1.msra.mxu0 0.0
        %2670 = vmatprep.subr.mxu0 0.0
        %2671 = vmatpush1.msra.mxu0 0.0
        %2672 = vmatprep.subr.mxu0 0.0
        %2673 = vmatpush1.msra.mxu0 0.0
        %2674 = vmatprep.subr.mxu0 0.0
        %2675 = vmatpush1.msra.mxu0 0.0
        %2676 = vmatprep.subr.mxu0 0.0
        %2677 = vmatpush1.msra.mxu0 0.0
        %2678 = vmatprep.subr.mxu0 0.0
        %2679 = vmatpush1.msra.mxu0 0.0
        %2680 = vmatprep.subr.mxu0 0.0
        %2681 = vmatpush1.msra.mxu0 0.0
        %2682 = vmatprep.subr.mxu0 0.0
        %2683 = vmatpush1.msra.mxu0 0.0
        %2684 = vmatprep.subr.mxu0 0.0
        %2685 = vmatpush1.msra.mxu0 0.0
        %2686 = vmatprep.subr.mxu0 0.0
        %2687 = vmatpush1.msra.mxu0 0.0
        %2688 = vmatprep.subr.mxu0 0.0
        %2689 = vmatpush1.msra.mxu0 0.0
        %2690 = vmatprep.subr.mxu0 0.0
        %2691 = vmatpush1.msra.mxu0 0.0
        %2692 = vmatprep.subr.mxu0 0.0
        %2693 = vmatpush1.msra.mxu0 0.0
        %2694 = vmatprep.subr.mxu0 0.0
        %2695 = vmatpush1.msra.mxu0 0.0
        %2696 = vmatprep.subr.mxu0 0.0
        %2697 = vmatpush1.msra.mxu0 0.0
        %2698 = vmatprep.subr.mxu0 0.0
        %2699 = vmatpush1.msra.mxu0 0.0
        %2700 = vmatprep.mubr.f32.mxu0 0.0
        %2701 = vmatmul.mubr.f32.gmra.mrb[0].mxu0 %v2634
        %v2702 = vpop.f32.mrb[0].mxu0
        %v2703 = vadd.f32 %v2630, %v2702
        %v2704 = vpop.f32.mrb[0].mxu0
        %2705 = vdwg.mxu0
        %2706 = vrot.lane.b32.xlu0 %v2221, 112
        %v2707 = vpop.permute.xlu0 %2706
        %2708 = vrot.lane.b32.xlu0 %v2221, 80
        %v2709 = vpop.permute.xlu0 %2708
        %v2710 = vsel %vm984, %v2707, 0
        %v2712 = vsel %vm984, %v2709, 0
        %2714 = vmatprep.subr.mxu0 0.0
        %2715 = vmatpush1.xpose.msra.mxu0 %v2712
        %2716 = vmatprep.subr.mxu0 0.0
        %2717 = vmatpush1.xpose.msra.mxu0 0.0
        %2718 = vmatprep.subr.mxu0 0.0
        %2719 = vmatpush1.xpose.msra.mxu0 0.0
        %2720 = vmatprep.subr.mxu0 0.0
        %2721 = vmatpush1.xpose.msra.mxu0 0.0
        %2722 = vmatprep.subr.mxu0 0.0
        %2723 = vmatpush1.xpose.msra.mxu0 0.0
        %2724 = vmatprep.subr.mxu0 0.0
        %2725 = vmatpush1.xpose.msra.mxu0 0.0
        %2726 = vmatprep.subr.mxu0 0.0
        %2727 = vmatpush1.xpose.msra.mxu0 0.0
        %2728 = vmatprep.subr.mxu0 0.0
        %2729 = vmatpush1.xpose.msra.mxu0 0.0
        %2730 = vmatprep.subr.mxu0 0.0
        %2731 = vmatpush1.xpose.msra.mxu0 0.0
        %2732 = vmatprep.subr.mxu0 0.0
        %2733 = vmatpush1.xpose.msra.mxu0 0.0
        %2734 = vmatprep.subr.mxu0 0.0
        %2735 = vmatpush1.xpose.msra.mxu0 0.0
        %2736 = vmatprep.subr.mxu0 0.0
        %2737 = vmatpush1.xpose.msra.mxu0 0.0
        %2738 = vmatprep.subr.mxu0 0.0
        %2739 = vmatpush1.xpose.msra.mxu0 0.0
        %2740 = vmatprep.subr.mxu0 0.0
        %2741 = vmatpush1.xpose.msra.mxu0 0.0
        %2742 = vmatprep.subr.mxu0 0.0
        %2743 = vmatpush1.xpose.msra.mxu0 0.0
        %2744 = vmatprep.subr.mxu0 0.0
        %2745 = vmatpush1.xpose.msra.mxu0 0.0
        %2746 = vmatprep.subr.mxu0 0.0
        %2747 = vmatpush1.xpose.msra.mxu0 0.0
        %2748 = vmatprep.subr.mxu0 0.0
        %2749 = vmatpush1.xpose.msra.mxu0 0.0
        %2750 = vmatprep.subr.mxu0 0.0
        %2751 = vmatpush1.xpose.msra.mxu0 0.0
        %2752 = vmatprep.subr.mxu0 0.0
        %2753 = vmatpush1.xpose.msra.mxu0 0.0
        %2754 = vmatprep.subr.mxu0 0.0
        %2755 = vmatpush1.xpose.msra.mxu0 0.0
        %2756 = vmatprep.subr.mxu0 0.0
        %2757 = vmatpush1.xpose.msra.mxu0 0.0
        %2758 = vmatprep.subr.mxu0 0.0
        %2759 = vmatpush1.xpose.msra.mxu0 0.0
        %2760 = vmatprep.subr.mxu0 0.0
        %2761 = vmatpush1.xpose.msra.mxu0 0.0
        %2762 = vmatprep.subr.mxu0 0.0
        %2763 = vmatpush1.xpose.msra.mxu0 0.0
        %2764 = vmatprep.subr.mxu0 0.0
        %2765 = vmatpush1.xpose.msra.mxu0 0.0
        %2766 = vmatprep.subr.mxu0 0.0
        %2767 = vmatpush1.xpose.msra.mxu0 0.0
        %2768 = vmatprep.subr.mxu0 0.0
        %2769 = vmatpush1.xpose.msra.mxu0 0.0
        %2770 = vmatprep.subr.mxu0 0.0
        %2771 = vmatpush1.xpose.msra.mxu0 0.0
        %2772 = vmatprep.subr.mxu0 0.0
        %2773 = vmatpush1.xpose.msra.mxu0 0.0
        %2774 = vmatprep.subr.mxu0 0.0
        %2775 = vmatpush1.xpose.msra.mxu0 0.0
        %2776 = vmatprep.subr.mxu0 0.0
        %2777 = vmatpush1.xpose.msra.mxu0 0.0
        %2778 = vmatprep.mubr.f32.mxu0 0.0
        %2779 = vmatmul.mubr.f32.gmra.mrb[0].mxu0 %v2710
        %v2780 = vpop.f32.mrb[0].mxu0
        %v2781 = vadd.f32 %v1468, %v2780
        %v2782 = vpop.f32.mrb[0].mxu0
        %2783 = vdwg.mxu0
        %v2784 = vadd.f32 %v2781, %v1063
        %v2785 = vsel %vm984, %v2784, -inf
        %2786 = vmax.xlane.f32.xlu0 %v2785
        %v2787 = vpop.xlane.xlu0 %2786
        %v2788 = vsub.f32 %v2784, %v2787
        %v2789 = vmul.f32 %v2788, 1.442695
        %v2790 = vpow.pop %v2789
        %v2791 = vsel %vm984, %v2790, 0.0
        %2792 = vadd.xlane.f32.xlu0 %v2791
        %v2793 = vpop.xlane.xlu0 %2792
        %v2794 = vrcp.pop %v2793
        %v2795 = vmul.f32 %v2790, %v2794
        %2796 = vrot.lane.b32.xlu0 %v2221, 48
        %v2797 = vpop.permute.xlu0 %2796
        %v2800 = vsel %vm984, %v2795, 0
        %2802 = vmatprep.subr.mxu0 0.0
        %2803 = vmatpush1.msra.mxu0 %v2797
        %2804 = vmatprep.subr.mxu0 0.0
        %2805 = vmatpush1.msra.mxu0 0.0
        %2806 = vmatprep.subr.mxu0 0.0
        %2807 = vmatpush1.msra.mxu0 0.0
        %2808 = vmatprep.subr.mxu0 0.0
        %2809 = vmatpush1.msra.mxu0 0.0
        %2810 = vmatprep.subr.mxu0 0.0
        %2811 = vmatpush1.msra.mxu0 0.0
        %2812 = vmatprep.subr.mxu0 0.0
        %2813 = vmatpush1.msra.mxu0 0.0
        %2814 = vmatprep.subr.mxu0 0.0
        %2815 = vmatpush1.msra.mxu0 0.0
        %2816 = vmatprep.subr.mxu0 0.0
        %2817 = vmatpush1.msra.mxu0 0.0
        %2818 = vmatprep.subr.mxu0 0.0
        %2819 = vmatpush1.msra.mxu0 0.0
        %2820 = vmatprep.subr.mxu0 0.0
        %2821 = vmatpush1.msra.mxu0 0.0
        %2822 = vmatprep.subr.mxu0 0.0
        %2823 = vmatpush1.msra.mxu0 0.0
        %2824 = vmatprep.subr.mxu0 0.0
        %2825 = vmatpush1.msra.mxu0 0.0
        %2826 = vmatprep.subr.mxu0 0.0
        %2827 = vmatpush1.msra.mxu0 0.0
        %2828 = vmatprep.subr.mxu0 0.0
        %2829 = vmatpush1.msra.mxu0 0.0
        %2830 = vmatprep.subr.mxu0 0.0
        %2831 = vmatpush1.msra.mxu0 0.0
        %2832 = vmatprep.subr.mxu0 0.0
        %2833 = vmatpush1.msra.mxu0 0.0
        %2834 = vmatprep.subr.mxu0 0.0
        %2835 = vmatpush1.msra.mxu0 0.0
        %2836 = vmatprep.subr.mxu0 0.0
        %2837 = vmatpush1.msra.mxu0 0.0
        %2838 = vmatprep.subr.mxu0 0.0
        %2839 = vmatpush1.msra.mxu0 0.0
        %2840 = vmatprep.subr.mxu0 0.0
        %2841 = vmatpush1.msra.mxu0 0.0
        %2842 = vmatprep.subr.mxu0 0.0
        %2843 = vmatpush1.msra.mxu0 0.0
        %2844 = vmatprep.subr.mxu0 0.0
        %2845 = vmatpush1.msra.mxu0 0.0
        %2846 = vmatprep.subr.mxu0 0.0
        %2847 = vmatpush1.msra.mxu0 0.0
        %2848 = vmatprep.subr.mxu0 0.0
        %2849 = vmatpush1.msra.mxu0 0.0
        %2850 = vmatprep.subr.mxu0 0.0
        %2851 = vmatpush1.msra.mxu0 0.0
        %2852 = vmatprep.subr.mxu0 0.0
        %2853 = vmatpush1.msra.mxu0 0.0
        %2854 = vmatprep.subr.mxu0 0.0
        %2855 = vmatpush1.msra.mxu0 0.0
        %2856 = vmatprep.subr.mxu0 0.0
        %2857 = vmatpush1.msra.mxu0 0.0
        %2858 = vmatprep.subr.mxu0 0.0
        %2859 = vmatpush1.msra.mxu0 0.0
        %2860 = vmatprep.subr.mxu0 0.0
        %2861 = vmatpush1.msra.mxu0 0.0
        %2862 = vmatprep.subr.mxu0 0.0
        %2863 = vmatpush1.msra.mxu0 0.0
        %2864 = vmatprep.subr.mxu0 0.0
        %2865 = vmatpush1.msra.mxu0 0.0
        %2866 = vmatprep.mubr.f32.mxu0 0.0
        %2867 = vmatmul.mubr.f32.gmra.mrb[0].mxu0 %v2800
        %v2868 = vpop.f32.mrb[0].mxu0
        %v2869 = vadd.f32 0.0, %v2868
        %v2870 = vpop.f32.mrb[0].mxu0
        %2871 = vdwg.mxu0
        %v2873 = vsel %vm984, %v2869, 0
        %2875 = vmatprep.subr.mxu0 0.0
        %2876 = vmatpush1.msra.mxu0 %v2227
        %2877 = vmatprep.subr.mxu0 0.0
        %2878 = vmatpush1.msra.mxu0 0.0
        %2879 = vmatprep.subr.mxu0 0.0
        %2880 = vmatpush1.msra.mxu0 0.0
        %2881 = vmatprep.subr.mxu0 0.0
        %2882 = vmatpush1.msra.mxu0 0.0
        %2883 = vmatprep.subr.mxu0 0.0
        %2884 = vmatpush1.msra.mxu0 0.0
        %2885 = vmatprep.subr.mxu0 0.0
        %2886 = vmatpush1.msra.mxu0 0.0
        %2887 = vmatprep.subr.mxu0 0.0
        %2888 = vmatpush1.msra.mxu0 0.0
        %2889 = vmatprep.subr.mxu0 0.0
        %2890 = vmatpush1.msra.mxu0 0.0
        %2891 = vmatprep.subr.mxu0 0.0
        %2892 = vmatpush1.msra.mxu0 0.0
        %2893 = vmatprep.subr.mxu0 0.0
        %2894 = vmatpush1.msra.mxu0 0.0
        %2895 = vmatprep.subr.mxu0 0.0
        %2896 = vmatpush1.msra.mxu0 0.0
        %2897 = vmatprep.subr.mxu0 0.0
        %2898 = vmatpush1.msra.mxu0 0.0
        %2899 = vmatprep.subr.mxu0 0.0
        %2900 = vmatpush1.msra.mxu0 0.0
        %2901 = vmatprep.subr.mxu0 0.0
        %2902 = vmatpush1.msra.mxu0 0.0
        %2903 = vmatprep.subr.mxu0 0.0
        %2904 = vmatpush1.msra.mxu0 0.0
        %2905 = vmatprep.subr.mxu0 0.0
        %2906 = vmatpush1.msra.mxu0 0.0
        %2907 = vmatprep.subr.mxu0 0.0
        %2908 = vmatpush1.msra.mxu0 0.0
        %2909 = vmatprep.subr.mxu0 0.0
        %2910 = vmatpush1.msra.mxu0 0.0
        %2911 = vmatprep.subr.mxu0 0.0
        %2912 = vmatpush1.msra.mxu0 0.0
        %2913 = vmatprep.subr.mxu0 0.0
        %2914 = vmatpush1.msra.mxu0 0.0
        %2915 = vmatprep.subr.mxu0 0.0
        %2916 = vmatpush1.msra.mxu0 0.0
        %2917 = vmatprep.subr.mxu0 0.0
        %2918 = vmatpush1.msra.mxu0 0.0
        %2919 = vmatprep.subr.mxu0 0.0
        %2920 = vmatpush1.msra.mxu0 0.0
        %2921 = vmatprep.subr.mxu0 0.0
        %2922 = vmatpush1.msra.mxu0 0.0
        %2923 = vmatprep.subr.mxu0 0.0
        %2924 = vmatpush1.msra.mxu0 0.0
        %2925 = vmatprep.subr.mxu0 0.0
        %2926 = vmatpush1.msra.mxu0 0.0
        %2927 = vmatprep.subr.mxu0 0.0
        %2928 = vmatpush1.msra.mxu0 0.0
        %2929 = vmatprep.subr.mxu0 0.0
        %2930 = vmatpush1.msra.mxu0 0.0
        %2931 = vmatprep.subr.mxu0 0.0
        %2932 = vmatpush1.msra.mxu0 0.0
        %2933 = vmatprep.subr.mxu0 0.0
        %2934 = vmatpush1.msra.mxu0 0.0
        %2935 = vmatprep.subr.mxu0 0.0
        %2936 = vmatpush1.msra.mxu0 0.0
        %2937 = vmatprep.subr.mxu0 0.0
        %2938 = vmatpush1.msra.mxu0 0.0
        %2939 = vmatprep.mubr.f32.mxu0 0.0
        %2940 = vmatmul.mubr.f32.gmra.mrb[0].mxu0 %v2873
        %v2941 = vpop.f32.mrb[0].mxu0
        %v2942 = vadd.f32 0.0, %v2941
        %v2943 = vpop.f32.mrb[0].mxu0
        %2944 = vdwg.mxu0
        %v2945 = vadd.f32 %v2703, %v2942
        %2946 = vrot.lane.b32.xlu0 %v2221, 104
        %v2947 = vpop.permute.xlu0 %2946
        %2948 = vrot.lane.b32.xlu0 %v2221, 72
        %v2949 = vpop.permute.xlu0 %2948
        %v2950 = vsel %vm984, %v2947, 0
        %v2952 = vsel %vm984, %v2949, 0
        %2954 = vmatprep.subr.mxu0 0.0
        %2955 = vmatpush1.xpose.msra.mxu0 %v2952
        %2956 = vmatprep.subr.mxu0 0.0
        %2957 = vmatpush1.xpose.msra.mxu0 0.0
        %2958 = vmatprep.subr.mxu0 0.0
        %2959 = vmatpush1.xpose.msra.mxu0 0.0
        %2960 = vmatprep.subr.mxu0 0.0
        %2961 = vmatpush1.xpose.msra.mxu0 0.0
        %2962 = vmatprep.subr.mxu0 0.0
        %2963 = vmatpush1.xpose.msra.mxu0 0.0
        %2964 = vmatprep.subr.mxu0 0.0
        %2965 = vmatpush1.xpose.msra.mxu0 0.0
        %2966 = vmatprep.subr.mxu0 0.0
        %2967 = vmatpush1.xpose.msra.mxu0 0.0
        %2968 = vmatprep.subr.mxu0 0.0
        %2969 = vmatpush1.xpose.msra.mxu0 0.0
        %2970 = vmatprep.subr.mxu0 0.0
        %2971 = vmatpush1.xpose.msra.mxu0 0.0
        %2972 = vmatprep.subr.mxu0 0.0
        %2973 = vmatpush1.xpose.msra.mxu0 0.0
        %2974 = vmatprep.subr.mxu0 0.0
        %2975 = vmatpush1.xpose.msra.mxu0 0.0
        %2976 = vmatprep.subr.mxu0 0.0
        %2977 = vmatpush1.xpose.msra.mxu0 0.0
        %2978 = vmatprep.subr.mxu0 0.0
        %2979 = vmatpush1.xpose.msra.mxu0 0.0
        %2980 = vmatprep.subr.mxu0 0.0
        %2981 = vmatpush1.xpose.msra.mxu0 0.0
        %2982 = vmatprep.subr.mxu0 0.0
        %2983 = vmatpush1.xpose.msra.mxu0 0.0
        %2984 = vmatprep.subr.mxu0 0.0
        %2985 = vmatpush1.xpose.msra.mxu0 0.0
        %2986 = vmatprep.subr.mxu0 0.0
        %2987 = vmatpush1.xpose.msra.mxu0 0.0
        %2988 = vmatprep.subr.mxu0 0.0
        %2989 = vmatpush1.xpose.msra.mxu0 0.0
        %2990 = vmatprep.subr.mxu0 0.0
        %2991 = vmatpush1.xpose.msra.mxu0 0.0
        %2992 = vmatprep.subr.mxu0 0.0
        %2993 = vmatpush1.xpose.msra.mxu0 0.0
        %2994 = vmatprep.subr.mxu0 0.0
        %2995 = vmatpush1.xpose.msra.mxu0 0.0
        %2996 = vmatprep.subr.mxu0 0.0
        %2997 = vmatpush1.xpose.msra.mxu0 0.0
        %2998 = vmatprep.subr.mxu0 0.0
        %2999 = vmatpush1.xpose.msra.mxu0 0.0
        %3000 = vmatprep.subr.mxu0 0.0
        %3001 = vmatpush1.xpose.msra.mxu0 0.0
        %3002 = vmatprep.subr.mxu0 0.0
        %3003 = vmatpush1.xpose.msra.mxu0 0.0
        %3004 = vmatprep.subr.mxu0 0.0
        %3005 = vmatpush1.xpose.msra.mxu0 0.0
        %3006 = vmatprep.subr.mxu0 0.0
        %3007 = vmatpush1.xpose.msra.mxu0 0.0
        %3008 = vmatprep.subr.mxu0 0.0
        %3009 = vmatpush1.xpose.msra.mxu0 0.0
        %3010 = vmatprep.subr.mxu0 0.0
        %3011 = vmatpush1.xpose.msra.mxu0 0.0
        %3012 = vmatprep.subr.mxu0 0.0
        %3013 = vmatpush1.xpose.msra.mxu0 0.0
        %3014 = vmatprep.subr.mxu0 0.0
        %3015 = vmatpush1.xpose.msra.mxu0 0.0
        %3016 = vmatprep.subr.mxu0 0.0
        %3017 = vmatpush1.xpose.msra.mxu0 0.0
        %3018 = vmatprep.mubr.f32.mxu0 0.0
        %3019 = vmatmul.mubr.f32.gmra.mrb[0].mxu0 %v2950
        %v3020 = vpop.f32.mrb[0].mxu0
        %v3021 = vadd.f32 %v1710, %v3020
        %v3022 = vpop.f32.mrb[0].mxu0
        %3023 = vdwg.mxu0
        %v3024 = vadd.f32 %v3021, %v1063
        %v3025 = vsel %vm984, %v3024, -inf
        %3026 = vmax.xlane.f32.xlu0 %v3025
        %v3027 = vpop.xlane.xlu0 %3026
        %v3028 = vsub.f32 %v3024, %v3027
        %v3029 = vmul.f32 %v3028, 1.442695
        %v3030 = vpow.pop %v3029
        %v3031 = vsel %vm984, %v3030, 0.0
        %3032 = vadd.xlane.f32.xlu0 %v3031
        %v3033 = vpop.xlane.xlu0 %3032
        %v3034 = vrcp.pop %v3033
        %v3035 = vmul.f32 %v3030, %v3034
        %3036 = vrot.lane.b32.xlu0 %v2221, 40
        %v3037 = vpop.permute.xlu0 %3036
        %v3040 = vsel %vm984, %v3035, 0
        %3042 = vmatprep.subr.mxu0 0.0
        %3043 = vmatpush1.msra.mxu0 %v3037
        %3044 = vmatprep.subr.mxu0 0.0
        %3045 = vmatpush1.msra.mxu0 0.0
        %3046 = vmatprep.subr.mxu0 0.0
        %3047 = vmatpush1.msra.mxu0 0.0
        %3048 = vmatprep.subr.mxu0 0.0
        %3049 = vmatpush1.msra.mxu0 0.0
        %3050 = vmatprep.subr.mxu0 0.0
        %3051 = vmatpush1.msra.mxu0 0.0
        %3052 = vmatprep.subr.mxu0 0.0
        %3053 = vmatpush1.msra.mxu0 0.0
        %3054 = vmatprep.subr.mxu0 0.0
        %3055 = vmatpush1.msra.mxu0 0.0
        %3056 = vmatprep.subr.mxu0 0.0
        %3057 = vmatpush1.msra.mxu0 0.0
        %3058 = vmatprep.subr.mxu0 0.0
        %3059 = vmatpush1.msra.mxu0 0.0
        %3060 = vmatprep.subr.mxu0 0.0
        %3061 = vmatpush1.msra.mxu0 0.0
        %3062 = vmatprep.subr.mxu0 0.0
        %3063 = vmatpush1.msra.mxu0 0.0
        %3064 = vmatprep.subr.mxu0 0.0
        %3065 = vmatpush1.msra.mxu0 0.0
        %3066 = vmatprep.subr.mxu0 0.0
        %3067 = vmatpush1.msra.mxu0 0.0
        %3068 = vmatprep.subr.mxu0 0.0
        %3069 = vmatpush1.msra.mxu0 0.0
        %3070 = vmatprep.subr.mxu0 0.0
        %3071 = vmatpush1.msra.mxu0 0.0
        %3072 = vmatprep.subr.mxu0 0.0
        %3073 = vmatpush1.msra.mxu0 0.0
        %3074 = vmatprep.subr.mxu0 0.0
        %3075 = vmatpush1.msra.mxu0 0.0
        %3076 = vmatprep.subr.mxu0 0.0
        %3077 = vmatpush1.msra.mxu0 0.0
        %3078 = vmatprep.subr.mxu0 0.0
        %3079 = vmatpush1.msra.mxu0 0.0
        %3080 = vmatprep.subr.mxu0 0.0
        %3081 = vmatpush1.msra.mxu0 0.0
        %3082 = vmatprep.subr.mxu0 0.0
        %3083 = vmatpush1.msra.mxu0 0.0
        %3084 = vmatprep.subr.mxu0 0.0
        %3085 = vmatpush1.msra.mxu0 0.0
        %3086 = vmatprep.subr.mxu0 0.0
        %3087 = vmatpush1.msra.mxu0 0.0
        %3088 = vmatprep.subr.mxu0 0.0
        %3089 = vmatpush1.msra.mxu0 0.0
        %3090 = vmatprep.subr.mxu0 0.0
        %3091 = vmatpush1.msra.mxu0 0.0
        %3092 = vmatprep.subr.mxu0 0.0
        %3093 = vmatpush1.msra.mxu0 0.0
        %3094 = vmatprep.subr.mxu0 0.0
        %3095 = vmatpush1.msra.mxu0 0.0
        %3096 = vmatprep.subr.mxu0 0.0
        %3097 = vmatpush1.msra.mxu0 0.0
        %3098 = vmatprep.subr.mxu0 0.0
        %3099 = vmatpush1.msra.mxu0 0.0
        %3100 = vmatprep.subr.mxu0 0.0
        %3101 = vmatpush1.msra.mxu0 0.0
        %3102 = vmatprep.subr.mxu0 0.0
        %3103 = vmatpush1.msra.mxu0 0.0
        %3104 = vmatprep.subr.mxu0 0.0
        %3105 = vmatpush1.msra.mxu0 0.0
        %3106 = vmatprep.mubr.f32.mxu0 0.0
        %3107 = vmatmul.mubr.f32.gmra.mrb[0].mxu0 %v3040
        %v3108 = vpop.f32.mrb[0].mxu0
        %v3109 = vadd.f32 0.0, %v3108
        %v3110 = vpop.f32.mrb[0].mxu0
        %3111 = vdwg.mxu0
        %v3113 = vsel %vm984, %v3109, 0
        %3115 = vmatprep.subr.mxu0 0.0
        %3116 = vmatpush1.msra.mxu0 %v2228
        %3117 = vmatprep.subr.mxu0 0.0
        %3118 = vmatpush1.msra.mxu0 0.0
        %3119 = vmatprep.subr.mxu0 0.0
        %3120 = vmatpush1.msra.mxu0 0.0
        %3121 = vmatprep.subr.mxu0 0.0
        %3122 = vmatpush1.msra.mxu0 0.0
        %3123 = vmatprep.subr.mxu0 0.0
        %3124 = vmatpush1.msra.mxu0 0.0
        %3125 = vmatprep.subr.mxu0 0.0
        %3126 = vmatpush1.msra.mxu0 0.0
        %3127 = vmatprep.subr.mxu0 0.0
        %3128 = vmatpush1.msra.mxu0 0.0
        %3129 = vmatprep.subr.mxu0 0.0
        %3130 = vmatpush1.msra.mxu0 0.0
        %3131 = vmatprep.subr.mxu0 0.0
        %3132 = vmatpush1.msra.mxu0 0.0
        %3133 = vmatprep.subr.mxu0 0.0
        %3134 = vmatpush1.msra.mxu0 0.0
        %3135 = vmatprep.subr.mxu0 0.0
        %3136 = vmatpush1.msra.mxu0 0.0
        %3137 = vmatprep.subr.mxu0 0.0
        %3138 = vmatpush1.msra.mxu0 0.0
        %3139 = vmatprep.subr.mxu0 0.0
        %3140 = vmatpush1.msra.mxu0 0.0
        %3141 = vmatprep.subr.mxu0 0.0
        %3142 = vmatpush1.msra.mxu0 0.0
        %3143 = vmatprep.subr.mxu0 0.0
        %3144 = vmatpush1.msra.mxu0 0.0
        %3145 = vmatprep.subr.mxu0 0.0
        %3146 = vmatpush1.msra.mxu0 0.0
        %3147 = vmatprep.subr.mxu0 0.0
        %3148 = vmatpush1.msra.mxu0 0.0
        %3149 = vmatprep.subr.mxu0 0.0
        %3150 = vmatpush1.msra.mxu0 0.0
        %3151 = vmatprep.subr.mxu0 0.0
        %3152 = vmatpush1.msra.mxu0 0.0
        %3153 = vmatprep.subr.mxu0 0.0
        %3154 = vmatpush1.msra.mxu0 0.0
        %3155 = vmatprep.subr.mxu0 0.0
        %3156 = vmatpush1.msra.mxu0 0.0
        %3157 = vmatprep.subr.mxu0 0.0
        %3158 = vmatpush1.msra.mxu0 0.0
        %3159 = vmatprep.subr.mxu0 0.0
        %3160 = vmatpush1.msra.mxu0 0.0
        %3161 = vmatprep.subr.mxu0 0.0
        %3162 = vmatpush1.msra.mxu0 0.0
        %3163 = vmatprep.subr.mxu0 0.0
        %3164 = vmatpush1.msra.mxu0 0.0
        %3165 = vmatprep.subr.mxu0 0.0
        %3166 = vmatpush1.msra.mxu0 0.0
        %3167 = vmatprep.subr.mxu0 0.0
        %3168 = vmatpush1.msra.mxu0 0.0
        %3169 = vmatprep.subr.mxu0 0.0
        %3170 = vmatpush1.msra.mxu0 0.0
        %3171 = vmatprep.subr.mxu0 0.0
        %3172 = vmatpush1.msra.mxu0 0.0
        %3173 = vmatprep.subr.mxu0 0.0
        %3174 = vmatpush1.msra.mxu0 0.0
        %3175 = vmatprep.subr.mxu0 0.0
        %3176 = vmatpush1.msra.mxu0 0.0
        %3177 = vmatprep.subr.mxu0 0.0
        %3178 = vmatpush1.msra.mxu0 0.0
        %3179 = vmatprep.mubr.f32.mxu0 0.0
        %3180 = vmatmul.mubr.f32.gmra.mrb[0].mxu0 %v3113
        %v3181 = vpop.f32.mrb[0].mxu0
        %v3182 = vadd.f32 0.0, %v3181
        %v3183 = vpop.f32.mrb[0].mxu0
        %3184 = vdwg.mxu0
        %v3185 = vadd.f32 %v2945, %v3182
        %v3186 = vadd.f32 %v2128, %v3185
        %s3187 = scalar_lea.vmem %s9, 1
        %v3188 = vld [vmem:[%s3187] sm:$0x1]
        %v3189 = vmul.f32 %v3186, %v3186
        %v3190 = vsel %vm883, %v3189, 0.0
        %3191 = vadd.xlane.f32.xlu0 %v3190
        %v3192 = vpop.xlane.xlu0 %3191
        %v3193 = vmul.f32 %v3192, %v887
        %v3194 = vadd.f32 %v3193, 1e-06
        %v3195 = vrsqrt.pop %v3194
        %v3196 = vmul.f32 %v3186, %v3195
        %v3198 = vlaneseq
        %v3199 = vshrl.u32 %v3198, 7
        %v3200 = vsub.s32 0, %v3199
        %v3201 = vrot.slane %v3188, %v3200
        %v3203 = vmul.f32 %v3196, %v3201
        %s3204 = scalar_lea.vmem %s10, 32
        %v3205 = vld [vmem:[%s3204] sm:$0xff]
        %v3206 = vld [vmem:[%s3204 + $0x8] sm:$0xff]
        %v3207 = vld [vmem:[%s3204 + $0x10] sm:$0xff]
        %v3208 = vld [vmem:[%s3204 + $0x18] sm:$0xff]
        %v3210 = vsel %vm883, %v3203, 0
        %3212 = vmatprep.subr.mxu0 0.0
        %3213 = vmatpush1.msra.mxu0 %v3205
        %3214 = vmatprep.subr.mxu0 0.0
        %3215 = vmatpush1.msra.mxu0 %v3206
        %3216 = vmatprep.subr.mxu0 0.0
        %3217 = vmatpush1.msra.mxu0 %v3207
        %3218 = vmatprep.subr.mxu0 0.0
        %3219 = vmatpush1.msra.mxu0 %v3208
        %3220 = vmatprep.subr.mxu0 0.0
        %3221 = vmatpush1.msra.mxu0 0.0
        %3222 = vmatprep.subr.mxu0 0.0
        %3223 = vmatpush1.msra.mxu0 0.0
        %3224 = vmatprep.subr.mxu0 0.0
        %3225 = vmatpush1.msra.mxu0 0.0
        %3226 = vmatprep.subr.mxu0 0.0
        %3227 = vmatpush1.msra.mxu0 0.0
        %3228 = vmatprep.subr.mxu0 0.0
        %3229 = vmatpush1.msra.mxu0 0.0
        %3230 = vmatprep.subr.mxu0 0.0
        %3231 = vmatpush1.msra.mxu0 0.0
        %3232 = vmatprep.subr.mxu0 0.0
        %3233 = vmatpush1.msra.mxu0 0.0
        %3234 = vmatprep.subr.mxu0 0.0
        %3235 = vmatpush1.msra.mxu0 0.0
        %3236 = vmatprep.subr.mxu0 0.0
        %3237 = vmatpush1.msra.mxu0 0.0
        %3238 = vmatprep.subr.mxu0 0.0
        %3239 = vmatpush1.msra.mxu0 0.0
        %3240 = vmatprep.subr.mxu0 0.0
        %3241 = vmatpush1.msra.mxu0 0.0
        %3242 = vmatprep.subr.mxu0 0.0
        %3243 = vmatpush1.msra.mxu0 0.0
        %3244 = vmatprep.subr.mxu0 0.0
        %3245 = vmatpush1.msra.mxu0 0.0
        %3246 = vmatprep.subr.mxu0 0.0
        %3247 = vmatpush1.msra.mxu0 0.0
        %3248 = vmatprep.subr.mxu0 0.0
        %3249 = vmatpush1.msra.mxu0 0.0
        %3250 = vmatprep.subr.mxu0 0.0
        %3251 = vmatpush1.msra.mxu0 0.0
        %3252 = vmatprep.subr.mxu0 0.0
        %3253 = vmatpush1.msra.mxu0 0.0
        %3254 = vmatprep.subr.mxu0 0.0
        %3255 = vmatpush1.msra.mxu0 0.0
        %3256 = vmatprep.subr.mxu0 0.0
        %3257 = vmatpush1.msra.mxu0 0.0
        %3258 = vmatprep.subr.mxu0 0.0
        %3259 = vmatpush1.msra.mxu0 0.0
        %3260 = vmatprep.subr.mxu0 0.0
        %3261 = vmatpush1.msra.mxu0 0.0
        %3262 = vmatprep.subr.mxu0 0.0
        %3263 = vmatpush1.msra.mxu0 0.0
        %3264 = vmatprep.subr.mxu0 0.0
        %3265 = vmatpush1.msra.mxu0 0.0
        %3266 = vmatprep.subr.mxu0 0.0
        %3267 = vmatpush1.msra.mxu0 0.0
        %3268 = vmatprep.subr.mxu0 0.0
        %3269 = vmatpush1.msra.mxu0 0.0
        %3270 = vmatprep.subr.mxu0 0.0
        %3271 = vmatpush1.msra.mxu0 0.0
        %3272 = vmatprep.subr.mxu0 0.0
        %3273 = vmatpush1.msra.mxu0 0.0
        %3274 = vmatprep.subr.mxu0 0.0
        %3275 = vmatpush1.msra.mxu0 0.0
        %3276 = vmatprep.mubr.f32.mxu0 0.0
        %3277 = vmatmul.mubr.f32.gmra.mrb[0].mxu0 %v3210
        %v3278 = vpop.f32.mrb[0].mxu0
        %v3279 = vadd.f32 0.0, %v3278
        %v3280 = vpop.f32.mrb[0].mxu0
        %3281 = vdwg.mxu0
        %v3282 = vmax.f32 %v3279, 0.0
        %s3283 = scalar_lea.vmem %s11, 64
        %v3284 = vld [vmem:[%s3283] sm:$0xff]
        %v3285 = vld [vmem:[%s3283 + $0x8] sm:$0xff]
        %v3286 = vld [vmem:[%s3283 + $0x10] sm:$0xff]
        %v3287 = vld [vmem:[%s3283 + $0x18] sm:$0xff]
        %v3288 = vld [vmem:[%s3283 + $0x20] sm:$0xff]
        %v3289 = vld [vmem:[%s3283 + $0x28] sm:$0xff]
        %v3290 = vld [vmem:[%s3283 + $0x30] sm:$0xff]
        %v3291 = vld [vmem:[%s3283 + $0x38] sm:$0xff]
        %v3293 = vsel %vm2054, %v3282, 0
        %3295 = vmatprep.subr.mxu0 0.0
        %3296 = vmatpush1.msra.mxu0 %v3284
        %3297 = vmatprep.subr.mxu0 0.0
        %3298 = vmatpush1.msra.mxu0 %v3285
        %3299 = vmatprep.subr.mxu0 0.0
        %3300 = vmatpush1.msra.mxu0 %v3286
        %3301 = vmatprep.subr.mxu0 0.0
        %3302 = vmatpush1.msra.mxu0 %v3287
        %3303 = vmatprep.subr.mxu0 0.0
        %3304 = vmatpush1.msra.mxu0 %v3288
        %3305 = vmatprep.subr.mxu0 0.0
        %3306 = vmatpush1.msra.mxu0 %v3289
        %3307 = vmatprep.subr.mxu0 0.0
        %3308 = vmatpush1.msra.mxu0 %v3290
        %3309 = vmatprep.subr.mxu0 0.0
        %3310 = vmatpush1.msra.mxu0 %v3291
        %3311 = vmatprep.subr.mxu0 0.0
        %3312 = vmatpush1.msra.mxu0 0.0
        %3313 = vmatprep.subr.mxu0 0.0
        %3314 = vmatpush1.msra.mxu0 0.0
        %3315 = vmatprep.subr.mxu0 0.0
        %3316 = vmatpush1.msra.mxu0 0.0
        %3317 = vmatprep.subr.mxu0 0.0
        %3318 = vmatpush1.msra.mxu0 0.0
        %3319 = vmatprep.subr.mxu0 0.0
        %3320 = vmatpush1.msra.mxu0 0.0
        %3321 = vmatprep.subr.mxu0 0.0
        %3322 = vmatpush1.msra.mxu0 0.0
        %3323 = vmatprep.subr.mxu0 0.0
        %3324 = vmatpush1.msra.mxu0 0.0
        %3325 = vmatprep.subr.mxu0 0.0
        %3326 = vmatpush1.msra.mxu0 0.0
        %3327 = vmatprep.subr.mxu0 0.0
        %3328 = vmatpush1.msra.mxu0 0.0
        %3329 = vmatprep.subr.mxu0 0.0
        %3330 = vmatpush1.msra.mxu0 0.0
        %3331 = vmatprep.subr.mxu0 0.0
        %3332 = vmatpush1.msra.mxu0 0.0
        %3333 = vmatprep.subr.mxu0 0.0
        %3334 = vmatpush1.msra.mxu0 0.0
        %3335 = vmatprep.subr.mxu0 0.0
        %3336 = vmatpush1.msra.mxu0 0.0
        %3337 = vmatprep.subr.mxu0 0.0
        %3338 = vmatpush1.msra.mxu0 0.0
        %3339 = vmatprep.subr.mxu0 0.0
        %3340 = vmatpush1.msra.mxu0 0.0
        %3341 = vmatprep.subr.mxu0 0.0
        %3342 = vmatpush1.msra.mxu0 0.0
        %3343 = vmatprep.subr.mxu0 0.0
        %3344 = vmatpush1.msra.mxu0 0.0
        %3345 = vmatprep.subr.mxu0 0.0
        %3346 = vmatpush1.msra.mxu0 0.0
        %3347 = vmatprep.subr.mxu0 0.0
        %3348 = vmatpush1.msra.mxu0 0.0
        %3349 = vmatprep.subr.mxu0 0.0
        %3350 = vmatpush1.msra.mxu0 0.0
        %3351 = vmatprep.subr.mxu0 0.0
        %3352 = vmatpush1.msra.mxu0 0.0
        %3353 = vmatprep.subr.mxu0 0.0
        %3354 = vmatpush1.msra.mxu0 0.0
        %3355 = vmatprep.subr.mxu0 0.0
        %3356 = vmatpush1.msra.mxu0 0.0
        %3357 = vmatprep.subr.mxu0 0.0
        %3358 = vmatpush1.msra.mxu0 0.0
        %3359 = vmatprep.mubr.f32.mxu0 0.0
        %3360 = vmatmul.mubr.f32.gmra.mrb[0].mxu0 %v3293
        %v3361 = vpop.f32.mrb[0].mxu0
        %v3362 = vadd.f32 0.0, %v3361
        %v3363 = vpop.f32.mrb[0].mxu0
        %3364 = vdwg.mxu0
        %v3365 = vadd.f32 %v3186, %v3362
        %v3366 = vld [vmem:[%s12] sm:$0x1]
        %v3367 = vmul.f32 %v3365, %v3365
        %v3368 = vsel %vm883, %v3367, 0.0
        %3369 = vadd.xlane.f32.xlu0 %v3368
        %v3370 = vpop.xlane.xlu0 %3369
        %v3371 = vmul.f32 %v3370, %v887
        %v3372 = vadd.f32 %v3371, 1e-06
        %v3373 = vrsqrt.pop %v3372
        %v3374 = vmul.f32 %v3365, %v3373
        %v3376 = vlaneseq
        %v3377 = vshrl.u32 %v3376, 7
        %v3378 = vsub.s32 0, %v3377
        %v3379 = vrot.slane %v3366, %v3378
        %v3381 = vmul.f32 %v3374, %v3379
        %v3382 = vld [vmem:[%s865] sm:$0xff]
        %v3383 = vld [vmem:[%s13] sm:$0x1]
        %v3384 = vmul.f32 %v3382, %v3382
        %v3385 = vsel %vm883, %v3384, 0.0
        %3386 = vadd.xlane.f32.xlu0 %v3385
        %v3387 = vpop.xlane.xlu0 %3386
        %v3388 = vmul.f32 %v3387, %v887
        %v3389 = vadd.f32 %v3388, 1e-06
        %v3390 = vrsqrt.pop %v3389
        %v3391 = vmul.f32 %v3382, %v3390
        %v3393 = vlaneseq
        %v3394 = vshrl.u32 %v3393, 7
        %v3395 = vsub.s32 0, %v3394
        %v3396 = vrot.slane %v3383, %v3395
        %v3398 = vmul.f32 %v3391, %v3396
        %v3399 = vld [vmem:[%s14] sm:$0xff]
        %v3400 = vld [vmem:[%s14 + $0x8] sm:$0xff]
        %v3401 = vld [vmem:[%s14 + $0x10] sm:$0xff]
        %v3402 = vld [vmem:[%s14 + $0x18] sm:$0xff]
        %v3404 = vsel %vm883, %v3398, 0
        %3406 = vmatprep.subr.mxu0 0.0
        %3407 = vmatpush1.msra.mxu0 %v3399
        %3408 = vmatprep.subr.mxu0 0.0
        %3409 = vmatpush1.msra.mxu0 %v3400
        %3410 = vmatprep.subr.mxu0 0.0
        %3411 = vmatpush1.msra.mxu0 %v3401
        %3412 = vmatprep.subr.mxu0 0.0
        %3413 = vmatpush1.msra.mxu0 %v3402
        %3414 = vmatprep.subr.mxu0 0.0
        %3415 = vmatpush1.msra.mxu0 0.0
        %3416 = vmatprep.subr.mxu0 0.0
        %3417 = vmatpush1.msra.mxu0 0.0
        %3418 = vmatprep.subr.mxu0 0.0
        %3419 = vmatpush1.msra.mxu0 0.0
        %3420 = vmatprep.subr.mxu0 0.0
        %3421 = vmatpush1.msra.mxu0 0.0
        %3422 = vmatprep.subr.mxu0 0.0
        %3423 = vmatpush1.msra.mxu0 0.0
        %3424 = vmatprep.subr.mxu0 0.0
        %3425 = vmatpush1.msra.mxu0 0.0
        %3426 = vmatprep.subr.mxu0 0.0
        %3427 = vmatpush1.msra.mxu0 0.0
        %3428 = vmatprep.subr.mxu0 0.0
        %3429 = vmatpush1.msra.mxu0 0.0
        %3430 = vmatprep.subr.mxu0 0.0
        %3431 = vmatpush1.msra.mxu0 0.0
        %3432 = vmatprep.subr.mxu0 0.0
        %3433 = vmatpush1.msra.mxu0 0.0
        %3434 = vmatprep.subr.mxu0 0.0
        %3435 = vmatpush1.msra.mxu0 0.0
        %3436 = vmatprep.subr.mxu0 0.0
        %3437 = vmatpush1.msra.mxu0 0.0
        %3438 = vmatprep.subr.mxu0 0.0
        %3439 = vmatpush1.msra.mxu0 0.0
        %3440 = vmatprep.subr.mxu0 0.0
        %3441 = vmatpush1.msra.mxu0 0.0
        %3442 = vmatprep.subr.mxu0 0.0
        %3443 = vmatpush1.msra.mxu0 0.0
        %3444 = vmatprep.subr.mxu0 0.0
        %3445 = vmatpush1.msra.mxu0 0.0
        %3446 = vmatprep.subr.mxu0 0.0
        %3447 = vmatpush1.msra.mxu0 0.0
        %3448 = vmatprep.subr.mxu0 0.0
        %3449 = vmatpush1.msra.mxu0 0.0
        %3450 = vmatprep.subr.mxu0 0.0
        %3451 = vmatpush1.msra.mxu0 0.0
        %3452 = vmatprep.subr.mxu0 0.0
        %3453 = vmatpush1.msra.mxu0 0.0
        %3454 = vmatprep.subr.mxu0 0.0
        %3455 = vmatpush1.msra.mxu0 0.0
        %3456 = vmatprep.subr.mxu0 0.0
        %3457 = vmatpush1.msra.mxu0 0.0
        %3458 = vmatprep.subr.mxu0 0.0
        %3459 = vmatpush1.msra.mxu0 0.0
        %3460 = vmatprep.subr.mxu0 0.0
        %3461 = vmatpush1.msra.mxu0 0.0
        %3462 = vmatprep.subr.mxu0 0.0
        %3463 = vmatpush1.msra.mxu0 0.0
        %3464 = vmatprep.subr.mxu0 0.0
        %3465 = vmatpush1.msra.mxu0 0.0
        %3466 = vmatprep.subr.mxu0 0.0
        %3467 = vmatpush1.msra.mxu0 0.0
        %3468 = vmatprep.subr.mxu0 0.0
        %3469 = vmatpush1.msra.mxu0 0.0
        %3470 = vmatprep.mubr.f32.mxu0 0.0
        %3471 = vmatmul.mubr.f32.gmra.mrb[0].mxu0 %v3404
        %v3472 = vpop.f32.mrb[0].mxu0
        %v3473 = vadd.f32 0.0, %v3472
        %v3474 = vpop.f32.mrb[0].mxu0
        %3475 = vdwg.mxu0
        %v3476 = vld [vmem:[%s15] sm:$0xff]
        %v3477 = vld [vmem:[%s15 + $0x8] sm:$0xff]
        %v3478 = vld [vmem:[%s15 + $0x10] sm:$0xff]
        %v3479 = vld [vmem:[%s15 + $0x18] sm:$0xff]
        %v3480 = vld [vmem:[%s3] sm:$0xff]
        %3482 = vrot.lane.b32.xlu0 %v3473, 96
        %v3483 = vpop.permute.xlu0 %3482
        %v3484 = vsel %vm984, %v3473, 0
        %v3486 = vsel %vm984, %v3483, 0
        %3488 = vmatprep.subr.mxu0 0.0
        %3489 = vmatpush1.xpose.msra.mxu0 %v3486
        %3490 = vmatprep.subr.mxu0 0.0
        %3491 = vmatpush1.xpose.msra.mxu0 0.0
        %3492 = vmatprep.subr.mxu0 0.0
        %3493 = vmatpush1.xpose.msra.mxu0 0.0
        %3494 = vmatprep.subr.mxu0 0.0
        %3495 = vmatpush1.xpose.msra.mxu0 0.0
        %3496 = vmatprep.subr.mxu0 0.0
        %3497 = vmatpush1.xpose.msra.mxu0 0.0
        %3498 = vmatprep.subr.mxu0 0.0
        %3499 = vmatpush1.xpose.msra.mxu0 0.0
        %3500 = vmatprep.subr.mxu0 0.0
        %3501 = vmatpush1.xpose.msra.mxu0 0.0
        %3502 = vmatprep.subr.mxu0 0.0
        %3503 = vmatpush1.xpose.msra.mxu0 0.0
        %3504 = vmatprep.subr.mxu0 0.0
        %3505 = vmatpush1.xpose.msra.mxu0 0.0
        %3506 = vmatprep.subr.mxu0 0.0
        %3507 = vmatpush1.xpose.msra.mxu0 0.0
        %3508 = vmatprep.subr.mxu0 0.0
        %3509 = vmatpush1.xpose.msra.mxu0 0.0
        %3510 = vmatprep.subr.mxu0 0.0
        %3511 = vmatpush1.xpose.msra.mxu0 0.0
        %3512 = vmatprep.subr.mxu0 0.0
        %3513 = vmatpush1.xpose.msra.mxu0 0.0
        %3514 = vmatprep.subr.mxu0 0.0
        %3515 = vmatpush1.xpose.msra.mxu0 0.0
        %3516 = vmatprep.subr.mxu0 0.0
        %3517 = vmatpush1.xpose.msra.mxu0 0.0
        %3518 = vmatprep.subr.mxu0 0.0
        %3519 = vmatpush1.xpose.msra.mxu0 0.0
        %3520 = vmatprep.subr.mxu0 0.0
        %3521 = vmatpush1.xpose.msra.mxu0 0.0
        %3522 = vmatprep.subr.mxu0 0.0
        %3523 = vmatpush1.xpose.msra.mxu0 0.0
        %3524 = vmatprep.subr.mxu0 0.0
        %3525 = vmatpush1.xpose.msra.mxu0 0.0
        %3526 = vmatprep.subr.mxu0 0.0
        %3527 = vmatpush1.xpose.msra.mxu0 0.0
        %3528 = vmatprep.subr.mxu0 0.0
        %3529 = vmatpush1.xpose.msra.mxu0 0.0
        %3530 = vmatprep.subr.mxu0 0.0
        %3531 = vmatpush1.xpose.msra.mxu0 0.0
        %3532 = vmatprep.subr.mxu0 0.0
        %3533 = vmatpush1.xpose.msra.mxu0 0.0
        %3534 = vmatprep.subr.mxu0 0.0
        %3535 = vmatpush1.xpose.msra.mxu0 0.0
        %3536 = vmatprep.subr.mxu0 0.0
        %3537 = vmatpush1.xpose.msra.mxu0 0.0
        %3538 = vmatprep.subr.mxu0 0.0
        %3539 = vmatpush1.xpose.msra.mxu0 0.0
        %3540 = vmatprep.subr.mxu0 0.0
        %3541 = vmatpush1.xpose.msra.mxu0 0.0
        %3542 = vmatprep.subr.mxu0 0.0
        %3543 = vmatpush1.xpose.msra.mxu0 0.0
        %3544 = vmatprep.subr.mxu0 0.0
        %3545 = vmatpush1.xpose.msra.mxu0 0.0
        %3546 = vmatprep.subr.mxu0 0.0
        %3547 = vmatpush1.xpose.msra.mxu0 0.0
        %3548 = vmatprep.subr.mxu0 0.0
        %3549 = vmatpush1.xpose.msra.mxu0 0.0
        %3550 = vmatprep.subr.mxu0 0.0
        %3551 = vmatpush1.xpose.msra.mxu0 0.0
        %3552 = vmatprep.mubr.f32.mxu0 0.0
        %3553 = vmatmul.mubr.f32.gmra.mrb[0].mxu0 %v3484
        %v3554 = vpop.f32.mrb[0].mxu0
        %v3555 = vadd.f32 %v3480, %v3554
        %v3556 = vpop.f32.mrb[0].mxu0
        %3557 = vdwg.mxu0
        %v3558 = vsel %vm984, %v3555, -inf
        %3559 = vmax.xlane.f32.xlu0 %v3558
        %v3560 = vpop.xlane.xlu0 %3559
        %v3561 = vsub.f32 %v3555, %v3560
        %v3562 = vmul.f32 %v3561, 1.442695
        %v3563 = vpow.pop %v3562
        %v3564 = vsel %vm984, %v3563, 0.0
        %3565 = vadd.xlane.f32.xlu0 %v3564
        %v3566 = vpop.xlane.xlu0 %3565
        %v3567 = vrcp.pop %v3566
        %v3568 = vmul.f32 %v3563, %v3567
        %3569 = vrot.lane.b32.xlu0 %v3473, 64
        %v3570 = vpop.permute.xlu0 %3569
        %v3573 = vsel %vm984, %v3568, 0
        %3575 = vmatprep.subr.mxu0 0.0
        %3576 = vmatpush1.msra.mxu0 %v3570
        %3577 = vmatprep.subr.mxu0 0.0
        %3578 = vmatpush1.msra.mxu0 0.0
        %3579 = vmatprep.subr.mxu0 0.0
        %3580 = vmatpush1.msra.mxu0 0.0
        %3581 = vmatprep.subr.mxu0 0.0
        %3582 = vmatpush1.msra.mxu0 0.0
        %3583 = vmatprep.subr.mxu0 0.0
        %3584 = vmatpush1.msra.mxu0 0.0
        %3585 = vmatprep.subr.mxu0 0.0
        %3586 = vmatpush1.msra.mxu0 0.0
        %3587 = vmatprep.subr.mxu0 0.0
        %3588 = vmatpush1.msra.mxu0 0.0
        %3589 = vmatprep.subr.mxu0 0.0
        %3590 = vmatpush1.msra.mxu0 0.0
        %3591 = vmatprep.subr.mxu0 0.0
        %3592 = vmatpush1.msra.mxu0 0.0
        %3593 = vmatprep.subr.mxu0 0.0
        %3594 = vmatpush1.msra.mxu0 0.0
        %3595 = vmatprep.subr.mxu0 0.0
        %3596 = vmatpush1.msra.mxu0 0.0
        %3597 = vmatprep.subr.mxu0 0.0
        %3598 = vmatpush1.msra.mxu0 0.0
        %3599 = vmatprep.subr.mxu0 0.0
        %3600 = vmatpush1.msra.mxu0 0.0
        %3601 = vmatprep.subr.mxu0 0.0
        %3602 = vmatpush1.msra.mxu0 0.0
        %3603 = vmatprep.subr.mxu0 0.0
        %3604 = vmatpush1.msra.mxu0 0.0
        %3605 = vmatprep.subr.mxu0 0.0
        %3606 = vmatpush1.msra.mxu0 0.0
        %3607 = vmatprep.subr.mxu0 0.0
        %3608 = vmatpush1.msra.mxu0 0.0
        %3609 = vmatprep.subr.mxu0 0.0
        %3610 = vmatpush1.msra.mxu0 0.0
        %3611 = vmatprep.subr.mxu0 0.0
        %3612 = vmatpush1.msra.mxu0 0.0
        %3613 = vmatprep.subr.mxu0 0.0
        %3614 = vmatpush1.msra.mxu0 0.0
        %3615 = vmatprep.subr.mxu0 0.0
        %3616 = vmatpush1.msra.mxu0 0.0
        %3617 = vmatprep.subr.mxu0 0.0
        %3618 = vmatpush1.msra.mxu0 0.0
        %3619 = vmatprep.subr.mxu0 0.0
        %3620 = vmatpush1.msra.mxu0 0.0
        %3621 = vmatprep.subr.mxu0 0.0
        %3622 = vmatpush1.msra.mxu0 0.0
        %3623 = vmatprep.subr.mxu0 0.0
        %3624 = vmatpush1.msra.mxu0 0.0
        %3625 = vmatprep.subr.mxu0 0.0
        %3626 = vmatpush1.msra.mxu0 0.0
        %3627 = vmatprep.subr.mxu0 0.0
        %3628 = vmatpush1.msra.mxu0 0.0
        %3629 = vmatprep.subr.mxu0 0.0
        %3630 = vmatpush1.msra.mxu0 0.0
        %3631 = vmatprep.subr.mxu0 0.0
        %3632 = vmatpush1.msra.mxu0 0.0
        %3633 = vmatprep.subr.mxu0 0.0
        %3634 = vmatpush1.msra.mxu0 0.0
        %3635 = vmatprep.subr.mxu0 0.0
        %3636 = vmatpush1.msra.mxu0 0.0
        %3637 = vmatprep.subr.mxu0 0.0
        %3638 = vmatpush1.msra.mxu0 0.0
        %3639 = vmatprep.mubr.f32.mxu0 0.0
        %3640 = vmatmul.mubr.f32.gmra.mrb[0].mxu0 %v3573
        %v3641 = vpop.f32.mrb[0].mxu0
        %v3642 = vadd.f32 0.0, %v3641
        %v3643 = vpop.f32.mrb[0].mxu0
        %3644 = vdwg.mxu0
        %s3645 = scalar_lea.vmem %s3, 8
        %v3646 = vld [vmem:[%s3645] sm:$0xff]
        %3647 = vrot.lane.b32.xlu0 %v3473, 120
        %v3648 = vpop.permute.xlu0 %3647
        %3649 = vrot.lane.b32.xlu0 %v3473, 88
        %v3650 = vpop.permute.xlu0 %3649
        %v3651 = vsel %vm984, %v3648, 0
        %v3653 = vsel %vm984, %v3650, 0
        %3655 = vmatprep.subr.mxu0 0.0
        %3656 = vmatpush1.xpose.msra.mxu0 %v3653
        %3657 = vmatprep.subr.mxu0 0.0
        %3658 = vmatpush1.xpose.msra.mxu0 0.0
        %3659 = vmatprep.subr.mxu0 0.0
        %3660 = vmatpush1.xpose.msra.mxu0 0.0
        %3661 = vmatprep.subr.mxu0 0.0
        %3662 = vmatpush1.xpose.msra.mxu0 0.0
        %3663 = vmatprep.subr.mxu0 0.0
        %3664 = vmatpush1.xpose.msra.mxu0 0.0
        %3665 = vmatprep.subr.mxu0 0.0
        %3666 = vmatpush1.xpose.msra.mxu0 0.0
        %3667 = vmatprep.subr.mxu0 0.0
        %3668 = vmatpush1.xpose.msra.mxu0 0.0
        %3669 = vmatprep.subr.mxu0 0.0
        %3670 = vmatpush1.xpose.msra.mxu0 0.0
        %3671 = vmatprep.subr.mxu0 0.0
        %3672 = vmatpush1.xpose.msra.mxu0 0.0
        %3673 = vmatprep.subr.mxu0 0.0
        %3674 = vmatpush1.xpose.msra.mxu0 0.0
        %3675 = vmatprep.subr.mxu0 0.0
        %3676 = vmatpush1.xpose.msra.mxu0 0.0
        %3677 = vmatprep.subr.mxu0 0.0
        %3678 = vmatpush1.xpose.msra.mxu0 0.0
        %3679 = vmatprep.subr.mxu0 0.0
        %3680 = vmatpush1.xpose.msra.mxu0 0.0
        %3681 = vmatprep.subr.mxu0 0.0
        %3682 = vmatpush1.xpose.msra.mxu0 0.0
        %3683 = vmatprep.subr.mxu0 0.0
        %3684 = vmatpush1.xpose.msra.mxu0 0.0
        %3685 = vmatprep.subr.mxu0 0.0
        %3686 = vmatpush1.xpose.msra.mxu0 0.0
        %3687 = vmatprep.subr.mxu0 0.0
        %3688 = vmatpush1.xpose.msra.mxu0 0.0
        %3689 = vmatprep.subr.mxu0 0.0
        %3690 = vmatpush1.xpose.msra.mxu0 0.0
        %3691 = vmatprep.subr.mxu0 0.0
        %3692 = vmatpush1.xpose.msra.mxu0 0.0
        %3693 = vmatprep.subr.mxu0 0.0
        %3694 = vmatpush1.xpose.msra.mxu0 0.0
        %3695 = vmatprep.subr.mxu0 0.0
        %3696 = vmatpush1.xpose.msra.mxu0 0.0
        %3697 = vmatprep.subr.mxu0 0.0
        %3698 = vmatpush1.xpose.msra.mxu0 0.0
        %3699 = vmatprep.subr.mxu0 0.0
        %3700 = vmatpush1.xpose.msra.mxu0 0.0
        %3701 = vmatprep.subr.mxu0 0.0
        %3702 = vmatpush1.xpose.msra.mxu0 0.0
        %3703 = vmatprep.subr.mxu0 0.0
        %3704 = vmatpush1.xpose.msra.mxu0 0.0
        %3705 = vmatprep.subr.mxu0 0.0
        %3706 = vmatpush1.xpose.msra.mxu0 0.0
        %3707 = vmatprep.subr.mxu0 0.0
        %3708 = vmatpush1.xpose.msra.mxu0 0.0
        %3709 = vmatprep.subr.mxu0 0.0
        %3710 = vmatpush1.xpose.msra.mxu0 0.0
        %3711 = vmatprep.subr.mxu0 0.0
        %3712 = vmatpush1.xpose.msra.mxu0 0.0
        %3713 = vmatprep.subr.mxu0 0.0
        %3714 = vmatpush1.xpose.msra.mxu0 0.0
        %3715 = vmatprep.subr.mxu0 0.0
        %3716 = vmatpush1.xpose.msra.mxu0 0.0
        %3717 = vmatprep.subr.mxu0 0.0
        %3718 = vmatpush1.xpose.msra.mxu0 0.0
        %3719 = vmatprep.mubr.f32.mxu0 0.0
        %3720 = vmatmul.mubr.f32.gmra.mrb[0].mxu0 %v3651
        %v3721 = vpop.f32.mrb[0].mxu0
        %v3722 = vadd.f32 %v3646, %v3721
        %v3723 = vpop.f32.mrb[0].mxu0
        %3724 = vdwg.mxu0
        %v3725 = vsel %vm984, %v3722, -inf
        %3726 = vmax.xlane.f32.xlu0 %v3725
        %v3727 = vpop.xlane.xlu0 %3726
        %v3728 = vsub.f32 %v3722, %v3727
        %v3729 = vmul.f32 %v3728, 1.442695
        %v3730 = vpow.pop %v3729
        %v3731 = vsel %vm984, %v3730, 0.0
        %3732 = vadd.xlane.f32.xlu0 %v3731
        %v3733 = vpop.xlane.xlu0 %3732
        %v3734 = vrcp.pop %v3733
        %v3735 = vmul.f32 %v3730, %v3734
        %3736 = vrot.lane.b32.xlu0 %v3473, 56
        %v3737 = vpop.permute.xlu0 %3736
        %v3740 = vsel %vm984, %v3735, 0
        %3742 = vmatprep.subr.mxu0 0.0
        %3743 = vmatpush1.msra.mxu0 %v3737
        %3744 = vmatprep.subr.mxu0 0.0
        %3745 = vmatpush1.msra.mxu0 0.0
        %3746 = vmatprep.subr.mxu0 0.0
        %3747 = vmatpush1.msra.mxu0 0.0
        %3748 = vmatprep.subr.mxu0 0.0
        %3749 = vmatpush1.msra.mxu0 0.0
        %3750 = vmatprep.subr.mxu0 0.0
        %3751 = vmatpush1.msra.mxu0 0.0
        %3752 = vmatprep.subr.mxu0 0.0
        %3753 = vmatpush1.msra.mxu0 0.0
        %3754 = vmatprep.subr.mxu0 0.0
        %3755 = vmatpush1.msra.mxu0 0.0
        %3756 = vmatprep.subr.mxu0 0.0
        %3757 = vmatpush1.msra.mxu0 0.0
        %3758 = vmatprep.subr.mxu0 0.0
        %3759 = vmatpush1.msra.mxu0 0.0
        %3760 = vmatprep.subr.mxu0 0.0
        %3761 = vmatpush1.msra.mxu0 0.0
        %3762 = vmatprep.subr.mxu0 0.0
        %3763 = vmatpush1.msra.mxu0 0.0
        %3764 = vmatprep.subr.mxu0 0.0
        %3765 = vmatpush1.msra.mxu0 0.0
        %3766 = vmatprep.subr.mxu0 0.0
        %3767 = vmatpush1.msra.mxu0 0.0
        %3768 = vmatprep.subr.mxu0 0.0
        %3769 = vmatpush1.msra.mxu0 0.0
        %3770 = vmatprep.subr.mxu0 0.0
        %3771 = vmatpush1.msra.mxu0 0.0
        %3772 = vmatprep.subr.mxu0 0.0
        %3773 = vmatpush1.msra.mxu0 0.0
        %3774 = vmatprep.subr.mxu0 0.0
        %3775 = vmatpush1.msra.mxu0 0.0
        %3776 = vmatprep.subr.mxu0 0.0
        %3777 = vmatpush1.msra.mxu0 0.0
        %3778 = vmatprep.subr.mxu0 0.0
        %3779 = vmatpush1.msra.mxu0 0.0
        %3780 = vmatprep.subr.mxu0 0.0
        %3781 = vmatpush1.msra.mxu0 0.0
        %3782 = vmatprep.subr.mxu0 0.0
        %3783 = vmatpush1.msra.mxu0 0.0
        %3784 = vmatprep.subr.mxu0 0.0
        %3785 = vmatpush1.msra.mxu0 0.0
        %3786 = vmatprep.subr.mxu0 0.0
        %3787 = vmatpush1.msra.mxu0 0.0
        %3788 = vmatprep.subr.mxu0 0.0
        %3789 = vmatpush1.msra.mxu0 0.0
        %3790 = vmatprep.subr.mxu0 0.0
        %3791 = vmatpush1.msra.mxu0 0.0
        %3792 = vmatprep.subr.mxu0 0.0
        %3793 = vmatpush1.msra.mxu0 0.0
        %3794 = vmatprep.subr.mxu0 0.0
        %3795 = vmatpush1.msra.mxu0 0.0
        %3796 = vmatprep.subr.mxu0 0.0
        %3797 = vmatpush1.msra.mxu0 0.0
        %3798 = vmatprep.subr.mxu0 0.0
        %3799 = vmatpush1.msra.mxu0 0.0
        %3800 = vmatprep.subr.mxu0 0.0
        %3801 = vmatpush1.msra.mxu0 0.0
        %3802 = vmatprep.subr.mxu0 0.0
        %3803 = vmatpush1.msra.mxu0 0.0
        %3804 = vmatprep.subr.mxu0 0.0
        %3805 = vmatpush1.msra.mxu0 0.0
        %3806 = vmatprep.mubr.f32.mxu0 0.0
        %3807 = vmatmul.mubr.f32.gmra.mrb[0].mxu0 %v3740
        %v3808 = vpop.f32.mrb[0].mxu0
        %v3809 = vadd.f32 0.0, %v3808
        %v3810 = vpop.f32.mrb[0].mxu0
        %3811 = vdwg.mxu0
        %v3813 = vsel %vm984, %v3809, 0
        %3815 = vmatprep.subr.mxu0 0.0
        %3816 = vmatpush1.msra.mxu0 %v3477
        %3817 = vmatprep.subr.mxu0 0.0
        %3818 = vmatpush1.msra.mxu0 0.0
        %3819 = vmatprep.subr.mxu0 0.0
        %3820 = vmatpush1.msra.mxu0 0.0
        %3821 = vmatprep.subr.mxu0 0.0
        %3822 = vmatpush1.msra.mxu0 0.0
        %3823 = vmatprep.subr.mxu0 0.0
        %3824 = vmatpush1.msra.mxu0 0.0
        %3825 = vmatprep.subr.mxu0 0.0
        %3826 = vmatpush1.msra.mxu0 0.0
        %3827 = vmatprep.subr.mxu0 0.0
        %3828 = vmatpush1.msra.mxu0 0.0
        %3829 = vmatprep.subr.mxu0 0.0
        %3830 = vmatpush1.msra.mxu0 0.0
        %3831 = vmatprep.subr.mxu0 0.0
        %3832 = vmatpush1.msra.mxu0 0.0
        %3833 = vmatprep.subr.mxu0 0.0
        %3834 = vmatpush1.msra.mxu0 0.0
        %3835 = vmatprep.subr.mxu0 0.0
        %3836 = vmatpush1.msra.mxu0 0.0
        %3837 = vmatprep.subr.mxu0 0.0
        %3838 = vmatpush1.msra.mxu0 0.0
        %3839 = vmatprep.subr.mxu0 0.0
        %3840 = vmatpush1.msra.mxu0 0.0
        %3841 = vmatprep.subr.mxu0 0.0
        %3842 = vmatpush1.msra.mxu0 0.0
        %3843 = vmatprep.subr.mxu0 0.0
        %3844 = vmatpush1.msra.mxu0 0.0
        %3845 = vmatprep.subr.mxu0 0.0
        %3846 = vmatpush1.msra.mxu0 0.0
        %3847 = vmatprep.subr.mxu0 0.0
        %3848 = vmatpush1.msra.mxu0 0.0
        %3849 = vmatprep.subr.mxu0 0.0
        %3850 = vmatpush1.msra.mxu0 0.0
        %3851 = vmatprep.subr.mxu0 0.0
        %3852 = vmatpush1.msra.mxu0 0.0
        %3853 = vmatprep.subr.mxu0 0.0
        %3854 = vmatpush1.msra.mxu0 0.0
        %3855 = vmatprep.subr.mxu0 0.0
        %3856 = vmatpush1.msra.mxu0 0.0
        %3857 = vmatprep.subr.mxu0 0.0
        %3858 = vmatpush1.msra.mxu0 0.0
        %3859 = vmatprep.subr.mxu0 0.0
        %3860 = vmatpush1.msra.mxu0 0.0
        %3861 = vmatprep.subr.mxu0 0.0
        %3862 = vmatpush1.msra.mxu0 0.0
        %3863 = vmatprep.subr.mxu0 0.0
        %3864 = vmatpush1.msra.mxu0 0.0
        %3865 = vmatprep.subr.mxu0 0.0
        %3866 = vmatpush1.msra.mxu0 0.0
        %3867 = vmatprep.subr.mxu0 0.0
        %3868 = vmatpush1.msra.mxu0 0.0
        %3869 = vmatprep.subr.mxu0 0.0
        %3870 = vmatpush1.msra.mxu0 0.0
        %3871 = vmatprep.subr.mxu0 0.0
        %3872 = vmatpush1.msra.mxu0 0.0
        %3873 = vmatprep.subr.mxu0 0.0
        %3874 = vmatpush1.msra.mxu0 0.0
        %3875 = vmatprep.subr.mxu0 0.0
        %3876 = vmatpush1.msra.mxu0 0.0
        %3877 = vmatprep.subr.mxu0 0.0
        %3878 = vmatpush1.msra.mxu0 0.0
        %3879 = vmatprep.mubr.f32.mxu0 0.0
        %3880 = vmatmul.mubr.f32.gmra.mrb[0].mxu0 %v3813
        %v3881 = vpop.f32.mrb[0].mxu0
        %v3882 = vadd.f32 0.0, %v3881
        %v3883 = vpop.f32.mrb[0].mxu0
        %3884 = vdwg.mxu0
        %v3886 = vsel %vm984, %v3642, 0
        %3888 = vmatprep.subr.mxu0 0.0
        %3889 = vmatpush1.msra.mxu0 %v3476
        %3890 = vmatprep.subr.mxu0 0.0
        %3891 = vmatpush1.msra.mxu0 0.0
        %3892 = vmatprep.subr.mxu0 0.0
        %3893 = vmatpush1.msra.mxu0 0.0
        %3894 = vmatprep.subr.mxu0 0.0
        %3895 = vmatpush1.msra.mxu0 0.0
        %3896 = vmatprep.subr.mxu0 0.0
        %3897 = vmatpush1.msra.mxu0 0.0
        %3898 = vmatprep.subr.mxu0 0.0
        %3899 = vmatpush1.msra.mxu0 0.0
        %3900 = vmatprep.subr.mxu0 0.0
        %3901 = vmatpush1.msra.mxu0 0.0
        %3902 = vmatprep.subr.mxu0 0.0
        %3903 = vmatpush1.msra.mxu0 0.0
        %3904 = vmatprep.subr.mxu0 0.0
        %3905 = vmatpush1.msra.mxu0 0.0
        %3906 = vmatprep.subr.mxu0 0.0
        %3907 = vmatpush1.msra.mxu0 0.0
        %3908 = vmatprep.subr.mxu0 0.0
        %3909 = vmatpush1.msra.mxu0 0.0
        %3910 = vmatprep.subr.mxu0 0.0
        %3911 = vmatpush1.msra.mxu0 0.0
        %3912 = vmatprep.subr.mxu0 0.0
        %3913 = vmatpush1.msra.mxu0 0.0
        %3914 = vmatprep.subr.mxu0 0.0
        %3915 = vmatpush1.msra.mxu0 0.0
        %3916 = vmatprep.subr.mxu0 0.0
        %3917 = vmatpush1.msra.mxu0 0.0
        %3918 = vmatprep.subr.mxu0 0.0
        %3919 = vmatpush1.msra.mxu0 0.0
        %3920 = vmatprep.subr.mxu0 0.0
        %3921 = vmatpush1.msra.mxu0 0.0
        %3922 = vmatprep.subr.mxu0 0.0
        %3923 = vmatpush1.msra.mxu0 0.0
        %3924 = vmatprep.subr.mxu0 0.0
        %3925 = vmatpush1.msra.mxu0 0.0
        %3926 = vmatprep.subr.mxu0 0.0
        %3927 = vmatpush1.msra.mxu0 0.0
        %3928 = vmatprep.subr.mxu0 0.0
        %3929 = vmatpush1.msra.mxu0 0.0
        %3930 = vmatprep.subr.mxu0 0.0
        %3931 = vmatpush1.msra.mxu0 0.0
        %3932 = vmatprep.subr.mxu0 0.0
        %3933 = vmatpush1.msra.mxu0 0.0
        %3934 = vmatprep.subr.mxu0 0.0
        %3935 = vmatpush1.msra.mxu0 0.0
        %3936 = vmatprep.subr.mxu0 0.0
        %3937 = vmatpush1.msra.mxu0 0.0
        %3938 = vmatprep.subr.mxu0 0.0
        %3939 = vmatpush1.msra.mxu0 0.0
        %3940 = vmatprep.subr.mxu0 0.0
        %3941 = vmatpush1.msra.mxu0 0.0
        %3942 = vmatprep.subr.mxu0 0.0
        %3943 = vmatpush1.msra.mxu0 0.0
        %3944 = vmatprep.subr.mxu0 0.0
        %3945 = vmatpush1.msra.mxu0 0.0
        %3946 = vmatprep.subr.mxu0 0.0
        %3947 = vmatpush1.msra.mxu0 0.0
        %3948 = vmatprep.subr.mxu0 0.0
        %3949 = vmatpush1.msra.mxu0 0.0
        %3950 = vmatprep.subr.mxu0 0.0
        %3951 = vmatpush1.msra.mxu0 0.0
        %3952 = vmatprep.mubr.f32.mxu0 0.0
        %3953 = vmatmul.mubr.f32.gmra.mrb[0].mxu0 %v3886
        %v3954 = vpop.f32.mrb[0].mxu0
        %v3955 = vadd.f32 %v3882, %v3954
        %v3956 = vpop.f32.mrb[0].mxu0
        %3957 = vdwg.mxu0
        %s3958 = scalar_lea.vmem %s3, 16
        %v3959 = vld [vmem:[%s3958] sm:$0xff]
        %3960 = vrot.lane.b32.xlu0 %v3473, 112
        %v3961 = vpop.permute.xlu0 %3960
        %3962 = vrot.lane.b32.xlu0 %v3473, 80
        %v3963 = vpop.permute.xlu0 %3962
        %v3964 = vsel %vm984, %v3961, 0
        %v3966 = vsel %vm984, %v3963, 0
        %3968 = vmatprep.subr.mxu0 0.0
        %3969 = vmatpush1.xpose.msra.mxu0 %v3966
        %3970 = vmatprep.subr.mxu0 0.0
        %3971 = vmatpush1.xpose.msra.mxu0 0.0
        %3972 = vmatprep.subr.mxu0 0.0
        %3973 = vmatpush1.xpose.msra.mxu0 0.0
        %3974 = vmatprep.subr.mxu0 0.0
        %3975 = vmatpush1.xpose.msra.mxu0 0.0
        %3976 = vmatprep.subr.mxu0 0.0
        %3977 = vmatpush1.xpose.msra.mxu0 0.0
        %3978 = vmatprep.subr.mxu0 0.0
        %3979 = vmatpush1.xpose.msra.mxu0 0.0
        %3980 = vmatprep.subr.mxu0 0.0
        %3981 = vmatpush1.xpose.msra.mxu0 0.0
        %3982 = vmatprep.subr.mxu0 0.0
        %3983 = vmatpush1.xpose.msra.mxu0 0.0
        %3984 = vmatprep.subr.mxu0 0.0
        %3985 = vmatpush1.xpose.msra.mxu0 0.0
        %3986 = vmatprep.subr.mxu0 0.0
        %3987 = vmatpush1.xpose.msra.mxu0 0.0
        %3988 = vmatprep.subr.mxu0 0.0
        %3989 = vmatpush1.xpose.msra.mxu0 0.0
        %3990 = vmatprep.subr.mxu0 0.0
        %3991 = vmatpush1.xpose.msra.mxu0 0.0
        %3992 = vmatprep.subr.mxu0 0.0
        %3993 = vmatpush1.xpose.msra.mxu0 0.0
        %3994 = vmatprep.subr.mxu0 0.0
        %3995 = vmatpush1.xpose.msra.mxu0 0.0
        %3996 = vmatprep.subr.mxu0 0.0
        %3997 = vmatpush1.xpose.msra.mxu0 0.0
        %3998 = vmatprep.subr.mxu0 0.0
        %3999 = vmatpush1.xpose.msra.mxu0 0.0
        %4000 = vmatprep.subr.mxu0 0.0
        %4001 = vmatpush1.xpose.msra.mxu0 0.0
        %4002 = vmatprep.subr.mxu0 0.0
        %4003 = vmatpush1.xpose.msra.mxu0 0.0
        %4004 = vmatprep.subr.mxu0 0.0
        %4005 = vmatpush1.xpose.msra.mxu0 0.0
        %4006 = vmatprep.subr.mxu0 0.0
        %4007 = vmatpush1.xpose.msra.mxu0 0.0
        %4008 = vmatprep.subr.mxu0 0.0
        %4009 = vmatpush1.xpose.msra.mxu0 0.0
        %4010 = vmatprep.subr.mxu0 0.0
        %4011 = vmatpush1.xpose.msra.mxu0 0.0
        %4012 = vmatprep.subr.mxu0 0.0
        %4013 = vmatpush1.xpose.msra.mxu0 0.0
        %4014 = vmatprep.subr.mxu0 0.0
        %4015 = vmatpush1.xpose.msra.mxu0 0.0
        %4016 = vmatprep.subr.mxu0 0.0
        %4017 = vmatpush1.xpose.msra.mxu0 0.0
        %4018 = vmatprep.subr.mxu0 0.0
        %4019 = vmatpush1.xpose.msra.mxu0 0.0
        %4020 = vmatprep.subr.mxu0 0.0
        %4021 = vmatpush1.xpose.msra.mxu0 0.0
        %4022 = vmatprep.subr.mxu0 0.0
        %4023 = vmatpush1.xpose.msra.mxu0 0.0
        %4024 = vmatprep.subr.mxu0 0.0
        %4025 = vmatpush1.xpose.msra.mxu0 0.0
        %4026 = vmatprep.subr.mxu0 0.0
        %4027 = vmatpush1.xpose.msra.mxu0 0.0
        %4028 = vmatprep.subr.mxu0 0.0
        %4029 = vmatpush1.xpose.msra.mxu0 0.0
        %4030 = vmatprep.subr.mxu0 0.0
        %4031 = vmatpush1.xpose.msra.mxu0 0.0
        %4032 = vmatprep.mubr.f32.mxu0 0.0
        %4033 = vmatmul.mubr.f32.gmra.mrb[0].mxu0 %v3964
        %v4034 = vpop.f32.mrb[0].mxu0
        %v4035 = vadd.f32 %v3959, %v4034
        %v4036 = vpop.f32.mrb[0].mxu0
        %4037 = vdwg.mxu0
        %v4038 = vsel %vm984, %v4035, -inf
        %4039 = vmax.xlane.f32.xlu0 %v4038
        %v4040 = vpop.xlane.xlu0 %4039
        %v4041 = vsub.f32 %v4035, %v4040
        %v4042 = vmul.f32 %v4041, 1.442695
        %v4043 = vpow.pop %v4042
        %v4044 = vsel %vm984, %v4043, 0.0
        %4045 = vadd.xlane.f32.xlu0 %v4044
        %v4046 = vpop.xlane.xlu0 %4045
        %v4047 = vrcp.pop %v4046
        %v4048 = vmul.f32 %v4043, %v4047
        %4049 = vrot.lane.b32.xlu0 %v3473, 48
        %v4050 = vpop.permute.xlu0 %4049
        %v4053 = vsel %vm984, %v4048, 0
        %4055 = vmatprep.subr.mxu0 0.0
        %4056 = vmatpush1.msra.mxu0 %v4050
        %4057 = vmatprep.subr.mxu0 0.0
        %4058 = vmatpush1.msra.mxu0 0.0
        %4059 = vmatprep.subr.mxu0 0.0
        %4060 = vmatpush1.msra.mxu0 0.0
        %4061 = vmatprep.subr.mxu0 0.0
        %4062 = vmatpush1.msra.mxu0 0.0
        %4063 = vmatprep.subr.mxu0 0.0
        %4064 = vmatpush1.msra.mxu0 0.0
        %4065 = vmatprep.subr.mxu0 0.0
        %4066 = vmatpush1.msra.mxu0 0.0
        %4067 = vmatprep.subr.mxu0 0.0
        %4068 = vmatpush1.msra.mxu0 0.0
        %4069 = vmatprep.subr.mxu0 0.0
        %4070 = vmatpush1.msra.mxu0 0.0
        %4071 = vmatprep.subr.mxu0 0.0
        %4072 = vmatpush1.msra.mxu0 0.0
        %4073 = vmatprep.subr.mxu0 0.0
        %4074 = vmatpush1.msra.mxu0 0.0
        %4075 = vmatprep.subr.mxu0 0.0
        %4076 = vmatpush1.msra.mxu0 0.0
        %4077 = vmatprep.subr.mxu0 0.0
        %4078 = vmatpush1.msra.mxu0 0.0
        %4079 = vmatprep.subr.mxu0 0.0
        %4080 = vmatpush1.msra.mxu0 0.0
        %4081 = vmatprep.subr.mxu0 0.0
        %4082 = vmatpush1.msra.mxu0 0.0
        %4083 = vmatprep.subr.mxu0 0.0
        %4084 = vmatpush1.msra.mxu0 0.0
        %4085 = vmatprep.subr.mxu0 0.0
        %4086 = vmatpush1.msra.mxu0 0.0
        %4087 = vmatprep.subr.mxu0 0.0
        %4088 = vmatpush1.msra.mxu0 0.0
        %4089 = vmatprep.subr.mxu0 0.0
        %4090 = vmatpush1.msra.mxu0 0.0
        %4091 = vmatprep.subr.mxu0 0.0
        %4092 = vmatpush1.msra.mxu0 0.0
        %4093 = vmatprep.subr.mxu0 0.0
        %4094 = vmatpush1.msra.mxu0 0.0
        %4095 = vmatprep.subr.mxu0 0.0
        %4096 = vmatpush1.msra.mxu0 0.0
        %4097 = vmatprep.subr.mxu0 0.0
        %4098 = vmatpush1.msra.mxu0 0.0
        %4099 = vmatprep.subr.mxu0 0.0
        %4100 = vmatpush1.msra.mxu0 0.0
        %4101 = vmatprep.subr.mxu0 0.0
        %4102 = vmatpush1.msra.mxu0 0.0
        %4103 = vmatprep.subr.mxu0 0.0
        %4104 = vmatpush1.msra.mxu0 0.0
        %4105 = vmatprep.subr.mxu0 0.0
        %4106 = vmatpush1.msra.mxu0 0.0
        %4107 = vmatprep.subr.mxu0 0.0
        %4108 = vmatpush1.msra.mxu0 0.0
        %4109 = vmatprep.subr.mxu0 0.0
        %4110 = vmatpush1.msra.mxu0 0.0
        %4111 = vmatprep.subr.mxu0 0.0
        %4112 = vmatpush1.msra.mxu0 0.0
        %4113 = vmatprep.subr.mxu0 0.0
        %4114 = vmatpush1.msra.mxu0 0.0
        %4115 = vmatprep.subr.mxu0 0.0
        %4116 = vmatpush1.msra.mxu0 0.0
        %4117 = vmatprep.subr.mxu0 0.0
        %4118 = vmatpush1.msra.mxu0 0.0
        %4119 = vmatprep.mubr.f32.mxu0 0.0
        %4120 = vmatmul.mubr.f32.gmra.mrb[0].mxu0 %v4053
        %v4121 = vpop.f32.mrb[0].mxu0
        %v4122 = vadd.f32 0.0, %v4121
        %v4123 = vpop.f32.mrb[0].mxu0
        %4124 = vdwg.mxu0
        %v4126 = vsel %vm984, %v4122, 0
        %4128 = vmatprep.subr.mxu0 0.0
        %4129 = vmatpush1.msra.mxu0 %v3478
        %4130 = vmatprep.subr.mxu0 0.0
        %4131 = vmatpush1.msra.mxu0 0.0
        %4132 = vmatprep.subr.mxu0 0.0
        %4133 = vmatpush1.msra.mxu0 0.0
        %4134 = vmatprep.subr.mxu0 0.0
        %4135 = vmatpush1.msra.mxu0 0.0
        %4136 = vmatprep.subr.mxu0 0.0
        %4137 = vmatpush1.msra.mxu0 0.0
        %4138 = vmatprep.subr.mxu0 0.0
        %4139 = vmatpush1.msra.mxu0 0.0
        %4140 = vmatprep.subr.mxu0 0.0
        %4141 = vmatpush1.msra.mxu0 0.0
        %4142 = vmatprep.subr.mxu0 0.0
        %4143 = vmatpush1.msra.mxu0 0.0
        %4144 = vmatprep.subr.mxu0 0.0
        %4145 = vmatpush1.msra.mxu0 0.0
        %4146 = vmatprep.subr.mxu0 0.0
        %4147 = vmatpush1.msra.mxu0 0.0
        %4148 = vmatprep.subr.mxu0 0.0
        %4149 = vmatpush1.msra.mxu0 0.0
        %4150 = vmatprep.subr.mxu0 0.0
        %4151 = vmatpush1.msra.mxu0 0.0
        %4152 = vmatprep.subr.mxu0 0.0
        %4153 = vmatpush1.msra.mxu0 0.0
        %4154 = vmatprep.subr.mxu0 0.0
        %4155 = vmatpush1.msra.mxu0 0.0
        %4156 = vmatprep.subr.mxu0 0.0
        %4157 = vmatpush1.msra.mxu0 0.0
        %4158 = vmatprep.subr.mxu0 0.0
        %4159 = vmatpush1.msra.mxu0 0.0
        %4160 = vmatprep.subr.mxu0 0.0
        %4161 = vmatpush1.msra.mxu0 0.0
        %4162 = vmatprep.subr.mxu0 0.0
        %4163 = vmatpush1.msra.mxu0 0.0
        %4164 = vmatprep.subr.mxu0 0.0
        %4165 = vmatpush1.msra.mxu0 0.0
        %4166 = vmatprep.subr.mxu0 0.0
        %4167 = vmatpush1.msra.mxu0 0.0
        %4168 = vmatprep.subr.mxu0 0.0
        %4169 = vmatpush1.msra.mxu0 0.0
        %4170 = vmatprep.subr.mxu0 0.0
        %4171 = vmatpush1.msra.mxu0 0.0
        %4172 = vmatprep.subr.mxu0 0.0
        %4173 = vmatpush1.msra.mxu0 0.0
        %4174 = vmatprep.subr.mxu0 0.0
        %4175 = vmatpush1.msra.mxu0 0.0
        %4176 = vmatprep.subr.mxu0 0.0
        %4177 = vmatpush1.msra.mxu0 0.0
        %4178 = vmatprep.subr.mxu0 0.0
        %4179 = vmatpush1.msra.mxu0 0.0
        %4180 = vmatprep.subr.mxu0 0.0
        %4181 = vmatpush1.msra.mxu0 0.0
        %4182 = vmatprep.subr.mxu0 0.0
        %4183 = vmatpush1.msra.mxu0 0.0
        %4184 = vmatprep.subr.mxu0 0.0
        %4185 = vmatpush1.msra.mxu0 0.0
        %4186 = vmatprep.subr.mxu0 0.0
        %4187 = vmatpush1.msra.mxu0 0.0
        %4188 = vmatprep.subr.mxu0 0.0
        %4189 = vmatpush1.msra.mxu0 0.0
        %4190 = vmatprep.subr.mxu0 0.0
        %4191 = vmatpush1.msra.mxu0 0.0
        %4192 = vmatprep.mubr.f32.mxu0 0.0
        %4193 = vmatmul.mubr.f32.gmra.mrb[0].mxu0 %v4126
        %v4194 = vpop.f32.mrb[0].mxu0
        %v4195 = vadd.f32 0.0, %v4194
        %v4196 = vpop.f32.mrb[0].mxu0
        %4197 = vdwg.mxu0
        %v4198 = vadd.f32 %v3955, %v4195
        %s4199 = scalar_lea.vmem %s3, 24
        %v4200 = vld [vmem:[%s4199] sm:$0xff]
        %4201 = vrot.lane.b32.xlu0 %v3473, 104
        %v4202 = vpop.permute.xlu0 %4201
        %4203 = vrot.lane.b32.xlu0 %v3473, 72
        %v4204 = vpop.permute.xlu0 %4203
        %v4205 = vsel %vm984, %v4202, 0
        %v4207 = vsel %vm984, %v4204, 0
        %4209 = vmatprep.subr.mxu0 0.0
        %4210 = vmatpush1.xpose.msra.mxu0 %v4207
        %4211 = vmatprep.subr.mxu0 0.0
        %4212 = vmatpush1.xpose.msra.mxu0 0.0
        %4213 = vmatprep.subr.mxu0 0.0
        %4214 = vmatpush1.xpose.msra.mxu0 0.0
        %4215 = vmatprep.subr.mxu0 0.0
        %4216 = vmatpush1.xpose.msra.mxu0 0.0
        %4217 = vmatprep.subr.mxu0 0.0
        %4218 = vmatpush1.xpose.msra.mxu0 0.0
        %4219 = vmatprep.subr.mxu0 0.0
        %4220 = vmatpush1.xpose.msra.mxu0 0.0
        %4221 = vmatprep.subr.mxu0 0.0
        %4222 = vmatpush1.xpose.msra.mxu0 0.0
        %4223 = vmatprep.subr.mxu0 0.0
        %4224 = vmatpush1.xpose.msra.mxu0 0.0
        %4225 = vmatprep.subr.mxu0 0.0
        %4226 = vmatpush1.xpose.msra.mxu0 0.0
        %4227 = vmatprep.subr.mxu0 0.0
        %4228 = vmatpush1.xpose.msra.mxu0 0.0
        %4229 = vmatprep.subr.mxu0 0.0
        %4230 = vmatpush1.xpose.msra.mxu0 0.0
        %4231 = vmatprep.subr.mxu0 0.0
        %4232 = vmatpush1.xpose.msra.mxu0 0.0
        %4233 = vmatprep.subr.mxu0 0.0
        %4234 = vmatpush1.xpose.msra.mxu0 0.0
        %4235 = vmatprep.subr.mxu0 0.0
        %4236 = vmatpush1.xpose.msra.mxu0 0.0
        %4237 = vmatprep.subr.mxu0 0.0
        %4238 = vmatpush1.xpose.msra.mxu0 0.0
        %4239 = vmatprep.subr.mxu0 0.0
        %4240 = vmatpush1.xpose.msra.mxu0 0.0
        %4241 = vmatprep.subr.mxu0 0.0
        %4242 = vmatpush1.xpose.msra.mxu0 0.0
        %4243 = vmatprep.subr.mxu0 0.0
        %4244 = vmatpush1.xpose.msra.mxu0 0.0
        %4245 = vmatprep.subr.mxu0 0.0
        %4246 = vmatpush1.xpose.msra.mxu0 0.0
        %4247 = vmatprep.subr.mxu0 0.0
        %4248 = vmatpush1.xpose.msra.mxu0 0.0
        %4249 = vmatprep.subr.mxu0 0.0
        %4250 = vmatpush1.xpose.msra.mxu0 0.0
        %4251 = vmatprep.subr.mxu0 0.0
        %4252 = vmatpush1.xpose.msra.mxu0 0.0
        %4253 = vmatprep.subr.mxu0 0.0
        %4254 = vmatpush1.xpose.msra.mxu0 0.0
        %4255 = vmatprep.subr.mxu0 0.0
        %4256 = vmatpush1.xpose.msra.mxu0 0.0
        %4257 = vmatprep.subr.mxu0 0.0
        %4258 = vmatpush1.xpose.msra.mxu0 0.0
        %4259 = vmatprep.subr.mxu0 0.0
        %4260 = vmatpush1.xpose.msra.mxu0 0.0
        %4261 = vmatprep.subr.mxu0 0.0
        %4262 = vmatpush1.xpose.msra.mxu0 0.0
        %4263 = vmatprep.subr.mxu0 0.0
        %4264 = vmatpush1.xpose.msra.mxu0 0.0
        %4265 = vmatprep.subr.mxu0 0.0
        %4266 = vmatpush1.xpose.msra.mxu0 0.0
        %4267 = vmatprep.subr.mxu0 0.0
        %4268 = vmatpush1.xpose.msra.mxu0 0.0
        %4269 = vmatprep.subr.mxu0 0.0
        %4270 = vmatpush1.xpose.msra.mxu0 0.0
        %4271 = vmatprep.subr.mxu0 0.0
        %4272 = vmatpush1.xpose.msra.mxu0 0.0
        %4273 = vmatprep.mubr.f32.mxu0 0.0
        %4274 = vmatmul.mubr.f32.gmra.mrb[0].mxu0 %v4205
        %v4275 = vpop.f32.mrb[0].mxu0
        %v4276 = vadd.f32 %v4200, %v4275
        %v4277 = vpop.f32.mrb[0].mxu0
        %4278 = vdwg.mxu0
        %v4279 = vsel %vm984, %v4276, -inf
        %4280 = vmax.xlane.f32.xlu0 %v4279
        %v4281 = vpop.xlane.xlu0 %4280
        %v4282 = vsub.f32 %v4276, %v4281
        %v4283 = vmul.f32 %v4282, 1.442695
        %v4284 = vpow.pop %v4283
        %v4285 = vsel %vm984, %v4284, 0.0
        %4286 = vadd.xlane.f32.xlu0 %v4285
        %v4287 = vpop.xlane.xlu0 %4286
        %v4288 = vrcp.pop %v4287
        %v4289 = vmul.f32 %v4284, %v4288
        %4290 = vrot.lane.b32.xlu0 %v3473, 40
        %v4291 = vpop.permute.xlu0 %4290
        %v4294 = vsel %vm984, %v4289, 0
        %4296 = vmatprep.subr.mxu0 0.0
        %4297 = vmatpush1.msra.mxu0 %v4291
        %4298 = vmatprep.subr.mxu0 0.0
        %4299 = vmatpush1.msra.mxu0 0.0
        %4300 = vmatprep.subr.mxu0 0.0
        %4301 = vmatpush1.msra.mxu0 0.0
        %4302 = vmatprep.subr.mxu0 0.0
        %4303 = vmatpush1.msra.mxu0 0.0
        %4304 = vmatprep.subr.mxu0 0.0
        %4305 = vmatpush1.msra.mxu0 0.0
        %4306 = vmatprep.subr.mxu0 0.0
        %4307 = vmatpush1.msra.mxu0 0.0
        %4308 = vmatprep.subr.mxu0 0.0
        %4309 = vmatpush1.msra.mxu0 0.0
        %4310 = vmatprep.subr.mxu0 0.0
        %4311 = vmatpush1.msra.mxu0 0.0
        %4312 = vmatprep.subr.mxu0 0.0
        %4313 = vmatpush1.msra.mxu0 0.0
        %4314 = vmatprep.subr.mxu0 0.0
        %4315 = vmatpush1.msra.mxu0 0.0
        %4316 = vmatprep.subr.mxu0 0.0
        %4317 = vmatpush1.msra.mxu0 0.0
        %4318 = vmatprep.subr.mxu0 0.0
        %4319 = vmatpush1.msra.mxu0 0.0
        %4320 = vmatprep.subr.mxu0 0.0
        %4321 = vmatpush1.msra.mxu0 0.0
        %4322 = vmatprep.subr.mxu0 0.0
        %4323 = vmatpush1.msra.mxu0 0.0
        %4324 = vmatprep.subr.mxu0 0.0
        %4325 = vmatpush1.msra.mxu0 0.0
        %4326 = vmatprep.subr.mxu0 0.0
        %4327 = vmatpush1.msra.mxu0 0.0
        %4328 = vmatprep.subr.mxu0 0.0
        %4329 = vmatpush1.msra.mxu0 0.0
        %4330 = vmatprep.subr.mxu0 0.0
        %4331 = vmatpush1.msra.mxu0 0.0
        %4332 = vmatprep.subr.mxu0 0.0
        %4333 = vmatpush1.msra.mxu0 0.0
        %4334 = vmatprep.subr.mxu0 0.0
        %4335 = vmatpush1.msra.mxu0 0.0
        %4336 = vmatprep.subr.mxu0 0.0
        %4337 = vmatpush1.msra.mxu0 0.0
        %4338 = vmatprep.subr.mxu0 0.0
        %4339 = vmatpush1.msra.mxu0 0.0
        %4340 = vmatprep.subr.mxu0 0.0
        %4341 = vmatpush1.msra.mxu0 0.0
        %4342 = vmatprep.subr.mxu0 0.0
        %4343 = vmatpush1.msra.mxu0 0.0
        %4344 = vmatprep.subr.mxu0 0.0
        %4345 = vmatpush1.msra.mxu0 0.0
        %4346 = vmatprep.subr.mxu0 0.0
        %4347 = vmatpush1.msra.mxu0 0.0
        %4348 = vmatprep.subr.mxu0 0.0
        %4349 = vmatpush1.msra.mxu0 0.0
        %4350 = vmatprep.subr.mxu0 0.0
        %4351 = vmatpush1.msra.mxu0 0.0
        %4352 = vmatprep.subr.mxu0 0.0
        %4353 = vmatpush1.msra.mxu0 0.0
        %4354 = vmatprep.subr.mxu0 0.0
        %4355 = vmatpush1.msra.mxu0 0.0
        %4356 = vmatprep.subr.mxu0 0.0
        %4357 = vmatpush1.msra.mxu0 0.0
        %4358 = vmatprep.subr.mxu0 0.0
        %4359 = vmatpush1.msra.mxu0 0.0
        %4360 = vmatprep.mubr.f32.mxu0 0.0
        %4361 = vmatmul.mubr.f32.gmra.mrb[0].mxu0 %v4294
        %v4362 = vpop.f32.mrb[0].mxu0
        %v4363 = vadd.f32 0.0, %v4362
        %v4364 = vpop.f32.mrb[0].mxu0
        %4365 = vdwg.mxu0
        %v4367 = vsel %vm984, %v4363, 0
        %4369 = vmatprep.subr.mxu0 0.0
        %4370 = vmatpush1.msra.mxu0 %v3479
        %4371 = vmatprep.subr.mxu0 0.0
        %4372 = vmatpush1.msra.mxu0 0.0
        %4373 = vmatprep.subr.mxu0 0.0
        %4374 = vmatpush1.msra.mxu0 0.0
        %4375 = vmatprep.subr.mxu0 0.0
        %4376 = vmatpush1.msra.mxu0 0.0
        %4377 = vmatprep.subr.mxu0 0.0
        %4378 = vmatpush1.msra.mxu0 0.0
        %4379 = vmatprep.subr.mxu0 0.0
        %4380 = vmatpush1.msra.mxu0 0.0
        %4381 = vmatprep.subr.mxu0 0.0
        %4382 = vmatpush1.msra.mxu0 0.0
        %4383 = vmatprep.subr.mxu0 0.0
        %4384 = vmatpush1.msra.mxu0 0.0
        %4385 = vmatprep.subr.mxu0 0.0
        %4386 = vmatpush1.msra.mxu0 0.0
        %4387 = vmatprep.subr.mxu0 0.0
        %4388 = vmatpush1.msra.mxu0 0.0
        %4389 = vmatprep.subr.mxu0 0.0
        %4390 = vmatpush1.msra.mxu0 0.0
        %4391 = vmatprep.subr.mxu0 0.0
        %4392 = vmatpush1.msra.mxu0 0.0
        %4393 = vmatprep.subr.mxu0 0.0
        %4394 = vmatpush1.msra.mxu0 0.0
        %4395 = vmatprep.subr.mxu0 0.0
        %4396 = vmatpush1.msra.mxu0 0.0
        %4397 = vmatprep.subr.mxu0 0.0
        %4398 = vmatpush1.msra.mxu0 0.0
        %4399 = vmatprep.subr.mxu0 0.0
        %4400 = vmatpush1.msra.mxu0 0.0
        %4401 = vmatprep.subr.mxu0 0.0
        %4402 = vmatpush1.msra.mxu0 0.0
        %4403 = vmatprep.subr.mxu0 0.0
        %4404 = vmatpush1.msra.mxu0 0.0
        %4405 = vmatprep.subr.mxu0 0.0
        %4406 = vmatpush1.msra.mxu0 0.0
        %4407 = vmatprep.subr.mxu0 0.0
        %4408 = vmatpush1.msra.mxu0 0.0
        %4409 = vmatprep.subr.mxu0 0.0
        %4410 = vmatpush1.msra.mxu0 0.0
        %4411 = vmatprep.subr.mxu0 0.0
        %4412 = vmatpush1.msra.mxu0 0.0
        %4413 = vmatprep.subr.mxu0 0.0
        %4414 = vmatpush1.msra.mxu0 0.0
        %4415 = vmatprep.subr.mxu0 0.0
        %4416 = vmatpush1.msra.mxu0 0.0
        %4417 = vmatprep.subr.mxu0 0.0
        %4418 = vmatpush1.msra.mxu0 0.0
        %4419 = vmatprep.subr.mxu0 0.0
        %4420 = vmatpush1.msra.mxu0 0.0
        %4421 = vmatprep.subr.mxu0 0.0
        %4422 = vmatpush1.msra.mxu0 0.0
        %4423 = vmatprep.subr.mxu0 0.0
        %4424 = vmatpush1.msra.mxu0 0.0
        %4425 = vmatprep.subr.mxu0 0.0
        %4426 = vmatpush1.msra.mxu0 0.0
        %4427 = vmatprep.subr.mxu0 0.0
        %4428 = vmatpush1.msra.mxu0 0.0
        %4429 = vmatprep.subr.mxu0 0.0
        %4430 = vmatpush1.msra.mxu0 0.0
        %4431 = vmatprep.subr.mxu0 0.0
        %4432 = vmatpush1.msra.mxu0 0.0
        %4433 = vmatprep.mubr.f32.mxu0 0.0
        %4434 = vmatmul.mubr.f32.gmra.mrb[0].mxu0 %v4367
        %v4435 = vpop.f32.mrb[0].mxu0
        %v4436 = vadd.f32 0.0, %v4435
        %v4437 = vpop.f32.mrb[0].mxu0
        %4438 = vdwg.mxu0
        %v4439 = vadd.f32 %v4198, %v4436
        %v4440 = vadd.f32 %v3382, %v4439
        %v4441 = vld [vmem:[%s16] sm:$0x1]
        %v4442 = vmul.f32 %v4440, %v4440
        %v4443 = vsel %vm883, %v4442, 0.0
        %4444 = vadd.xlane.f32.xlu0 %v4443
        %v4445 = vpop.xlane.xlu0 %4444
        %v4446 = vmul.f32 %v4445, %v887
        %v4447 = vadd.f32 %v4446, 1e-06
        %v4448 = vrsqrt.pop %v4447
        %v4449 = vmul.f32 %v4440, %v4448
        %v4451 = vlaneseq
        %v4452 = vshrl.u32 %v4451, 7
        %v4453 = vsub.s32 0, %v4452
        %v4454 = vrot.slane %v4441, %v4453
        %v4456 = vmul.f32 %v4449, %v4454
        %v4457 = vld [vmem:[%s17] sm:$0xff]
        %v4458 = vld [vmem:[%s17 + $0x8] sm:$0xff]
        %v4459 = vld [vmem:[%s17 + $0x10] sm:$0xff]
        %v4460 = vld [vmem:[%s17 + $0x18] sm:$0xff]
        %v4462 = vsel %vm883, %v4456, 0
        %4464 = vmatprep.subr.mxu0 0.0
        %4465 = vmatpush1.msra.mxu0 %v4457
        %4466 = vmatprep.subr.mxu0 0.0
        %4467 = vmatpush1.msra.mxu0 %v4458
        %4468 = vmatprep.subr.mxu0 0.0
        %4469 = vmatpush1.msra.mxu0 %v4459
        %4470 = vmatprep.subr.mxu0 0.0
        %4471 = vmatpush1.msra.mxu0 %v4460
        %4472 = vmatprep.subr.mxu0 0.0
        %4473 = vmatpush1.msra.mxu0 0.0
        %4474 = vmatprep.subr.mxu0 0.0
        %4475 = vmatpush1.msra.mxu0 0.0
        %4476 = vmatprep.subr.mxu0 0.0
        %4477 = vmatpush1.msra.mxu0 0.0
        %4478 = vmatprep.subr.mxu0 0.0
        %4479 = vmatpush1.msra.mxu0 0.0
        %4480 = vmatprep.subr.mxu0 0.0
        %4481 = vmatpush1.msra.mxu0 0.0
        %4482 = vmatprep.subr.mxu0 0.0
        %4483 = vmatpush1.msra.mxu0 0.0
        %4484 = vmatprep.subr.mxu0 0.0
        %4485 = vmatpush1.msra.mxu0 0.0
        %4486 = vmatprep.subr.mxu0 0.0
        %4487 = vmatpush1.msra.mxu0 0.0
        %4488 = vmatprep.subr.mxu0 0.0
        %4489 = vmatpush1.msra.mxu0 0.0
        %4490 = vmatprep.subr.mxu0 0.0
        %4491 = vmatpush1.msra.mxu0 0.0
        %4492 = vmatprep.subr.mxu0 0.0
        %4493 = vmatpush1.msra.mxu0 0.0
        %4494 = vmatprep.subr.mxu0 0.0
        %4495 = vmatpush1.msra.mxu0 0.0
        %4496 = vmatprep.subr.mxu0 0.0
        %4497 = vmatpush1.msra.mxu0 0.0
        %4498 = vmatprep.subr.mxu0 0.0
        %4499 = vmatpush1.msra.mxu0 0.0
        %4500 = vmatprep.subr.mxu0 0.0
        %4501 = vmatpush1.msra.mxu0 0.0
        %4502 = vmatprep.subr.mxu0 0.0
        %4503 = vmatpush1.msra.mxu0 0.0
        %4504 = vmatprep.subr.mxu0 0.0
        %4505 = vmatpush1.msra.mxu0 0.0
        %4506 = vmatprep.subr.mxu0 0.0
        %4507 = vmatpush1.msra.mxu0 0.0
        %4508 = vmatprep.subr.mxu0 0.0
        %4509 = vmatpush1.msra.mxu0 0.0
        %4510 = vmatprep.subr.mxu0 0.0
        %4511 = vmatpush1.msra.mxu0 0.0
        %4512 = vmatprep.subr.mxu0 0.0
        %4513 = vmatpush1.msra.mxu0 0.0
        %4514 = vmatprep.subr.mxu0 0.0
        %4515 = vmatpush1.msra.mxu0 0.0
        %4516 = vmatprep.subr.mxu0 0.0
        %4517 = vmatpush1.msra.mxu0 0.0
        %4518 = vmatprep.subr.mxu0 0.0
        %4519 = vmatpush1.msra.mxu0 0.0
        %4520 = vmatprep.subr.mxu0 0.0
        %4521 = vmatpush1.msra.mxu0 0.0
        %4522 = vmatprep.subr.mxu0 0.0
        %4523 = vmatpush1.msra.mxu0 0.0
        %4524 = vmatprep.subr.mxu0 0.0
        %4525 = vmatpush1.msra.mxu0 0.0
        %4526 = vmatprep.subr.mxu0 0.0
        %4527 = vmatpush1.msra.mxu0 0.0
        %4528 = vmatprep.mubr.f32.mxu0 0.0
        %4529 = vmatmul.mubr.f32.gmra.mrb[0].mxu0 %v4462
        %v4530 = vpop.f32.mrb[0].mxu0
        %v4531 = vadd.f32 0.0, %v4530
        %v4532 = vpop.f32.mrb[0].mxu0
        %4533 = vdwg.mxu0
        %v4534 = vld [vmem:[%s18] sm:$0xff]
        %v4535 = vld [vmem:[%s18 + $0x8] sm:$0xff]
        %v4536 = vld [vmem:[%s18 + $0x10] sm:$0xff]
        %v4537 = vld [vmem:[%s18 + $0x18] sm:$0xff]
        %v4539 = vsel %vm883, %v3381, 0
        %4541 = vmatprep.subr.mxu0 0.0
        %4542 = vmatpush1.msra.mxu0 %v4534
        %4543 = vmatprep.subr.mxu0 0.0
        %4544 = vmatpush1.msra.mxu0 %v4535
        %4545 = vmatprep.subr.mxu0 0.0
        %4546 = vmatpush1.msra.mxu0 %v4536
        %4547 = vmatprep.subr.mxu0 0.0
        %4548 = vmatpush1.msra.mxu0 %v4537
        %4549 = vmatprep.subr.mxu0 0.0
        %4550 = vmatpush1.msra.mxu0 0.0
        %4551 = vmatprep.subr.mxu0 0.0
        %4552 = vmatpush1.msra.mxu0 0.0
        %4553 = vmatprep.subr.mxu0 0.0
        %4554 = vmatpush1.msra.mxu0 0.0
        %4555 = vmatprep.subr.mxu0 0.0
        %4556 = vmatpush1.msra.mxu0 0.0
        %4557 = vmatprep.subr.mxu0 0.0
        %4558 = vmatpush1.msra.mxu0 0.0
        %4559 = vmatprep.subr.mxu0 0.0
        %4560 = vmatpush1.msra.mxu0 0.0
        %4561 = vmatprep.subr.mxu0 0.0
        %4562 = vmatpush1.msra.mxu0 0.0
        %4563 = vmatprep.subr.mxu0 0.0
        %4564 = vmatpush1.msra.mxu0 0.0
        %4565 = vmatprep.subr.mxu0 0.0
        %4566 = vmatpush1.msra.mxu0 0.0
        %4567 = vmatprep.subr.mxu0 0.0
        %4568 = vmatpush1.msra.mxu0 0.0
        %4569 = vmatprep.subr.mxu0 0.0
        %4570 = vmatpush1.msra.mxu0 0.0
        %4571 = vmatprep.subr.mxu0 0.0
        %4572 = vmatpush1.msra.mxu0 0.0
        %4573 = vmatprep.subr.mxu0 0.0
        %4574 = vmatpush1.msra.mxu0 0.0
        %4575 = vmatprep.subr.mxu0 0.0
        %4576 = vmatpush1.msra.mxu0 0.0
        %4577 = vmatprep.subr.mxu0 0.0
        %4578 = vmatpush1.msra.mxu0 0.0
        %4579 = vmatprep.subr.mxu0 0.0
        %4580 = vmatpush1.msra.mxu0 0.0
        %4581 = vmatprep.subr.mxu0 0.0
        %4582 = vmatpush1.msra.mxu0 0.0
        %4583 = vmatprep.subr.mxu0 0.0
        %4584 = vmatpush1.msra.mxu0 0.0
        %4585 = vmatprep.subr.mxu0 0.0
        %4586 = vmatpush1.msra.mxu0 0.0
        %4587 = vmatprep.subr.mxu0 0.0
        %4588 = vmatpush1.msra.mxu0 0.0
        %4589 = vmatprep.subr.mxu0 0.0
        %4590 = vmatpush1.msra.mxu0 0.0
        %4591 = vmatprep.subr.mxu0 0.0
        %4592 = vmatpush1.msra.mxu0 0.0
        %4593 = vmatprep.subr.mxu0 0.0
        %4594 = vmatpush1.msra.mxu0 0.0
        %4595 = vmatprep.subr.mxu0 0.0
        %4596 = vmatpush1.msra.mxu0 0.0
        %4597 = vmatprep.subr.mxu0 0.0
        %4598 = vmatpush1.msra.mxu0 0.0
        %4599 = vmatprep.subr.mxu0 0.0
        %4600 = vmatpush1.msra.mxu0 0.0
        %4601 = vmatprep.subr.mxu0 0.0
        %4602 = vmatpush1.msra.mxu0 0.0
        %4603 = vmatprep.subr.mxu0 0.0
        %4604 = vmatpush1.msra.mxu0 0.0
        %4605 = vmatprep.mubr.f32.mxu0 0.0
        %4606 = vmatmul.mubr.f32.gmra.mrb[0].mxu0 %v4539
        %v4607 = vpop.f32.mrb[0].mxu0
        %v4608 = vadd.f32 0.0, %v4607
        %v4609 = vpop.f32.mrb[0].mxu0
        %4610 = vdwg.mxu0
        %v4611 = vld [vmem:[%s19] sm:$0xff]
        %v4612 = vld [vmem:[%s19 + $0x8] sm:$0xff]
        %v4613 = vld [vmem:[%s19 + $0x10] sm:$0xff]
        %v4614 = vld [vmem:[%s19 + $0x18] sm:$0xff]
        %v4616 = vsel %vm984, %v4531, 0
        %v4619 = vsel %vm984, %v4608, 0
        %4621 = vmatprep.subr.mxu0 0.0
        %4622 = vmatpush1.xpose.msra.mxu0 %v4619
        %4623 = vmatprep.subr.mxu0 0.0
        %4624 = vmatpush1.xpose.msra.mxu0 0.0
        %4625 = vmatprep.subr.mxu0 0.0
        %4626 = vmatpush1.xpose.msra.mxu0 0.0
        %4627 = vmatprep.subr.mxu0 0.0
        %4628 = vmatpush1.xpose.msra.mxu0 0.0
        %4629 = vmatprep.subr.mxu0 0.0
        %4630 = vmatpush1.xpose.msra.mxu0 0.0
        %4631 = vmatprep.subr.mxu0 0.0
        %4632 = vmatpush1.xpose.msra.mxu0 0.0
        %4633 = vmatprep.subr.mxu0 0.0
        %4634 = vmatpush1.xpose.msra.mxu0 0.0
        %4635 = vmatprep.subr.mxu0 0.0
        %4636 = vmatpush1.xpose.msra.mxu0 0.0
        %4637 = vmatprep.subr.mxu0 0.0
        %4638 = vmatpush1.xpose.msra.mxu0 0.0
        %4639 = vmatprep.subr.mxu0 0.0
        %4640 = vmatpush1.xpose.msra.mxu0 0.0
        %4641 = vmatprep.subr.mxu0 0.0
        %4642 = vmatpush1.xpose.msra.mxu0 0.0
        %4643 = vmatprep.subr.mxu0 0.0
        %4644 = vmatpush1.xpose.msra.mxu0 0.0
        %4645 = vmatprep.subr.mxu0 0.0
        %4646 = vmatpush1.xpose.msra.mxu0 0.0
        %4647 = vmatprep.subr.mxu0 0.0
        %4648 = vmatpush1.xpose.msra.mxu0 0.0
        %4649 = vmatprep.subr.mxu0 0.0
        %4650 = vmatpush1.xpose.msra.mxu0 0.0
        %4651 = vmatprep.subr.mxu0 0.0
        %4652 = vmatpush1.xpose.msra.mxu0 0.0
        %4653 = vmatprep.subr.mxu0 0.0
        %4654 = vmatpush1.xpose.msra.mxu0 0.0
        %4655 = vmatprep.subr.mxu0 0.0
        %4656 = vmatpush1.xpose.msra.mxu0 0.0
        %4657 = vmatprep.subr.mxu0 0.0
        %4658 = vmatpush1.xpose.msra.mxu0 0.0
        %4659 = vmatprep.subr.mxu0 0.0
        %4660 = vmatpush1.xpose.msra.mxu0 0.0
        %4661 = vmatprep.subr.mxu0 0.0
        %4662 = vmatpush1.xpose.msra.mxu0 0.0
        %4663 = vmatprep.subr.mxu0 0.0
        %4664 = vmatpush1.xpose.msra.mxu0 0.0
        %4665 = vmatprep.subr.mxu0 0.0
        %4666 = vmatpush1.xpose.msra.mxu0 0.0
        %4667 = vmatprep.subr.mxu0 0.0
        %4668 = vmatpush1.xpose.msra.mxu0 0.0
        %4669 = vmatprep.subr.mxu0 0.0
        %4670 = vmatpush1.xpose.msra.mxu0 0.0
        %4671 = vmatprep.subr.mxu0 0.0
        %4672 = vmatpush1.xpose.msra.mxu0 0.0
        %4673 = vmatprep.subr.mxu0 0.0
        %4674 = vmatpush1.xpose.msra.mxu0 0.0
        %4675 = vmatprep.subr.mxu0 0.0
        %4676 = vmatpush1.xpose.msra.mxu0 0.0
        %4677 = vmatprep.subr.mxu0 0.0
        %4678 = vmatpush1.xpose.msra.mxu0 0.0
        %4679 = vmatprep.subr.mxu0 0.0
        %4680 = vmatpush1.xpose.msra.mxu0 0.0
        %4681 = vmatprep.subr.mxu0 0.0
        %4682 = vmatpush1.xpose.msra.mxu0 0.0
        %4683 = vmatprep.subr.mxu0 0.0
        %4684 = vmatpush1.xpose.msra.mxu0 0.0
        %4685 = vmatprep.mubr.f32.mxu0 0.0
        %4686 = vmatmul.mubr.f32.gmra.mrb[0].mxu0 %v4616
        %v4687 = vpop.f32.mrb[0].mxu0
        %v4688 = vadd.f32 %v1063, %v4687
        %v4689 = vpop.f32.mrb[0].mxu0
        %4690 = vdwg.mxu0
        %v4691 = vsel %vm984, %v4688, -inf
        %4692 = vmax.xlane.f32.xlu0 %v4691
        %v4693 = vpop.xlane.xlu0 %4692
        %v4694 = vsub.f32 %v4688, %v4693
        %v4695 = vmul.f32 %v4694, 1.442695
        %v4696 = vpow.pop %v4695
        %v4697 = vsel %vm984, %v4696, 0.0
        %4698 = vadd.xlane.f32.xlu0 %v4697
        %v4699 = vpop.xlane.xlu0 %4698
        %v4700 = vrcp.pop %v4699
        %v4701 = vmul.f32 %v4696, %v4700
        %4702 = vrot.lane.b32.xlu0 %v4608, 96
        %v4703 = vpop.permute.xlu0 %4702
        %v4706 = vsel %vm984, %v4701, 0
        %4708 = vmatprep.subr.mxu0 0.0
        %4709 = vmatpush1.msra.mxu0 %v4703
        %4710 = vmatprep.subr.mxu0 0.0
        %4711 = vmatpush1.msra.mxu0 0.0
        %4712 = vmatprep.subr.mxu0 0.0
        %4713 = vmatpush1.msra.mxu0 0.0
        %4714 = vmatprep.subr.mxu0 0.0
        %4715 = vmatpush1.msra.mxu0 0.0
        %4716 = vmatprep.subr.mxu0 0.0
        %4717 = vmatpush1.msra.mxu0 0.0
        %4718 = vmatprep.subr.mxu0 0.0
        %4719 = vmatpush1.msra.mxu0 0.0
        %4720 = vmatprep.subr.mxu0 0.0
        %4721 = vmatpush1.msra.mxu0 0.0
        %4722 = vmatprep.subr.mxu0 0.0
        %4723 = vmatpush1.msra.mxu0 0.0
        %4724 = vmatprep.subr.mxu0 0.0
        %4725 = vmatpush1.msra.mxu0 0.0
        %4726 = vmatprep.subr.mxu0 0.0
        %4727 = vmatpush1.msra.mxu0 0.0
        %4728 = vmatprep.subr.mxu0 0.0
        %4729 = vmatpush1.msra.mxu0 0.0
        %4730 = vmatprep.subr.mxu0 0.0
        %4731 = vmatpush1.msra.mxu0 0.0
        %4732 = vmatprep.subr.mxu0 0.0
        %4733 = vmatpush1.msra.mxu0 0.0
        %4734 = vmatprep.subr.mxu0 0.0
        %4735 = vmatpush1.msra.mxu0 0.0
        %4736 = vmatprep.subr.mxu0 0.0
        %4737 = vmatpush1.msra.mxu0 0.0
        %4738 = vmatprep.subr.mxu0 0.0
        %4739 = vmatpush1.msra.mxu0 0.0
        %4740 = vmatprep.subr.mxu0 0.0
        %4741 = vmatpush1.msra.mxu0 0.0
        %4742 = vmatprep.subr.mxu0 0.0
        %4743 = vmatpush1.msra.mxu0 0.0
        %4744 = vmatprep.subr.mxu0 0.0
        %4745 = vmatpush1.msra.mxu0 0.0
        %4746 = vmatprep.subr.mxu0 0.0
        %4747 = vmatpush1.msra.mxu0 0.0
        %4748 = vmatprep.subr.mxu0 0.0
        %4749 = vmatpush1.msra.mxu0 0.0
        %4750 = vmatprep.subr.mxu0 0.0
        %4751 = vmatpush1.msra.mxu0 0.0
        %4752 = vmatprep.subr.mxu0 0.0
        %4753 = vmatpush1.msra.mxu0 0.0
        %4754 = vmatprep.subr.mxu0 0.0
        %4755 = vmatpush1.msra.mxu0 0.0
        %4756 = vmatprep.subr.mxu0 0.0
        %4757 = vmatpush1.msra.mxu0 0.0
        %4758 = vmatprep.subr.mxu0 0.0
        %4759 = vmatpush1.msra.mxu0 0.0
        %4760 = vmatprep.subr.mxu0 0.0
        %4761 = vmatpush1.msra.mxu0 0.0
        %4762 = vmatprep.subr.mxu0 0.0
        %4763 = vmatpush1.msra.mxu0 0.0
        %4764 = vmatprep.subr.mxu0 0.0
        %4765 = vmatpush1.msra.mxu0 0.0
        %4766 = vmatprep.subr.mxu0 0.0
        %4767 = vmatpush1.msra.mxu0 0.0
        %4768 = vmatprep.subr.mxu0 0.0
        %4769 = vmatpush1.msra.mxu0 0.0
        %4770 = vmatprep.subr.mxu0 0.0
        %4771 = vmatpush1.msra.mxu0 0.0
        %4772 = vmatprep.mubr.f32.mxu0 0.0
        %4773 = vmatmul.mubr.f32.gmra.mrb[0].mxu0 %v4706
        %v4774 = vpop.f32.mrb[0].mxu0
        %v4775 = vadd.f32 0.0, %v4774
        %v4776 = vpop.f32.mrb[0].mxu0
        %4777 = vdwg.mxu0
        %4778 = vrot.lane.b32.xlu0 %v4531, 120
        %v4779 = vpop.permute.xlu0 %4778
        %4780 = vrot.lane.b32.xlu0 %v4608, 120
        %v4781 = vpop.permute.xlu0 %4780
        %v4782 = vsel %vm984, %v4779, 0
        %v4784 = vsel %vm984, %v4781, 0
        %4786 = vmatprep.subr.mxu0 0.0
        %4787 = vmatpush1.xpose.msra.mxu0 %v4784
        %4788 = vmatprep.subr.mxu0 0.0
        %4789 = vmatpush1.xpose.msra.mxu0 0.0
        %4790 = vmatprep.subr.mxu0 0.0
        %4791 = vmatpush1.xpose.msra.mxu0 0.0
        %4792 = vmatprep.subr.mxu0 0.0
        %4793 = vmatpush1.xpose.msra.mxu0 0.0
        %4794 = vmatprep.subr.mxu0 0.0
        %4795 = vmatpush1.xpose.msra.mxu0 0.0
        %4796 = vmatprep.subr.mxu0 0.0
        %4797 = vmatpush1.xpose.msra.mxu0 0.0
        %4798 = vmatprep.subr.mxu0 0.0
        %4799 = vmatpush1.xpose.msra.mxu0 0.0
        %4800 = vmatprep.subr.mxu0 0.0
        %4801 = vmatpush1.xpose.msra.mxu0 0.0
        %4802 = vmatprep.subr.mxu0 0.0
        %4803 = vmatpush1.xpose.msra.mxu0 0.0
        %4804 = vmatprep.subr.mxu0 0.0
        %4805 = vmatpush1.xpose.msra.mxu0 0.0
        %4806 = vmatprep.subr.mxu0 0.0
        %4807 = vmatpush1.xpose.msra.mxu0 0.0
        %4808 = vmatprep.subr.mxu0 0.0
        %4809 = vmatpush1.xpose.msra.mxu0 0.0
        %4810 = vmatprep.subr.mxu0 0.0
        %4811 = vmatpush1.xpose.msra.mxu0 0.0
        %4812 = vmatprep.subr.mxu0 0.0
        %4813 = vmatpush1.xpose.msra.mxu0 0.0
        %4814 = vmatprep.subr.mxu0 0.0
        %4815 = vmatpush1.xpose.msra.mxu0 0.0
        %4816 = vmatprep.subr.mxu0 0.0
        %4817 = vmatpush1.xpose.msra.mxu0 0.0
        %4818 = vmatprep.subr.mxu0 0.0
        %4819 = vmatpush1.xpose.msra.mxu0 0.0
        %4820 = vmatprep.subr.mxu0 0.0
        %4821 = vmatpush1.xpose.msra.mxu0 0.0
        %4822 = vmatprep.subr.mxu0 0.0
        %4823 = vmatpush1.xpose.msra.mxu0 0.0
        %4824 = vmatprep.subr.mxu0 0.0
        %4825 = vmatpush1.xpose.msra.mxu0 0.0
        %4826 = vmatprep.subr.mxu0 0.0
        %4827 = vmatpush1.xpose.msra.mxu0 0.0
        %4828 = vmatprep.subr.mxu0 0.0
        %4829 = vmatpush1.xpose.msra.mxu0 0.0
        %4830 = vmatprep.subr.mxu0 0.0
        %4831 = vmatpush1.xpose.msra.mxu0 0.0
        %4832 = vmatprep.subr.mxu0 0.0
        %4833 = vmatpush1.xpose.msra.mxu0 0.0
        %4834 = vmatprep.subr.mxu0 0.0
        %4835 = vmatpush1.xpose.msra.mxu0 0.0
        %4836 = vmatprep.subr.mxu0 0.0
        %4837 = vmatpush1.xpose.msra.mxu0 0.0
        %4838 = vmatprep.subr.mxu0 0.0
        %4839 = vmatpush1.xpose.msra.mxu0 0.0
        %4840 = vmatprep.subr.mxu0 0.0
        %4841 = vmatpush1.xpose.msra.mxu0 0.0
        %4842 = vmatprep.subr.mxu0 0.0
        %4843 = vmatpush1.xpose.msra.mxu0 0.0
        %4844 = vmatprep.subr.mxu0 0.0
        %4845 = vmatpush1.xpose.msra.mxu0 0.0
        %4846 = vmatprep.subr.mxu0 0.0
        %4847 = vmatpush1.xpose.msra.mxu0 0.0
        %4848 = vmatprep.subr.mxu0 0.0
        %4849 = vmatpush1.xpose.msra.mxu0 0.0
        %4850 = vmatprep.mubr.f32.mxu0 0.0
        %4851 = vmatmul.mubr.f32.gmra.mrb[0].mxu0 %v4782
        %v4852 = vpop.f32.mrb[0].mxu0
        %v4853 = vadd.f32 %v1063, %v4852
        %v4854 = vpop.f32.mrb[0].mxu0
        %4855 = vdwg.mxu0
        %v4856 = vsel %vm984, %v4853, -inf
        %4857 = vmax.xlane.f32.xlu0 %v4856
        %v4858 = vpop.xlane.xlu0 %4857
        %v4859 = vsub.f32 %v4853, %v4858
        %v4860 = vmul.f32 %v4859, 1.442695
        %v4861 = vpow.pop %v4860
        %v4862 = vsel %vm984, %v4861, 0.0
        %4863 = vadd.xlane.f32.xlu0 %v4862
        %v4864 = vpop.xlane.xlu0 %4863
        %v4865 = vrcp.pop %v4864
        %v4866 = vmul.f32 %v4861, %v4865
        %4867 = vrot.lane.b32.xlu0 %v4608, 88
        %v4868 = vpop.permute.xlu0 %4867
        %v4871 = vsel %vm984, %v4866, 0
        %4873 = vmatprep.subr.mxu0 0.0
        %4874 = vmatpush1.msra.mxu0 %v4868
        %4875 = vmatprep.subr.mxu0 0.0
        %4876 = vmatpush1.msra.mxu0 0.0
        %4877 = vmatprep.subr.mxu0 0.0
        %4878 = vmatpush1.msra.mxu0 0.0
        %4879 = vmatprep.subr.mxu0 0.0
        %4880 = vmatpush1.msra.mxu0 0.0
        %4881 = vmatprep.subr.mxu0 0.0
        %4882 = vmatpush1.msra.mxu0 0.0
        %4883 = vmatprep.subr.mxu0 0.0
        %4884 = vmatpush1.msra.mxu0 0.0
        %4885 = vmatprep.subr.mxu0 0.0
        %4886 = vmatpush1.msra.mxu0 0.0
        %4887 = vmatprep.subr.mxu0 0.0
        %4888 = vmatpush1.msra.mxu0 0.0
        %4889 = vmatprep.subr.mxu0 0.0
        %4890 = vmatpush1.msra.mxu0 0.0
        %4891 = vmatprep.subr.mxu0 0.0
        %4892 = vmatpush1.msra.mxu0 0.0
        %4893 = vmatprep.subr.mxu0 0.0
        %4894 = vmatpush1.msra.mxu0 0.0
        %4895 = vmatprep.subr.mxu0 0.0
        %4896 = vmatpush1.msra.mxu0 0.0
        %4897 = vmatprep.subr.mxu0 0.0
        %4898 = vmatpush1.msra.mxu0 0.0
        %4899 = vmatprep.subr.mxu0 0.0
        %4900 = vmatpush1.msra.mxu0 0.0
        %4901 = vmatprep.subr.mxu0 0.0
        %4902 = vmatpush1.msra.mxu0 0.0
        %4903 = vmatprep.subr.mxu0 0.0
        %4904 = vmatpush1.msra.mxu0 0.0
        %4905 = vmatprep.subr.mxu0 0.0
        %4906 = vmatpush1.msra.mxu0 0.0
        %4907 = vmatprep.subr.mxu0 0.0
        %4908 = vmatpush1.msra.mxu0 0.0
        %4909 = vmatprep.subr.mxu0 0.0
        %4910 = vmatpush1.msra.mxu0 0.0
        %4911 = vmatprep.subr.mxu0 0.0
        %4912 = vmatpush1.msra.mxu0 0.0
        %4913 = vmatprep.subr.mxu0 0.0
        %4914 = vmatpush1.msra.mxu0 0.0
        %4915 = vmatprep.subr.mxu0 0.0
        %4916 = vmatpush1.msra.mxu0 0.0
        %4917 = vmatprep.subr.mxu0 0.0
        %4918 = vmatpush1.msra.mxu0 0.0
        %4919 = vmatprep.subr.mxu0 0.0
        %4920 = vmatpush1.msra.mxu0 0.0
        %4921 = vmatprep.subr.mxu0 0.0
        %4922 = vmatpush1.msra.mxu0 0.0
        %4923 = vmatprep.subr.mxu0 0.0
        %4924 = vmatpush1.msra.mxu0 0.0
        %4925 = vmatprep.subr.mxu0 0.0
        %4926 = vmatpush1.msra.mxu0 0.0
        %4927 = vmatprep.subr.mxu0 0.0
        %4928 = vmatpush1.msra.mxu0 0.0
        %4929 = vmatprep.subr.mxu0 0.0
        %4930 = vmatpush1.msra.mxu0 0.0
        %4931 = vmatprep.subr.mxu0 0.0
        %4932 = vmatpush1.msra.mxu0 0.0
        %4933 = vmatprep.subr.mxu0 0.0
        %4934 = vmatpush1.msra.mxu0 0.0
        %4935 = vmatprep.subr.mxu0 0.0
        %4936 = vmatpush1.msra.mxu0 0.0
        %4937 = vmatprep.mubr.f32.mxu0 0.0
        %4938 = vmatmul.mubr.f32.gmra.mrb[0].mxu0 %v4871
        %v4939 = vpop.f32.mrb[0].mxu0
        %v4940 = vadd.f32 0.0, %v4939
        %v4941 = vpop.f32.mrb[0].mxu0
        %4942 = vdwg.mxu0
        %v4944 = vsel %vm984, %v4940, 0
        %4946 = vmatprep.subr.mxu0 0.0
        %4947 = vmatpush1.msra.mxu0 %v4612
        %4948 = vmatprep.subr.mxu0 0.0
        %4949 = vmatpush1.msra.mxu0 0.0
        %4950 = vmatprep.subr.mxu0 0.0
        %4951 = vmatpush1.msra.mxu0 0.0
        %4952 = vmatprep.subr.mxu0 0.0
        %4953 = vmatpush1.msra.mxu0 0.0
        %4954 = vmatprep.subr.mxu0 0.0
        %4955 = vmatpush1.msra.mxu0 0.0
        %4956 = vmatprep.subr.mxu0 0.0
        %4957 = vmatpush1.msra.mxu0 0.0
        %4958 = vmatprep.subr.mxu0 0.0
        %4959 = vmatpush1.msra.mxu0 0.0
        %4960 = vmatprep.subr.mxu0 0.0
        %4961 = vmatpush1.msra.mxu0 0.0
        %4962 = vmatprep.subr.mxu0 0.0
        %4963 = vmatpush1.msra.mxu0 0.0
        %4964 = vmatprep.subr.mxu0 0.0
        %4965 = vmatpush1.msra.mxu0 0.0
        %4966 = vmatprep.subr.mxu0 0.0
        %4967 = vmatpush1.msra.mxu0 0.0
        %4968 = vmatprep.subr.mxu0 0.0
        %4969 = vmatpush1.msra.mxu0 0.0
        %4970 = vmatprep.subr.mxu0 0.0
        %4971 = vmatpush1.msra.mxu0 0.0
        %4972 = vmatprep.subr.mxu0 0.0
        %4973 = vmatpush1.msra.mxu0 0.0
        %4974 = vmatprep.subr.mxu0 0.0
        %4975 = vmatpush1.msra.mxu0 0.0
        %4976 = vmatprep.subr.mxu0 0.0
        %4977 = vmatpush1.msra.mxu0 0.0
        %4978 = vmatprep.subr.mxu0 0.0
        %4979 = vmatpush1.msra.mxu0 0.0
        %4980 = vmatprep.subr.mxu0 0.0
        %4981 = vmatpush1.msra.mxu0 0.0
        %4982 = vmatprep.subr.mxu0 0.0
        %4983 = vmatpush1.msra.mxu0 0.0
        %4984 = vmatprep.subr.mxu0 0.0
        %4985 = vmatpush1.msra.mxu0 0.0
        %4986 = vmatprep.subr.mxu0 0.0
        %4987 = vmatpush1.msra.mxu0 0.0
        %4988 = vmatprep.subr.mxu0 0.0
        %4989 = vmatpush1.msra.mxu0 0.0
        %4990 = vmatprep.subr.mxu0 0.0
        %4991 = vmatpush1.msra.mxu0 0.0
        %4992 = vmatprep.subr.mxu0 0.0
        %4993 = vmatpush1.msra.mxu0 0.0
        %4994 = vmatprep.subr.mxu0 0.0
        %4995 = vmatpush1.msra.mxu0 0.0
        %4996 = vmatprep.subr.mxu0 0.0
        %4997 = vmatpush1.msra.mxu0 0.0
        %4998 = vmatprep.subr.mxu0 0.0
        %4999 = vmatpush1.msra.mxu0 0.0
        %5000 = vmatprep.subr.mxu0 0.0
        %5001 = vmatpush1.msra.mxu0 0.0
        %5002 = vmatprep.subr.mxu0 0.0
        %5003 = vmatpush1.msra.mxu0 0.0
        %5004 = vmatprep.subr.mxu0 0.0
        %5005 = vmatpush1.msra.mxu0 0.0
        %5006 = vmatprep.subr.mxu0 0.0
        %5007 = vmatpush1.msra.mxu0 0.0
        %5008 = vmatprep.subr.mxu0 0.0
        %5009 = vmatpush1.msra.mxu0 0.0
        %5010 = vmatprep.mubr.f32.mxu0 0.0
        %5011 = vmatmul.mubr.f32.gmra.mrb[0].mxu0 %v4944
        %v5012 = vpop.f32.mrb[0].mxu0
        %v5013 = vadd.f32 0.0, %v5012
        %v5014 = vpop.f32.mrb[0].mxu0
        %5015 = vdwg.mxu0
        %v5017 = vsel %vm984, %v4775, 0
        %5019 = vmatprep.subr.mxu0 0.0
        %5020 = vmatpush1.msra.mxu0 %v4611
        %5021 = vmatprep.subr.mxu0 0.0
        %5022 = vmatpush1.msra.mxu0 0.0
        %5023 = vmatprep.subr.mxu0 0.0
        %5024 = vmatpush1.msra.mxu0 0.0
        %5025 = vmatprep.subr.mxu0 0.0
        %5026 = vmatpush1.msra.mxu0 0.0
        %5027 = vmatprep.subr.mxu0 0.0
        %5028 = vmatpush1.msra.mxu0 0.0
        %5029 = vmatprep.subr.mxu0 0.0
        %5030 = vmatpush1.msra.mxu0 0.0
        %5031 = vmatprep.subr.mxu0 0.0
        %5032 = vmatpush1.msra.mxu0 0.0
        %5033 = vmatprep.subr.mxu0 0.0
        %5034 = vmatpush1.msra.mxu0 0.0
        %5035 = vmatprep.subr.mxu0 0.0
        %5036 = vmatpush1.msra.mxu0 0.0
        %5037 = vmatprep.subr.mxu0 0.0
        %5038 = vmatpush1.msra.mxu0 0.0
        %5039 = vmatprep.subr.mxu0 0.0
        %5040 = vmatpush1.msra.mxu0 0.0
        %5041 = vmatprep.subr.mxu0 0.0
        %5042 = vmatpush1.msra.mxu0 0.0
        %5043 = vmatprep.subr.mxu0 0.0
        %5044 = vmatpush1.msra.mxu0 0.0
        %5045 = vmatprep.subr.mxu0 0.0
        %5046 = vmatpush1.msra.mxu0 0.0
        %5047 = vmatprep.subr.mxu0 0.0
        %5048 = vmatpush1.msra.mxu0 0.0
        %5049 = vmatprep.subr.mxu0 0.0
        %5050 = vmatpush1.msra.mxu0 0.0
        %5051 = vmatprep.subr.mxu0 0.0
        %5052 = vmatpush1.msra.mxu0 0.0
        %5053 = vmatprep.subr.mxu0 0.0
        %5054 = vmatpush1.msra.mxu0 0.0
        %5055 = vmatprep.subr.mxu0 0.0
        %5056 = vmatpush1.msra.mxu0 0.0
        %5057 = vmatprep.subr.mxu0 0.0
        %5058 = vmatpush1.msra.mxu0 0.0
        %5059 = vmatprep.subr.mxu0 0.0
        %5060 = vmatpush1.msra.mxu0 0.0
        %5061 = vmatprep.subr.mxu0 0.0
        %5062 = vmatpush1.msra.mxu0 0.0
        %5063 = vmatprep.subr.mxu0 0.0
        %5064 = vmatpush1.msra.mxu0 0.0
        %5065 = vmatprep.subr.mxu0 0.0
        %5066 = vmatpush1.msra.mxu0 0.0
        %5067 = vmatprep.subr.mxu0 0.0
        %5068 = vmatpush1.msra.mxu0 0.0
        %5069 = vmatprep.subr.mxu0 0.0
        %5070 = vmatpush1.msra.mxu0 0.0
        %5071 = vmatprep.subr.mxu0 0.0
        %5072 = vmatpush1.msra.mxu0 0.0
        %5073 = vmatprep.subr.mxu0 0.0
        %5074 = vmatpush1.msra.mxu0 0.0
        %5075 = vmatprep.subr.mxu0 0.0
        %5076 = vmatpush1.msra.mxu0 0.0
        %5077 = vmatprep.subr.mxu0 0.0
        %5078 = vmatpush1.msra.mxu0 0.0
        %5079 = vmatprep.subr.mxu0 0.0
        %5080 = vmatpush1.msra.mxu0 0.0
        %5081 = vmatprep.subr.mxu0 0.0
        %5082 = vmatpush1.msra.mxu0 0.0
        %5083 = vmatprep.mubr.f32.mxu0 0.0
        %5084 = vmatmul.mubr.f32.gmra.mrb[0].mxu0 %v5017
        %v5085 = vpop.f32.mrb[0].mxu0
        %v5086 = vadd.f32 %v5013, %v5085
        %v5087 = vpop.f32.mrb[0].mxu0
        %5088 = vdwg.mxu0
        %5089 = vrot.lane.b32.xlu0 %v4531, 112
        %v5090 = vpop.permute.xlu0 %5089
        %5091 = vrot.lane.b32.xlu0 %v4608, 112
        %v5092 = vpop.permute.xlu0 %5091
        %v5093 = vsel %vm984, %v5090, 0
        %v5095 = vsel %vm984, %v5092, 0
        %5097 = vmatprep.subr.mxu0 0.0
        %5098 = vmatpush1.xpose.msra.mxu0 %v5095
        %5099 = vmatprep.subr.mxu0 0.0
        %5100 = vmatpush1.xpose.msra.mxu0 0.0
        %5101 = vmatprep.subr.mxu0 0.0
        %5102 = vmatpush1.xpose.msra.mxu0 0.0
        %5103 = vmatprep.subr.mxu0 0.0
        %5104 = vmatpush1.xpose.msra.mxu0 0.0
        %5105 = vmatprep.subr.mxu0 0.0
        %5106 = vmatpush1.xpose.msra.mxu0 0.0
        %5107 = vmatprep.subr.mxu0 0.0
        %5108 = vmatpush1.xpose.msra.mxu0 0.0
        %5109 = vmatprep.subr.mxu0 0.0
        %5110 = vmatpush1.xpose.msra.mxu0 0.0
        %5111 = vmatprep.subr.mxu0 0.0
        %5112 = vmatpush1.xpose.msra.mxu0 0.0
        %5113 = vmatprep.subr.mxu0 0.0
        %5114 = vmatpush1.xpose.msra.mxu0 0.0
        %5115 = vmatprep.subr.mxu0 0.0
        %5116 = vmatpush1.xpose.msra.mxu0 0.0
        %5117 = vmatprep.subr.mxu0 0.0
        %5118 = vmatpush1.xpose.msra.mxu0 0.0
        %5119 = vmatprep.subr.mxu0 0.0
        %5120 = vmatpush1.xpose.msra.mxu0 0.0
        %5121 = vmatprep.subr.mxu0 0.0
        %5122 = vmatpush1.xpose.msra.mxu0 0.0
        %5123 = vmatprep.subr.mxu0 0.0
        %5124 = vmatpush1.xpose.msra.mxu0 0.0
        %5125 = vmatprep.subr.mxu0 0.0
        %5126 = vmatpush1.xpose.msra.mxu0 0.0
        %5127 = vmatprep.subr.mxu0 0.0
        %5128 = vmatpush1.xpose.msra.mxu0 0.0
        %5129 = vmatprep.subr.mxu0 0.0
        %5130 = vmatpush1.xpose.msra.mxu0 0.0
        %5131 = vmatprep.subr.mxu0 0.0
        %5132 = vmatpush1.xpose.msra.mxu0 0.0
        %5133 = vmatprep.subr.mxu0 0.0
        %5134 = vmatpush1.xpose.msra.mxu0 0.0
        %5135 = vmatprep.subr.mxu0 0.0
        %5136 = vmatpush1.xpose.msra.mxu0 0.0
        %5137 = vmatprep.subr.mxu0 0.0
        %5138 = vmatpush1.xpose.msra.mxu0 0.0
        %5139 = vmatprep.subr.mxu0 0.0
        %5140 = vmatpush1.xpose.msra.mxu0 0.0
        %5141 = vmatprep.subr.mxu0 0.0
        %5142 = vmatpush1.xpose.msra.mxu0 0.0
        %5143 = vmatprep.subr.mxu0 0.0
        %5144 = vmatpush1.xpose.msra.mxu0 0.0
        %5145 = vmatprep.subr.mxu0 0.0
        %5146 = vmatpush1.xpose.msra.mxu0 0.0
        %5147 = vmatprep.subr.mxu0 0.0
        %5148 = vmatpush1.xpose.msra.mxu0 0.0
        %5149 = vmatprep.subr.mxu0 0.0
        %5150 = vmatpush1.xpose.msra.mxu0 0.0
        %5151 = vmatprep.subr.mxu0 0.0
        %5152 = vmatpush1.xpose.msra.mxu0 0.0
        %5153 = vmatprep.subr.mxu0 0.0
        %5154 = vmatpush1.xpose.msra.mxu0 0.0
        %5155 = vmatprep.subr.mxu0 0.0
        %5156 = vmatpush1.xpose.msra.mxu0 0.0
        %5157 = vmatprep.subr.mxu0 0.0
        %5158 = vmatpush1.xpose.msra.mxu0 0.0
        %5159 = vmatprep.subr.mxu0 0.0
        %5160 = vmatpush1.xpose.msra.mxu0 0.0
        %5161 = vmatprep.mubr.f32.mxu0 0.0
        %5162 = vmatmul.mubr.f32.gmra.mrb[0].mxu0 %v5093
        %v5163 = vpop.f32.mrb[0].mxu0
        %v5164 = vadd.f32 %v1063, %v5163
        %v5165 = vpop.f32.mrb[0].mxu0
        %5166 = vdwg.mxu0
        %v5167 = vsel %vm984, %v5164, -inf
        %5168 = vmax.xlane.f32.xlu0 %v5167
        %v5169 = vpop.xlane.xlu0 %5168
        %v5170 = vsub.f32 %v5164, %v5169
        %v5171 = vmul.f32 %v5170, 1.442695
        %v5172 = vpow.pop %v5171
        %v5173 = vsel %vm984, %v5172, 0.0
        %5174 = vadd.xlane.f32.xlu0 %v5173
        %v5175 = vpop.xlane.xlu0 %5174
        %v5176 = vrcp.pop %v5175
        %v5177 = vmul.f32 %v5172, %v5176
        %5178 = vrot.lane.b32.xlu0 %v4608, 80
        %v5179 = vpop.permute.xlu0 %5178
        %v5182 = vsel %vm984, %v5177, 0
        %5184 = vmatprep.subr.mxu0 0.0
        %5185 = vmatpush1.msra.mxu0 %v5179
        %5186 = vmatprep.subr.mxu0 0.0
        %5187 = vmatpush1.msra.mxu0 0.0
        %5188 = vmatprep.subr.mxu0 0.0
        %5189 = vmatpush1.msra.mxu0 0.0
        %5190 = vmatprep.subr.mxu0 0.0
        %5191 = vmatpush1.msra.mxu0 0.0
        %5192 = vmatprep.subr.mxu0 0.0
        %5193 = vmatpush1.msra.mxu0 0.0
        %5194 = vmatprep.subr.mxu0 0.0
        %5195 = vmatpush1.msra.mxu0 0.0
        %5196 = vmatprep.subr.mxu0 0.0
        %5197 = vmatpush1.msra.mxu0 0.0
        %5198 = vmatprep.subr.mxu0 0.0
        %5199 = vmatpush1.msra.mxu0 0.0
        %5200 = vmatprep.subr.mxu0 0.0
        %5201 = vmatpush1.msra.mxu0 0.0
        %5202 = vmatprep.subr.mxu0 0.0
        %5203 = vmatpush1.msra.mxu0 0.0
        %5204 = vmatprep.subr.mxu0 0.0
        %5205 = vmatpush1.msra.mxu0 0.0
        %5206 = vmatprep.subr.mxu0 0.0
        %5207 = vmatpush1.msra.mxu0 0.0
        %5208 = vmatprep.subr.mxu0 0.0
        %5209 = vmatpush1.msra.mxu0 0.0
        %5210 = vmatprep.subr.mxu0 0.0
        %5211 = vmatpush1.msra.mxu0 0.0
        %5212 = vmatprep.subr.mxu0 0.0
        %5213 = vmatpush1.msra.mxu0 0.0
        %5214 = vmatprep.subr.mxu0 0.0
        %5215 = vmatpush1.msra.mxu0 0.0
        %5216 = vmatprep.subr.mxu0 0.0
        %5217 = vmatpush1.msra.mxu0 0.0
        %5218 = vmatprep.subr.mxu0 0.0
        %5219 = vmatpush1.msra.mxu0 0.0
        %5220 = vmatprep.subr.mxu0 0.0
        %5221 = vmatpush1.msra.mxu0 0.0
        %5222 = vmatprep.subr.mxu0 0.0
        %5223 = vmatpush1.msra.mxu0 0.0
        %5224 = vmatprep.subr.mxu0 0.0
        %5225 = vmatpush1.msra.mxu0 0.0
        %5226 = vmatprep.subr.mxu0 0.0
        %5227 = vmatpush1.msra.mxu0 0.0
        %5228 = vmatprep.subr.mxu0 0.0
        %5229 = vmatpush1.msra.mxu0 0.0
        %5230 = vmatprep.subr.mxu0 0.0
        %5231 = vmatpush1.msra.mxu0 0.0
        %5232 = vmatprep.subr.mxu0 0.0
        %5233 = vmatpush1.msra.mxu0 0.0
        %5234 = vmatprep.subr.mxu0 0.0
        %5235 = vmatpush1.msra.mxu0 0.0
        %5236 = vmatprep.subr.mxu0 0.0
        %5237 = vmatpush1.msra.mxu0 0.0
        %5238 = vmatprep.subr.mxu0 0.0
        %5239 = vmatpush1.msra.mxu0 0.0
        %5240 = vmatprep.subr.mxu0 0.0
        %5241 = vmatpush1.msra.mxu0 0.0
        %5242 = vmatprep.subr.mxu0 0.0
        %5243 = vmatpush1.msra.mxu0 0.0
        %5244 = vmatprep.subr.mxu0 0.0
        %5245 = vmatpush1.msra.mxu0 0.0
        %5246 = vmatprep.subr.mxu0 0.0
        %5247 = vmatpush1.msra.mxu0 0.0
        %5248 = vmatprep.mubr.f32.mxu0 0.0
        %5249 = vmatmul.mubr.f32.gmra.mrb[0].mxu0 %v5182
        %v5250 = vpop.f32.mrb[0].mxu0
        %v5251 = vadd.f32 0.0, %v5250
        %v5252 = vpop.f32.mrb[0].mxu0
        %5253 = vdwg.mxu0
        %v5255 = vsel %vm984, %v5251, 0
        %5257 = vmatprep.subr.mxu0 0.0
        %5258 = vmatpush1.msra.mxu0 %v4613
        %5259 = vmatprep.subr.mxu0 0.0
        %5260 = vmatpush1.msra.mxu0 0.0
        %5261 = vmatprep.subr.mxu0 0.0
        %5262 = vmatpush1.msra.mxu0 0.0
        %5263 = vmatprep.subr.mxu0 0.0
        %5264 = vmatpush1.msra.mxu0 0.0
        %5265 = vmatprep.subr.mxu0 0.0
        %5266 = vmatpush1.msra.mxu0 0.0
        %5267 = vmatprep.subr.mxu0 0.0
        %5268 = vmatpush1.msra.mxu0 0.0
        %5269 = vmatprep.subr.mxu0 0.0
        %5270 = vmatpush1.msra.mxu0 0.0
        %5271 = vmatprep.subr.mxu0 0.0
        %5272 = vmatpush1.msra.mxu0 0.0
        %5273 = vmatprep.subr.mxu0 0.0
        %5274 = vmatpush1.msra.mxu0 0.0
        %5275 = vmatprep.subr.mxu0 0.0
        %5276 = vmatpush1.msra.mxu0 0.0
        %5277 = vmatprep.subr.mxu0 0.0
        %5278 = vmatpush1.msra.mxu0 0.0
        %5279 = vmatprep.subr.mxu0 0.0
        %5280 = vmatpush1.msra.mxu0 0.0
        %5281 = vmatprep.subr.mxu0 0.0
        %5282 = vmatpush1.msra.mxu0 0.0
        %5283 = vmatprep.subr.mxu0 0.0
        %5284 = vmatpush1.msra.mxu0 0.0
        %5285 = vmatprep.subr.mxu0 0.0
        %5286 = vmatpush1.msra.mxu0 0.0
        %5287 = vmatprep.subr.mxu0 0.0
        %5288 = vmatpush1.msra.mxu0 0.0
        %5289 = vmatprep.subr.mxu0 0.0
        %5290 = vmatpush1.msra.mxu0 0.0
        %5291 = vmatprep.subr.mxu0 0.0
        %5292 = vmatpush1.msra.mxu0 0.0
        %5293 = vmatprep.subr.mxu0 0.0
        %5294 = vmatpush1.msra.mxu0 0.0
        %5295 = vmatprep.subr.mxu0 0.0
        %5296 = vmatpush1.msra.mxu0 0.0
        %5297 = vmatprep.subr.mxu0 0.0
        %5298 = vmatpush1.msra.mxu0 0.0
        %5299 = vmatprep.subr.mxu0 0.0
        %5300 = vmatpush1.msra.mxu0 0.0
        %5301 = vmatprep.subr.mxu0 0.0
        %5302 = vmatpush1.msra.mxu0 0.0
        %5303 = vmatprep.subr.mxu0 0.0
        %5304 = vmatpush1.msra.mxu0 0.0
        %5305 = vmatprep.subr.mxu0 0.0
        %5306 = vmatpush1.msra.mxu0 0.0
        %5307 = vmatprep.subr.mxu0 0.0
        %5308 = vmatpush1.msra.mxu0 0.0
        %5309 = vmatprep.subr.mxu0 0.0
        %5310 = vmatpush1.msra.mxu0 0.0
        %5311 = vmatprep.subr.mxu0 0.0
        %5312 = vmatpush1.msra.mxu0 0.0
        %5313 = vmatprep.subr.mxu0 0.0
        %5314 = vmatpush1.msra.mxu0 0.0
        %5315 = vmatprep.subr.mxu0 0.0
        %5316 = vmatpush1.msra.mxu0 0.0
        %5317 = vmatprep.subr.mxu0 0.0
        %5318 = vmatpush1.msra.mxu0 0.0
        %5319 = vmatprep.subr.mxu0 0.0
        %5320 = vmatpush1.msra.mxu0 0.0
        %5321 = vmatprep.mubr.f32.mxu0 0.0
        %5322 = vmatmul.mubr.f32.gmra.mrb[0].mxu0 %v5255
        %v5323 = vpop.f32.mrb[0].mxu0
        %v5324 = vadd.f32 0.0, %v5323
        %v5325 = vpop.f32.mrb[0].mxu0
        %5326 = vdwg.mxu0
        %v5327 = vadd.f32 %v5086, %v5324
        %5328 = vrot.lane.b32.xlu0 %v4531, 104
        %v5329 = vpop.permute.xlu0 %5328
        %5330 = vrot.lane.b32.xlu0 %v4608, 104
        %v5331 = vpop.permute.xlu0 %5330
        %v5332 = vsel %vm984, %v5329, 0
        %v5334 = vsel %vm984, %v5331, 0
        %5336 = vmatprep.subr.mxu0 0.0
        %5337 = vmatpush1.xpose.msra.mxu0 %v5334
        %5338 = vmatprep.subr.mxu0 0.0
        %5339 = vmatpush1.xpose.msra.mxu0 0.0
        %5340 = vmatprep.subr.mxu0 0.0
        %5341 = vmatpush1.xpose.msra.mxu0 0.0
        %5342 = vmatprep.subr.mxu0 0.0
        %5343 = vmatpush1.xpose.msra.mxu0 0.0
        %5344 = vmatprep.subr.mxu0 0.0
        %5345 = vmatpush1.xpose.msra.mxu0 0.0
        %5346 = vmatprep.subr.mxu0 0.0
        %5347 = vmatpush1.xpose.msra.mxu0 0.0
        %5348 = vmatprep.subr.mxu0 0.0
        %5349 = vmatpush1.xpose.msra.mxu0 0.0
        %5350 = vmatprep.subr.mxu0 0.0
        %5351 = vmatpush1.xpose.msra.mxu0 0.0
        %5352 = vmatprep.subr.mxu0 0.0
        %5353 = vmatpush1.xpose.msra.mxu0 0.0
        %5354 = vmatprep.subr.mxu0 0.0
        %5355 = vmatpush1.xpose.msra.mxu0 0.0
        %5356 = vmatprep.subr.mxu0 0.0
        %5357 = vmatpush1.xpose.msra.mxu0 0.0
        %5358 = vmatprep.subr.mxu0 0.0
        %5359 = vmatpush1.xpose.msra.mxu0 0.0
        %5360 = vmatprep.subr.mxu0 0.0
        %5361 = vmatpush1.xpose.msra.mxu0 0.0
        %5362 = vmatprep.subr.mxu0 0.0
        %5363 = vmatpush1.xpose.msra.mxu0 0.0
        %5364 = vmatprep.subr.mxu0 0.0
        %5365 = vmatpush1.xpose.msra.mxu0 0.0
        %5366 = vmatprep.subr.mxu0 0.0
        %5367 = vmatpush1.xpose.msra.mxu0 0.0
        %5368 = vmatprep.subr.mxu0 0.0
        %5369 = vmatpush1.xpose.msra.mxu0 0.0
        %5370 = vmatprep.subr.mxu0 0.0
        %5371 = vmatpush1.xpose.msra.mxu0 0.0
        %5372 = vmatprep.subr.mxu0 0.0
        %5373 = vmatpush1.xpose.msra.mxu0 0.0
        %5374 = vmatprep.subr.mxu0 0.0
        %5375 = vmatpush1.xpose.msra.mxu0 0.0
        %5376 = vmatprep.subr.mxu0 0.0
        %5377 = vmatpush1.xpose.msra.mxu0 0.0
        %5378 = vmatprep.subr.mxu0 0.0
        %5379 = vmatpush1.xpose.msra.mxu0 0.0
        %5380 = vmatprep.subr.mxu0 0.0
        %5381 = vmatpush1.xpose.msra.mxu0 0.0
        %5382 = vmatprep.subr.mxu0 0.0
        %5383 = vmatpush1.xpose.msra.mxu0 0.0
        %5384 = vmatprep.subr.mxu0 0.0
        %5385 = vmatpush1.xpose.msra.mxu0 0.0
        %5386 = vmatprep.subr.mxu0 0.0
        %5387 = vmatpush1.xpose.msra.mxu0 0.0
        %5388 = vmatprep.subr.mxu0 0.0
        %5389 = vmatpush1.xpose.msra.mxu0 0.0
        %5390 = vmatprep.subr.mxu0 0.0
        %5391 = vmatpush1.xpose.msra.mxu0 0.0
        %5392 = vmatprep.subr.mxu0 0.0
        %5393 = vmatpush1.xpose.msra.mxu0 0.0
        %5394 = vmatprep.subr.mxu0 0.0
        %5395 = vmatpush1.xpose.msra.mxu0 0.0
        %5396 = vmatprep.subr.mxu0 0.0
        %5397 = vmatpush1.xpose.msra.mxu0 0.0
        %5398 = vmatprep.subr.mxu0 0.0
        %5399 = vmatpush1.xpose.msra.mxu0 0.0
        %5400 = vmatprep.mubr.f32.mxu0 0.0
        %5401 = vmatmul.mubr.f32.gmra.mrb[0].mxu0 %v5332
        %v5402 = vpop.f32.mrb[0].mxu0
        %v5403 = vadd.f32 %v1063, %v5402
        %v5404 = vpop.f32.mrb[0].mxu0
        %5405 = vdwg.mxu0
        %v5406 = vsel %vm984, %v5403, -inf
        %5407 = vmax.xlane.f32.xlu0 %v5406
        %v5408 = vpop.xlane.xlu0 %5407
        %v5409 = vsub.f32 %v5403, %v5408
        %v5410 = vmul.f32 %v5409, 1.442695
        %v5411 = vpow.pop %v5410
        %v5412 = vsel %vm984, %v5411, 0.0
        %5413 = vadd.xlane.f32.xlu0 %v5412
        %v5414 = vpop.xlane.xlu0 %5413
        %v5415 = vrcp.pop %v5414
        %v5416 = vmul.f32 %v5411, %v5415
        %5417 = vrot.lane.b32.xlu0 %v4608, 72
        %v5418 = vpop.permute.xlu0 %5417
        %v5421 = vsel %vm984, %v5416, 0
        %5423 = vmatprep.subr.mxu0 0.0
        %5424 = vmatpush1.msra.mxu0 %v5418
        %5425 = vmatprep.subr.mxu0 0.0
        %5426 = vmatpush1.msra.mxu0 0.0
        %5427 = vmatprep.subr.mxu0 0.0
        %5428 = vmatpush1.msra.mxu0 0.0
        %5429 = vmatprep.subr.mxu0 0.0
        %5430 = vmatpush1.msra.mxu0 0.0
        %5431 = vmatprep.subr.mxu0 0.0
        %5432 = vmatpush1.msra.mxu0 0.0
        %5433 = vmatprep.subr.mxu0 0.0
        %5434 = vmatpush1.msra.mxu0 0.0
        %5435 = vmatprep.subr.mxu0 0.0
        %5436 = vmatpush1.msra.mxu0 0.0
        %5437 = vmatprep.subr.mxu0 0.0
        %5438 = vmatpush1.msra.mxu0 0.0
        %5439 = vmatprep.subr.mxu0 0.0
        %5440 = vmatpush1.msra.mxu0 0.0
        %5441 = vmatprep.subr.mxu0 0.0
        %5442 = vmatpush1.msra.mxu0 0.0
        %5443 = vmatprep.subr.mxu0 0.0
        %5444 = vmatpush1.msra.mxu0 0.0
        %5445 = vmatprep.subr.mxu0 0.0
        %5446 = vmatpush1.msra.mxu0 0.0
        %5447 = vmatprep.subr.mxu0 0.0
        %5448 = vmatpush1.msra.mxu0 0.0
        %5449 = vmatprep.subr.mxu0 0.0
        %5450 = vmatpush1.msra.mxu0 0.0
        %5451 = vmatprep.subr.mxu0 0.0
        %5452 = vmatpush1.msra.mxu0 0.0
        %5453 = vmatprep.subr.mxu0 0.0
        %5454 = vmatpush1.msra.mxu0 0.0
        %5455 = vmatprep.subr.mxu0 0.0
        %5456 = vmatpush1.msra.mxu0 0.0
        %5457 = vmatprep.subr.mxu0 0.0
        %5458 = vmatpush1.msra.mxu0 0.0
        %5459 = vmatprep.subr.mxu0 0.0
        %5460 = vmatpush1.msra.mxu0 0.0
        %5461 = vmatprep.subr.mxu0 0.0
        %5462 = vmatpush1.msra.mxu0 0.0
        %5463 = vmatprep.subr.mxu0 0.0
        %5464 = vmatpush1.msra.mxu0 0.0
        %5465 = vmatprep.subr.mxu0 0.0
        %5466 = vmatpush1.msra.mxu0 0.0
        %5467 = vmatprep.subr.mxu0 0.0
        %5468 = vmatpush1.msra.mxu0 0.0
        %5469 = vmatprep.subr.mxu0 0.0
        %5470 = vmatpush1.msra.mxu0 0.0
        %5471 = vmatprep.subr.mxu0 0.0
        %5472 = vmatpush1.msra.mxu0 0.0
        %5473 = vmatprep.subr.mxu0 0.0
        %5474 = vmatpush1.msra.mxu0 0.0
        %5475 = vmatprep.subr.mxu0 0.0
        %5476 = vmatpush1.msra.mxu0 0.0
        %5477 = vmatprep.subr.mxu0 0.0
        %5478 = vmatpush1.msra.mxu0 0.0
        %5479 = vmatprep.subr.mxu0 0.0
        %5480 = vmatpush1.msra.mxu0 0.0
        %5481 = vmatprep.subr.mxu0 0.0
        %5482 = vmatpush1.msra.mxu0 0.0
        %5483 = vmatprep.subr.mxu0 0.0
        %5484 = vmatpush1.msra.mxu0 0.0
        %5485 = vmatprep.subr.mxu0 0.0
        %5486 = vmatpush1.msra.mxu0 0.0
        %5487 = vmatprep.mubr.f32.mxu0 0.0
        %5488 = vmatmul.mubr.f32.gmra.mrb[0].mxu0 %v5421
        %v5489 = vpop.f32.mrb[0].mxu0
        %v5490 = vadd.f32 0.0, %v5489
        %v5491 = vpop.f32.mrb[0].mxu0
        %5492 = vdwg.mxu0
        %v5494 = vsel %vm984, %v5490, 0
        %5496 = vmatprep.subr.mxu0 0.0
        %5497 = vmatpush1.msra.mxu0 %v4614
        %5498 = vmatprep.subr.mxu0 0.0
        %5499 = vmatpush1.msra.mxu0 0.0
        %5500 = vmatprep.subr.mxu0 0.0
        %5501 = vmatpush1.msra.mxu0 0.0
        %5502 = vmatprep.subr.mxu0 0.0
        %5503 = vmatpush1.msra.mxu0 0.0
        %5504 = vmatprep.subr.mxu0 0.0
        %5505 = vmatpush1.msra.mxu0 0.0
        %5506 = vmatprep.subr.mxu0 0.0
        %5507 = vmatpush1.msra.mxu0 0.0
        %5508 = vmatprep.subr.mxu0 0.0
        %5509 = vmatpush1.msra.mxu0 0.0
        %5510 = vmatprep.subr.mxu0 0.0
        %5511 = vmatpush1.msra.mxu0 0.0
        %5512 = vmatprep.subr.mxu0 0.0
        %5513 = vmatpush1.msra.mxu0 0.0
        %5514 = vmatprep.subr.mxu0 0.0
        %5515 = vmatpush1.msra.mxu0 0.0
        %5516 = vmatprep.subr.mxu0 0.0
        %5517 = vmatpush1.msra.mxu0 0.0
        %5518 = vmatprep.subr.mxu0 0.0
        %5519 = vmatpush1.msra.mxu0 0.0
        %5520 = vmatprep.subr.mxu0 0.0
        %5521 = vmatpush1.msra.mxu0 0.0
        %5522 = vmatprep.subr.mxu0 0.0
        %5523 = vmatpush1.msra.mxu0 0.0
        %5524 = vmatprep.subr.mxu0 0.0
        %5525 = vmatpush1.msra.mxu0 0.0
        %5526 = vmatprep.subr.mxu0 0.0
        %5527 = vmatpush1.msra.mxu0 0.0
        %5528 = vmatprep.subr.mxu0 0.0
        %5529 = vmatpush1.msra.mxu0 0.0
        %5530 = vmatprep.subr.mxu0 0.0
        %5531 = vmatpush1.msra.mxu0 0.0
        %5532 = vmatprep.subr.mxu0 0.0
        %5533 = vmatpush1.msra.mxu0 0.0
        %5534 = vmatprep.subr.mxu0 0.0
        %5535 = vmatpush1.msra.mxu0 0.0
        %5536 = vmatprep.subr.mxu0 0.0
        %5537 = vmatpush1.msra.mxu0 0.0
        %5538 = vmatprep.subr.mxu0 0.0
        %5539 = vmatpush1.msra.mxu0 0.0
        %5540 = vmatprep.subr.mxu0 0.0
        %5541 = vmatpush1.msra.mxu0 0.0
        %5542 = vmatprep.subr.mxu0 0.0
        %5543 = vmatpush1.msra.mxu0 0.0
        %5544 = vmatprep.subr.mxu0 0.0
        %5545 = vmatpush1.msra.mxu0 0.0
        %5546 = vmatprep.subr.mxu0 0.0
        %5547 = vmatpush1.msra.mxu0 0.0
        %5548 = vmatprep.subr.mxu0 0.0
        %5549 = vmatpush1.msra.mxu0 0.0
        %5550 = vmatprep.subr.mxu0 0.0
        %5551 = vmatpush1.msra.mxu0 0.0
        %5552 = vmatprep.subr.mxu0 0.0
        %5553 = vmatpush1.msra.mxu0 0.0
        %5554 = vmatprep.subr.mxu0 0.0
        %5555 = vmatpush1.msra.mxu0 0.0
        %5556 = vmatprep.subr.mxu0 0.0
        %5557 = vmatpush1.msra.mxu0 0.0
        %5558 = vmatprep.subr.mxu0 0.0
        %5559 = vmatpush1.msra.mxu0 0.0
        %5560 = vmatprep.mubr.f32.mxu0 0.0
        %5561 = vmatmul.mubr.f32.gmra.mrb[0].mxu0 %v5494
        %v5562 = vpop.f32.mrb[0].mxu0
        %v5563 = vadd.f32 0.0, %v5562
        %v5564 = vpop.f32.mrb[0].mxu0
        %5565 = vdwg.mxu0
        %v5566 = vadd.f32 %v5327, %v5563
        %v5567 = vadd.f32 %v4440, %v5566
        %v5568 = vld [vmem:[%s20] sm:$0x1]
        %v5569 = vmul.f32 %v5567, %v5567
        %v5570 = vsel %vm883, %v5569, 0.0
        %5571 = vadd.xlane.f32.xlu0 %v5570
        %v5572 = vpop.xlane.xlu0 %5571
        %v5573 = vmul.f32 %v5572, %v887
        %v5574 = vadd.f32 %v5573, 1e-06
        %v5575 = vrsqrt.pop %v5574
        %v5576 = vmul.f32 %v5567, %v5575
        %v5578 = vlaneseq
        %v5579 = vshrl.u32 %v5578, 7
        %v5580 = vsub.s32 0, %v5579
        %v5581 = vrot.slane %v5568, %v5580
        %v5583 = vmul.f32 %v5576, %v5581
        %v5584 = vld [vmem:[%s21] sm:$0xff]
        %v5585 = vld [vmem:[%s21 + $0x8] sm:$0xff]
        %v5586 = vld [vmem:[%s21 + $0x10] sm:$0xff]
        %v5587 = vld [vmem:[%s21 + $0x18] sm:$0xff]
        %v5589 = vsel %vm883, %v5583, 0
        %5591 = vmatprep.subr.mxu0 0.0
        %5592 = vmatpush1.msra.mxu0 %v5584
        %5593 = vmatprep.subr.mxu0 0.0
        %5594 = vmatpush1.msra.mxu0 %v5585
        %5595 = vmatprep.subr.mxu0 0.0
        %5596 = vmatpush1.msra.mxu0 %v5586
        %5597 = vmatprep.subr.mxu0 0.0
        %5598 = vmatpush1.msra.mxu0 %v5587
        %5599 = vmatprep.subr.mxu0 0.0
        %5600 = vmatpush1.msra.mxu0 0.0
        %5601 = vmatprep.subr.mxu0 0.0
        %5602 = vmatpush1.msra.mxu0 0.0
        %5603 = vmatprep.subr.mxu0 0.0
        %5604 = vmatpush1.msra.mxu0 0.0
        %5605 = vmatprep.subr.mxu0 0.0
        %5606 = vmatpush1.msra.mxu0 0.0
        %5607 = vmatprep.subr.mxu0 0.0
        %5608 = vmatpush1.msra.mxu0 0.0
        %5609 = vmatprep.subr.mxu0 0.0
        %5610 = vmatpush1.msra.mxu0 0.0
        %5611 = vmatprep.subr.mxu0 0.0
        %5612 = vmatpush1.msra.mxu0 0.0
        %5613 = vmatprep.subr.mxu0 0.0
        %5614 = vmatpush1.msra.mxu0 0.0
        %5615 = vmatprep.subr.mxu0 0.0
        %5616 = vmatpush1.msra.mxu0 0.0
        %5617 = vmatprep.subr.mxu0 0.0
        %5618 = vmatpush1.msra.mxu0 0.0
        %5619 = vmatprep.subr.mxu0 0.0
        %5620 = vmatpush1.msra.mxu0 0.0
        %5621 = vmatprep.subr.mxu0 0.0
        %5622 = vmatpush1.msra.mxu0 0.0
        %5623 = vmatprep.subr.mxu0 0.0
        %5624 = vmatpush1.msra.mxu0 0.0
        %5625 = vmatprep.subr.mxu0 0.0
        %5626 = vmatpush1.msra.mxu0 0.0
        %5627 = vmatprep.subr.mxu0 0.0
        %5628 = vmatpush1.msra.mxu0 0.0
        %5629 = vmatprep.subr.mxu0 0.0
        %5630 = vmatpush1.msra.mxu0 0.0
        %5631 = vmatprep.subr.mxu0 0.0
        %5632 = vmatpush1.msra.mxu0 0.0
        %5633 = vmatprep.subr.mxu0 0.0
        %5634 = vmatpush1.msra.mxu0 0.0
        %5635 = vmatprep.subr.mxu0 0.0
        %5636 = vmatpush1.msra.mxu0 0.0
        %5637 = vmatprep.subr.mxu0 0.0
        %5638 = vmatpush1.msra.mxu0 0.0
        %5639 = vmatprep.subr.mxu0 0.0
        %5640 = vmatpush1.msra.mxu0 0.0
        %5641 = vmatprep.subr.mxu0 0.0
        %5642 = vmatpush1.msra.mxu0 0.0
        %5643 = vmatprep.subr.mxu0 0.0
        %5644 = vmatpush1.msra.mxu0 0.0
        %5645 = vmatprep.subr.mxu0 0.0
        %5646 = vmatpush1.msra.mxu0 0.0
        %5647 = vmatprep.subr.mxu0 0.0
        %5648 = vmatpush1.msra.mxu0 0.0
        %5649 = vmatprep.subr.mxu0 0.0
        %5650 = vmatpush1.msra.mxu0 0.0
        %5651 = vmatprep.subr.mxu0 0.0
        %5652 = vmatpush1.msra.mxu0 0.0
        %5653 = vmatprep.subr.mxu0 0.0
        %5654 = vmatpush1.msra.mxu0 0.0
        %5655 = vmatprep.mubr.f32.mxu0 0.0
        %5656 = vmatmul.mubr.f32.gmra.mrb[0].mxu0 %v5589
        %v5657 = vpop.f32.mrb[0].mxu0
        %v5658 = vadd.f32 0.0, %v5657
        %v5659 = vpop.f32.mrb[0].mxu0
        %5660 = vdwg.mxu0
        %v5661 = vmax.f32 %v5658, 0.0
        %v5662 = vld [vmem:[%s22] sm:$0xff]
        %v5663 = vld [vmem:[%s22 + $0x8] sm:$0xff]
        %v5664 = vld [vmem:[%s22 + $0x10] sm:$0xff]
        %v5665 = vld [vmem:[%s22 + $0x18] sm:$0xff]
        %v5666 = vld [vmem:[%s22 + $0x20] sm:$0xff]
        %v5667 = vld [vmem:[%s22 + $0x28] sm:$0xff]
        %v5668 = vld [vmem:[%s22 + $0x30] sm:$0xff]
        %v5669 = vld [vmem:[%s22 + $0x38] sm:$0xff]
        %v5671 = vsel %vm2054, %v5661, 0
        %5673 = vmatprep.subr.mxu0 0.0
        %5674 = vmatpush1.msra.mxu0 %v5662
        %5675 = vmatprep.subr.mxu0 0.0
        %5676 = vmatpush1.msra.mxu0 %v5663
        %5677 = vmatprep.subr.mxu0 0.0
        %5678 = vmatpush1.msra.mxu0 %v5664
        %5679 = vmatprep.subr.mxu0 0.0
        %5680 = vmatpush1.msra.mxu0 %v5665
        %5681 = vmatprep.subr.mxu0 0.0
        %5682 = vmatpush1.msra.mxu0 %v5666
        %5683 = vmatprep.subr.mxu0 0.0
        %5684 = vmatpush1.msra.mxu0 %v5667
        %5685 = vmatprep.subr.mxu0 0.0
        %5686 = vmatpush1.msra.mxu0 %v5668
        %5687 = vmatprep.subr.mxu0 0.0
        %5688 = vmatpush1.msra.mxu0 %v5669
        %5689 = vmatprep.subr.mxu0 0.0
        %5690 = vmatpush1.msra.mxu0 0.0
        %5691 = vmatprep.subr.mxu0 0.0
        %5692 = vmatpush1.msra.mxu0 0.0
        %5693 = vmatprep.subr.mxu0 0.0
        %5694 = vmatpush1.msra.mxu0 0.0
        %5695 = vmatprep.subr.mxu0 0.0
        %5696 = vmatpush1.msra.mxu0 0.0
        %5697 = vmatprep.subr.mxu0 0.0
        %5698 = vmatpush1.msra.mxu0 0.0
        %5699 = vmatprep.subr.mxu0 0.0
        %5700 = vmatpush1.msra.mxu0 0.0
        %5701 = vmatprep.subr.mxu0 0.0
        %5702 = vmatpush1.msra.mxu0 0.0
        %5703 = vmatprep.subr.mxu0 0.0
        %5704 = vmatpush1.msra.mxu0 0.0
        %5705 = vmatprep.subr.mxu0 0.0
        %5706 = vmatpush1.msra.mxu0 0.0
        %5707 = vmatprep.subr.mxu0 0.0
        %5708 = vmatpush1.msra.mxu0 0.0
        %5709 = vmatprep.subr.mxu0 0.0
        %5710 = vmatpush1.msra.mxu0 0.0
        %5711 = vmatprep.subr.mxu0 0.0
        %5712 = vmatpush1.msra.mxu0 0.0
        %5713 = vmatprep.subr.mxu0 0.0
        %5714 = vmatpush1.msra.mxu0 0.0
        %5715 = vmatprep.subr.mxu0 0.0
        %5716 = vmatpush1.msra.mxu0 0.0
        %5717 = vmatprep.subr.mxu0 0.0
        %5718 = vmatpush1.msra.mxu0 0.0
        %5719 = vmatprep.subr.mxu0 0.0
        %5720 = vmatpush1.msra.mxu0 0.0
        %5721 = vmatprep.subr.mxu0 0.0
        %5722 = vmatpush1.msra.mxu0 0.0
        %5723 = vmatprep.subr.mxu0 0.0
        %5724 = vmatpush1.msra.mxu0 0.0
        %5725 = vmatprep.subr.mxu0 0.0
        %5726 = vmatpush1.msra.mxu0 0.0
        %5727 = vmatprep.subr.mxu0 0.0
        %5728 = vmatpush1.msra.mxu0 0.0
        %5729 = vmatprep.subr.mxu0 0.0
        %5730 = vmatpush1.msra.mxu0 0.0
        %5731 = vmatprep.subr.mxu0 0.0
        %5732 = vmatpush1.msra.mxu0 0.0
        %5733 = vmatprep.subr.mxu0 0.0
        %5734 = vmatpush1.msra.mxu0 0.0
        %5735 = vmatprep.subr.mxu0 0.0
        %5736 = vmatpush1.msra.mxu0 0.0
        %5737 = vmatprep.mubr.f32.mxu0 0.0
        %5738 = vmatmul.mubr.f32.gmra.mrb[0].mxu0 %v5671
        %v5739 = vpop.f32.mrb[0].mxu0
        %v5740 = vadd.f32 0.0, %v5739
        %v5741 = vpop.f32.mrb[0].mxu0
        %5742 = vdwg.mxu0
        %v5743 = vadd.f32 %v5567, %v5740
        %s5744 = scalar_lea.vmem %s13, 1
        %v5745 = vld [vmem:[%s5744] sm:$0x1]
        %v5746 = vmul.f32 %v5743, %v5743
        %v5747 = vsel %vm883, %v5746, 0.0
        %5748 = vadd.xlane.f32.xlu0 %v5747
        %v5749 = vpop.xlane.xlu0 %5748
        %v5750 = vmul.f32 %v5749, %v887
        %v5751 = vadd.f32 %v5750, 1e-06
        %v5752 = vrsqrt.pop %v5751
        %v5753 = vmul.f32 %v5743, %v5752
        %v5755 = vlaneseq
        %v5756 = vshrl.u32 %v5755, 7
        %v5757 = vsub.s32 0, %v5756
        %v5758 = vrot.slane %v5745, %v5757
        %v5760 = vmul.f32 %v5753, %v5758
        %s5761 = scalar_lea.vmem %s14, 32
        %v5762 = vld [vmem:[%s5761] sm:$0xff]
        %v5763 = vld [vmem:[%s5761 + $0x8] sm:$0xff]
        %v5764 = vld [vmem:[%s5761 + $0x10] sm:$0xff]
        %v5765 = vld [vmem:[%s5761 + $0x18] sm:$0xff]
        %v5767 = vsel %vm883, %v5760, 0
        %5769 = vmatprep.subr.mxu0 0.0
        %5770 = vmatpush1.msra.mxu0 %v5762
        %5771 = vmatprep.subr.mxu0 0.0
        %5772 = vmatpush1.msra.mxu0 %v5763
        %5773 = vmatprep.subr.mxu0 0.0
        %5774 = vmatpush1.msra.mxu0 %v5764
        %5775 = vmatprep.subr.mxu0 0.0
        %5776 = vmatpush1.msra.mxu0 %v5765
        %5777 = vmatprep.subr.mxu0 0.0
        %5778 = vmatpush1.msra.mxu0 0.0
        %5779 = vmatprep.subr.mxu0 0.0
        %5780 = vmatpush1.msra.mxu0 0.0
        %5781 = vmatprep.subr.mxu0 0.0
        %5782 = vmatpush1.msra.mxu0 0.0
        %5783 = vmatprep.subr.mxu0 0.0
        %5784 = vmatpush1.msra.mxu0 0.0
        %5785 = vmatprep.subr.mxu0 0.0
        %5786 = vmatpush1.msra.mxu0 0.0
        %5787 = vmatprep.subr.mxu0 0.0
        %5788 = vmatpush1.msra.mxu0 0.0
        %5789 = vmatprep.subr.mxu0 0.0
        %5790 = vmatpush1.msra.mxu0 0.0
        %5791 = vmatprep.subr.mxu0 0.0
        %5792 = vmatpush1.msra.mxu0 0.0
        %5793 = vmatprep.subr.mxu0 0.0
        %5794 = vmatpush1.msra.mxu0 0.0
        %5795 = vmatprep.subr.mxu0 0.0
        %5796 = vmatpush1.msra.mxu0 0.0
        %5797 = vmatprep.subr.mxu0 0.0
        %5798 = vmatpush1.msra.mxu0 0.0
        %5799 = vmatprep.subr.mxu0 0.0
        %5800 = vmatpush1.msra.mxu0 0.0
        %5801 = vmatprep.subr.mxu0 0.0
        %5802 = vmatpush1.msra.mxu0 0.0
        %5803 = vmatprep.subr.mxu0 0.0
        %5804 = vmatpush1.msra.mxu0 0.0
        %5805 = vmatprep.subr.mxu0 0.0
        %5806 = vmatpush1.msra.mxu0 0.0
        %5807 = vmatprep.subr.mxu0 0.0
        %5808 = vmatpush1.msra.mxu0 0.0
        %5809 = vmatprep.subr.mxu0 0.0
        %5810 = vmatpush1.msra.mxu0 0.0
        %5811 = vmatprep.subr.mxu0 0.0
        %5812 = vmatpush1.msra.mxu0 0.0
        %5813 = vmatprep.subr.mxu0 0.0
        %5814 = vmatpush1.msra.mxu0 0.0
        %5815 = vmatprep.subr.mxu0 0.0
        %5816 = vmatpush1.msra.mxu0 0.0
        %5817 = vmatprep.subr.mxu0 0.0
        %5818 = vmatpush1.msra.mxu0 0.0
        %5819 = vmatprep.subr.mxu0 0.0
        %5820 = vmatpush1.msra.mxu0 0.0
        %5821 = vmatprep.subr.mxu0 0.0
        %5822 = vmatpush1.msra.mxu0 0.0
        %5823 = vmatprep.subr.mxu0 0.0
        %5824 = vmatpush1.msra.mxu0 0.0
        %5825 = vmatprep.subr.mxu0 0.0
        %5826 = vmatpush1.msra.mxu0 0.0
        %5827 = vmatprep.subr.mxu0 0.0
        %5828 = vmatpush1.msra.mxu0 0.0
        %5829 = vmatprep.subr.mxu0 0.0
        %5830 = vmatpush1.msra.mxu0 0.0
        %5831 = vmatprep.subr.mxu0 0.0
        %5832 = vmatpush1.msra.mxu0 0.0
        %5833 = vmatprep.mubr.f32.mxu0 0.0
        %5834 = vmatmul.mubr.f32.gmra.mrb[0].mxu0 %v5767
        %v5835 = vpop.f32.mrb[0].mxu0
        %v5836 = vadd.f32 0.0, %v5835
        %v5837 = vpop.f32.mrb[0].mxu0
        %5838 = vdwg.mxu0
        %s5839 = scalar_lea.vmem %s15, 32
        %v5840 = vld [vmem:[%s5839] sm:$0xff]
        %v5841 = vld [vmem:[%s5839 + $0x8] sm:$0xff]
        %v5842 = vld [vmem:[%s5839 + $0x10] sm:$0xff]
        %v5843 = vld [vmem:[%s5839 + $0x18] sm:$0xff]
        %5845 = vrot.lane.b32.xlu0 %v5836, 96
        %v5846 = vpop.permute.xlu0 %5845
        %v5847 = vsel %vm984, %v5836, 0
        %v5849 = vsel %vm984, %v5846, 0
        %5851 = vmatprep.subr.mxu0 0.0
        %5852 = vmatpush1.xpose.msra.mxu0 %v5849
        %5853 = vmatprep.subr.mxu0 0.0
        %5854 = vmatpush1.xpose.msra.mxu0 0.0
        %5855 = vmatprep.subr.mxu0 0.0
        %5856 = vmatpush1.xpose.msra.mxu0 0.0
        %5857 = vmatprep.subr.mxu0 0.0
        %5858 = vmatpush1.xpose.msra.mxu0 0.0
        %5859 = vmatprep.subr.mxu0 0.0
        %5860 = vmatpush1.xpose.msra.mxu0 0.0
        %5861 = vmatprep.subr.mxu0 0.0
        %5862 = vmatpush1.xpose.msra.mxu0 0.0
        %5863 = vmatprep.subr.mxu0 0.0
        %5864 = vmatpush1.xpose.msra.mxu0 0.0
        %5865 = vmatprep.subr.mxu0 0.0
        %5866 = vmatpush1.xpose.msra.mxu0 0.0
        %5867 = vmatprep.subr.mxu0 0.0
        %5868 = vmatpush1.xpose.msra.mxu0 0.0
        %5869 = vmatprep.subr.mxu0 0.0
        %5870 = vmatpush1.xpose.msra.mxu0 0.0
        %5871 = vmatprep.subr.mxu0 0.0
        %5872 = vmatpush1.xpose.msra.mxu0 0.0
        %5873 = vmatprep.subr.mxu0 0.0
        %5874 = vmatpush1.xpose.msra.mxu0 0.0
        %5875 = vmatprep.subr.mxu0 0.0
        %5876 = vmatpush1.xpose.msra.mxu0 0.0
        %5877 = vmatprep.subr.mxu0 0.0
        %5878 = vmatpush1.xpose.msra.mxu0 0.0
        %5879 = vmatprep.subr.mxu0 0.0
        %5880 = vmatpush1.xpose.msra.mxu0 0.0
        %5881 = vmatprep.subr.mxu0 0.0
        %5882 = vmatpush1.xpose.msra.mxu0 0.0
        %5883 = vmatprep.subr.mxu0 0.0
        %5884 = vmatpush1.xpose.msra.mxu0 0.0
        %5885 = vmatprep.subr.mxu0 0.0
        %5886 = vmatpush1.xpose.msra.mxu0 0.0
        %5887 = vmatprep.subr.mxu0 0.0
        %5888 = vmatpush1.xpose.msra.mxu0 0.0
        %5889 = vmatprep.subr.mxu0 0.0
        %5890 = vmatpush1.xpose.msra.mxu0 0.0
        %5891 = vmatprep.subr.mxu0 0.0
        %5892 = vmatpush1.xpose.msra.mxu0 0.0
        %5893 = vmatprep.subr.mxu0 0.0
        %5894 = vmatpush1.xpose.msra.mxu0 0.0
        %5895 = vmatprep.subr.mxu0 0.0
        %5896 = vmatpush1.xpose.msra.mxu0 0.0
        %5897 = vmatprep.subr.mxu0 0.0
        %5898 = vmatpush1.xpose.msra.mxu0 0.0
        %5899 = vmatprep.subr.mxu0 0.0
        %5900 = vmatpush1.xpose.msra.mxu0 0.0
        %5901 = vmatprep.subr.mxu0 0.0
        %5902 = vmatpush1.xpose.msra.mxu0 0.0
        %5903 = vmatprep.subr.mxu0 0.0
        %5904 = vmatpush1.xpose.msra.mxu0 0.0
        %5905 = vmatprep.subr.mxu0 0.0
        %5906 = vmatpush1.xpose.msra.mxu0 0.0
        %5907 = vmatprep.subr.mxu0 0.0
        %5908 = vmatpush1.xpose.msra.mxu0 0.0
        %5909 = vmatprep.subr.mxu0 0.0
        %5910 = vmatpush1.xpose.msra.mxu0 0.0
        %5911 = vmatprep.subr.mxu0 0.0
        %5912 = vmatpush1.xpose.msra.mxu0 0.0
        %5913 = vmatprep.subr.mxu0 0.0
        %5914 = vmatpush1.xpose.msra.mxu0 0.0
        %5915 = vmatprep.mubr.f32.mxu0 0.0
        %5916 = vmatmul.mubr.f32.gmra.mrb[0].mxu0 %v5847
        %v5917 = vpop.f32.mrb[0].mxu0
        %v5918 = vadd.f32 %v3480, %v5917
        %v5919 = vpop.f32.mrb[0].mxu0
        %5920 = vdwg.mxu0
        %v5921 = vsel %vm984, %v5918, -inf
        %5922 = vmax.xlane.f32.xlu0 %v5921
        %v5923 = vpop.xlane.xlu0 %5922
        %v5924 = vsub.f32 %v5918, %v5923
        %v5925 = vmul.f32 %v5924, 1.442695
        %v5926 = vpow.pop %v5925
        %v5927 = vsel %vm984, %v5926, 0.0
        %5928 = vadd.xlane.f32.xlu0 %v5927
        %v5929 = vpop.xlane.xlu0 %5928
        %v5930 = vrcp.pop %v5929
        %v5931 = vmul.f32 %v5926, %v5930
        %5932 = vrot.lane.b32.xlu0 %v5836, 64
        %v5933 = vpop.permute.xlu0 %5932
        %v5936 = vsel %vm984, %v5931, 0
        %5938 = vmatprep.subr.mxu0 0.0
        %5939 = vmatpush1.msra.mxu0 %v5933
        %5940 = vmatprep.subr.mxu0 0.0
        %5941 = vmatpush1.msra.mxu0 0.0
        %5942 = vmatprep.subr.mxu0 0.0
        %5943 = vmatpush1.msra.mxu0 0.0
        %5944 = vmatprep.subr.mxu0 0.0
        %5945 = vmatpush1.msra.mxu0 0.0
        %5946 = vmatprep.subr.mxu0 0.0
        %5947 = vmatpush1.msra.mxu0 0.0
        %5948 = vmatprep.subr.mxu0 0.0
        %5949 = vmatpush1.msra.mxu0 0.0
        %5950 = vmatprep.subr.mxu0 0.0
        %5951 = vmatpush1.msra.mxu0 0.0
        %5952 = vmatprep.subr.mxu0 0.0
        %5953 = vmatpush1.msra.mxu0 0.0
        %5954 = vmatprep.subr.mxu0 0.0
        %5955 = vmatpush1.msra.mxu0 0.0
        %5956 = vmatprep.subr.mxu0 0.0
        %5957 = vmatpush1.msra.mxu0 0.0
        %5958 = vmatprep.subr.mxu0 0.0
        %5959 = vmatpush1.msra.mxu0 0.0
        %5960 = vmatprep.subr.mxu0 0.0
        %5961 = vmatpush1.msra.mxu0 0.0
        %5962 = vmatprep.subr.mxu0 0.0
        %5963 = vmatpush1.msra.mxu0 0.0
        %5964 = vmatprep.subr.mxu0 0.0
        %5965 = vmatpush1.msra.mxu0 0.0
        %5966 = vmatprep.subr.mxu0 0.0
        %5967 = vmatpush1.msra.mxu0 0.0
        %5968 = vmatprep.subr.mxu0 0.0
        %5969 = vmatpush1.msra.mxu0 0.0
        %5970 = vmatprep.subr.mxu0 0.0
        %5971 = vmatpush1.msra.mxu0 0.0
        %5972 = vmatprep.subr.mxu0 0.0
        %5973 = vmatpush1.msra.mxu0 0.0
        %5974 = vmatprep.subr.mxu0 0.0
        %5975 = vmatpush1.msra.mxu0 0.0
        %5976 = vmatprep.subr.mxu0 0.0
        %5977 = vmatpush1.msra.mxu0 0.0
        %5978 = vmatprep.subr.mxu0 0.0
        %5979 = vmatpush1.msra.mxu0 0.0
        %5980 = vmatprep.subr.mxu0 0.0
        %5981 = vmatpush1.msra.mxu0 0.0
        %5982 = vmatprep.subr.mxu0 0.0
        %5983 = vmatpush1.msra.mxu0 0.0
        %5984 = vmatprep.subr.mxu0 0.0
        %5985 = vmatpush1.msra.mxu0 0.0
        %5986 = vmatprep.subr.mxu0 0.0
        %5987 = vmatpush1.msra.mxu0 0.0
        %5988 = vmatprep.subr.mxu0 0.0
        %5989 = vmatpush1.msra.mxu0 0.0
        %5990 = vmatprep.subr.mxu0 0.0
        %5991 = vmatpush1.msra.mxu0 0.0
        %5992 = vmatprep.subr.mxu0 0.0
        %5993 = vmatpush1.msra.mxu0 0.0
        %5994 = vmatprep.subr.mxu0 0.0
        %5995 = vmatpush1.msra.mxu0 0.0
        %5996 = vmatprep.subr.mxu0 0.0
        %5997 = vmatpush1.msra.mxu0 0.0
        %5998 = vmatprep.subr.mxu0 0.0
        %5999 = vmatpush1.msra.mxu0 0.0
        %6000 = vmatprep.subr.mxu0 0.0
        %6001 = vmatpush1.msra.mxu0 0.0
        %6002 = vmatprep.mubr.f32.mxu0 0.0
        %6003 = vmatmul.mubr.f32.gmra.mrb[0].mxu0 %v5936
        %v6004 = vpop.f32.mrb[0].mxu0
        %v6005 = vadd.f32 0.0, %v6004
        %v6006 = vpop.f32.mrb[0].mxu0
        %6007 = vdwg.mxu0
        %6008 = vrot.lane.b32.xlu0 %v5836, 120
        %v6009 = vpop.permute.xlu0 %6008
        %6010 = vrot.lane.b32.xlu0 %v5836, 88
        %v6011 = vpop.permute.xlu0 %6010
        %v6012 = vsel %vm984, %v6009, 0
        %v6014 = vsel %vm984, %v6011, 0
        %6016 = vmatprep.subr.mxu0 0.0
        %6017 = vmatpush1.xpose.msra.mxu0 %v6014
        %6018 = vmatprep.subr.mxu0 0.0
        %6019 = vmatpush1.xpose.msra.mxu0 0.0
        %6020 = vmatprep.subr.mxu0 0.0
        %6021 = vmatpush1.xpose.msra.mxu0 0.0
        %6022 = vmatprep.subr.mxu0 0.0
        %6023 = vmatpush1.xpose.msra.mxu0 0.0
        %6024 = vmatprep.subr.mxu0 0.0
        %6025 = vmatpush1.xpose.msra.mxu0 0.0
        %6026 = vmatprep.subr.mxu0 0.0
        %6027 = vmatpush1.xpose.msra.mxu0 0.0
        %6028 = vmatprep.subr.mxu0 0.0
        %6029 = vmatpush1.xpose.msra.mxu0 0.0
        %6030 = vmatprep.subr.mxu0 0.0
        %6031 = vmatpush1.xpose.msra.mxu0 0.0
        %6032 = vmatprep.subr.mxu0 0.0
        %6033 = vmatpush1.xpose.msra.mxu0 0.0
        %6034 = vmatprep.subr.mxu0 0.0
        %6035 = vmatpush1.xpose.msra.mxu0 0.0
        %6036 = vmatprep.subr.mxu0 0.0
        %6037 = vmatpush1.xpose.msra.mxu0 0.0
        %6038 = vmatprep.subr.mxu0 0.0
        %6039 = vmatpush1.xpose.msra.mxu0 0.0
        %6040 = vmatprep.subr.mxu0 0.0
        %6041 = vmatpush1.xpose.msra.mxu0 0.0
        %6042 = vmatprep.subr.mxu0 0.0
        %6043 = vmatpush1.xpose.msra.mxu0 0.0
        %6044 = vmatprep.subr.mxu0 0.0
        %6045 = vmatpush1.xpose.msra.mxu0 0.0
        %6046 = vmatprep.subr.mxu0 0.0
        %6047 = vmatpush1.xpose.msra.mxu0 0.0
        %6048 = vmatprep.subr.mxu0 0.0
        %6049 = vmatpush1.xpose.msra.mxu0 0.0
        %6050 = vmatprep.subr.mxu0 0.0
        %6051 = vmatpush1.xpose.msra.mxu0 0.0
        %6052 = vmatprep.subr.mxu0 0.0
        %6053 = vmatpush1.xpose.msra.mxu0 0.0
        %6054 = vmatprep.subr.mxu0 0.0
        %6055 = vmatpush1.xpose.msra.mxu0 0.0
        %6056 = vmatprep.subr.mxu0 0.0
        %6057 = vmatpush1.xpose.msra.mxu0 0.0
        %6058 = vmatprep.subr.mxu0 0.0
        %6059 = vmatpush1.xpose.msra.mxu0 0.0
        %6060 = vmatprep.subr.mxu0 0.0
        %6061 = vmatpush1.xpose.msra.mxu0 0.0
        %6062 = vmatprep.subr.mxu0 0.0
        %6063 = vmatpush1.xpose.msra.mxu0 0.0
        %6064 = vmatprep.subr.mxu0 0.0
        %6065 = vmatpush1.xpose.msra.mxu0 0.0
        %6066 = vmatprep.subr.mxu0 0.0
        %6067 = vmatpush1.xpose.msra.mxu0 0.0
        %6068 = vmatprep.subr.mxu0 0.0
        %6069 = vmatpush1.xpose.msra.mxu0 0.0
        %6070 = vmatprep.subr.mxu0 0.0
        %6071 = vmatpush1.xpose.msra.mxu0 0.0
        %6072 = vmatprep.subr.mxu0 0.0
        %6073 = vmatpush1.xpose.msra.mxu0 0.0
        %6074 = vmatprep.subr.mxu0 0.0
        %6075 = vmatpush1.xpose.msra.mxu0 0.0
        %6076 = vmatprep.subr.mxu0 0.0
        %6077 = vmatpush1.xpose.msra.mxu0 0.0
        %6078 = vmatprep.subr.mxu0 0.0
        %6079 = vmatpush1.xpose.msra.mxu0 0.0
        %6080 = vmatprep.mubr.f32.mxu0 0.0
        %6081 = vmatmul.mubr.f32.gmra.mrb[0].mxu0 %v6012
        %v6082 = vpop.f32.mrb[0].mxu0
        %v6083 = vadd.f32 %v3646, %v6082
        %v6084 = vpop.f32.mrb[0].mxu0
        %6085 = vdwg.mxu0
        %v6086 = vsel %vm984, %v6083, -inf
        %6087 = vmax.xlane.f32.xlu0 %v6086
        %v6088 = vpop.xlane.xlu0 %6087
        %v6089 = vsub.f32 %v6083, %v6088
        %v6090 = vmul.f32 %v6089, 1.442695
        %v6091 = vpow.pop %v6090
        %v6092 = vsel %vm984, %v6091, 0.0
        %6093 = vadd.xlane.f32.xlu0 %v6092
        %v6094 = vpop.xlane.xlu0 %6093
        %v6095 = vrcp.pop %v6094
        %v6096 = vmul.f32 %v6091, %v6095
        %6097 = vrot.lane.b32.xlu0 %v5836, 56
        %v6098 = vpop.permute.xlu0 %6097
        %v6101 = vsel %vm984, %v6096, 0
        %6103 = vmatprep.subr.mxu0 0.0
        %6104 = vmatpush1.msra.mxu0 %v6098
        %6105 = vmatprep.subr.mxu0 0.0
        %6106 = vmatpush1.msra.mxu0 0.0
        %6107 = vmatprep.subr.mxu0 0.0
        %6108 = vmatpush1.msra.mxu0 0.0
        %6109 = vmatprep.subr.mxu0 0.0
        %6110 = vmatpush1.msra.mxu0 0.0
        %6111 = vmatprep.subr.mxu0 0.0
        %6112 = vmatpush1.msra.mxu0 0.0
        %6113 = vmatprep.subr.mxu0 0.0
        %6114 = vmatpush1.msra.mxu0 0.0
        %6115 = vmatprep.subr.mxu0 0.0
        %6116 = vmatpush1.msra.mxu0 0.0
        %6117 = vmatprep.subr.mxu0 0.0
        %6118 = vmatpush1.msra.mxu0 0.0
        %6119 = vmatprep.subr.mxu0 0.0
        %6120 = vmatpush1.msra.mxu0 0.0
        %6121 = vmatprep.subr.mxu0 0.0
        %6122 = vmatpush1.msra.mxu0 0.0
        %6123 = vmatprep.subr.mxu0 0.0
        %6124 = vmatpush1.msra.mxu0 0.0
        %6125 = vmatprep.subr.mxu0 0.0
        %6126 = vmatpush1.msra.mxu0 0.0
        %6127 = vmatprep.subr.mxu0 0.0
        %6128 = vmatpush1.msra.mxu0 0.0
        %6129 = vmatprep.subr.mxu0 0.0
        %6130 = vmatpush1.msra.mxu0 0.0
        %6131 = vmatprep.subr.mxu0 0.0
        %6132 = vmatpush1.msra.mxu0 0.0
        %6133 = vmatprep.subr.mxu0 0.0
        %6134 = vmatpush1.msra.mxu0 0.0
        %6135 = vmatprep.subr.mxu0 0.0
        %6136 = vmatpush1.msra.mxu0 0.0
        %6137 = vmatprep.subr.mxu0 0.0
        %6138 = vmatpush1.msra.mxu0 0.0
        %6139 = vmatprep.subr.mxu0 0.0
        %6140 = vmatpush1.msra.mxu0 0.0
        %6141 = vmatprep.subr.mxu0 0.0
        %6142 = vmatpush1.msra.mxu0 0.0
        %6143 = vmatprep.subr.mxu0 0.0
        %6144 = vmatpush1.msra.mxu0 0.0
        %6145 = vmatprep.subr.mxu0 0.0
        %6146 = vmatpush1.msra.mxu0 0.0
        %6147 = vmatprep.subr.mxu0 0.0
        %6148 = vmatpush1.msra.mxu0 0.0
        %6149 = vmatprep.subr.mxu0 0.0
        %6150 = vmatpush1.msra.mxu0 0.0
        %6151 = vmatprep.subr.mxu0 0.0
        %6152 = vmatpush1.msra.mxu0 0.0
        %6153 = vmatprep.subr.mxu0 0.0
        %6154 = vmatpush1.msra.mxu0 0.0
        %6155 = vmatprep.subr.mxu0 0.0
        %6156 = vmatpush1.msra.mxu0 0.0
        %6157 = vmatprep.subr.mxu0 0.0
        %6158 = vmatpush1.msra.mxu0 0.0
        %6159 = vmatprep.subr.mxu0 0.0
        %6160 = vmatpush1.msra.mxu0 0.0
        %6161 = vmatprep.subr.mxu0 0.0
        %6162 = vmatpush1.msra.mxu0 0.0
        %6163 = vmatprep.subr.mxu0 0.0
        %6164 = vmatpush1.msra.mxu0 0.0
        %6165 = vmatprep.subr.mxu0 0.0
        %6166 = vmatpush1.msra.mxu0 0.0
        %6167 = vmatprep.mubr.f32.mxu0 0.0
        %6168 = vmatmul.mubr.f32.gmra.mrb[0].mxu0 %v6101
        %v6169 = vpop.f32.mrb[0].mxu0
        %v6170 = vadd.f32 0.0, %v6169
        %v6171 = vpop.f32.mrb[0].mxu0
        %6172 = vdwg.mxu0
        %v6174 = vsel %vm984, %v6170, 0
        %6176 = vmatprep.subr.mxu0 0.0
        %6177 = vmatpush1.msra.mxu0 %v5841
        %6178 = vmatprep.subr.mxu0 0.0
        %6179 = vmatpush1.msra.mxu0 0.0
        %6180 = vmatprep.subr.mxu0 0.0
        %6181 = vmatpush1.msra.mxu0 0.0
        %6182 = vmatprep.subr.mxu0 0.0
        %6183 = vmatpush1.msra.mxu0 0.0
        %6184 = vmatprep.subr.mxu0 0.0
        %6185 = vmatpush1.msra.mxu0 0.0
        %6186 = vmatprep.subr.mxu0 0.0
        %6187 = vmatpush1.msra.mxu0 0.0
        %6188 = vmatprep.subr.mxu0 0.0
        %6189 = vmatpush1.msra.mxu0 0.0
        %6190 = vmatprep.subr.mxu0 0.0
        %6191 = vmatpush1.msra.mxu0 0.0
        %6192 = vmatprep.subr.mxu0 0.0
        %6193 = vmatpush1.msra.mxu0 0.0
        %6194 = vmatprep.subr.mxu0 0.0
        %6195 = vmatpush1.msra.mxu0 0.0
        %6196 = vmatprep.subr.mxu0 0.0
        %6197 = vmatpush1.msra.mxu0 0.0
        %6198 = vmatprep.subr.mxu0 0.0
        %6199 = vmatpush1.msra.mxu0 0.0
        %6200 = vmatprep.subr.mxu0 0.0
        %6201 = vmatpush1.msra.mxu0 0.0
        %6202 = vmatprep.subr.mxu0 0.0
        %6203 = vmatpush1.msra.mxu0 0.0
        %6204 = vmatprep.subr.mxu0 0.0
        %6205 = vmatpush1.msra.mxu0 0.0
        %6206 = vmatprep.subr.mxu0 0.0
        %6207 = vmatpush1.msra.mxu0 0.0
        %6208 = vmatprep.subr.mxu0 0.0
        %6209 = vmatpush1.msra.mxu0 0.0
        %6210 = vmatprep.subr.mxu0 0.0
        %6211 = vmatpush1.msra.mxu0 0.0
        %6212 = vmatprep.subr.mxu0 0.0
        %6213 = vmatpush1.msra.mxu0 0.0
        %6214 = vmatprep.subr.mxu0 0.0
        %6215 = vmatpush1.msra.mxu0 0.0
        %6216 = vmatprep.subr.mxu0 0.0
        %6217 = vmatpush1.msra.mxu0 0.0
        %6218 = vmatprep.subr.mxu0 0.0
        %6219 = vmatpush1.msra.mxu0 0.0
        %6220 = vmatprep.subr.mxu0 0.0
        %6221 = vmatpush1.msra.mxu0 0.0
        %6222 = vmatprep.subr.mxu0 0.0
        %6223 = vmatpush1.msra.mxu0 0.0
        %6224 = vmatprep.subr.mxu0 0.0
        %6225 = vmatpush1.msra.mxu0 0.0
        %6226 = vmatprep.subr.mxu0 0.0
        %6227 = vmatpush1.msra.mxu0 0.0
        %6228 = vmatprep.subr.mxu0 0.0
        %6229 = vmatpush1.msra.mxu0 0.0
        %6230 = vmatprep.subr.mxu0 0.0
        %6231 = vmatpush1.msra.mxu0 0.0
        %6232 = vmatprep.subr.mxu0 0.0
        %6233 = vmatpush1.msra.mxu0 0.0
        %6234 = vmatprep.subr.mxu0 0.0
        %6235 = vmatpush1.msra.mxu0 0.0
        %6236 = vmatprep.subr.mxu0 0.0
        %6237 = vmatpush1.msra.mxu0 0.0
        %6238 = vmatprep.subr.mxu0 0.0
        %6239 = vmatpush1.msra.mxu0 0.0
        %6240 = vmatprep.mubr.f32.mxu0 0.0
        %6241 = vmatmul.mubr.f32.gmra.mrb[0].mxu0 %v6174
        %v6242 = vpop.f32.mrb[0].mxu0
        %v6243 = vadd.f32 0.0, %v6242
        %v6244 = vpop.f32.mrb[0].mxu0
        %6245 = vdwg.mxu0
        %v6247 = vsel %vm984, %v6005, 0
        %6249 = vmatprep.subr.mxu0 0.0
        %6250 = vmatpush1.msra.mxu0 %v5840
        %6251 = vmatprep.subr.mxu0 0.0
        %6252 = vmatpush1.msra.mxu0 0.0
        %6253 = vmatprep.subr.mxu0 0.0
        %6254 = vmatpush1.msra.mxu0 0.0
        %6255 = vmatprep.subr.mxu0 0.0
        %6256 = vmatpush1.msra.mxu0 0.0
        %6257 = vmatprep.subr.mxu0 0.0
        %6258 = vmatpush1.msra.mxu0 0.0
        %6259 = vmatprep.subr.mxu0 0.0
        %6260 = vmatpush1.msra.mxu0 0.0
        %6261 = vmatprep.subr.mxu0 0.0
        %6262 = vmatpush1.msra.mxu0 0.0
        %6263 = vmatprep.subr.mxu0 0.0
        %6264 = vmatpush1.msra.mxu0 0.0
        %6265 = vmatprep.subr.mxu0 0.0
        %6266 = vmatpush1.msra.mxu0 0.0
        %6267 = vmatprep.subr.mxu0 0.0
        %6268 = vmatpush1.msra.mxu0 0.0
        %6269 = vmatprep.subr.mxu0 0.0
        %6270 = vmatpush1.msra.mxu0 0.0
        %6271 = vmatprep.subr.mxu0 0.0
        %6272 = vmatpush1.msra.mxu0 0.0
        %6273 = vmatprep.subr.mxu0 0.0
        %6274 = vmatpush1.msra.mxu0 0.0
        %6275 = vmatprep.subr.mxu0 0.0
        %6276 = vmatpush1.msra.mxu0 0.0
        %6277 = vmatprep.subr.mxu0 0.0
        %6278 = vmatpush1.msra.mxu0 0.0
        %6279 = vmatprep.subr.mxu0 0.0
        %6280 = vmatpush1.msra.mxu0 0.0
        %6281 = vmatprep.subr.mxu0 0.0
        %6282 = vmatpush1.msra.mxu0 0.0
        %6283 = vmatprep.subr.mxu0 0.0
        %6284 = vmatpush1.msra.mxu0 0.0
        %6285 = vmatprep.subr.mxu0 0.0
        %6286 = vmatpush1.msra.mxu0 0.0
        %6287 = vmatprep.subr.mxu0 0.0
        %6288 = vmatpush1.msra.mxu0 0.0
        %6289 = vmatprep.subr.mxu0 0.0
        %6290 = vmatpush1.msra.mxu0 0.0
        %6291 = vmatprep.subr.mxu0 0.0
        %6292 = vmatpush1.msra.mxu0 0.0
        %6293 = vmatprep.subr.mxu0 0.0
        %6294 = vmatpush1.msra.mxu0 0.0
        %6295 = vmatprep.subr.mxu0 0.0
        %6296 = vmatpush1.msra.mxu0 0.0
        %6297 = vmatprep.subr.mxu0 0.0
        %6298 = vmatpush1.msra.mxu0 0.0
        %6299 = vmatprep.subr.mxu0 0.0
        %6300 = vmatpush1.msra.mxu0 0.0
        %6301 = vmatprep.subr.mxu0 0.0
        %6302 = vmatpush1.msra.mxu0 0.0
        %6303 = vmatprep.subr.mxu0 0.0
        %6304 = vmatpush1.msra.mxu0 0.0
        %6305 = vmatprep.subr.mxu0 0.0
        %6306 = vmatpush1.msra.mxu0 0.0
        %6307 = vmatprep.subr.mxu0 0.0
        %6308 = vmatpush1.msra.mxu0 0.0
        %6309 = vmatprep.subr.mxu0 0.0
        %6310 = vmatpush1.msra.mxu0 0.0
        %6311 = vmatprep.subr.mxu0 0.0
        %6312 = vmatpush1.msra.mxu0 0.0
        %6313 = vmatprep.mubr.f32.mxu0 0.0
        %6314 = vmatmul.mubr.f32.gmra.mrb[0].mxu0 %v6247
        %v6315 = vpop.f32.mrb[0].mxu0
        %v6316 = vadd.f32 %v6243, %v6315
        %v6317 = vpop.f32.mrb[0].mxu0
        %6318 = vdwg.mxu0
        %6319 = vrot.lane.b32.xlu0 %v5836, 112
        %v6320 = vpop.permute.xlu0 %6319
        %6321 = vrot.lane.b32.xlu0 %v5836, 80
        %v6322 = vpop.permute.xlu0 %6321
        %v6323 = vsel %vm984, %v6320, 0
        %v6325 = vsel %vm984, %v6322, 0
        %6327 = vmatprep.subr.mxu0 0.0
        %6328 = vmatpush1.xpose.msra.mxu0 %v6325
        %6329 = vmatprep.subr.mxu0 0.0
        %6330 = vmatpush1.xpose.msra.mxu0 0.0
        %6331 = vmatprep.subr.mxu0 0.0
        %6332 = vmatpush1.xpose.msra.mxu0 0.0
        %6333 = vmatprep.subr.mxu0 0.0
        %6334 = vmatpush1.xpose.msra.mxu0 0.0
        %6335 = vmatprep.subr.mxu0 0.0
        %6336 = vmatpush1.xpose.msra.mxu0 0.0
        %6337 = vmatprep.subr.mxu0 0.0
        %6338 = vmatpush1.xpose.msra.mxu0 0.0
        %6339 = vmatprep.subr.mxu0 0.0
        %6340 = vmatpush1.xpose.msra.mxu0 0.0
        %6341 = vmatprep.subr.mxu0 0.0
        %6342 = vmatpush1.xpose.msra.mxu0 0.0
        %6343 = vmatprep.subr.mxu0 0.0
        %6344 = vmatpush1.xpose.msra.mxu0 0.0
        %6345 = vmatprep.subr.mxu0 0.0
        %6346 = vmatpush1.xpose.msra.mxu0 0.0
        %6347 = vmatprep.subr.mxu0 0.0
        %6348 = vmatpush1.xpose.msra.mxu0 0.0
        %6349 = vmatprep.subr.mxu0 0.0
        %6350 = vmatpush1.xpose.msra.mxu0 0.0
        %6351 = vmatprep.subr.mxu0 0.0
        %6352 = vmatpush1.xpose.msra.mxu0 0.0
        %6353 = vmatprep.subr.mxu0 0.0
        %6354 = vmatpush1.xpose.msra.mxu0 0.0
        %6355 = vmatprep.subr.mxu0 0.0
        %6356 = vmatpush1.xpose.msra.mxu0 0.0
        %6357 = vmatprep.subr.mxu0 0.0
        %6358 = vmatpush1.xpose.msra.mxu0 0.0
        %6359 = vmatprep.subr.mxu0 0.0
        %6360 = vmatpush1.xpose.msra.mxu0 0.0
        %6361 = vmatprep.subr.mxu0 0.0
        %6362 = vmatpush1.xpose.msra.mxu0 0.0
        %6363 = vmatprep.subr.mxu0 0.0
        %6364 = vmatpush1.xpose.msra.mxu0 0.0
        %6365 = vmatprep.subr.mxu0 0.0
        %6366 = vmatpush1.xpose.msra.mxu0 0.0
        %6367 = vmatprep.subr.mxu0 0.0
        %6368 = vmatpush1.xpose.msra.mxu0 0.0
        %6369 = vmatprep.subr.mxu0 0.0
        %6370 = vmatpush1.xpose.msra.mxu0 0.0
        %6371 = vmatprep.subr.mxu0 0.0
        %6372 = vmatpush1.xpose.msra.mxu0 0.0
        %6373 = vmatprep.subr.mxu0 0.0
        %6374 = vmatpush1.xpose.msra.mxu0 0.0
        %6375 = vmatprep.subr.mxu0 0.0
        %6376 = vmatpush1.xpose.msra.mxu0 0.0
        %6377 = vmatprep.subr.mxu0 0.0
        %6378 = vmatpush1.xpose.msra.mxu0 0.0
        %6379 = vmatprep.subr.mxu0 0.0
        %6380 = vmatpush1.xpose.msra.mxu0 0.0
        %6381 = vmatprep.subr.mxu0 0.0
        %6382 = vmatpush1.xpose.msra.mxu0 0.0
        %6383 = vmatprep.subr.mxu0 0.0
        %6384 = vmatpush1.xpose.msra.mxu0 0.0
        %6385 = vmatprep.subr.mxu0 0.0
        %6386 = vmatpush1.xpose.msra.mxu0 0.0
        %6387 = vmatprep.subr.mxu0 0.0
        %6388 = vmatpush1.xpose.msra.mxu0 0.0
        %6389 = vmatprep.subr.mxu0 0.0
        %6390 = vmatpush1.xpose.msra.mxu0 0.0
        %6391 = vmatprep.mubr.f32.mxu0 0.0
        %6392 = vmatmul.mubr.f32.gmra.mrb[0].mxu0 %v6323
        %v6393 = vpop.f32.mrb[0].mxu0
        %v6394 = vadd.f32 %v3959, %v6393
        %v6395 = vpop.f32.mrb[0].mxu0
        %6396 = vdwg.mxu0
        %v6397 = vsel %vm984, %v6394, -inf
        %6398 = vmax.xlane.f32.xlu0 %v6397
        %v6399 = vpop.xlane.xlu0 %6398
        %v6400 = vsub.f32 %v6394, %v6399
        %v6401 = vmul.f32 %v6400, 1.442695
        %v6402 = vpow.pop %v6401
        %v6403 = vsel %vm984, %v6402, 0.0
        %6404 = vadd.xlane.f32.xlu0 %v6403
        %v6405 = vpop.xlane.xlu0 %6404
        %v6406 = vrcp.pop %v6405
        %v6407 = vmul.f32 %v6402, %v6406
        %6408 = vrot.lane.b32.xlu0 %v5836, 48
        %v6409 = vpop.permute.xlu0 %6408
        %v6412 = vsel %vm984, %v6407, 0
        %6414 = vmatprep.subr.mxu0 0.0
        %6415 = vmatpush1.msra.mxu0 %v6409
        %6416 = vmatprep.subr.mxu0 0.0
        %6417 = vmatpush1.msra.mxu0 0.0
        %6418 = vmatprep.subr.mxu0 0.0
        %6419 = vmatpush1.msra.mxu0 0.0
        %6420 = vmatprep.subr.mxu0 0.0
        %6421 = vmatpush1.msra.mxu0 0.0
        %6422 = vmatprep.subr.mxu0 0.0
        %6423 = vmatpush1.msra.mxu0 0.0
        %6424 = vmatprep.subr.mxu0 0.0
        %6425 = vmatpush1.msra.mxu0 0.0
        %6426 = vmatprep.subr.mxu0 0.0
        %6427 = vmatpush1.msra.mxu0 0.0
        %6428 = vmatprep.subr.mxu0 0.0
        %6429 = vmatpush1.msra.mxu0 0.0
        %6430 = vmatprep.subr.mxu0 0.0
        %6431 = vmatpush1.msra.mxu0 0.0
        %6432 = vmatprep.subr.mxu0 0.0
        %6433 = vmatpush1.msra.mxu0 0.0
        %6434 = vmatprep.subr.mxu0 0.0
        %6435 = vmatpush1.msra.mxu0 0.0
        %6436 = vmatprep.subr.mxu0 0.0
        %6437 = vmatpush1.msra.mxu0 0.0
        %6438 = vmatprep.subr.mxu0 0.0
        %6439 = vmatpush1.msra.mxu0 0.0
        %6440 = vmatprep.subr.mxu0 0.0
        %6441 = vmatpush1.msra.mxu0 0.0
        %6442 = vmatprep.subr.mxu0 0.0
        %6443 = vmatpush1.msra.mxu0 0.0
        %6444 = vmatprep.subr.mxu0 0.0
        %6445 = vmatpush1.msra.mxu0 0.0
        %6446 = vmatprep.subr.mxu0 0.0
        %6447 = vmatpush1.msra.mxu0 0.0
        %6448 = vmatprep.subr.mxu0 0.0
        %6449 = vmatpush1.msra.mxu0 0.0
        %6450 = vmatprep.subr.mxu0 0.0
        %6451 = vmatpush1.msra.mxu0 0.0
        %6452 = vmatprep.subr.mxu0 0.0
        %6453 = vmatpush1.msra.mxu0 0.0
        %6454 = vmatprep.subr.mxu0 0.0
        %6455 = vmatpush1.msra.mxu0 0.0
        %6456 = vmatprep.subr.mxu0 0.0
        %6457 = vmatpush1.msra.mxu0 0.0
        %6458 = vmatprep.subr.mxu0 0.0
        %6459 = vmatpush1.msra.mxu0 0.0
        %6460 = vmatprep.subr.mxu0 0.0
        %6461 = vmatpush1.msra.mxu0 0.0
        %6462 = vmatprep.subr.mxu0 0.0
        %6463 = vmatpush1.msra.mxu0 0.0
        %6464 = vmatprep.subr.mxu0 0.0
        %6465 = vmatpush1.msra.mxu0 0.0
        %6466 = vmatprep.subr.mxu0 0.0
        %6467 = vmatpush1.msra.mxu0 0.0
        %6468 = vmatprep.subr.mxu0 0.0
        %6469 = vmatpush1.msra.mxu0 0.0
        %6470 = vmatprep.subr.mxu0 0.0
        %6471 = vmatpush1.msra.mxu0 0.0
        %6472 = vmatprep.subr.mxu0 0.0
        %6473 = vmatpush1.msra.mxu0 0.0
        %6474 = vmatprep.subr.mxu0 0.0
        %6475 = vmatpush1.msra.mxu0 0.0
        %6476 = vmatprep.subr.mxu0 0.0
        %6477 = vmatpush1.msra.mxu0 0.0
        %6478 = vmatprep.mubr.f32.mxu0 0.0
        %6479 = vmatmul.mubr.f32.gmra.mrb[0].mxu0 %v6412
        %v6480 = vpop.f32.mrb[0].mxu0
        %v6481 = vadd.f32 0.0, %v6480
        %v6482 = vpop.f32.mrb[0].mxu0
        %6483 = vdwg.mxu0
        %v6485 = vsel %vm984, %v6481, 0
        %6487 = vmatprep.subr.mxu0 0.0
        %6488 = vmatpush1.msra.mxu0 %v5842
        %6489 = vmatprep.subr.mxu0 0.0
        %6490 = vmatpush1.msra.mxu0 0.0
        %6491 = vmatprep.subr.mxu0 0.0
        %6492 = vmatpush1.msra.mxu0 0.0
        %6493 = vmatprep.subr.mxu0 0.0
        %6494 = vmatpush1.msra.mxu0 0.0
        %6495 = vmatprep.subr.mxu0 0.0
        %6496 = vmatpush1.msra.mxu0 0.0
        %6497 = vmatprep.subr.mxu0 0.0
        %6498 = vmatpush1.msra.mxu0 0.0
        %6499 = vmatprep.subr.mxu0 0.0
        %6500 = vmatpush1.msra.mxu0 0.0
        %6501 = vmatprep.subr.mxu0 0.0
        %6502 = vmatpush1.msra.mxu0 0.0
        %6503 = vmatprep.subr.mxu0 0.0
        %6504 = vmatpush1.msra.mxu0 0.0
        %6505 = vmatprep.subr.mxu0 0.0
        %6506 = vmatpush1.msra.mxu0 0.0
        %6507 = vmatprep.subr.mxu0 0.0
        %6508 = vmatpush1.msra.mxu0 0.0
        %6509 = vmatprep.subr.mxu0 0.0
        %6510 = vmatpush1.msra.mxu0 0.0
        %6511 = vmatprep.subr.mxu0 0.0
        %6512 = vmatpush1.msra.mxu0 0.0
        %6513 = vmatprep.subr.mxu0 0.0
        %6514 = vmatpush1.msra.mxu0 0.0
        %6515 = vmatprep.subr.mxu0 0.0
        %6516 = vmatpush1.msra.mxu0 0.0
        %6517 = vmatprep.subr.mxu0 0.0
        %6518 = vmatpush1.msra.mxu0 0.0
        %6519 = vmatprep.subr.mxu0 0.0
        %6520 = vmatpush1.msra.mxu0 0.0
        %6521 = vmatprep.subr.mxu0 0.0
        %6522 = vmatpush1.msra.mxu0 0.0
        %6523 = vmatprep.subr.mxu0 0.0
        %6524 = vmatpush1.msra.mxu0 0.0
        %6525 = vmatprep.subr.mxu0 0.0
        %6526 = vmatpush1.msra.mxu0 0.0
        %6527 = vmatprep.subr.mxu0 0.0
        %6528 = vmatpush1.msra.mxu0 0.0
        %6529 = vmatprep.subr.mxu0 0.0
        %6530 = vmatpush1.msra.mxu0 0.0
        %6531 = vmatprep.subr.mxu0 0.0
        %6532 = vmatpush1.msra.mxu0 0.0
        %6533 = vmatprep.subr.mxu0 0.0
        %6534 = vmatpush1.msra.mxu0 0.0
        %6535 = vmatprep.subr.mxu0 0.0
        %6536 = vmatpush1.msra.mxu0 0.0
        %6537 = vmatprep.subr.mxu0 0.0
        %6538 = vmatpush1.msra.mxu0 0.0
        %6539 = vmatprep.subr.mxu0 0.0
        %6540 = vmatpush1.msra.mxu0 0.0
        %6541 = vmatprep.subr.mxu0 0.0
        %6542 = vmatpush1.msra.mxu0 0.0
        %6543 = vmatprep.subr.mxu0 0.0
        %6544 = vmatpush1.msra.mxu0 0.0
        %6545 = vmatprep.subr.mxu0 0.0
        %6546 = vmatpush1.msra.mxu0 0.0
        %6547 = vmatprep.subr.mxu0 0.0
        %6548 = vmatpush1.msra.mxu0 0.0
        %6549 = vmatprep.subr.mxu0 0.0
        %6550 = vmatpush1.msra.mxu0 0.0
        %6551 = vmatprep.mubr.f32.mxu0 0.0
        %6552 = vmatmul.mubr.f32.gmra.mrb[0].mxu0 %v6485
        %v6553 = vpop.f32.mrb[0].mxu0
        %v6554 = vadd.f32 0.0, %v6553
        %v6555 = vpop.f32.mrb[0].mxu0
        %6556 = vdwg.mxu0
        %v6557 = vadd.f32 %v6316, %v6554
        %6558 = vrot.lane.b32.xlu0 %v5836, 104
        %v6559 = vpop.permute.xlu0 %6558
        %6560 = vrot.lane.b32.xlu0 %v5836, 72
        %v6561 = vpop.permute.xlu0 %6560
        %v6562 = vsel %vm984, %v6559, 0
        %v6564 = vsel %vm984, %v6561, 0
        %6566 = vmatprep.subr.mxu0 0.0
        %6567 = vmatpush1.xpose.msra.mxu0 %v6564
        %6568 = vmatprep.subr.mxu0 0.0
        %6569 = vmatpush1.xpose.msra.mxu0 0.0
        %6570 = vmatprep.subr.mxu0 0.0
        %6571 = vmatpush1.xpose.msra.mxu0 0.0
        %6572 = vmatprep.subr.mxu0 0.0
        %6573 = vmatpush1.xpose.msra.mxu0 0.0
        %6574 = vmatprep.subr.mxu0 0.0
        %6575 = vmatpush1.xpose.msra.mxu0 0.0
        %6576 = vmatprep.subr.mxu0 0.0
        %6577 = vmatpush1.xpose.msra.mxu0 0.0
        %6578 = vmatprep.subr.mxu0 0.0
        %6579 = vmatpush1.xpose.msra.mxu0 0.0
        %6580 = vmatprep.subr.mxu0 0.0
        %6581 = vmatpush1.xpose.msra.mxu0 0.0
        %6582 = vmatprep.subr.mxu0 0.0
        %6583 = vmatpush1.xpose.msra.mxu0 0.0
        %6584 = vmatprep.subr.mxu0 0.0
        %6585 = vmatpush1.xpose.msra.mxu0 0.0
        %6586 = vmatprep.subr.mxu0 0.0
        %6587 = vmatpush1.xpose.msra.mxu0 0.0
        %6588 = vmatprep.subr.mxu0 0.0
        %6589 = vmatpush1.xpose.msra.mxu0 0.0
        %6590 = vmatprep.subr.mxu0 0.0
        %6591 = vmatpush1.xpose.msra.mxu0 0.0
        %6592 = vmatprep.subr.mxu0 0.0
        %6593 = vmatpush1.xpose.msra.mxu0 0.0
        %6594 = vmatprep.subr.mxu0 0.0
        %6595 = vmatpush1.xpose.msra.mxu0 0.0
        %6596 = vmatprep.subr.mxu0 0.0
        %6597 = vmatpush1.xpose.msra.mxu0 0.0
        %6598 = vmatprep.subr.mxu0 0.0
        %6599 = vmatpush1.xpose.msra.mxu0 0.0
        %6600 = vmatprep.subr.mxu0 0.0
        %6601 = vmatpush1.xpose.msra.mxu0 0.0
        %6602 = vmatprep.subr.mxu0 0.0
        %6603 = vmatpush1.xpose.msra.mxu0 0.0
        %6604 = vmatprep.subr.mxu0 0.0
        %6605 = vmatpush1.xpose.msra.mxu0 0.0
        %6606 = vmatprep.subr.mxu0 0.0
        %6607 = vmatpush1.xpose.msra.mxu0 0.0
        %6608 = vmatprep.subr.mxu0 0.0
        %6609 = vmatpush1.xpose.msra.mxu0 0.0
        %6610 = vmatprep.subr.mxu0 0.0
        %6611 = vmatpush1.xpose.msra.mxu0 0.0
        %6612 = vmatprep.subr.mxu0 0.0
        %6613 = vmatpush1.xpose.msra.mxu0 0.0
        %6614 = vmatprep.subr.mxu0 0.0
        %6615 = vmatpush1.xpose.msra.mxu0 0.0
        %6616 = vmatprep.subr.mxu0 0.0
        %6617 = vmatpush1.xpose.msra.mxu0 0.0
        %6618 = vmatprep.subr.mxu0 0.0
        %6619 = vmatpush1.xpose.msra.mxu0 0.0
        %6620 = vmatprep.subr.mxu0 0.0
        %6621 = vmatpush1.xpose.msra.mxu0 0.0
        %6622 = vmatprep.subr.mxu0 0.0
        %6623 = vmatpush1.xpose.msra.mxu0 0.0
        %6624 = vmatprep.subr.mxu0 0.0
        %6625 = vmatpush1.xpose.msra.mxu0 0.0
        %6626 = vmatprep.subr.mxu0 0.0
        %6627 = vmatpush1.xpose.msra.mxu0 0.0
        %6628 = vmatprep.subr.mxu0 0.0
        %6629 = vmatpush1.xpose.msra.mxu0 0.0
        %6630 = vmatprep.mubr.f32.mxu0 0.0
        %6631 = vmatmul.mubr.f32.gmra.mrb[0].mxu0 %v6562
        %v6632 = vpop.f32.mrb[0].mxu0
        %v6633 = vadd.f32 %v4200, %v6632
        %v6634 = vpop.f32.mrb[0].mxu0
        %6635 = vdwg.mxu0
        %v6636 = vsel %vm984, %v6633, -inf
        %6637 = vmax.xlane.f32.xlu0 %v6636
        %v6638 = vpop.xlane.xlu0 %6637
        %v6639 = vsub.f32 %v6633, %v6638
        %v6640 = vmul.f32 %v6639, 1.442695
        %v6641 = vpow.pop %v6640
        %v6642 = vsel %vm984, %v6641, 0.0
        %6643 = vadd.xlane.f32.xlu0 %v6642
        %v6644 = vpop.xlane.xlu0 %6643
        %v6645 = vrcp.pop %v6644
        %v6646 = vmul.f32 %v6641, %v6645
        %6647 = vrot.lane.b32.xlu0 %v5836, 40
        %v6648 = vpop.permute.xlu0 %6647
        %v6651 = vsel %vm984, %v6646, 0
        %6653 = vmatprep.subr.mxu0 0.0
        %6654 = vmatpush1.msra.mxu0 %v6648
        %6655 = vmatprep.subr.mxu0 0.0
        %6656 = vmatpush1.msra.mxu0 0.0
        %6657 = vmatprep.subr.mxu0 0.0
        %6658 = vmatpush1.msra.mxu0 0.0
        %6659 = vmatprep.subr.mxu0 0.0
        %6660 = vmatpush1.msra.mxu0 0.0
        %6661 = vmatprep.subr.mxu0 0.0
        %6662 = vmatpush1.msra.mxu0 0.0
        %6663 = vmatprep.subr.mxu0 0.0
        %6664 = vmatpush1.msra.mxu0 0.0
        %6665 = vmatprep.subr.mxu0 0.0
        %6666 = vmatpush1.msra.mxu0 0.0
        %6667 = vmatprep.subr.mxu0 0.0
        %6668 = vmatpush1.msra.mxu0 0.0
        %6669 = vmatprep.subr.mxu0 0.0
        %6670 = vmatpush1.msra.mxu0 0.0
        %6671 = vmatprep.subr.mxu0 0.0
        %6672 = vmatpush1.msra.mxu0 0.0
        %6673 = vmatprep.subr.mxu0 0.0
        %6674 = vmatpush1.msra.mxu0 0.0
        %6675 = vmatprep.subr.mxu0 0.0
        %6676 = vmatpush1.msra.mxu0 0.0
        %6677 = vmatprep.subr.mxu0 0.0
        %6678 = vmatpush1.msra.mxu0 0.0
        %6679 = vmatprep.subr.mxu0 0.0
        %6680 = vmatpush1.msra.mxu0 0.0
        %6681 = vmatprep.subr.mxu0 0.0
        %6682 = vmatpush1.msra.mxu0 0.0
        %6683 = vmatprep.subr.mxu0 0.0
        %6684 = vmatpush1.msra.mxu0 0.0
        %6685 = vmatprep.subr.mxu0 0.0
        %6686 = vmatpush1.msra.mxu0 0.0
        %6687 = vmatprep.subr.mxu0 0.0
        %6688 = vmatpush1.msra.mxu0 0.0
        %6689 = vmatprep.subr.mxu0 0.0
        %6690 = vmatpush1.msra.mxu0 0.0
        %6691 = vmatprep.subr.mxu0 0.0
        %6692 = vmatpush1.msra.mxu0 0.0
        %6693 = vmatprep.subr.mxu0 0.0
        %6694 = vmatpush1.msra.mxu0 0.0
        %6695 = vmatprep.subr.mxu0 0.0
        %6696 = vmatpush1.msra.mxu0 0.0
        %6697 = vmatprep.subr.mxu0 0.0
        %6698 = vmatpush1.msra.mxu0 0.0
        %6699 = vmatprep.subr.mxu0 0.0
        %6700 = vmatpush1.msra.mxu0 0.0
        %6701 = vmatprep.subr.mxu0 0.0
        %6702 = vmatpush1.msra.mxu0 0.0
        %6703 = vmatprep.subr.mxu0 0.0
        %6704 = vmatpush1.msra.mxu0 0.0
        %6705 = vmatprep.subr.mxu0 0.0
        %6706 = vmatpush1.msra.mxu0 0.0
        %6707 = vmatprep.subr.mxu0 0.0
        %6708 = vmatpush1.msra.mxu0 0.0
        %6709 = vmatprep.subr.mxu0 0.0
        %6710 = vmatpush1.msra.mxu0 0.0
        %6711 = vmatprep.subr.mxu0 0.0
        %6712 = vmatpush1.msra.mxu0 0.0
        %6713 = vmatprep.subr.mxu0 0.0
        %6714 = vmatpush1.msra.mxu0 0.0
        %6715 = vmatprep.subr.mxu0 0.0
        %6716 = vmatpush1.msra.mxu0 0.0
        %6717 = vmatprep.mubr.f32.mxu0 0.0
        %6718 = vmatmul.mubr.f32.gmra.mrb[0].mxu0 %v6651
        %v6719 = vpop.f32.mrb[0].mxu0
        %v6720 = vadd.f32 0.0, %v6719
        %v6721 = vpop.f32.mrb[0].mxu0
        %6722 = vdwg.mxu0
        %v6724 = vsel %vm984, %v6720, 0
        %6726 = vmatprep.subr.mxu0 0.0
        %6727 = vmatpush1.msra.mxu0 %v5843
        %6728 = vmatprep.subr.mxu0 0.0
        %6729 = vmatpush1.msra.mxu0 0.0
        %6730 = vmatprep.subr.mxu0 0.0
        %6731 = vmatpush1.msra.mxu0 0.0
        %6732 = vmatprep.subr.mxu0 0.0
        %6733 = vmatpush1.msra.mxu0 0.0
        %6734 = vmatprep.subr.mxu0 0.0
        %6735 = vmatpush1.msra.mxu0 0.0
        %6736 = vmatprep.subr.mxu0 0.0
        %6737 = vmatpush1.msra.mxu0 0.0
        %6738 = vmatprep.subr.mxu0 0.0
        %6739 = vmatpush1.msra.mxu0 0.0
        %6740 = vmatprep.subr.mxu0 0.0
        %6741 = vmatpush1.msra.mxu0 0.0
        %6742 = vmatprep.subr.mxu0 0.0
        %6743 = vmatpush1.msra.mxu0 0.0
        %6744 = vmatprep.subr.mxu0 0.0
        %6745 = vmatpush1.msra.mxu0 0.0
        %6746 = vmatprep.subr.mxu0 0.0
        %6747 = vmatpush1.msra.mxu0 0.0
        %6748 = vmatprep.subr.mxu0 0.0
        %6749 = vmatpush1.msra.mxu0 0.0
        %6750 = vmatprep.subr.mxu0 0.0
        %6751 = vmatpush1.msra.mxu0 0.0
        %6752 = vmatprep.subr.mxu0 0.0
        %6753 = vmatpush1.msra.mxu0 0.0
        %6754 = vmatprep.subr.mxu0 0.0
        %6755 = vmatpush1.msra.mxu0 0.0
        %6756 = vmatprep.subr.mxu0 0.0
        %6757 = vmatpush1.msra.mxu0 0.0
        %6758 = vmatprep.subr.mxu0 0.0
        %6759 = vmatpush1.msra.mxu0 0.0
        %6760 = vmatprep.subr.mxu0 0.0
        %6761 = vmatpush1.msra.mxu0 0.0
        %6762 = vmatprep.subr.mxu0 0.0
        %6763 = vmatpush1.msra.mxu0 0.0
        %6764 = vmatprep.subr.mxu0 0.0
        %6765 = vmatpush1.msra.mxu0 0.0
        %6766 = vmatprep.subr.mxu0 0.0
        %6767 = vmatpush1.msra.mxu0 0.0
        %6768 = vmatprep.subr.mxu0 0.0
        %6769 = vmatpush1.msra.mxu0 0.0
        %6770 = vmatprep.subr.mxu0 0.0
        %6771 = vmatpush1.msra.mxu0 0.0
        %6772 = vmatprep.subr.mxu0 0.0
        %6773 = vmatpush1.msra.mxu0 0.0
        %6774 = vmatprep.subr.mxu0 0.0
        %6775 = vmatpush1.msra.mxu0 0.0
        %6776 = vmatprep.subr.mxu0 0.0
        %6777 = vmatpush1.msra.mxu0 0.0
        %6778 = vmatprep.subr.mxu0 0.0
        %6779 = vmatpush1.msra.mxu0 0.0
        %6780 = vmatprep.subr.mxu0 0.0
        %6781 = vmatpush1.msra.mxu0 0.0
        %6782 = vmatprep.subr.mxu0 0.0
        %6783 = vmatpush1.msra.mxu0 0.0
        %6784 = vmatprep.subr.mxu0 0.0
        %6785 = vmatpush1.msra.mxu0 0.0
        %6786 = vmatprep.subr.mxu0 0.0
        %6787 = vmatpush1.msra.mxu0 0.0
        %6788 = vmatprep.subr.mxu0 0.0
        %6789 = vmatpush1.msra.mxu0 0.0
        %6790 = vmatprep.mubr.f32.mxu0 0.0
        %6791 = vmatmul.mubr.f32.gmra.mrb[0].mxu0 %v6724
        %v6792 = vpop.f32.mrb[0].mxu0
        %v6793 = vadd.f32 0.0, %v6792
        %v6794 = vpop.f32.mrb[0].mxu0
        %6795 = vdwg.mxu0
        %v6796 = vadd.f32 %v6557, %v6793
        %v6797 = vadd.f32 %v5743, %v6796
        %s6798 = scalar_lea.vmem %s16, 1
        %v6799 = vld [vmem:[%s6798] sm:$0x1]
        %v6800 = vmul.f32 %v6797, %v6797
        %v6801 = vsel %vm883, %v6800, 0.0
        %6802 = vadd.xlane.f32.xlu0 %v6801
        %v6803 = vpop.xlane.xlu0 %6802
        %v6804 = vmul.f32 %v6803, %v887
        %v6805 = vadd.f32 %v6804, 1e-06
        %v6806 = vrsqrt.pop %v6805
        %v6807 = vmul.f32 %v6797, %v6806
        %v6809 = vlaneseq
        %v6810 = vshrl.u32 %v6809, 7
        %v6811 = vsub.s32 0, %v6810
        %v6812 = vrot.slane %v6799, %v6811
        %v6814 = vmul.f32 %v6807, %v6812
        %s6815 = scalar_lea.vmem %s17, 32
        %v6816 = vld [vmem:[%s6815] sm:$0xff]
        %v6817 = vld [vmem:[%s6815 + $0x8] sm:$0xff]
        %v6818 = vld [vmem:[%s6815 + $0x10] sm:$0xff]
        %v6819 = vld [vmem:[%s6815 + $0x18] sm:$0xff]
        %v6821 = vsel %vm883, %v6814, 0
        %6823 = vmatprep.subr.mxu0 0.0
        %6824 = vmatpush1.msra.mxu0 %v6816
        %6825 = vmatprep.subr.mxu0 0.0
        %6826 = vmatpush1.msra.mxu0 %v6817
        %6827 = vmatprep.subr.mxu0 0.0
        %6828 = vmatpush1.msra.mxu0 %v6818
        %6829 = vmatprep.subr.mxu0 0.0
        %6830 = vmatpush1.msra.mxu0 %v6819
        %6831 = vmatprep.subr.mxu0 0.0
        %6832 = vmatpush1.msra.mxu0 0.0
        %6833 = vmatprep.subr.mxu0 0.0
        %6834 = vmatpush1.msra.mxu0 0.0
        %6835 = vmatprep.subr.mxu0 0.0
        %6836 = vmatpush1.msra.mxu0 0.0
        %6837 = vmatprep.subr.mxu0 0.0
        %6838 = vmatpush1.msra.mxu0 0.0
        %6839 = vmatprep.subr.mxu0 0.0
        %6840 = vmatpush1.msra.mxu0 0.0
        %6841 = vmatprep.subr.mxu0 0.0
        %6842 = vmatpush1.msra.mxu0 0.0
        %6843 = vmatprep.subr.mxu0 0.0
        %6844 = vmatpush1.msra.mxu0 0.0
        %6845 = vmatprep.subr.mxu0 0.0
        %6846 = vmatpush1.msra.mxu0 0.0
        %6847 = vmatprep.subr.mxu0 0.0
        %6848 = vmatpush1.msra.mxu0 0.0
        %6849 = vmatprep.subr.mxu0 0.0
        %6850 = vmatpush1.msra.mxu0 0.0
        %6851 = vmatprep.subr.mxu0 0.0
        %6852 = vmatpush1.msra.mxu0 0.0
        %6853 = vmatprep.subr.mxu0 0.0
        %6854 = vmatpush1.msra.mxu0 0.0
        %6855 = vmatprep.subr.mxu0 0.0
        %6856 = vmatpush1.msra.mxu0 0.0
        %6857 = vmatprep.subr.mxu0 0.0
        %6858 = vmatpush1.msra.mxu0 0.0
        %6859 = vmatprep.subr.mxu0 0.0
        %6860 = vmatpush1.msra.mxu0 0.0
        %6861 = vmatprep.subr.mxu0 0.0
        %6862 = vmatpush1.msra.mxu0 0.0
        %6863 = vmatprep.subr.mxu0 0.0
        %6864 = vmatpush1.msra.mxu0 0.0
        %6865 = vmatprep.subr.mxu0 0.0
        %6866 = vmatpush1.msra.mxu0 0.0
        %6867 = vmatprep.subr.mxu0 0.0
        %6868 = vmatpush1.msra.mxu0 0.0
        %6869 = vmatprep.subr.mxu0 0.0
        %6870 = vmatpush1.msra.mxu0 0.0
        %6871 = vmatprep.subr.mxu0 0.0
        %6872 = vmatpush1.msra.mxu0 0.0
        %6873 = vmatprep.subr.mxu0 0.0
        %6874 = vmatpush1.msra.mxu0 0.0
        %6875 = vmatprep.subr.mxu0 0.0
        %6876 = vmatpush1.msra.mxu0 0.0
        %6877 = vmatprep.subr.mxu0 0.0
        %6878 = vmatpush1.msra.mxu0 0.0
        %6879 = vmatprep.subr.mxu0 0.0
        %6880 = vmatpush1.msra.mxu0 0.0
        %6881 = vmatprep.subr.mxu0 0.0
        %6882 = vmatpush1.msra.mxu0 0.0
        %6883 = vmatprep.subr.mxu0 0.0
        %6884 = vmatpush1.msra.mxu0 0.0
        %6885 = vmatprep.subr.mxu0 0.0
        %6886 = vmatpush1.msra.mxu0 0.0
        %6887 = vmatprep.mubr.f32.mxu0 0.0
        %6888 = vmatmul.mubr.f32.gmra.mrb[0].mxu0 %v6821
        %v6889 = vpop.f32.mrb[0].mxu0
        %v6890 = vadd.f32 0.0, %v6889
        %v6891 = vpop.f32.mrb[0].mxu0
        %6892 = vdwg.mxu0
        %s6893 = scalar_lea.vmem %s18, 32
        %v6894 = vld [vmem:[%s6893] sm:$0xff]
        %v6895 = vld [vmem:[%s6893 + $0x8] sm:$0xff]
        %v6896 = vld [vmem:[%s6893 + $0x10] sm:$0xff]
        %v6897 = vld [vmem:[%s6893 + $0x18] sm:$0xff]
        %6898 = vmatprep.subr.mxu0 0.0
        %6899 = vmatpush1.msra.mxu0 %v6894
        %6900 = vmatprep.subr.mxu0 0.0
        %6901 = vmatpush1.msra.mxu0 %v6895
        %6902 = vmatprep.subr.mxu0 0.0
        %6903 = vmatpush1.msra.mxu0 %v6896
        %6904 = vmatprep.subr.mxu0 0.0
        %6905 = vmatpush1.msra.mxu0 %v6897
        %6906 = vmatprep.subr.mxu0 0.0
        %6907 = vmatpush1.msra.mxu0 0.0
        %6908 = vmatprep.subr.mxu0 0.0
        %6909 = vmatpush1.msra.mxu0 0.0
        %6910 = vmatprep.subr.mxu0 0.0
        %6911 = vmatpush1.msra.mxu0 0.0
        %6912 = vmatprep.subr.mxu0 0.0
        %6913 = vmatpush1.msra.mxu0 0.0
        %6914 = vmatprep.subr.mxu0 0.0
        %6915 = vmatpush1.msra.mxu0 0.0
        %6916 = vmatprep.subr.mxu0 0.0
        %6917 = vmatpush1.msra.mxu0 0.0
        %6918 = vmatprep.subr.mxu0 0.0
        %6919 = vmatpush1.msra.mxu0 0.0
        %6920 = vmatprep.subr.mxu0 0.0
        %6921 = vmatpush1.msra.mxu0 0.0
        %6922 = vmatprep.subr.mxu0 0.0
        %6923 = vmatpush1.msra.mxu0 0.0
        %6924 = vmatprep.subr.mxu0 0.0
        %6925 = vmatpush1.msra.mxu0 0.0
        %6926 = vmatprep.subr.mxu0 0.0
        %6927 = vmatpush1.msra.mxu0 0.0
        %6928 = vmatprep.subr.mxu0 0.0
        %6929 = vmatpush1.msra.mxu0 0.0
        %6930 = vmatprep.subr.mxu0 0.0
        %6931 = vmatpush1.msra.mxu0 0.0
        %6932 = vmatprep.subr.mxu0 0.0
        %6933 = vmatpush1.msra.mxu0 0.0
        %6934 = vmatprep.subr.mxu0 0.0
        %6935 = vmatpush1.msra.mxu0 0.0
        %6936 = vmatprep.subr.mxu0 0.0
        %6937 = vmatpush1.msra.mxu0 0.0
        %6938 = vmatprep.subr.mxu0 0.0
        %6939 = vmatpush1.msra.mxu0 0.0
        %6940 = vmatprep.subr.mxu0 0.0
        %6941 = vmatpush1.msra.mxu0 0.0
        %6942 = vmatprep.subr.mxu0 0.0
        %6943 = vmatpush1.msra.mxu0 0.0
        %6944 = vmatprep.subr.mxu0 0.0
        %6945 = vmatpush1.msra.mxu0 0.0
        %6946 = vmatprep.subr.mxu0 0.0
        %6947 = vmatpush1.msra.mxu0 0.0
        %6948 = vmatprep.subr.mxu0 0.0
        %6949 = vmatpush1.msra.mxu0 0.0
        %6950 = vmatprep.subr.mxu0 0.0
        %6951 = vmatpush1.msra.mxu0 0.0
        %6952 = vmatprep.subr.mxu0 0.0
        %6953 = vmatpush1.msra.mxu0 0.0
        %6954 = vmatprep.subr.mxu0 0.0
        %6955 = vmatpush1.msra.mxu0 0.0
        %6956 = vmatprep.subr.mxu0 0.0
        %6957 = vmatpush1.msra.mxu0 0.0
        %6958 = vmatprep.subr.mxu0 0.0
        %6959 = vmatpush1.msra.mxu0 0.0
        %6960 = vmatprep.subr.mxu0 0.0
        %6961 = vmatpush1.msra.mxu0 0.0
        %6962 = vmatprep.mubr.f32.mxu0 0.0
        %6963 = vmatmul.mubr.f32.gmra.mrb[0].mxu0 %v4539
        %v6964 = vpop.f32.mrb[0].mxu0
        %v6965 = vadd.f32 0.0, %v6964
        %v6966 = vpop.f32.mrb[0].mxu0
        %6967 = vdwg.mxu0
        %s6968 = scalar_lea.vmem %s19, 32
        %v6969 = vld [vmem:[%s6968] sm:$0xff]
        %v6970 = vld [vmem:[%s6968 + $0x8] sm:$0xff]
        %v6971 = vld [vmem:[%s6968 + $0x10] sm:$0xff]
        %v6972 = vld [vmem:[%s6968 + $0x18] sm:$0xff]
        %v6974 = vsel %vm984, %v6890, 0
        %v6977 = vsel %vm984, %v6965, 0
        %6979 = vmatprep.subr.mxu0 0.0
        %6980 = vmatpush1.xpose.msra.mxu0 %v6977
        %6981 = vmatprep.subr.mxu0 0.0
        %6982 = vmatpush1.xpose.msra.mxu0 0.0
        %6983 = vmatprep.subr.mxu0 0.0
        %6984 = vmatpush1.xpose.msra.mxu0 0.0
        %6985 = vmatprep.subr.mxu0 0.0
        %6986 = vmatpush1.xpose.msra.mxu0 0.0
        %6987 = vmatprep.subr.mxu0 0.0
        %6988 = vmatpush1.xpose.msra.mxu0 0.0
        %6989 = vmatprep.subr.mxu0 0.0
        %6990 = vmatpush1.xpose.msra.mxu0 0.0
        %6991 = vmatprep.subr.mxu0 0.0
        %6992 = vmatpush1.xpose.msra.mxu0 0.0
        %6993 = vmatprep.subr.mxu0 0.0
        %6994 = vmatpush1.xpose.msra.mxu0 0.0
        %6995 = vmatprep.subr.mxu0 0.0
        %6996 = vmatpush1.xpose.msra.mxu0 0.0
        %6997 = vmatprep.subr.mxu0 0.0
        %6998 = vmatpush1.xpose.msra.mxu0 0.0
        %6999 = vmatprep.subr.mxu0 0.0
        %7000 = vmatpush1.xpose.msra.mxu0 0.0
        %7001 = vmatprep.subr.mxu0 0.0
        %7002 = vmatpush1.xpose.msra.mxu0 0.0
        %7003 = vmatprep.subr.mxu0 0.0
        %7004 = vmatpush1.xpose.msra.mxu0 0.0
        %7005 = vmatprep.subr.mxu0 0.0
        %7006 = vmatpush1.xpose.msra.mxu0 0.0
        %7007 = vmatprep.subr.mxu0 0.0
        %7008 = vmatpush1.xpose.msra.mxu0 0.0
        %7009 = vmatprep.subr.mxu0 0.0
        %7010 = vmatpush1.xpose.msra.mxu0 0.0
        %7011 = vmatprep.subr.mxu0 0.0
        %7012 = vmatpush1.xpose.msra.mxu0 0.0
        %7013 = vmatprep.subr.mxu0 0.0
        %7014 = vmatpush1.xpose.msra.mxu0 0.0
        %7015 = vmatprep.subr.mxu0 0.0
        %7016 = vmatpush1.xpose.msra.mxu0 0.0
        %7017 = vmatprep.subr.mxu0 0.0
        %7018 = vmatpush1.xpose.msra.mxu0 0.0
        %7019 = vmatprep.subr.mxu0 0.0
        %7020 = vmatpush1.xpose.msra.mxu0 0.0
        %7021 = vmatprep.subr.mxu0 0.0
        %7022 = vmatpush1.xpose.msra.mxu0 0.0
        %7023 = vmatprep.subr.mxu0 0.0
        %7024 = vmatpush1.xpose.msra.mxu0 0.0
        %7025 = vmatprep.subr.mxu0 0.0
        %7026 = vmatpush1.xpose.msra.mxu0 0.0
        %7027 = vmatprep.subr.mxu0 0.0
        %7028 = vmatpush1.xpose.msra.mxu0 0.0
        %7029 = vmatprep.subr.mxu0 0.0
        %7030 = vmatpush1.xpose.msra.mxu0 0.0
        %7031 = vmatprep.subr.mxu0 0.0
        %7032 = vmatpush1.xpose.msra.mxu0 0.0
        %7033 = vmatprep.subr.mxu0 0.0
        %7034 = vmatpush1.xpose.msra.mxu0 0.0
        %7035 = vmatprep.subr.mxu0 0.0
        %7036 = vmatpush1.xpose.msra.mxu0 0.0
        %7037 = vmatprep.subr.mxu0 0.0
        %7038 = vmatpush1.xpose.msra.mxu0 0.0
        %7039 = vmatprep.subr.mxu0 0.0
        %7040 = vmatpush1.xpose.msra.mxu0 0.0
        %7041 = vmatprep.subr.mxu0 0.0
        %7042 = vmatpush1.xpose.msra.mxu0 0.0
        %7043 = vmatprep.mubr.f32.mxu0 0.0
        %7044 = vmatmul.mubr.f32.gmra.mrb[0].mxu0 %v6974
        %v7045 = vpop.f32.mrb[0].mxu0
        %v7046 = vadd.f32 %v1063, %v7045
        %v7047 = vpop.f32.mrb[0].mxu0
        %7048 = vdwg.mxu0
        %v7049 = vsel %vm984, %v7046, -inf
        %7050 = vmax.xlane.f32.xlu0 %v7049
        %v7051 = vpop.xlane.xlu0 %7050
        %v7052 = vsub.f32 %v7046, %v7051
        %v7053 = vmul.f32 %v7052, 1.442695
        %v7054 = vpow.pop %v7053
        %v7055 = vsel %vm984, %v7054, 0.0
        %7056 = vadd.xlane.f32.xlu0 %v7055
        %v7057 = vpop.xlane.xlu0 %7056
        %v7058 = vrcp.pop %v7057
        %v7059 = vmul.f32 %v7054, %v7058
        %7060 = vrot.lane.b32.xlu0 %v6965, 96
        %v7061 = vpop.permute.xlu0 %7060
        %v7064 = vsel %vm984, %v7059, 0
        %7066 = vmatprep.subr.mxu0 0.0
        %7067 = vmatpush1.msra.mxu0 %v7061
        %7068 = vmatprep.subr.mxu0 0.0
        %7069 = vmatpush1.msra.mxu0 0.0
        %7070 = vmatprep.subr.mxu0 0.0
        %7071 = vmatpush1.msra.mxu0 0.0
        %7072 = vmatprep.subr.mxu0 0.0
        %7073 = vmatpush1.msra.mxu0 0.0
        %7074 = vmatprep.subr.mxu0 0.0
        %7075 = vmatpush1.msra.mxu0 0.0
        %7076 = vmatprep.subr.mxu0 0.0
        %7077 = vmatpush1.msra.mxu0 0.0
        %7078 = vmatprep.subr.mxu0 0.0
        %7079 = vmatpush1.msra.mxu0 0.0
        %7080 = vmatprep.subr.mxu0 0.0
        %7081 = vmatpush1.msra.mxu0 0.0
        %7082 = vmatprep.subr.mxu0 0.0
        %7083 = vmatpush1.msra.mxu0 0.0
        %7084 = vmatprep.subr.mxu0 0.0
        %7085 = vmatpush1.msra.mxu0 0.0
        %7086 = vmatprep.subr.mxu0 0.0
        %7087 = vmatpush1.msra.mxu0 0.0
        %7088 = vmatprep.subr.mxu0 0.0
        %7089 = vmatpush1.msra.mxu0 0.0
        %7090 = vmatprep.subr.mxu0 0.0
        %7091 = vmatpush1.msra.mxu0 0.0
        %7092 = vmatprep.subr.mxu0 0.0
        %7093 = vmatpush1.msra.mxu0 0.0
        %7094 = vmatprep.subr.mxu0 0.0
        %7095 = vmatpush1.msra.mxu0 0.0
        %7096 = vmatprep.subr.mxu0 0.0
        %7097 = vmatpush1.msra.mxu0 0.0
        %7098 = vmatprep.subr.mxu0 0.0
        %7099 = vmatpush1.msra.mxu0 0.0
        %7100 = vmatprep.subr.mxu0 0.0
        %7101 = vmatpush1.msra.mxu0 0.0
        %7102 = vmatprep.subr.mxu0 0.0
        %7103 = vmatpush1.msra.mxu0 0.0
        %7104 = vmatprep.subr.mxu0 0.0
        %7105 = vmatpush1.msra.mxu0 0.0
        %7106 = vmatprep.subr.mxu0 0.0
        %7107 = vmatpush1.msra.mxu0 0.0
        %7108 = vmatprep.subr.mxu0 0.0
        %7109 = vmatpush1.msra.mxu0 0.0
        %7110 = vmatprep.subr.mxu0 0.0
        %7111 = vmatpush1.msra.mxu0 0.0
        %7112 = vmatprep.subr.mxu0 0.0
        %7113 = vmatpush1.msra.mxu0 0.0
        %7114 = vmatprep.subr.mxu0 0.0
        %7115 = vmatpush1.msra.mxu0 0.0
        %7116 = vmatprep.subr.mxu0 0.0
        %7117 = vmatpush1.msra.mxu0 0.0
        %7118 = vmatprep.subr.mxu0 0.0
        %7119 = vmatpush1.msra.mxu0 0.0
        %7120 = vmatprep.subr.mxu0 0.0
        %7121 = vmatpush1.msra.mxu0 0.0
        %7122 = vmatprep.subr.mxu0 0.0
        %7123 = vmatpush1.msra.mxu0 0.0
        %7124 = vmatprep.subr.mxu0 0.0
        %7125 = vmatpush1.msra.mxu0 0.0
        %7126 = vmatprep.subr.mxu0 0.0
        %7127 = vmatpush1.msra.mxu0 0.0
        %7128 = vmatprep.subr.mxu0 0.0
        %7129 = vmatpush1.msra.mxu0 0.0
        %7130 = vmatprep.mubr.f32.mxu0 0.0
        %7131 = vmatmul.mubr.f32.gmra.mrb[0].mxu0 %v7064
        %v7132 = vpop.f32.mrb[0].mxu0
        %v7133 = vadd.f32 0.0, %v7132
        %v7134 = vpop.f32.mrb[0].mxu0
        %7135 = vdwg.mxu0
        %7136 = vrot.lane.b32.xlu0 %v6890, 120
        %v7137 = vpop.permute.xlu0 %7136
        %7138 = vrot.lane.b32.xlu0 %v6965, 120
        %v7139 = vpop.permute.xlu0 %7138
        %v7140 = vsel %vm984, %v7137, 0
        %v7142 = vsel %vm984, %v7139, 0
        %7144 = vmatprep.subr.mxu0 0.0
        %7145 = vmatpush1.xpose.msra.mxu0 %v7142
        %7146 = vmatprep.subr.mxu0 0.0
        %7147 = vmatpush1.xpose.msra.mxu0 0.0
        %7148 = vmatprep.subr.mxu0 0.0
        %7149 = vmatpush1.xpose.msra.mxu0 0.0
        %7150 = vmatprep.subr.mxu0 0.0
        %7151 = vmatpush1.xpose.msra.mxu0 0.0
        %7152 = vmatprep.subr.mxu0 0.0
        %7153 = vmatpush1.xpose.msra.mxu0 0.0
        %7154 = vmatprep.subr.mxu0 0.0
        %7155 = vmatpush1.xpose.msra.mxu0 0.0
        %7156 = vmatprep.subr.mxu0 0.0
        %7157 = vmatpush1.xpose.msra.mxu0 0.0
        %7158 = vmatprep.subr.mxu0 0.0
        %7159 = vmatpush1.xpose.msra.mxu0 0.0
        %7160 = vmatprep.subr.mxu0 0.0
        %7161 = vmatpush1.xpose.msra.mxu0 0.0
        %7162 = vmatprep.subr.mxu0 0.0
        %7163 = vmatpush1.xpose.msra.mxu0 0.0
        %7164 = vmatprep.subr.mxu0 0.0
        %7165 = vmatpush1.xpose.msra.mxu0 0.0
        %7166 = vmatprep.subr.mxu0 0.0
        %7167 = vmatpush1.xpose.msra.mxu0 0.0
        %7168 = vmatprep.subr.mxu0 0.0
        %7169 = vmatpush1.xpose.msra.mxu0 0.0
        %7170 = vmatprep.subr.mxu0 0.0
        %7171 = vmatpush1.xpose.msra.mxu0 0.0
        %7172 = vmatprep.subr.mxu0 0.0
        %7173 = vmatpush1.xpose.msra.mxu0 0.0
        %7174 = vmatprep.subr.mxu0 0.0
        %7175 = vmatpush1.xpose.msra.mxu0 0.0
        %7176 = vmatprep.subr.mxu0 0.0
        %7177 = vmatpush1.xpose.msra.mxu0 0.0
        %7178 = vmatprep.subr.mxu0 0.0
        %7179 = vmatpush1.xpose.msra.mxu0 0.0
        %7180 = vmatprep.subr.mxu0 0.0
        %7181 = vmatpush1.xpose.msra.mxu0 0.0
        %7182 = vmatprep.subr.mxu0 0.0
        %7183 = vmatpush1.xpose.msra.mxu0 0.0
        %7184 = vmatprep.subr.mxu0 0.0
        %7185 = vmatpush1.xpose.msra.mxu0 0.0
        %7186 = vmatprep.subr.mxu0 0.0
        %7187 = vmatpush1.xpose.msra.mxu0 0.0
        %7188 = vmatprep.subr.mxu0 0.0
        %7189 = vmatpush1.xpose.msra.mxu0 0.0
        %7190 = vmatprep.subr.mxu0 0.0
        %7191 = vmatpush1.xpose.msra.mxu0 0.0
        %7192 = vmatprep.subr.mxu0 0.0
        %7193 = vmatpush1.xpose.msra.mxu0 0.0
        %7194 = vmatprep.subr.mxu0 0.0
        %7195 = vmatpush1.xpose.msra.mxu0 0.0
        %7196 = vmatprep.subr.mxu0 0.0
        %7197 = vmatpush1.xpose.msra.mxu0 0.0
        %7198 = vmatprep.subr.mxu0 0.0
        %7199 = vmatpush1.xpose.msra.mxu0 0.0
        %7200 = vmatprep.subr.mxu0 0.0
        %7201 = vmatpush1.xpose.msra.mxu0 0.0
        %7202 = vmatprep.subr.mxu0 0.0
        %7203 = vmatpush1.xpose.msra.mxu0 0.0
        %7204 = vmatprep.subr.mxu0 0.0
        %7205 = vmatpush1.xpose.msra.mxu0 0.0
        %7206 = vmatprep.subr.mxu0 0.0
        %7207 = vmatpush1.xpose.msra.mxu0 0.0
        %7208 = vmatprep.mubr.f32.mxu0 0.0
        %7209 = vmatmul.mubr.f32.gmra.mrb[0].mxu0 %v7140
        %v7210 = vpop.f32.mrb[0].mxu0
        %v7211 = vadd.f32 %v1063, %v7210
        %v7212 = vpop.f32.mrb[0].mxu0
        %7213 = vdwg.mxu0
        %v7214 = vsel %vm984, %v7211, -inf
        %7215 = vmax.xlane.f32.xlu0 %v7214
        %v7216 = vpop.xlane.xlu0 %7215
        %v7217 = vsub.f32 %v7211, %v7216
        %v7218 = vmul.f32 %v7217, 1.442695
        %v7219 = vpow.pop %v7218
        %v7220 = vsel %vm984, %v7219, 0.0
        %7221 = vadd.xlane.f32.xlu0 %v7220
        %v7222 = vpop.xlane.xlu0 %7221
        %v7223 = vrcp.pop %v7222
        %v7224 = vmul.f32 %v7219, %v7223
        %7225 = vrot.lane.b32.xlu0 %v6965, 88
        %v7226 = vpop.permute.xlu0 %7225
        %v7229 = vsel %vm984, %v7224, 0
        %7231 = vmatprep.subr.mxu0 0.0
        %7232 = vmatpush1.msra.mxu0 %v7226
        %7233 = vmatprep.subr.mxu0 0.0
        %7234 = vmatpush1.msra.mxu0 0.0
        %7235 = vmatprep.subr.mxu0 0.0
        %7236 = vmatpush1.msra.mxu0 0.0
        %7237 = vmatprep.subr.mxu0 0.0
        %7238 = vmatpush1.msra.mxu0 0.0
        %7239 = vmatprep.subr.mxu0 0.0
        %7240 = vmatpush1.msra.mxu0 0.0
        %7241 = vmatprep.subr.mxu0 0.0
        %7242 = vmatpush1.msra.mxu0 0.0
        %7243 = vmatprep.subr.mxu0 0.0
        %7244 = vmatpush1.msra.mxu0 0.0
        %7245 = vmatprep.subr.mxu0 0.0
        %7246 = vmatpush1.msra.mxu0 0.0
        %7247 = vmatprep.subr.mxu0 0.0
        %7248 = vmatpush1.msra.mxu0 0.0
        %7249 = vmatprep.subr.mxu0 0.0
        %7250 = vmatpush1.msra.mxu0 0.0
        %7251 = vmatprep.subr.mxu0 0.0
        %7252 = vmatpush1.msra.mxu0 0.0
        %7253 = vmatprep.subr.mxu0 0.0
        %7254 = vmatpush1.msra.mxu0 0.0
        %7255 = vmatprep.subr.mxu0 0.0
        %7256 = vmatpush1.msra.mxu0 0.0
        %7257 = vmatprep.subr.mxu0 0.0
        %7258 = vmatpush1.msra.mxu0 0.0
        %7259 = vmatprep.subr.mxu0 0.0
        %7260 = vmatpush1.msra.mxu0 0.0
        %7261 = vmatprep.subr.mxu0 0.0
        %7262 = vmatpush1.msra.mxu0 0.0
        %7263 = vmatprep.subr.mxu0 0.0
        %7264 = vmatpush1.msra.mxu0 0.0
        %7265 = vmatprep.subr.mxu0 0.0
        %7266 = vmatpush1.msra.mxu0 0.0
        %7267 = vmatprep.subr.mxu0 0.0
        %7268 = vmatpush1.msra.mxu0 0.0
        %7269 = vmatprep.subr.mxu0 0.0
        %7270 = vmatpush1.msra.mxu0 0.0
        %7271 = vmatprep.subr.mxu0 0.0
        %7272 = vmatpush1.msra.mxu0 0.0
        %7273 = vmatprep.subr.mxu0 0.0
        %7274 = vmatpush1.msra.mxu0 0.0
        %7275 = vmatprep.subr.mxu0 0.0
        %7276 = vmatpush1.msra.mxu0 0.0
        %7277 = vmatprep.subr.mxu0 0.0
        %7278 = vmatpush1.msra.mxu0 0.0
        %7279 = vmatprep.subr.mxu0 0.0
        %7280 = vmatpush1.msra.mxu0 0.0
        %7281 = vmatprep.subr.mxu0 0.0
        %7282 = vmatpush1.msra.mxu0 0.0
        %7283 = vmatprep.subr.mxu0 0.0
        %7284 = vmatpush1.msra.mxu0 0.0
        %7285 = vmatprep.subr.mxu0 0.0
        %7286 = vmatpush1.msra.mxu0 0.0
        %7287 = vmatprep.subr.mxu0 0.0
        %7288 = vmatpush1.msra.mxu0 0.0
        %7289 = vmatprep.subr.mxu0 0.0
        %7290 = vmatpush1.msra.mxu0 0.0
        %7291 = vmatprep.subr.mxu0 0.0
        %7292 = vmatpush1.msra.mxu0 0.0
        %7293 = vmatprep.subr.mxu0 0.0
        %7294 = vmatpush1.msra.mxu0 0.0
        %7295 = vmatprep.mubr.f32.mxu0 0.0
        %7296 = vmatmul.mubr.f32.gmra.mrb[0].mxu0 %v7229
        %v7297 = vpop.f32.mrb[0].mxu0
        %v7298 = vadd.f32 0.0, %v7297
        %v7299 = vpop.f32.mrb[0].mxu0
        %7300 = vdwg.mxu0
        %v7302 = vsel %vm984, %v7298, 0
        %7304 = vmatprep.subr.mxu0 0.0
        %7305 = vmatpush1.msra.mxu0 %v6970
        %7306 = vmatprep.subr.mxu0 0.0
        %7307 = vmatpush1.msra.mxu0 0.0
        %7308 = vmatprep.subr.mxu0 0.0
        %7309 = vmatpush1.msra.mxu0 0.0
        %7310 = vmatprep.subr.mxu0 0.0
        %7311 = vmatpush1.msra.mxu0 0.0
        %7312 = vmatprep.subr.mxu0 0.0
        %7313 = vmatpush1.msra.mxu0 0.0
        %7314 = vmatprep.subr.mxu0 0.0
        %7315 = vmatpush1.msra.mxu0 0.0
        %7316 = vmatprep.subr.mxu0 0.0
        %7317 = vmatpush1.msra.mxu0 0.0
        %7318 = vmatprep.subr.mxu0 0.0
        %7319 = vmatpush1.msra.mxu0 0.0
        %7320 = vmatprep.subr.mxu0 0.0
        %7321 = vmatpush1.msra.mxu0 0.0
        %7322 = vmatprep.subr.mxu0 0.0
        %7323 = vmatpush1.msra.mxu0 0.0
        %7324 = vmatprep.subr.mxu0 0.0
        %7325 = vmatpush1.msra.mxu0 0.0
        %7326 = vmatprep.subr.mxu0 0.0
        %7327 = vmatpush1.msra.mxu0 0.0
        %7328 = vmatprep.subr.mxu0 0.0
        %7329 = vmatpush1.msra.mxu0 0.0
        %7330 = vmatprep.subr.mxu0 0.0
        %7331 = vmatpush1.msra.mxu0 0.0
        %7332 = vmatprep.subr.mxu0 0.0
        %7333 = vmatpush1.msra.mxu0 0.0
        %7334 = vmatprep.subr.mxu0 0.0
        %7335 = vmatpush1.msra.mxu0 0.0
        %7336 = vmatprep.subr.mxu0 0.0
        %7337 = vmatpush1.msra.mxu0 0.0
        %7338 = vmatprep.subr.mxu0 0.0
        %7339 = vmatpush1.msra.mxu0 0.0
        %7340 = vmatprep.subr.mxu0 0.0
        %7341 = vmatpush1.msra.mxu0 0.0
        %7342 = vmatprep.subr.mxu0 0.0
        %7343 = vmatpush1.msra.mxu0 0.0
        %7344 = vmatprep.subr.mxu0 0.0
        %7345 = vmatpush1.msra.mxu0 0.0
        %7346 = vmatprep.subr.mxu0 0.0
        %7347 = vmatpush1.msra.mxu0 0.0
        %7348 = vmatprep.subr.mxu0 0.0
        %7349 = vmatpush1.msra.mxu0 0.0
        %7350 = vmatprep.subr.mxu0 0.0
        %7351 = vmatpush1.msra.mxu0 0.0
        %7352 = vmatprep.subr.mxu0 0.0
        %7353 = vmatpush1.msra.mxu0 0.0
        %7354 = vmatprep.subr.mxu0 0.0
        %7355 = vmatpush1.msra.mxu0 0.0
        %7356 = vmatprep.subr.mxu0 0.0
        %7357 = vmatpush1.msra.mxu0 0.0
        %7358 = vmatprep.subr.mxu0 0.0
        %7359 = vmatpush1.msra.mxu0 0.0
        %7360 = vmatprep.subr.mxu0 0.0
        %7361 = vmatpush1.msra.mxu0 0.0
        %7362 = vmatprep.subr.mxu0 0.0
        %7363 = vmatpush1.msra.mxu0 0.0
        %7364 = vmatprep.subr.mxu0 0.0
        %7365 = vmatpush1.msra.mxu0 0.0
        %7366 = vmatprep.subr.mxu0 0.0
        %7367 = vmatpush1.msra.mxu0 0.0
        %7368 = vmatprep.mubr.f32.mxu0 0.0
        %7369 = vmatmul.mubr.f32.gmra.mrb[0].mxu0 %v7302
        %v7370 = vpop.f32.mrb[0].mxu0
        %v7371 = vadd.f32 0.0, %v7370
        %v7372 = vpop.f32.mrb[0].mxu0
        %7373 = vdwg.mxu0
        %v7375 = vsel %vm984, %v7133, 0
        %7377 = vmatprep.subr.mxu0 0.0
        %7378 = vmatpush1.msra.mxu0 %v6969
        %7379 = vmatprep.subr.mxu0 0.0
        %7380 = vmatpush1.msra.mxu0 0.0
        %7381 = vmatprep.subr.mxu0 0.0
        %7382 = vmatpush1.msra.mxu0 0.0
        %7383 = vmatprep.subr.mxu0 0.0
        %7384 = vmatpush1.msra.mxu0 0.0
        %7385 = vmatprep.subr.mxu0 0.0
        %7386 = vmatpush1.msra.mxu0 0.0
        %7387 = vmatprep.subr.mxu0 0.0
        %7388 = vmatpush1.msra.mxu0 0.0
        %7389 = vmatprep.subr.mxu0 0.0
        %7390 = vmatpush1.msra.mxu0 0.0
        %7391 = vmatprep.subr.mxu0 0.0
        %7392 = vmatpush1.msra.mxu0 0.0
        %7393 = vmatprep.subr.mxu0 0.0
        %7394 = vmatpush1.msra.mxu0 0.0
        %7395 = vmatprep.subr.mxu0 0.0
        %7396 = vmatpush1.msra.mxu0 0.0
        %7397 = vmatprep.subr.mxu0 0.0
        %7398 = vmatpush1.msra.mxu0 0.0
        %7399 = vmatprep.subr.mxu0 0.0
        %7400 = vmatpush1.msra.mxu0 0.0
        %7401 = vmatprep.subr.mxu0 0.0
        %7402 = vmatpush1.msra.mxu0 0.0
        %7403 = vmatprep.subr.mxu0 0.0
        %7404 = vmatpush1.msra.mxu0 0.0
        %7405 = vmatprep.subr.mxu0 0.0
        %7406 = vmatpush1.msra.mxu0 0.0
        %7407 = vmatprep.subr.mxu0 0.0
        %7408 = vmatpush1.msra.mxu0 0.0
        %7409 = vmatprep.subr.mxu0 0.0
        %7410 = vmatpush1.msra.mxu0 0.0
        %7411 = vmatprep.subr.mxu0 0.0
        %7412 = vmatpush1.msra.mxu0 0.0
        %7413 = vmatprep.subr.mxu0 0.0
        %7414 = vmatpush1.msra.mxu0 0.0
        %7415 = vmatprep.subr.mxu0 0.0
        %7416 = vmatpush1.msra.mxu0 0.0
        %7417 = vmatprep.subr.mxu0 0.0
        %7418 = vmatpush1.msra.mxu0 0.0
        %7419 = vmatprep.subr.mxu0 0.0
        %7420 = vmatpush1.msra.mxu0 0.0
        %7421 = vmatprep.subr.mxu0 0.0
        %7422 = vmatpush1.msra.mxu0 0.0
        %7423 = vmatprep.subr.mxu0 0.0
        %7424 = vmatpush1.msra.mxu0 0.0
        %7425 = vmatprep.subr.mxu0 0.0
        %7426 = vmatpush1.msra.mxu0 0.0
        %7427 = vmatprep.subr.mxu0 0.0
        %7428 = vmatpush1.msra.mxu0 0.0
        %7429 = vmatprep.subr.mxu0 0.0
        %7430 = vmatpush1.msra.mxu0 0.0
        %7431 = vmatprep.subr.mxu0 0.0
        %7432 = vmatpush1.msra.mxu0 0.0
        %7433 = vmatprep.subr.mxu0 0.0
        %7434 = vmatpush1.msra.mxu0 0.0
        %7435 = vmatprep.subr.mxu0 0.0
        %7436 = vmatpush1.msra.mxu0 0.0
        %7437 = vmatprep.subr.mxu0 0.0
        %7438 = vmatpush1.msra.mxu0 0.0
        %7439 = vmatprep.subr.mxu0 0.0
        %7440 = vmatpush1.msra.mxu0 0.0
        %7441 = vmatprep.mubr.f32.mxu0 0.0
        %7442 = vmatmul.mubr.f32.gmra.mrb[0].mxu0 %v7375
        %v7443 = vpop.f32.mrb[0].mxu0
        %v7444 = vadd.f32 %v7371, %v7443
        %v7445 = vpop.f32.mrb[0].mxu0
        %7446 = vdwg.mxu0
        %7447 = vrot.lane.b32.xlu0 %v6890, 112
        %v7448 = vpop.permute.xlu0 %7447
        %7449 = vrot.lane.b32.xlu0 %v6965, 112
        %v7450 = vpop.permute.xlu0 %7449
        %v7451 = vsel %vm984, %v7448, 0
        %v7453 = vsel %vm984, %v7450, 0
        %7455 = vmatprep.subr.mxu0 0.0
        %7456 = vmatpush1.xpose.msra.mxu0 %v7453
        %7457 = vmatprep.subr.mxu0 0.0
        %7458 = vmatpush1.xpose.msra.mxu0 0.0
        %7459 = vmatprep.subr.mxu0 0.0
        %7460 = vmatpush1.xpose.msra.mxu0 0.0
        %7461 = vmatprep.subr.mxu0 0.0
        %7462 = vmatpush1.xpose.msra.mxu0 0.0
        %7463 = vmatprep.subr.mxu0 0.0
        %7464 = vmatpush1.xpose.msra.mxu0 0.0
        %7465 = vmatprep.subr.mxu0 0.0
        %7466 = vmatpush1.xpose.msra.mxu0 0.0
        %7467 = vmatprep.subr.mxu0 0.0
        %7468 = vmatpush1.xpose.msra.mxu0 0.0
        %7469 = vmatprep.subr.mxu0 0.0
        %7470 = vmatpush1.xpose.msra.mxu0 0.0
        %7471 = vmatprep.subr.mxu0 0.0
        %7472 = vmatpush1.xpose.msra.mxu0 0.0
        %7473 = vmatprep.subr.mxu0 0.0
        %7474 = vmatpush1.xpose.msra.mxu0 0.0
        %7475 = vmatprep.subr.mxu0 0.0
        %7476 = vmatpush1.xpose.msra.mxu0 0.0
        %7477 = vmatprep.subr.mxu0 0.0
        %7478 = vmatpush1.xpose.msra.mxu0 0.0
        %7479 = vmatprep.subr.mxu0 0.0
        %7480 = vmatpush1.xpose.msra.mxu0 0.0
        %7481 = vmatprep.subr.mxu0 0.0
        %7482 = vmatpush1.xpose.msra.mxu0 0.0
        %7483 = vmatprep.subr.mxu0 0.0
        %7484 = vmatpush1.xpose.msra.mxu0 0.0
        %7485 = vmatprep.subr.mxu0 0.0
        %7486 = vmatpush1.xpose.msra.mxu0 0.0
        %7487 = vmatprep.subr.mxu0 0.0
        %7488 = vmatpush1.xpose.msra.mxu0 0.0
        %7489 = vmatprep.subr.mxu0 0.0
        %7490 = vmatpush1.xpose.msra.mxu0 0.0
        %7491 = vmatprep.subr.mxu0 0.0
        %7492 = vmatpush1.xpose.msra.mxu0 0.0
        %7493 = vmatprep.subr.mxu0 0.0
        %7494 = vmatpush1.xpose.msra.mxu0 0.0
        %7495 = vmatprep.subr.mxu0 0.0
        %7496 = vmatpush1.xpose.msra.mxu0 0.0
        %7497 = vmatprep.subr.mxu0 0.0
        %7498 = vmatpush1.xpose.msra.mxu0 0.0
        %7499 = vmatprep.subr.mxu0 0.0
        %7500 = vmatpush1.xpose.msra.mxu0 0.0
        %7501 = vmatprep.subr.mxu0 0.0
        %7502 = vmatpush1.xpose.msra.mxu0 0.0
        %7503 = vmatprep.subr.mxu0 0.0
        %7504 = vmatpush1.xpose.msra.mxu0 0.0
        %7505 = vmatprep.subr.mxu0 0.0
        %7506 = vmatpush1.xpose.msra.mxu0 0.0
        %7507 = vmatprep.subr.mxu0 0.0
        %7508 = vmatpush1.xpose.msra.mxu0 0.0
        %7509 = vmatprep.subr.mxu0 0.0
        %7510 = vmatpush1.xpose.msra.mxu0 0.0
        %7511 = vmatprep.subr.mxu0 0.0
        %7512 = vmatpush1.xpose.msra.mxu0 0.0
        %7513 = vmatprep.subr.mxu0 0.0
        %7514 = vmatpush1.xpose.msra.mxu0 0.0
        %7515 = vmatprep.subr.mxu0 0.0
        %7516 = vmatpush1.xpose.msra.mxu0 0.0
        %7517 = vmatprep.subr.mxu0 0.0
        %7518 = vmatpush1.xpose.msra.mxu0 0.0
        %7519 = vmatprep.mubr.f32.mxu0 0.0
        %7520 = vmatmul.mubr.f32.gmra.mrb[0].mxu0 %v7451
        %v7521 = vpop.f32.mrb[0].mxu0
        %v7522 = vadd.f32 %v1063, %v7521
        %v7523 = vpop.f32.mrb[0].mxu0
        %7524 = vdwg.mxu0
        %v7525 = vsel %vm984, %v7522, -inf
        %7526 = vmax.xlane.f32.xlu0 %v7525
        %v7527 = vpop.xlane.xlu0 %7526
        %v7528 = vsub.f32 %v7522, %v7527
        %v7529 = vmul.f32 %v7528, 1.442695
        %v7530 = vpow.pop %v7529
        %v7531 = vsel %vm984, %v7530, 0.0
        %7532 = vadd.xlane.f32.xlu0 %v7531
        %v7533 = vpop.xlane.xlu0 %7532
        %v7534 = vrcp.pop %v7533
        %v7535 = vmul.f32 %v7530, %v7534
        %7536 = vrot.lane.b32.xlu0 %v6965, 80
        %v7537 = vpop.permute.xlu0 %7536
        %v7540 = vsel %vm984, %v7535, 0
        %7542 = vmatprep.subr.mxu0 0.0
        %7543 = vmatpush1.msra.mxu0 %v7537
        %7544 = vmatprep.subr.mxu0 0.0
        %7545 = vmatpush1.msra.mxu0 0.0
        %7546 = vmatprep.subr.mxu0 0.0
        %7547 = vmatpush1.msra.mxu0 0.0
        %7548 = vmatprep.subr.mxu0 0.0
        %7549 = vmatpush1.msra.mxu0 0.0
        %7550 = vmatprep.subr.mxu0 0.0
        %7551 = vmatpush1.msra.mxu0 0.0
        %7552 = vmatprep.subr.mxu0 0.0
        %7553 = vmatpush1.msra.mxu0 0.0
        %7554 = vmatprep.subr.mxu0 0.0
        %7555 = vmatpush1.msra.mxu0 0.0
        %7556 = vmatprep.subr.mxu0 0.0
        %7557 = vmatpush1.msra.mxu0 0.0
        %7558 = vmatprep.subr.mxu0 0.0
        %7559 = vmatpush1.msra.mxu0 0.0
        %7560 = vmatprep.subr.mxu0 0.0
        %7561 = vmatpush1.msra.mxu0 0.0
        %7562 = vmatprep.subr.mxu0 0.0
        %7563 = vmatpush1.msra.mxu0 0.0
        %7564 = vmatprep.subr.mxu0 0.0
        %7565 = vmatpush1.msra.mxu0 0.0
        %7566 = vmatprep.subr.mxu0 0.0
        %7567 = vmatpush1.msra.mxu0 0.0
        %7568 = vmatprep.subr.mxu0 0.0
        %7569 = vmatpush1.msra.mxu0 0.0
        %7570 = vmatprep.subr.mxu0 0.0
        %7571 = vmatpush1.msra.mxu0 0.0
        %7572 = vmatprep.subr.mxu0 0.0
        %7573 = vmatpush1.msra.mxu0 0.0
        %7574 = vmatprep.subr.mxu0 0.0
        %7575 = vmatpush1.msra.mxu0 0.0
        %7576 = vmatprep.subr.mxu0 0.0
        %7577 = vmatpush1.msra.mxu0 0.0
        %7578 = vmatprep.subr.mxu0 0.0
        %7579 = vmatpush1.msra.mxu0 0.0
        %7580 = vmatprep.subr.mxu0 0.0
        %7581 = vmatpush1.msra.mxu0 0.0
        %7582 = vmatprep.subr.mxu0 0.0
        %7583 = vmatpush1.msra.mxu0 0.0
        %7584 = vmatprep.subr.mxu0 0.0
        %7585 = vmatpush1.msra.mxu0 0.0
        %7586 = vmatprep.subr.mxu0 0.0
        %7587 = vmatpush1.msra.mxu0 0.0
        %7588 = vmatprep.subr.mxu0 0.0
        %7589 = vmatpush1.msra.mxu0 0.0
        %7590 = vmatprep.subr.mxu0 0.0
        %7591 = vmatpush1.msra.mxu0 0.0
        %7592 = vmatprep.subr.mxu0 0.0
        %7593 = vmatpush1.msra.mxu0 0.0
        %7594 = vmatprep.subr.mxu0 0.0
        %7595 = vmatpush1.msra.mxu0 0.0
        %7596 = vmatprep.subr.mxu0 0.0
        %7597 = vmatpush1.msra.mxu0 0.0
        %7598 = vmatprep.subr.mxu0 0.0
        %7599 = vmatpush1.msra.mxu0 0.0
        %7600 = vmatprep.subr.mxu0 0.0
        %7601 = vmatpush1.msra.mxu0 0.0
        %7602 = vmatprep.subr.mxu0 0.0
        %7603 = vmatpush1.msra.mxu0 0.0
        %7604 = vmatprep.subr.mxu0 0.0
        %7605 = vmatpush1.msra.mxu0 0.0
        %7606 = vmatprep.mubr.f32.mxu0 0.0
        %7607 = vmatmul.mubr.f32.gmra.mrb[0].mxu0 %v7540
        %v7608 = vpop.f32.mrb[0].mxu0
        %v7609 = vadd.f32 0.0, %v7608
        %v7610 = vpop.f32.mrb[0].mxu0
        %7611 = vdwg.mxu0
        %v7613 = vsel %vm984, %v7609, 0
        %7615 = vmatprep.subr.mxu0 0.0
        %7616 = vmatpush1.msra.mxu0 %v6971
        %7617 = vmatprep.subr.mxu0 0.0
        %7618 = vmatpush1.msra.mxu0 0.0
        %7619 = vmatprep.subr.mxu0 0.0
        %7620 = vmatpush1.msra.mxu0 0.0
        %7621 = vmatprep.subr.mxu0 0.0
        %7622 = vmatpush1.msra.mxu0 0.0
        %7623 = vmatprep.subr.mxu0 0.0
        %7624 = vmatpush1.msra.mxu0 0.0
        %7625 = vmatprep.subr.mxu0 0.0
        %7626 = vmatpush1.msra.mxu0 0.0
        %7627 = vmatprep.subr.mxu0 0.0
        %7628 = vmatpush1.msra.mxu0 0.0
        %7629 = vmatprep.subr.mxu0 0.0
        %7630 = vmatpush1.msra.mxu0 0.0
        %7631 = vmatprep.subr.mxu0 0.0
        %7632 = vmatpush1.msra.mxu0 0.0
        %7633 = vmatprep.subr.mxu0 0.0
        %7634 = vmatpush1.msra.mxu0 0.0
        %7635 = vmatprep.subr.mxu0 0.0
        %7636 = vmatpush1.msra.mxu0 0.0
        %7637 = vmatprep.subr.mxu0 0.0
        %7638 = vmatpush1.msra.mxu0 0.0
        %7639 = vmatprep.subr.mxu0 0.0
        %7640 = vmatpush1.msra.mxu0 0.0
        %7641 = vmatprep.subr.mxu0 0.0
        %7642 = vmatpush1.msra.mxu0 0.0
        %7643 = vmatprep.subr.mxu0 0.0
        %7644 = vmatpush1.msra.mxu0 0.0
        %7645 = vmatprep.subr.mxu0 0.0
        %7646 = vmatpush1.msra.mxu0 0.0
        %7647 = vmatprep.subr.mxu0 0.0
        %7648 = vmatpush1.msra.mxu0 0.0
        %7649 = vmatprep.subr.mxu0 0.0
        %7650 = vmatpush1.msra.mxu0 0.0
        %7651 = vmatprep.subr.mxu0 0.0
        %7652 = vmatpush1.msra.mxu0 0.0
        %7653 = vmatprep.subr.mxu0 0.0
        %7654 = vmatpush1.msra.mxu0 0.0
        %7655 = vmatprep.subr.mxu0 0.0
        %7656 = vmatpush1.msra.mxu0 0.0
        %7657 = vmatprep.subr.mxu0 0.0
        %7658 = vmatpush1.msra.mxu0 0.0
        %7659 = vmatprep.subr.mxu0 0.0
        %7660 = vmatpush1.msra.mxu0 0.0
        %7661 = vmatprep.subr.mxu0 0.0
        %7662 = vmatpush1.msra.mxu0 0.0
        %7663 = vmatprep.subr.mxu0 0.0
        %7664 = vmatpush1.msra.mxu0 0.0
        %7665 = vmatprep.subr.mxu0 0.0
        %7666 = vmatpush1.msra.mxu0 0.0
        %7667 = vmatprep.subr.mxu0 0.0
        %7668 = vmatpush1.msra.mxu0 0.0
        %7669 = vmatprep.subr.mxu0 0.0
        %7670 = vmatpush1.msra.mxu0 0.0
        %7671 = vmatprep.subr.mxu0 0.0
        %7672 = vmatpush1.msra.mxu0 0.0
        %7673 = vmatprep.subr.mxu0 0.0
        %7674 = vmatpush1.msra.mxu0 0.0
        %7675 = vmatprep.subr.mxu0 0.0
        %7676 = vmatpush1.msra.mxu0 0.0
        %7677 = vmatprep.subr.mxu0 0.0
        %7678 = vmatpush1.msra.mxu0 0.0
        %7679 = vmatprep.mubr.f32.mxu0 0.0
        %7680 = vmatmul.mubr.f32.gmra.mrb[0].mxu0 %v7613
        %v7681 = vpop.f32.mrb[0].mxu0
        %v7682 = vadd.f32 0.0, %v7681
        %v7683 = vpop.f32.mrb[0].mxu0
        %7684 = vdwg.mxu0
        %v7685 = vadd.f32 %v7444, %v7682
        %7686 = vrot.lane.b32.xlu0 %v6890, 104
        %v7687 = vpop.permute.xlu0 %7686
        %7688 = vrot.lane.b32.xlu0 %v6965, 104
        %v7689 = vpop.permute.xlu0 %7688
        %v7690 = vsel %vm984, %v7687, 0
        %v7692 = vsel %vm984, %v7689, 0
        %7694 = vmatprep.subr.mxu0 0.0
        %7695 = vmatpush1.xpose.msra.mxu0 %v7692
        %7696 = vmatprep.subr.mxu0 0.0
        %7697 = vmatpush1.xpose.msra.mxu0 0.0
        %7698 = vmatprep.subr.mxu0 0.0
        %7699 = vmatpush1.xpose.msra.mxu0 0.0
        %7700 = vmatprep.subr.mxu0 0.0
        %7701 = vmatpush1.xpose.msra.mxu0 0.0
        %7702 = vmatprep.subr.mxu0 0.0
        %7703 = vmatpush1.xpose.msra.mxu0 0.0
        %7704 = vmatprep.subr.mxu0 0.0
        %7705 = vmatpush1.xpose.msra.mxu0 0.0
        %7706 = vmatprep.subr.mxu0 0.0
        %7707 = vmatpush1.xpose.msra.mxu0 0.0
        %7708 = vmatprep.subr.mxu0 0.0
        %7709 = vmatpush1.xpose.msra.mxu0 0.0
        %7710 = vmatprep.subr.mxu0 0.0
        %7711 = vmatpush1.xpose.msra.mxu0 0.0
        %7712 = vmatprep.subr.mxu0 0.0
        %7713 = vmatpush1.xpose.msra.mxu0 0.0
        %7714 = vmatprep.subr.mxu0 0.0
        %7715 = vmatpush1.xpose.msra.mxu0 0.0
        %7716 = vmatprep.subr.mxu0 0.0
        %7717 = vmatpush1.xpose.msra.mxu0 0.0
        %7718 = vmatprep.subr.mxu0 0.0
        %7719 = vmatpush1.xpose.msra.mxu0 0.0
        %7720 = vmatprep.subr.mxu0 0.0
        %7721 = vmatpush1.xpose.msra.mxu0 0.0
        %7722 = vmatprep.subr.mxu0 0.0
        %7723 = vmatpush1.xpose.msra.mxu0 0.0
        %7724 = vmatprep.subr.mxu0 0.0
        %7725 = vmatpush1.xpose.msra.mxu0 0.0
        %7726 = vmatprep.subr.mxu0 0.0
        %7727 = vmatpush1.xpose.msra.mxu0 0.0
        %7728 = vmatprep.subr.mxu0 0.0
        %7729 = vmatpush1.xpose.msra.mxu0 0.0
        %7730 = vmatprep.subr.mxu0 0.0
        %7731 = vmatpush1.xpose.msra.mxu0 0.0
        %7732 = vmatprep.subr.mxu0 0.0
        %7733 = vmatpush1.xpose.msra.mxu0 0.0
        %7734 = vmatprep.subr.mxu0 0.0
        %7735 = vmatpush1.xpose.msra.mxu0 0.0
        %7736 = vmatprep.subr.mxu0 0.0
        %7737 = vmatpush1.xpose.msra.mxu0 0.0
        %7738 = vmatprep.subr.mxu0 0.0
        %7739 = vmatpush1.xpose.msra.mxu0 0.0
        %7740 = vmatprep.subr.mxu0 0.0
        %7741 = vmatpush1.xpose.msra.mxu0 0.0
        %7742 = vmatprep.subr.mxu0 0.0
        %7743 = vmatpush1.xpose.msra.mxu0 0.0
        %7744 = vmatprep.subr.mxu0 0.0
        %7745 = vmatpush1.xpose.msra.mxu0 0.0
        %7746 = vmatprep.subr.mxu0 0.0
        %7747 = vmatpush1.xpose.msra.mxu0 0.0
        %7748 = vmatprep.subr.mxu0 0.0
        %7749 = vmatpush1.xpose.msra.mxu0 0.0
        %7750 = vmatprep.subr.mxu0 0.0
        %7751 = vmatpush1.xpose.msra.mxu0 0.0
        %7752 = vmatprep.subr.mxu0 0.0
        %7753 = vmatpush1.xpose.msra.mxu0 0.0
        %7754 = vmatprep.subr.mxu0 0.0
        %7755 = vmatpush1.xpose.msra.mxu0 0.0
        %7756 = vmatprep.subr.mxu0 0.0
        %7757 = vmatpush1.xpose.msra.mxu0 0.0
        %7758 = vmatprep.mubr.f32.mxu0 0.0
        %7759 = vmatmul.mubr.f32.gmra.mrb[0].mxu0 %v7690
        %v7760 = vpop.f32.mrb[0].mxu0
        %v7761 = vadd.f32 %v1063, %v7760
        %v7762 = vpop.f32.mrb[0].mxu0
        %7763 = vdwg.mxu0
        %v7764 = vsel %vm984, %v7761, -inf
        %7765 = vmax.xlane.f32.xlu0 %v7764
        %v7766 = vpop.xlane.xlu0 %7765
        %v7767 = vsub.f32 %v7761, %v7766
        %v7768 = vmul.f32 %v7767, 1.442695
        %v7769 = vpow.pop %v7768
        %v7770 = vsel %vm984, %v7769, 0.0
        %7771 = vadd.xlane.f32.xlu0 %v7770
        %v7772 = vpop.xlane.xlu0 %7771
        %v7773 = vrcp.pop %v7772
        %v7774 = vmul.f32 %v7769, %v7773
        %7775 = vrot.lane.b32.xlu0 %v6965, 72
        %v7776 = vpop.permute.xlu0 %7775
        %v7779 = vsel %vm984, %v7774, 0
        %7781 = vmatprep.subr.mxu0 0.0
        %7782 = vmatpush1.msra.mxu0 %v7776
        %7783 = vmatprep.subr.mxu0 0.0
        %7784 = vmatpush1.msra.mxu0 0.0
        %7785 = vmatprep.subr.mxu0 0.0
        %7786 = vmatpush1.msra.mxu0 0.0
        %7787 = vmatprep.subr.mxu0 0.0
        %7788 = vmatpush1.msra.mxu0 0.0
        %7789 = vmatprep.subr.mxu0 0.0
        %7790 = vmatpush1.msra.mxu0 0.0
        %7791 = vmatprep.subr.mxu0 0.0
        %7792 = vmatpush1.msra.mxu0 0.0
        %7793 = vmatprep.subr.mxu0 0.0
        %7794 = vmatpush1.msra.mxu0 0.0
        %7795 = vmatprep.subr.mxu0 0.0
        %7796 = vmatpush1.msra.mxu0 0.0
        %7797 = vmatprep.subr.mxu0 0.0
        %7798 = vmatpush1.msra.mxu0 0.0
        %7799 = vmatprep.subr.mxu0 0.0
        %7800 = vmatpush1.msra.mxu0 0.0
        %7801 = vmatprep.subr.mxu0 0.0
        %7802 = vmatpush1.msra.mxu0 0.0
        %7803 = vmatprep.subr.mxu0 0.0
        %7804 = vmatpush1.msra.mxu0 0.0
        %7805 = vmatprep.subr.mxu0 0.0
        %7806 = vmatpush1.msra.mxu0 0.0
        %7807 = vmatprep.subr.mxu0 0.0
        %7808 = vmatpush1.msra.mxu0 0.0
        %7809 = vmatprep.subr.mxu0 0.0
        %7810 = vmatpush1.msra.mxu0 0.0
        %7811 = vmatprep.subr.mxu0 0.0
        %7812 = vmatpush1.msra.mxu0 0.0
        %7813 = vmatprep.subr.mxu0 0.0
        %7814 = vmatpush1.msra.mxu0 0.0
        %7815 = vmatprep.subr.mxu0 0.0
        %7816 = vmatpush1.msra.mxu0 0.0
        %7817 = vmatprep.subr.mxu0 0.0
        %7818 = vmatpush1.msra.mxu0 0.0
        %7819 = vmatprep.subr.mxu0 0.0
        %7820 = vmatpush1.msra.mxu0 0.0
        %7821 = vmatprep.subr.mxu0 0.0
        %7822 = vmatpush1.msra.mxu0 0.0
        %7823 = vmatprep.subr.mxu0 0.0
        %7824 = vmatpush1.msra.mxu0 0.0
        %7825 = vmatprep.subr.mxu0 0.0
        %7826 = vmatpush1.msra.mxu0 0.0
        %7827 = vmatprep.subr.mxu0 0.0
        %7828 = vmatpush1.msra.mxu0 0.0
        %7829 = vmatprep.subr.mxu0 0.0
        %7830 = vmatpush1.msra.mxu0 0.0
        %7831 = vmatprep.subr.mxu0 0.0
        %7832 = vmatpush1.msra.mxu0 0.0
        %7833 = vmatprep.subr.mxu0 0.0
        %7834 = vmatpush1.msra.mxu0 0.0
        %7835 = vmatprep.subr.mxu0 0.0
        %7836 = vmatpush1.msra.mxu0 0.0
        %7837 = vmatprep.subr.mxu0 0.0
        %7838 = vmatpush1.msra.mxu0 0.0
        %7839 = vmatprep.subr.mxu0 0.0
        %7840 = vmatpush1.msra.mxu0 0.0
        %7841 = vmatprep.subr.mxu0 0.0
        %7842 = vmatpush1.msra.mxu0 0.0
        %7843 = vmatprep.subr.mxu0 0.0
        %7844 = vmatpush1.msra.mxu0 0.0
        %7845 = vmatprep.mubr.f32.mxu0 0.0
        %7846 = vmatmul.mubr.f32.gmra.mrb[0].mxu0 %v7779
        %v7847 = vpop.f32.mrb[0].mxu0
        %v7848 = vadd.f32 0.0, %v7847
        %v7849 = vpop.f32.mrb[0].mxu0
        %7850 = vdwg.mxu0
        %v7852 = vsel %vm984, %v7848, 0
        %7854 = vmatprep.subr.mxu0 0.0
        %7855 = vmatpush1.msra.mxu0 %v6972
        %7856 = vmatprep.subr.mxu0 0.0
        %7857 = vmatpush1.msra.mxu0 0.0
        %7858 = vmatprep.subr.mxu0 0.0
        %7859 = vmatpush1.msra.mxu0 0.0
        %7860 = vmatprep.subr.mxu0 0.0
        %7861 = vmatpush1.msra.mxu0 0.0
        %7862 = vmatprep.subr.mxu0 0.0
        %7863 = vmatpush1.msra.mxu0 0.0
        %7864 = vmatprep.subr.mxu0 0.0
        %7865 = vmatpush1.msra.mxu0 0.0
        %7866 = vmatprep.subr.mxu0 0.0
        %7867 = vmatpush1.msra.mxu0 0.0
        %7868 = vmatprep.subr.mxu0 0.0
        %7869 = vmatpush1.msra.mxu0 0.0
        %7870 = vmatprep.subr.mxu0 0.0
        %7871 = vmatpush1.msra.mxu0 0.0
        %7872 = vmatprep.subr.mxu0 0.0
        %7873 = vmatpush1.msra.mxu0 0.0
        %7874 = vmatprep.subr.mxu0 0.0
        %7875 = vmatpush1.msra.mxu0 0.0
        %7876 = vmatprep.subr.mxu0 0.0
        %7877 = vmatpush1.msra.mxu0 0.0
        %7878 = vmatprep.subr.mxu0 0.0
        %7879 = vmatpush1.msra.mxu0 0.0
        %7880 = vmatprep.subr.mxu0 0.0
        %7881 = vmatpush1.msra.mxu0 0.0
        %7882 = vmatprep.subr.mxu0 0.0
        %7883 = vmatpush1.msra.mxu0 0.0
        %7884 = vmatprep.subr.mxu0 0.0
        %7885 = vmatpush1.msra.mxu0 0.0
        %7886 = vmatprep.subr.mxu0 0.0
        %7887 = vmatpush1.msra.mxu0 0.0
        %7888 = vmatprep.subr.mxu0 0.0
        %7889 = vmatpush1.msra.mxu0 0.0
        %7890 = vmatprep.subr.mxu0 0.0
        %7891 = vmatpush1.msra.mxu0 0.0
        %7892 = vmatprep.subr.mxu0 0.0
        %7893 = vmatpush1.msra.mxu0 0.0
        %7894 = vmatprep.subr.mxu0 0.0
        %7895 = vmatpush1.msra.mxu0 0.0
        %7896 = vmatprep.subr.mxu0 0.0
        %7897 = vmatpush1.msra.mxu0 0.0
        %7898 = vmatprep.subr.mxu0 0.0
        %7899 = vmatpush1.msra.mxu0 0.0
        %7900 = vmatprep.subr.mxu0 0.0
        %7901 = vmatpush1.msra.mxu0 0.0
        %7902 = vmatprep.subr.mxu0 0.0
        %7903 = vmatpush1.msra.mxu0 0.0
        %7904 = vmatprep.subr.mxu0 0.0
        %7905 = vmatpush1.msra.mxu0 0.0
        %7906 = vmatprep.subr.mxu0 0.0
        %7907 = vmatpush1.msra.mxu0 0.0
        %7908 = vmatprep.subr.mxu0 0.0
        %7909 = vmatpush1.msra.mxu0 0.0
        %7910 = vmatprep.subr.mxu0 0.0
        %7911 = vmatpush1.msra.mxu0 0.0
        %7912 = vmatprep.subr.mxu0 0.0
        %7913 = vmatpush1.msra.mxu0 0.0
        %7914 = vmatprep.subr.mxu0 0.0
        %7915 = vmatpush1.msra.mxu0 0.0
        %7916 = vmatprep.subr.mxu0 0.0
        %7917 = vmatpush1.msra.mxu0 0.0
        %7918 = vmatprep.mubr.f32.mxu0 0.0
        %7919 = vmatmul.mubr.f32.gmra.mrb[0].mxu0 %v7852
        %v7920 = vpop.f32.mrb[0].mxu0
        %v7921 = vadd.f32 0.0, %v7920
        %v7922 = vpop.f32.mrb[0].mxu0
        %7923 = vdwg.mxu0
        %v7924 = vadd.f32 %v7685, %v7921
        %v7925 = vadd.f32 %v6797, %v7924
        %s7926 = scalar_lea.vmem %s20, 1
        %v7927 = vld [vmem:[%s7926] sm:$0x1]
        %v7928 = vmul.f32 %v7925, %v7925
        %v7929 = vsel %vm883, %v7928, 0.0
        %7930 = vadd.xlane.f32.xlu0 %v7929
        %v7931 = vpop.xlane.xlu0 %7930
        %v7932 = vmul.f32 %v7931, %v887
        %v7933 = vadd.f32 %v7932, 1e-06
        %v7934 = vrsqrt.pop %v7933
        %v7935 = vmul.f32 %v7925, %v7934
        %v7937 = vlaneseq
        %v7938 = vshrl.u32 %v7937, 7
        %v7939 = vsub.s32 0, %v7938
        %v7940 = vrot.slane %v7927, %v7939
        %v7942 = vmul.f32 %v7935, %v7940
        %s7943 = scalar_lea.vmem %s21, 32
        %v7944 = vld [vmem:[%s7943] sm:$0xff]
        %v7945 = vld [vmem:[%s7943 + $0x8] sm:$0xff]
        %v7946 = vld [vmem:[%s7943 + $0x10] sm:$0xff]
        %v7947 = vld [vmem:[%s7943 + $0x18] sm:$0xff]
        %v7949 = vsel %vm883, %v7942, 0
        %7951 = vmatprep.subr.mxu0 0.0
        %7952 = vmatpush1.msra.mxu0 %v7944
        %7953 = vmatprep.subr.mxu0 0.0
        %7954 = vmatpush1.msra.mxu0 %v7945
        %7955 = vmatprep.subr.mxu0 0.0
        %7956 = vmatpush1.msra.mxu0 %v7946
        %7957 = vmatprep.subr.mxu0 0.0
        %7958 = vmatpush1.msra.mxu0 %v7947
        %7959 = vmatprep.subr.mxu0 0.0
        %7960 = vmatpush1.msra.mxu0 0.0
        %7961 = vmatprep.subr.mxu0 0.0
        %7962 = vmatpush1.msra.mxu0 0.0
        %7963 = vmatprep.subr.mxu0 0.0
        %7964 = vmatpush1.msra.mxu0 0.0
        %7965 = vmatprep.subr.mxu0 0.0
        %7966 = vmatpush1.msra.mxu0 0.0
        %7967 = vmatprep.subr.mxu0 0.0
        %7968 = vmatpush1.msra.mxu0 0.0
        %7969 = vmatprep.subr.mxu0 0.0
        %7970 = vmatpush1.msra.mxu0 0.0
        %7971 = vmatprep.subr.mxu0 0.0
        %7972 = vmatpush1.msra.mxu0 0.0
        %7973 = vmatprep.subr.mxu0 0.0
        %7974 = vmatpush1.msra.mxu0 0.0
        %7975 = vmatprep.subr.mxu0 0.0
        %7976 = vmatpush1.msra.mxu0 0.0
        %7977 = vmatprep.subr.mxu0 0.0
        %7978 = vmatpush1.msra.mxu0 0.0
        %7979 = vmatprep.subr.mxu0 0.0
        %7980 = vmatpush1.msra.mxu0 0.0
        %7981 = vmatprep.subr.mxu0 0.0
        %7982 = vmatpush1.msra.mxu0 0.0
        %7983 = vmatprep.subr.mxu0 0.0
        %7984 = vmatpush1.msra.mxu0 0.0
        %7985 = vmatprep.subr.mxu0 0.0
        %7986 = vmatpush1.msra.mxu0 0.0
        %7987 = vmatprep.subr.mxu0 0.0
        %7988 = vmatpush1.msra.mxu0 0.0
        %7989 = vmatprep.subr.mxu0 0.0
        %7990 = vmatpush1.msra.mxu0 0.0
        %7991 = vmatprep.subr.mxu0 0.0
        %7992 = vmatpush1.msra.mxu0 0.0
        %7993 = vmatprep.subr.mxu0 0.0
        %7994 = vmatpush1.msra.mxu0 0.0
        %7995 = vmatprep.subr.mxu0 0.0
        %7996 = vmatpush1.msra.mxu0 0.0
        %7997 = vmatprep.subr.mxu0 0.0
        %7998 = vmatpush1.msra.mxu0 0.0
        %7999 = vmatprep.subr.mxu0 0.0
        %8000 = vmatpush1.msra.mxu0 0.0
        %8001 = vmatprep.subr.mxu0 0.0
        %8002 = vmatpush1.msra.mxu0 0.0
        %8003 = vmatprep.subr.mxu0 0.0
        %8004 = vmatpush1.msra.mxu0 0.0
        %8005 = vmatprep.subr.mxu0 0.0
        %8006 = vmatpush1.msra.mxu0 0.0
        %8007 = vmatprep.subr.mxu0 0.0
        %8008 = vmatpush1.msra.mxu0 0.0
        %8009 = vmatprep.subr.mxu0 0.0
        %8010 = vmatpush1.msra.mxu0 0.0
        %8011 = vmatprep.subr.mxu0 0.0
        %8012 = vmatpush1.msra.mxu0 0.0
        %8013 = vmatprep.subr.mxu0 0.0
        %8014 = vmatpush1.msra.mxu0 0.0
        %8015 = vmatprep.mubr.f32.mxu0 0.0
        %8016 = vmatmul.mubr.f32.gmra.mrb[0].mxu0 %v7949
        %v8017 = vpop.f32.mrb[0].mxu0
        %v8018 = vadd.f32 0.0, %v8017
        %v8019 = vpop.f32.mrb[0].mxu0
        %8020 = vdwg.mxu0
        %v8021 = vmax.f32 %v8018, 0.0
        %s8022 = scalar_lea.vmem %s22, 64
        %v8023 = vld [vmem:[%s8022] sm:$0xff]
        %v8024 = vld [vmem:[%s8022 + $0x8] sm:$0xff]
        %v8025 = vld [vmem:[%s8022 + $0x10] sm:$0xff]
        %v8026 = vld [vmem:[%s8022 + $0x18] sm:$0xff]
        %v8027 = vld [vmem:[%s8022 + $0x20] sm:$0xff]
        %v8028 = vld [vmem:[%s8022 + $0x28] sm:$0xff]
        %v8029 = vld [vmem:[%s8022 + $0x30] sm:$0xff]
        %v8030 = vld [vmem:[%s8022 + $0x38] sm:$0xff]
        %v8032 = vsel %vm2054, %v8021, 0
        %8034 = vmatprep.subr.mxu0 0.0
        %8035 = vmatpush1.msra.mxu0 %v8023
        %8036 = vmatprep.subr.mxu0 0.0
        %8037 = vmatpush1.msra.mxu0 %v8024
        %8038 = vmatprep.subr.mxu0 0.0
        %8039 = vmatpush1.msra.mxu0 %v8025
        %8040 = vmatprep.subr.mxu0 0.0
        %8041 = vmatpush1.msra.mxu0 %v8026
        %8042 = vmatprep.subr.mxu0 0.0
        %8043 = vmatpush1.msra.mxu0 %v8027
        %8044 = vmatprep.subr.mxu0 0.0
        %8045 = vmatpush1.msra.mxu0 %v8028
        %8046 = vmatprep.subr.mxu0 0.0
        %8047 = vmatpush1.msra.mxu0 %v8029
        %8048 = vmatprep.subr.mxu0 0.0
        %8049 = vmatpush1.msra.mxu0 %v8030
        %8050 = vmatprep.subr.mxu0 0.0
        %8051 = vmatpush1.msra.mxu0 0.0
        %8052 = vmatprep.subr.mxu0 0.0
        %8053 = vmatpush1.msra.mxu0 0.0
        %8054 = vmatprep.subr.mxu0 0.0
        %8055 = vmatpush1.msra.mxu0 0.0
        %8056 = vmatprep.subr.mxu0 0.0
        %8057 = vmatpush1.msra.mxu0 0.0
        %8058 = vmatprep.subr.mxu0 0.0
        %8059 = vmatpush1.msra.mxu0 0.0
        %8060 = vmatprep.subr.mxu0 0.0
        %8061 = vmatpush1.msra.mxu0 0.0
        %8062 = vmatprep.subr.mxu0 0.0
        %8063 = vmatpush1.msra.mxu0 0.0
        %8064 = vmatprep.subr.mxu0 0.0
        %8065 = vmatpush1.msra.mxu0 0.0
        %8066 = vmatprep.subr.mxu0 0.0
        %8067 = vmatpush1.msra.mxu0 0.0
        %8068 = vmatprep.subr.mxu0 0.0
        %8069 = vmatpush1.msra.mxu0 0.0
        %8070 = vmatprep.subr.mxu0 0.0
        %8071 = vmatpush1.msra.mxu0 0.0
        %8072 = vmatprep.subr.mxu0 0.0
        %8073 = vmatpush1.msra.mxu0 0.0
        %8074 = vmatprep.subr.mxu0 0.0
        %8075 = vmatpush1.msra.mxu0 0.0
        %8076 = vmatprep.subr.mxu0 0.0
        %8077 = vmatpush1.msra.mxu0 0.0
        %8078 = vmatprep.subr.mxu0 0.0
        %8079 = vmatpush1.msra.mxu0 0.0
        %8080 = vmatprep.subr.mxu0 0.0
        %8081 = vmatpush1.msra.mxu0 0.0
        %8082 = vmatprep.subr.mxu0 0.0
        %8083 = vmatpush1.msra.mxu0 0.0
        %8084 = vmatprep.subr.mxu0 0.0
        %8085 = vmatpush1.msra.mxu0 0.0
        %8086 = vmatprep.subr.mxu0 0.0
        %8087 = vmatpush1.msra.mxu0 0.0
        %8088 = vmatprep.subr.mxu0 0.0
        %8089 = vmatpush1.msra.mxu0 0.0
        %8090 = vmatprep.subr.mxu0 0.0
        %8091 = vmatpush1.msra.mxu0 0.0
        %8092 = vmatprep.subr.mxu0 0.0
        %8093 = vmatpush1.msra.mxu0 0.0
        %8094 = vmatprep.subr.mxu0 0.0
        %8095 = vmatpush1.msra.mxu0 0.0
        %8096 = vmatprep.subr.mxu0 0.0
        %8097 = vmatpush1.msra.mxu0 0.0
        %8098 = vmatprep.mubr.f32.mxu0 0.0
        %8099 = vmatmul.mubr.f32.gmra.mrb[0].mxu0 %v8032
        %v8100 = vpop.f32.mrb[0].mxu0
        %v8101 = vadd.f32 0.0, %v8100
        %v8102 = vpop.f32.mrb[0].mxu0
        %8103 = vdwg.mxu0
        %v8104 = vadd.f32 %v7925, %v8101
        %v8105 = vld [vmem:[%s23] sm:$0x1]
        %v8106 = vmul.f32 %v8104, %v8104
        %v8107 = vsel %vm883, %v8106, 0.0
        %8108 = vadd.xlane.f32.xlu0 %v8107
        %v8109 = vpop.xlane.xlu0 %8108
        %v8110 = vmul.f32 %v8109, %v887
        %v8111 = vadd.f32 %v8110, 1e-06
        %v8112 = vrsqrt.pop %v8111
        %v8113 = vmul.f32 %v8104, %v8112
        %v8115 = vlaneseq
        %v8116 = vshrl.u32 %v8115, 7
        %v8117 = vsub.s32 0, %v8116
        %v8118 = vrot.slane %v8105, %v8117
        %v8120 = vmul.f32 %v8113, %v8118
        %v8121 = vmul.f32 %v8120, 0.17677669
        %v8122 = vld [vmem:[%s24] sm:$0xff]
        %v8123 = vld [vmem:[%s24 + $0x8] sm:$0xff]
        %v8124 = vld [vmem:[%s24 + $0x10] sm:$0xff]
        %v8125 = vld [vmem:[%s24 + $0x18] sm:$0xff]
        %v8127 = vsel %vm883, %v8121, 0
        %8129 = vmatprep.subr.mxu0 0.0
        %8130 = vmatpush1.msra.mxu0 %v8122
        %8131 = vmatprep.subr.mxu0 0.0
        %8132 = vmatpush1.msra.mxu0 %v8123
        %8133 = vmatprep.subr.mxu0 0.0
        %8134 = vmatpush1.msra.mxu0 %v8124
        %8135 = vmatprep.subr.mxu0 0.0
        %8136 = vmatpush1.msra.mxu0 %v8125
        %8137 = vmatprep.subr.mxu0 0.0
        %8138 = vmatpush1.msra.mxu0 0.0
        %8139 = vmatprep.subr.mxu0 0.0
        %8140 = vmatpush1.msra.mxu0 0.0
        %8141 = vmatprep.subr.mxu0 0.0
        %8142 = vmatpush1.msra.mxu0 0.0
        %8143 = vmatprep.subr.mxu0 0.0
        %8144 = vmatpush1.msra.mxu0 0.0
        %8145 = vmatprep.subr.mxu0 0.0
        %8146 = vmatpush1.msra.mxu0 0.0
        %8147 = vmatprep.subr.mxu0 0.0
        %8148 = vmatpush1.msra.mxu0 0.0
        %8149 = vmatprep.subr.mxu0 0.0
        %8150 = vmatpush1.msra.mxu0 0.0
        %8151 = vmatprep.subr.mxu0 0.0
        %8152 = vmatpush1.msra.mxu0 0.0
        %8153 = vmatprep.subr.mxu0 0.0
        %8154 = vmatpush1.msra.mxu0 0.0
        %8155 = vmatprep.subr.mxu0 0.0
        %8156 = vmatpush1.msra.mxu0 0.0
        %8157 = vmatprep.subr.mxu0 0.0
        %8158 = vmatpush1.msra.mxu0 0.0
        %8159 = vmatprep.subr.mxu0 0.0
        %8160 = vmatpush1.msra.mxu0 0.0
        %8161 = vmatprep.subr.mxu0 0.0
        %8162 = vmatpush1.msra.mxu0 0.0
        %8163 = vmatprep.subr.mxu0 0.0
        %8164 = vmatpush1.msra.mxu0 0.0
        %8165 = vmatprep.subr.mxu0 0.0
        %8166 = vmatpush1.msra.mxu0 0.0
        %8167 = vmatprep.subr.mxu0 0.0
        %8168 = vmatpush1.msra.mxu0 0.0
        %8169 = vmatprep.subr.mxu0 0.0
        %8170 = vmatpush1.msra.mxu0 0.0
        %8171 = vmatprep.subr.mxu0 0.0
        %8172 = vmatpush1.msra.mxu0 0.0
        %8173 = vmatprep.subr.mxu0 0.0
        %8174 = vmatpush1.msra.mxu0 0.0
        %8175 = vmatprep.subr.mxu0 0.0
        %8176 = vmatpush1.msra.mxu0 0.0
        %8177 = vmatprep.subr.mxu0 0.0
        %8178 = vmatpush1.msra.mxu0 0.0
        %8179 = vmatprep.subr.mxu0 0.0
        %8180 = vmatpush1.msra.mxu0 0.0
        %8181 = vmatprep.subr.mxu0 0.0
        %8182 = vmatpush1.msra.mxu0 0.0
        %8183 = vmatprep.subr.mxu0 0.0
        %8184 = vmatpush1.msra.mxu0 0.0
        %8185 = vmatprep.subr.mxu0 0.0
        %8186 = vmatpush1.msra.mxu0 0.0
        %8187 = vmatprep.subr.mxu0 0.0
        %8188 = vmatpush1.msra.mxu0 0.0
        %8189 = vmatprep.subr.mxu0 0.0
        %8190 = vmatpush1.msra.mxu0 0.0
        %8191 = vmatprep.subr.mxu0 0.0
        %8192 = vmatpush1.msra.mxu0 0.0
        %8193 = vmatprep.mubr.f32.mxu0 0.0
        %8194 = vmatmul.mubr.f32.gmra.mrb[0].mxu0 %v8127
        %v8195 = vpop.f32.mrb[0].mxu0
        %v8196 = vadd.f32 0.0, %v8195
        %v8197 = vpop.f32.mrb[0].mxu0
        %8198 = vdwg.mxu0
        %8199 = vst [vmem:[%s847] sm:$0xff] %v8196
        %v8200 = vlaneseq
        %v8201 = vand.u32 %v8200, 127
        %vm8202 = vcmp.lt.s32.totalorder %v8201, 64
        %v8203 = vsel %vm8202, %v8196, -1e+09
        %8204 = vmax.xlane.f32.xlu0 %v8203
        %v8205 = vpop.xlane.xlu0 %8204
        %v8206 = vsub.f32 %v8203, %v8205
        %v8207 = vmul.f32 %v8206, 1.442695
        %v8208 = vpow.pop %v8207
        %8209 = vadd.xlane.f32.xlu0 %v8208
        %v8210 = vpop.xlane.xlu0 %8209
        %v8211 = vlog2.pop %v8210
        %v8212 = vmul.f32 %v8211, 0.6931472
        %v8213 = vsub.f32 %v8206, %v8212
        %v8214 = vld [vmem:[%s872] sm:$0xff]
        %vm8215 = vcmp.ne.s32.totalorder %v8214, 4294967196
        %v8216 = vsel %vm8215, %v8214, 0
        %8217 = vset.pattern.permute.xlu0 0
        %8218 = vperm.xlu0 %8217, %v8216
        %v8219 = vpop.permute.xlu0 %8218
        %vm8220 = vcmp.eq.s32.totalorder %v8201, %v8219
        %v8221 = vsel %vm8220, 1, 0
        %v8222 = vcvt.s32.f32 %v8221
        %v8223 = vmul.f32 %v8213, %v8222
        %8224 = vadd.xlane.f32.xlu0 %v8223
        %v8225 = vpop.xlane.xlu0 %8224
        %v8226 = vsub.f32 0.0, %v8225
        %v8227 = vsel %vm8215, %v8226, 0.0
        %vm8228 = vcmask 7168
        %v8229 = vsel %vm8228, %v8227, 0.0
        %v8230 = vrot.slane %v8229, 4
        %v8231 = vadd.f32 %v8229, %v8230
        %v8232 = vrot.slane %v8231, 2
        %v8233 = vadd.f32 %v8231, %v8232
        %v8234 = vrot.slane %v8233, 1
        %v8235 = vadd.f32 %v8233, %v8234
        %vm8236 = vcmask 0
        %8237 = vst.msk [vmem:[%s875] sm:$0x1] %vm8236, %v8235
        %v8238 = vsel %vm8215, 1, 0
        %v8239 = vcvt.s32.f32 %v8238
        %v8240 = vsel %vm8228, %v8239, 0.0
        %v8241 = vrot.slane %v8240, 4
        %v8242 = vadd.f32 %v8240, %v8241
        %v8243 = vrot.slane %v8242, 2
        %v8244 = vadd.f32 %v8242, %v8243
        %v8245 = vrot.slane %v8244, 1
        %v8246 = vadd.f32 %v8244, %v8245
        %8247 = vst.msk [vmem:[%s878] sm:$0x1] %vm8236, %v8246
        %s8248 = sand.u32 %s595, 1
        %s8249 = scalar_lea.sflag [#allocation3], %s8248
        %s8250 = sand.u32 %s595, 1
        %s8251 = smul.addr %s8250, 8
        %s8252 = scalar_lea.vmem [#allocation2], %s8251
        %p8253 = scmp.lt.s32.totalorder %s42, 1
        %s8254 = scalar_select %p8253, %s42, 1
        %s8255 = scalar_lea.vmem %s26, %s8254
        %p8256 = scmp.lt.s32.totalorder %s42, 1
        %s8257 = scalar_select %p8256, %s42, 1
        %s8258 = scalar_lea.vmem %s27, %s8257
        // Predicated region
        $region121: #{model_forward.1} parent=119 // pred_check
          %p8259 = pneg %p605
        $region122: #{model_forward.1} parent=119 // pred_check_branch
          %8261 = sbr.rel (%p8259) target = $region124
        $region123: #{model_forward.1} parent=119 // pred_region
          %s8263 = ssub.s32 128, 128
          %8264 = vsyncadd %s8249, %s8263
          %s8265 = smul.addr %s42, 128
          %s8266 = scalar_lea.hbm %s25, %s8265
          %s8268 = sshll.u32 %s8252, 4
          %s8269 = int_to_ptr.vmem [resolvable:$true] %s8268
          %8271 = dma.vmem_to_hbm [thread:$0]  %s8269, 128, %s8266, %s8249
        $region124: #{model_forward.1} parent=119 // pred_fallthru
          _
        // Predicated region
        $region125: #{model_forward.1} parent=119 // pred_check
          %p8272 = pneg %p631
        $region126: #{model_forward.1} parent=119 // pred_check_branch
          %8274 = sbr.rel (%p8272) target = $region128
        $region127: #{model_forward.1} parent=119 // pred_region
          _
        $region128: #{model_forward.1} parent=119 // pred_fallthru
          _
        // Predicated region
        $region129: #{model_forward.1} parent=119 // pred_check
          %p8275 = pneg %p657
        $region130: #{model_forward.1} parent=119 // pred_check_branch
          %8277 = sbr.rel (%p8275) target = $region132
        $region131: #{model_forward.1} parent=119 // pred_region
          _
        $region132: #{model_forward.1} parent=119 // pred_fallthru
          _
      $region120: #{model_forward.1} parent=5 // pred_fallthru
        _
      %p8278 = scmp.le.s32.totalorder 2, %s37
      // Predicated region
      $region133: #{model_forward.1} parent=5 // pred_check
        %p8279 = pneg %p8278
      $region134: #{model_forward.1} parent=5 // pred_check_branch
        %8281 = sbr.rel (%p8279) target = $region136
      $region135: #{model_forward.1} parent=5 // pred_region
        %s8282 = ssub.s32 %s37, 2
        // Predicated region
        $region137: #{model_forward.1} parent=135 // pred_check
          %p8283 = pneg %p611
        $region138: #{model_forward.1} parent=135 // pred_check_branch
          %8285 = sbr.rel (%p8283) target = $region140
        $region139: #{model_forward.1} parent=135 // pred_region
          %s8286 = sand.u32 %s596, 1
          %s8287 = scalar_lea.sflag [#allocation3], %s8286
          %s8288 = sand.u32 %s596, 1
          %s8289 = smul.addr %s8288, 8
          %s8290 = scalar_lea.vmem [#allocation2], %s8289
          %8291 = dma.done %s8287, 128
        $region140: #{model_forward.1} parent=135 // pred_fallthru
          _
        // Predicated region
        $region141: #{model_forward.1} parent=135 // pred_check
          %p8292 = pneg %p637
        $region142: #{model_forward.1} parent=135 // pred_check_branch
          %8294 = sbr.rel (%p8292) target = $region144
        $region143: #{model_forward.1} parent=135 // pred_region
          %p8295 = scmp.lt.s32.totalorder %s43, 1
          %s8296 = scalar_select %p8295, %s43, 1
          %s8297 = scalar_lea.vmem %s26, %s8296
        $region144: #{model_forward.1} parent=135 // pred_fallthru
          _
        // Predicated region
        $region145: #{model_forward.1} parent=135 // pred_check
          %p8298 = pneg %p663
        $region146: #{model_forward.1} parent=135 // pred_check_branch
          %8300 = sbr.rel (%p8298) target = $region148
        $region147: #{model_forward.1} parent=135 // pred_region
          %p8301 = scmp.lt.s32.totalorder %s43, 1
          %s8302 = scalar_select %p8301, %s43, 1
          %s8303 = scalar_lea.vmem %s27, %s8302
        $region148: #{model_forward.1} parent=135 // pred_fallthru
          _
      $region136: #{model_forward.1} parent=5 // pred_fallthru
        _
    $region6: #{model_forward.1} parent=1 // loop_footer
      %s41 = sadd.s32 1, %s37
    $region7: #{model_forward.1} parent=1 // loop_footer_branch
      %36 = sbr.rel target = $region3
    $region8: #{model_forward.1} parent=1 // loop_exit
      _
    %8304 = vsyncpa [#allocation3], 1
    %s8305 = scalar_lea.sflag [#allocation3], 1
    %8306 = vsyncpa %s8305, 1

</llo_original>
